<compile_context>
chip_gen: v5e
topology: v5e:2x2
jax: 0.10.0
libtpu: 0.0.40
codegen_flags: <defaults>
</compile_context>

<pallas_src>
import functools

import jax
import jax.numpy as jnp
from jax.experimental import pallas as pl
from jax.experimental.pallas import tpu as pltpu

_LANE = 128   # channel dims padded to a multiple of this (lane width)
_SUB = 8      # W padded to a multiple of this (sublane width)
_Y1_TAIL = 8  # spare zeroed rows after the y1 scratch for flat-row wrap reads


def _round_up(x, m):
    return (x + m - 1) // m * m


def _double_conv_kernel(x_hbm, w1_ref, w2_ref, o_ref, xbuf, y1buf, sem, *,
                        tile_h, wp, mc1, mc2):
    # x_hbm : (N, hp*wp, cin_p)               flat rows, in HBM (manual DMA)
    # w1_ref: (3, 3*cin_p, cmid_p)            kw-fused conv1 weight (VMEM)
    # w2_ref: (3, 3*cmid_p, cout_p)           kw-fused conv2 weight (VMEM)
    # o_ref : (1, tile_h*wp, cout_p)          flat output row-tile
    # xbuf  : (2, (tile_h+5)*wp, cin_p)       double-buffered input rows
    # y1buf : ((tile_h+2)*wp + tail, cmid_p)  conv1 output (flat rows)
    n = pl.program_id(0)
    t = pl.program_id(1)
    num_t = pl.num_programs(1)

    xrows = tile_h + 5                  # 4-row conv halo + 1 flat-row wrap row
    rows1 = tile_h + 2                  # conv1 output rows per tile
    cmid_p = y1buf.shape[-1]
    tail = y1buf.shape[0] - rows1 * wp
    slot = t % 2

    def in_copy(tile_idx, s):
        start = pl.multiple_of(tile_idx * (tile_h * wp), _SUB)
        return pltpu.make_async_copy(
            x_hbm.at[n, pl.ds(start, xrows * wp)], xbuf.at[s], sem.at[s])

    # Prime the double buffer and zero the y1 wrap tail once per image.
    @pl.when(t == 0)
    def _():
        in_copy(t, slot).start()
        y1buf[rows1 * wp:, :] = jnp.zeros((tail, cmid_p), dtype=y1buf.dtype)

    # Wait on the *real* descriptor for this tile.
    in_copy(t, slot).wait()

    # Prefetch the next row-tile of the same image while computing this one.
    @pl.when(t + 1 < num_t)
    def _():
        in_copy(t + 1, 1 - slot).start()

    # ---- conv1 (3x3, valid, no bias) + ReLU --------------------------------
    # Flat-row trick: output flat index j reads input flat rows j + kh*wp + kw.
    # Chunk M so the f32 accumulator stays in vregs; fuse kw along K.
    m_total = rows1 * wp
    r0 = 0
    while r0 < m_total:
        m = min(mc1, m_total - r0)
        acc = None
        for kh in range(3):
            base = r0 + kh * wp
            patch = jnp.concatenate(
                [xbuf[slot, base + kw:base + kw + m, :] for kw in range(3)],
                axis=-1)
            z = jnp.dot(patch, w1_ref[kh], preferred_element_type=jnp.float32)
            acc = z if acc is None else acc + z
        y1buf[r0:r0 + m, :] = jnp.maximum(acc, 0.0).astype(y1buf.dtype)
        r0 += m

    # ---- conv2 (3x3, valid, no bias) + ReLU --------------------------------
    m_total = tile_h * wp
    r0 = 0
    while r0 < m_total:
        m = min(mc2, m_total - r0)
        acc = None
        for kh in range(3):
            base = r0 + kh * wp
            patch = jnp.concatenate(
                [y1buf[base + kw:base + kw + m, :] for kw in range(3)],
                axis=-1)
            z = jnp.dot(patch, w2_ref[kh], preferred_element_type=jnp.float32)
            acc = z if acc is None else acc + z
        o_ref[0, r0:r0 + m, :] = jnp.maximum(acc, 0.0).astype(o_ref.dtype)
        r0 += m


def _pick_vmem_limit():
    # ~96 MiB on v5e/v6e (128 MiB physical), 48 MiB on v7x (64 MiB physical).
    try:
        phys = int(pltpu.get_tpu_info().vmem_capacity_bytes)
        return min(96 * 1024 * 1024, (phys * 3) // 4)
    except Exception:
        return 48 * 1024 * 1024


def _chunk_m(total_m, n_out_ch):
    # ~128 KiB f32 accumulator per chunk, but at most ~16 chunks per conv
    # (bounds trace-time unrolling); chunk boundaries stay multiples of 8.
    target = max(_SUB, ((128 * 1024) // (4 * n_out_ch)) // _SUB * _SUB)
    target = max(target, _round_up(pl.cdiv(total_m, 16), _SUB))
    return min(total_m, target)


def double_conv_pallas(x_nchw, w1_oihw, w2_oihw, *, tile_h=16,
                       compute_dtype=jnp.bfloat16):
    """x_nchw: (N, Cin, H, W); w*_oihw: (Cout, Cin, 3, 3). Returns NCHW."""
    N, Cin, H, W = x_nchw.shape
    Cmid = w1_oihw.shape[0]
    Cout = w2_oihw.shape[0]
    assert w1_oihw.shape == (Cmid, Cin, 3, 3)
    assert w2_oihw.shape == (Cout, Cmid, 3, 3)
    H2, W2 = H - 4, W - 4
    assert H2 > 0 and W2 > 0, "input too small for two valid 3x3 convs"

    cin_p = _round_up(Cin, _LANE)
    cmid_p = _round_up(Cmid, _LANE)
    cout_p = _round_up(Cout, _LANE)
    wp = _round_up(W, _SUB)
    out_dtype = x_nchw.dtype
    cd_bytes = jnp.dtype(compute_dtype).itemsize
    out_bytes = jnp.dtype(out_dtype).itemsize

    vmem_limit = _pick_vmem_limit()

    # Largest tile_h whose working set fits the per-generation VMEM budget.
    tile_h = max(1, min(tile_h, H2))

    def vmem_bytes(th):
        b = 2 * (th + 5) * wp * cin_p * cd_bytes                 # xbuf (x2)
        b += ((th + 2) * wp + _Y1_TAIL) * cmid_p * cd_bytes      # y1buf
        b += 2 * 9 * (cin_p * cmid_p + cmid_p * cout_p) * cd_bytes  # weights
        b += 2 * th * wp * cout_p * out_bytes                    # out block x2
        return b

    while tile_h > 4 and vmem_bytes(tile_h) > (vmem_limit * 4) // 5:
        tile_h = max(4, tile_h // 2)
    tile_h = max(1, min(tile_h, H2))

    num_t = pl.cdiv(H2, tile_h)
    h2_p = num_t * tile_h
    hp = h2_p + 5                     # +4-row conv halo, +1 flat-row wrap row
    xrows = tile_h + 5
    rows1 = tile_h + 2
    mc1 = _chunk_m(rows1 * wp, cmid_p)
    mc2 = _chunk_m(tile_h * wp, cout_p)

    # Layout glue (one-time, outside the hot loop): NCHW->NHWC, OIHW->HWIO,
    # zero-pad channels to lane width / spatial dims to the tiled extents,
    # flatten H x W, and fuse the kw taps into the weights' K dimension.
    # Zero-padded channels contribute exactly 0 to every dot product; padded
    # rows/cols only produce outputs that get sliced off below.
    x = jnp.transpose(x_nchw, (0, 2, 3, 1))
    x = jnp.pad(x, ((0, 0), (0, hp - H), (0, wp - W), (0, cin_p - Cin)))
    x = x.astype(compute_dtype).reshape(N, hp * wp, cin_p)

    w1 = jnp.transpose(w1_oihw, (2, 3, 1, 0))            # (3, 3, Cin, Cmid)
    w1 = jnp.pad(w1, ((0, 0), (0, 0), (0, cin_p - Cin), (0, cmid_p - Cmid)))
    w1 = w1.astype(compute_dtype).reshape(3, 3 * cin_p, cmid_p)
    w2 = jnp.transpose(w2_oihw, (2, 3, 1, 0))
    w2 = jnp.pad(w2, ((0, 0), (0, 0), (0, cmid_p - Cmid), (0, cout_p - Cout)))
    w2 = w2.astype(compute_dtype).reshape(3, 3 * cmid_p, cout_p)

    kernel = functools.partial(_double_conv_kernel, tile_h=tile_h, wp=wp,
                               mc1=mc1, mc2=mc2)

    def build(single_buffer_weights):
        w_kwargs = ({"pipeline_mode": pl.Buffered(1)}
                    if single_buffer_weights else {})
        return pl.pallas_call(
            kernel,
            out_shape=jax.ShapeDtypeStruct((N, h2_p * wp, cout_p), out_dtype),
            grid_spec=pltpu.PrefetchScalarGridSpec(
                num_scalar_prefetch=0,
                grid=(N, num_t),
                in_specs=[
                    pl.BlockSpec(memory_space=pl.ANY),        # x stays in HBM
                    pl.BlockSpec((3, 3 * cin_p, cmid_p),
                                 lambda n, t: (0, 0, 0), **w_kwargs),
                    pl.BlockSpec((3, 3 * cmid_p, cout_p),
                                 lambda n, t: (0, 0, 0), **w_kwargs),
                ],
                out_specs=pl.BlockSpec((1, tile_h * wp, cout_p),
                                       lambda n, t: (n, t, 0)),
                scratch_shapes=[
                    pltpu.VMEM((2, xrows * wp, cin_p), compute_dtype),
                    pltpu.VMEM((rows1 * wp + _Y1_TAIL, cmid_p), compute_dtype),
                    pltpu.SemaphoreType.DMA((2,)),
                ],
            ),
            compiler_params=pltpu.CompilerParams(
                dimension_semantics=("parallel", "arbitrary"),
                vmem_limit_bytes=int(vmem_limit),
            ),
        )

    try:
        # Constant index maps -> a single resident weight buffer is enough
        # (saves ~9 MiB at 512-channel layers; matters most on v7x).
        out_p = build(True)(x, w1, w2)
    except Exception:
        # pipeline_mode=pl.Buffered(1) unsupported on this JAX build: fall
        # back to the default (double-buffered) weight pipeline.
        out_p = build(False)(x, w1, w2)

    out = out_p.reshape(N, h2_p, wp, cout_p)[:, :H2, :W2, :Cout]
    return jnp.transpose(out, (0, 3, 1, 2))               # back to NCHW


def reference_double_conv(x_nchw, w1_oihw, w2_oihw):
    dn = ("NCHW", "OIHW", "NCHW")
    y = jax.lax.conv_general_dilated(x_nchw, w1_oihw, (1, 1), "VALID",
                                     dimension_numbers=dn)
    y = jnp.maximum(y, 0.0)
    y = jax.lax.conv_general_dilated(y, w2_oihw, (1, 1), "VALID",
                                     dimension_numbers=dn)
    return jnp.maximum(y, 0.0)


if __name__ == "__main__":
    key = jax.random.PRNGKey(0)
    k_x, k_w1, k_w2 = jax.random.split(key, 3)

    N, Cin, Cout, S = 2, 4, 8, 16
    x = jax.random.normal(k_x, (N, Cin, S, S), dtype=jnp.float32)
    w1 = jax.random.normal(k_w1, (Cout, Cin, 3, 3), dtype=jnp.float32) * 0.1
    w2 = jax.random.normal(k_w2, (Cout, Cout, 3, 3), dtype=jnp.float32) * 0.1

    ref = reference_double_conv(x, w1, w2)

    # Exact-path check (f32 matmuls).
    out_f32 = jax.block_until_ready(
        double_conv_pallas(x, w1, w2, compute_dtype=jnp.float32))
    assert out_f32.shape == (N, Cout, S - 4, S - 4), out_f32.shape
    assert jnp.allclose(out_f32, ref, atol=1e-4, rtol=1e-4), "f32 mismatch"

    # Production path (bf16 matmul inputs, f32 accumulation) -> loose tolerance.
    out_bf16 = jax.block_until_ready(
        double_conv_pallas(x, w1, w2, compute_dtype=jnp.bfloat16))
    assert out_bf16.shape == (N, Cout, S - 4, S - 4), out_bf16.shape
    assert jnp.allclose(out_bf16, ref, atol=5e-2, rtol=5e-2), "bf16 mismatch"

    print("KERNEL_OK")
</pallas_src>

<mosaic_0001>
module attributes {stable_mosaic.version = 11 : i64} {
  func.func @_double_conv_kernel(%arg0: i32, %arg1: i32, %arg2: memref<2x272x128xf32, #tpu.memory_space<any>>, %arg3: memref<3x384x128xf32, #tpu.memory_space<vmem>>, %arg4: memref<3x384x128xf32, #tpu.memory_space<vmem>>, %arg5: memref<1x192x128xf32, #tpu.memory_space<vmem>>, %arg6: memref<2x272x128xf32, #tpu.memory_space<vmem>>, %arg7: memref<232x128xf32, #tpu.memory_space<vmem>>, %arg8: memref<2x!tpu.dma_semaphore, #tpu.memory_space<semaphore_mem>>) attributes {dimension_semantics = [#tpu.dimension_semantics<parallel>, #tpu.dimension_semantics<arbitrary>], iteration_bounds = array<i64: 2, 1>, scalar_prefetch = 0 : i64, scratch_operands = 3 : i64, tpu.core_type = #tpu.core_type<tc>, window_params = [{}, {pipeline_mode = #tpu.pipeline_mode<synchronous>, transform_indices = @transform_1, window_bounds = array<i64: 3, 384, 128>}, {pipeline_mode = #tpu.pipeline_mode<synchronous>, transform_indices = @transform_2, window_bounds = array<i64: 3, 384, 128>}, {transform_indices = @transform_3, window_bounds = array<i64: 1, 192, 128>}]} {
    %c2_i32 = arith.constant 2 : i32
    %c0_i32 = arith.constant 0 : i32
    %0 = arith.cmpi eq, %c2_i32, %c0_i32 : i32
    %c1_i32 = arith.constant 1 : i32
    %1 = arith.select %0, %c1_i32, %c2_i32 : i32
    %2 = arith.remsi %arg1, %1 : i32
    %c0_i32_0 = arith.constant 0 : i32
    %3 = arith.cmpi ne, %2, %c0_i32_0 : i32
    %c0_i32_1 = arith.constant 0 : i32
    %4 = arith.cmpi slt, %2, %c0_i32_1 : i32
    %c0_i32_2 = arith.constant 0 : i32
    %5 = arith.cmpi slt, %1, %c0_i32_2 : i32
    %6 = arith.xori %4, %5 : i1
    %7 = arith.andi %6, %3 : i1
    %8 = arith.addi %2, %1 : i32
    %9 = arith.select %7, %8, %2 : i32
    %c0_i32_3 = arith.constant 0 : i32
    %10 = arith.cmpi eq, %arg1, %c0_i32_3 : i32
    %11 = arith.extui %10 : i1 to i32
    %c0_i32_4 = arith.constant 0 : i32
    %12 = arith.cmpi ne, %11, %c0_i32_4 : i32
    scf.if %12 {
      %c192_i32_68 = arith.constant 192 : i32
      %97 = arith.muli %arg1, %c192_i32_68 : i32
      %98 = tpu.assume_multiple %97, 8 : i32
      %c0_i32_69 = arith.constant 0 : i32
      %99 = tpu.memref_slice %arg2[%arg0, %98, %c0_i32_69] : memref<2x272x128xf32, #tpu.memory_space<any>> -> memref<1x272x128xf32, #tpu.memory_space<any>>
      %100 = tpu.memref_squeeze %99 : memref<1x272x128xf32, #tpu.memory_space<any>> -> memref<272x128xf32, #tpu.memory_space<any>>
      %c0_i32_70 = arith.constant 0 : i32
      %c0_i32_71 = arith.constant 0 : i32
      %101 = tpu.memref_slice %arg6[%9, %c0_i32_70, %c0_i32_71] : memref<2x272x128xf32, #tpu.memory_space<vmem>> -> memref<1x272x128xf32, #tpu.memory_space<vmem>>
      %102 = tpu.memref_squeeze %101 : memref<1x272x128xf32, #tpu.memory_space<vmem>> -> memref<272x128xf32, #tpu.memory_space<vmem>>
      %103 = tpu.memref_slice %arg8[%9] : memref<2x!tpu.dma_semaphore, #tpu.memory_space<semaphore_mem>> -> memref<1x!tpu.dma_semaphore, #tpu.memory_space<semaphore_mem>>
      %104 = tpu.memref_squeeze %103 : memref<1x!tpu.dma_semaphore, #tpu.memory_space<semaphore_mem>> -> memref<!tpu.dma_semaphore, #tpu.memory_space<semaphore_mem>>
      tpu.enqueue_dma source(%100 : memref<272x128xf32, #tpu.memory_space<any>>) target(%102 : memref<272x128xf32, #tpu.memory_space<vmem>>) target_semaphore(%104 : memref<!tpu.dma_semaphore, #tpu.memory_space<semaphore_mem>>)
      %cst_72 = arith.constant 0.000000e+00 : f32
      %105 = vector.broadcast %cst_72 : f32 to vector<8x128xf32>
      %c224 = arith.constant 224 : index
      %c0_73 = arith.constant 0 : index
      %106 = vector.load %arg7[%c224, %c0_73] : memref<232x128xf32, #tpu.memory_space<vmem>>, vector<8x128xf32>
      tpu.vector_store %arg7[%c224, %c0_73], %105 {strides = array<i32>} : memref<232x128xf32, #tpu.memory_space<vmem>>, vector<8x128xf32>,
    } else {
    }
    %c192_i32 = arith.constant 192 : i32
    %13 = arith.muli %arg1, %c192_i32 : i32
    %14 = tpu.assume_multiple %13, 8 : i32
    %c0_i32_5 = arith.constant 0 : i32
    %15 = tpu.memref_slice %arg2[%arg0, %14, %c0_i32_5] : memref<2x272x128xf32, #tpu.memory_space<any>> -> memref<1x272x128xf32, #tpu.memory_space<any>>
    %16 = tpu.memref_squeeze %15 : memref<1x272x128xf32, #tpu.memory_space<any>> -> memref<272x128xf32, #tpu.memory_space<any>>
    %c0_i32_6 = arith.constant 0 : i32
    %c0_i32_7 = arith.constant 0 : i32
    %17 = tpu.memref_slice %arg6[%9, %c0_i32_6, %c0_i32_7] : memref<2x272x128xf32, #tpu.memory_space<vmem>> -> memref<1x272x128xf32, #tpu.memory_space<vmem>>
    %18 = tpu.memref_squeeze %17 : memref<1x272x128xf32, #tpu.memory_space<vmem>> -> memref<272x128xf32, #tpu.memory_space<vmem>>
    %19 = tpu.memref_slice %arg8[%9] : memref<2x!tpu.dma_semaphore, #tpu.memory_space<semaphore_mem>> -> memref<1x!tpu.dma_semaphore, #tpu.memory_space<semaphore_mem>>
    %20 = tpu.memref_squeeze %19 : memref<1x!tpu.dma_semaphore, #tpu.memory_space<semaphore_mem>> -> memref<!tpu.dma_semaphore, #tpu.memory_space<semaphore_mem>>
    tpu.wait_dma2 semaphore(%20 : memref<!tpu.dma_semaphore, #tpu.memory_space<semaphore_mem>>) src(%16 : memref<272x128xf32, #tpu.memory_space<any>>) dst(%18 : memref<272x128xf32, #tpu.memory_space<vmem>>)
    %c1_i32_8 = arith.constant 1 : i32
    %21 = arith.addi %arg1, %c1_i32_8 : i32
    %c1_i32_9 = arith.constant 1 : i32
    %22 = arith.cmpi slt, %21, %c1_i32_9 : i32
    %23 = arith.extui %22 : i1 to i32
    %c0_i32_10 = arith.constant 0 : i32
    %24 = arith.cmpi ne, %23, %c0_i32_10 : i32
    scf.if %24 {
      %c1_i32_68 = arith.constant 1 : i32
      %97 = arith.addi %arg1, %c1_i32_68 : i32
      %c1_i32_69 = arith.constant 1 : i32
      %98 = arith.subi %c1_i32_69, %9 : i32
      %c192_i32_70 = arith.constant 192 : i32
      %99 = arith.muli %97, %c192_i32_70 : i32
      %100 = tpu.assume_multiple %99, 8 : i32
      %c0_i32_71 = arith.constant 0 : i32
      %101 = tpu.memref_slice %arg2[%arg0, %100, %c0_i32_71] : memref<2x272x128xf32, #tpu.memory_space<any>> -> memref<1x272x128xf32, #tpu.memory_space<any>>
      %102 = tpu.memref_squeeze %101 : memref<1x272x128xf32, #tpu.memory_space<any>> -> memref<272x128xf32, #tpu.memory_space<any>>
      %c0_i32_72 = arith.constant 0 : i32
      %c0_i32_73 = arith.constant 0 : i32
      %103 = tpu.memref_slice %arg6[%98, %c0_i32_72, %c0_i32_73] : memref<2x272x128xf32, #tpu.memory_space<vmem>> -> memref<1x272x128xf32, #tpu.memory_space<vmem>>
      %104 = tpu.memref_squeeze %103 : memref<1x272x128xf32, #tpu.memory_space<vmem>> -> memref<272x128xf32, #tpu.memory_space<vmem>>
      %105 = tpu.memref_slice %arg8[%98] : memref<2x!tpu.dma_semaphore, #tpu.memory_space<semaphore_mem>> -> memref<1x!tpu.dma_semaphore, #tpu.memory_space<semaphore_mem>>
      %106 = tpu.memref_squeeze %105 : memref<1x!tpu.dma_semaphore, #tpu.memory_space<semaphore_mem>> -> memref<!tpu.dma_semaphore, #tpu.memory_space<semaphore_mem>>
      tpu.enqueue_dma source(%102 : memref<272x128xf32, #tpu.memory_space<any>>) target(%104 : memref<272x128xf32, #tpu.memory_space<vmem>>) target_semaphore(%106 : memref<!tpu.dma_semaphore, #tpu.memory_space<semaphore_mem>>)
    } else {
    }
    %25 = arith.index_cast %9 : i32 to index
    %c0 = arith.constant 0 : index
    %c0_11 = arith.constant 0 : index
    %26 = vector.load %arg6[%25, %c0, %c0_11] : memref<2x272x128xf32, #tpu.memory_space<vmem>>, vector<1x224x128xf32>
    %27 = vector.shape_cast %26 : vector<1x224x128xf32> to vector<224x128xf32>
    %28 = arith.index_cast %9 : i32 to index
    %c1 = arith.constant 1 : index
    %c0_12 = arith.constant 0 : index
    %29 = vector.load %arg6[%28, %c1, %c0_12] : memref<2x272x128xf32, #tpu.memory_space<vmem>>, vector<1x224x128xf32>
    %30 = vector.shape_cast %29 : vector<1x224x128xf32> to vector<224x128xf32>
    %31 = arith.index_cast %9 : i32 to index
    %c2 = arith.constant 2 : index
    %c0_13 = arith.constant 0 : index
    %32 = vector.load %arg6[%31, %c2, %c0_13] : memref<2x272x128xf32, #tpu.memory_space<vmem>>, vector<1x224x128xf32>
    %33 = vector.shape_cast %32 : vector<1x224x128xf32> to vector<224x128xf32>
    %34 = tpu.concatenate %27, %30, %33 in 1 : vector<224x128xf32>, vector<224x128xf32>, vector<224x128xf32> -> vector<224x384xf32>
    %c0_14 = arith.constant 0 : index
    %c0_15 = arith.constant 0 : index
    %c0_16 = arith.constant 0 : index
    %35 = vector.load %arg3[%c0_14, %c0_15, %c0_16] : memref<3x384x128xf32, #tpu.memory_space<vmem>>, vector<1x384x128xf32>
    %36 = vector.shape_cast %35 : vector<1x384x128xf32> to vector<384x128xf32>
    %cst = arith.constant dense<0.000000e+00> : vector<224x128xf32>
    %37 = tpu.matmul %34, %36, %cst {dimension_numbers = #tpu.dot_dimension_numbers<[1], [0], [0], [1], [0, 0, 1, 1], [], []>} : vector<224x384xf32>, vector<384x128xf32>, vector<224x128xf32> -> vector<224x128xf32>
    %38 = arith.index_cast %9 : i32 to index
    %c16 = arith.constant 16 : index
    %c0_17 = arith.constant 0 : index
    %39 = vector.load %arg6[%38, %c16, %c0_17] : memref<2x272x128xf32, #tpu.memory_space<vmem>>, vector<1x224x128xf32>
    %40 = vector.shape_cast %39 : vector<1x224x128xf32> to vector<224x128xf32>
    %41 = arith.index_cast %9 : i32 to index
    %c17 = arith.constant 17 : index
    %c0_18 = arith.constant 0 : index
    %42 = vector.load %arg6[%41, %c17, %c0_18] : memref<2x272x128xf32, #tpu.memory_space<vmem>>, vector<1x224x128xf32>
    %43 = vector.shape_cast %42 : vector<1x224x128xf32> to vector<224x128xf32>
    %44 = arith.index_cast %9 : i32 to index
    %c18 = arith.constant 18 : index
    %c0_19 = arith.constant 0 : index
    %45 = vector.load %arg6[%44, %c18, %c0_19] : memref<2x272x128xf32, #tpu.memory_space<vmem>>, vector<1x224x128xf32>
    %46 = vector.shape_cast %45 : vector<1x224x128xf32> to vector<224x128xf32>
    %47 = tpu.concatenate %40, %43, %46 in 1 : vector<224x128xf32>, vector<224x128xf32>, vector<224x128xf32> -> vector<224x384xf32>
    %c1_20 = arith.constant 1 : index
    %c0_21 = arith.constant 0 : index
    %c0_22 = arith.constant 0 : index
    %48 = vector.load %arg3[%c1_20, %c0_21, %c0_22] : memref<3x384x128xf32, #tpu.memory_space<vmem>>, vector<1x384x128xf32>
    %49 = vector.shape_cast %48 : vector<1x384x128xf32> to vector<384x128xf32>
    %cst_23 = arith.constant dense<0.000000e+00> : vector<224x128xf32>
    %50 = tpu.matmul %47, %49, %cst_23 {dimension_numbers = #tpu.dot_dimension_numbers<[1], [0], [0], [1], [0, 0, 1, 1], [], []>} : vector<224x384xf32>, vector<384x128xf32>, vector<224x128xf32> -> vector<224x128xf32>
    %51 = arith.addf %37, %50 : vector<224x128xf32>
    %52 = arith.index_cast %9 : i32 to index
    %c32 = arith.constant 32 : index
    %c0_24 = arith.constant 0 : index
    %53 = vector.load %arg6[%52, %c32, %c0_24] : memref<2x272x128xf32, #tpu.memory_space<vmem>>, vector<1x224x128xf32>
    %54 = vector.shape_cast %53 : vector<1x224x128xf32> to vector<224x128xf32>
    %55 = arith.index_cast %9 : i32 to index
    %c33 = arith.constant 33 : index
    %c0_25 = arith.constant 0 : index
    %56 = vector.load %arg6[%55, %c33, %c0_25] : memref<2x272x128xf32, #tpu.memory_space<vmem>>, vector<1x224x128xf32>
    %57 = vector.shape_cast %56 : vector<1x224x128xf32> to vector<224x128xf32>
    %58 = arith.index_cast %9 : i32 to index
    %c34 = arith.constant 34 : index
    %c0_26 = arith.constant 0 : index
    %59 = vector.load %arg6[%58, %c34, %c0_26] : memref<2x272x128xf32, #tpu.memory_space<vmem>>, vector<1x224x128xf32>
    %60 = vector.shape_cast %59 : vector<1x224x128xf32> to vector<224x128xf32>
    %61 = tpu.concatenate %54, %57, %60 in 1 : vector<224x128xf32>, vector<224x128xf32>, vector<224x128xf32> -> vector<224x384xf32>
    %c2_27 = arith.constant 2 : index
    %c0_28 = arith.constant 0 : index
    %c0_29 = arith.constant 0 : index
    %62 = vector.load %arg3[%c2_27, %c0_28, %c0_29] : memref<3x384x128xf32, #tpu.memory_space<vmem>>, vector<1x384x128xf32>
    %63 = vector.shape_cast %62 : vector<1x384x128xf32> to vector<384x128xf32>
    %cst_30 = arith.constant dense<0.000000e+00> : vector<224x128xf32>
    %64 = tpu.matmul %61, %63, %cst_30 {dimension_numbers = #tpu.dot_dimension_numbers<[1], [0], [0], [1], [0, 0, 1, 1], [], []>} : vector<224x384xf32>, vector<384x128xf32>, vector<224x128xf32> -> vector<224x128xf32>
    %65 = arith.addf %51, %64 : vector<224x128xf32>
    %cst_31 = arith.constant 0.000000e+00 : f32
    %66 = vector.broadcast %cst_31 : f32 to vector<224x128xf32>
    %67 = arith.maximumf %65, %66 : vector<224x128xf32>
    %c0_32 = arith.constant 0 : index
    %c0_33 = arith.constant 0 : index
    %68 = vector.load %arg7[%c0_32, %c0_33] : memref<232x128xf32, #tpu.memory_space<vmem>>, vector<224x128xf32>
    tpu.vector_store %arg7[%c0_32, %c0_33], %67 {strides = array<i32>} : memref<232x128xf32, #tpu.memory_space<vmem>>, vector<224x128xf32>,
    %c0_34 = arith.constant 0 : index
    %c0_35 = arith.constant 0 : index
    %69 = vector.load %arg7[%c0_34, %c0_35] : memref<232x128xf32, #tpu.memory_space<vmem>>, vector<192x128xf32>
    %c1_36 = arith.constant 1 : index
    %c0_37 = arith.constant 0 : index
    %70 = vector.load %arg7[%c1_36, %c0_37] : memref<232x128xf32, #tpu.memory_space<vmem>>, vector<192x128xf32>
    %c2_38 = arith.constant 2 : index
    %c0_39 = arith.constant 0 : index
    %71 = vector.load %arg7[%c2_38, %c0_39] : memref<232x128xf32, #tpu.memory_space<vmem>>, vector<192x128xf32>
    %72 = tpu.concatenate %69, %70, %71 in 1 : vector<192x128xf32>, vector<192x128xf32>, vector<192x128xf32> -> vector<192x384xf32>
    %c0_40 = arith.constant 0 : index
    %c0_41 = arith.constant 0 : index
    %c0_42 = arith.constant 0 : index
    %73 = vector.load %arg4[%c0_40, %c0_41, %c0_42] : memref<3x384x128xf32, #tpu.memory_space<vmem>>, vector<1x384x128xf32>
    %74 = vector.shape_cast %73 : vector<1x384x128xf32> to vector<384x128xf32>
    %cst_43 = arith.constant dense<0.000000e+00> : vector<192x128xf32>
    %75 = tpu.matmul %72, %74, %cst_43 {dimension_numbers = #tpu.dot_dimension_numbers<[1], [0], [0], [1], [0, 0, 1, 1], [], []>} : vector<192x384xf32>, vector<384x128xf32>, vector<192x128xf32> -> vector<192x128xf32>
    %c16_44 = arith.constant 16 : index
    %c0_45 = arith.constant 0 : index
    %76 = vector.load %arg7[%c16_44, %c0_45] : memref<232x128xf32, #tpu.memory_space<vmem>>, vector<192x128xf32>
    %c17_46 = arith.constant 17 : index
    %c0_47 = arith.constant 0 : index
    %77 = vector.load %arg7[%c17_46, %c0_47] : memref<232x128xf32, #tpu.memory_space<vmem>>, vector<192x128xf32>
    %c18_48 = arith.constant 18 : index
    %c0_49 = arith.constant 0 : index
    %78 = vector.load %arg7[%c18_48, %c0_49] : memref<232x128xf32, #tpu.memory_space<vmem>>, vector<192x128xf32>
    %79 = tpu.concatenate %76, %77, %78 in 1 : vector<192x128xf32>, vector<192x128xf32>, vector<192x128xf32> -> vector<192x384xf32>
    %c1_50 = arith.constant 1 : index
    %c0_51 = arith.constant 0 : index
    %c0_52 = arith.constant 0 : index
    %80 = vector.load %arg4[%c1_50, %c0_51, %c0_52] : memref<3x384x128xf32, #tpu.memory_space<vmem>>, vector<1x384x128xf32>
    %81 = vector.shape_cast %80 : vector<1x384x128xf32> to vector<384x128xf32>
    %cst_53 = arith.constant dense<0.000000e+00> : vector<192x128xf32>
    %82 = tpu.matmul %79, %81, %cst_53 {dimension_numbers = #tpu.dot_dimension_numbers<[1], [0], [0], [1], [0, 0, 1, 1], [], []>} : vector<192x384xf32>, vector<384x128xf32>, vector<192x128xf32> -> vector<192x128xf32>
    %83 = arith.addf %75, %82 : vector<192x128xf32>
    %c32_54 = arith.constant 32 : index
    %c0_55 = arith.constant 0 : index
    %84 = vector.load %arg7[%c32_54, %c0_55] : memref<232x128xf32, #tpu.memory_space<vmem>>, vector<192x128xf32>
    %c33_56 = arith.constant 33 : index
    %c0_57 = arith.constant 0 : index
    %85 = vector.load %arg7[%c33_56, %c0_57] : memref<232x128xf32, #tpu.memory_space<vmem>>, vector<192x128xf32>
    %c34_58 = arith.constant 34 : index
    %c0_59 = arith.constant 0 : index
    %86 = vector.load %arg7[%c34_58, %c0_59] : memref<232x128xf32, #tpu.memory_space<vmem>>, vector<192x128xf32>
    %87 = tpu.concatenate %84, %85, %86 in 1 : vector<192x128xf32>, vector<192x128xf32>, vector<192x128xf32> -> vector<192x384xf32>
    %c2_60 = arith.constant 2 : index
    %c0_61 = arith.constant 0 : index
    %c0_62 = arith.constant 0 : index
    %88 = vector.load %arg4[%c2_60, %c0_61, %c0_62] : memref<3x384x128xf32, #tpu.memory_space<vmem>>, vector<1x384x128xf32>
    %89 = vector.shape_cast %88 : vector<1x384x128xf32> to vector<384x128xf32>
    %cst_63 = arith.constant dense<0.000000e+00> : vector<192x128xf32>
    %90 = tpu.matmul %87, %89, %cst_63 {dimension_numbers = #tpu.dot_dimension_numbers<[1], [0], [0], [1], [0, 0, 1, 1], [], []>} : vector<192x384xf32>, vector<384x128xf32>, vector<192x128xf32> -> vector<192x128xf32>
    %91 = arith.addf %83, %90 : vector<192x128xf32>
    %cst_64 = arith.constant 0.000000e+00 : f32
    %92 = vector.broadcast %cst_64 : f32 to vector<192x128xf32>
    %93 = arith.maximumf %91, %92 : vector<192x128xf32>
    %c0_65 = arith.constant 0 : index
    %c0_66 = arith.constant 0 : index
    %c0_67 = arith.constant 0 : index
    %94 = vector.load %arg5[%c0_65, %c0_66, %c0_67] : memref<1x192x128xf32, #tpu.memory_space<vmem>>, vector<1x192x128xf32>
    %95 = vector.shape_cast %94 : vector<1x192x128xf32> to vector<192x128xf32>
    %96 = vector.shape_cast %93 : vector<192x128xf32> to vector<1x192x128xf32>
    tpu.vector_store %arg5[%c0_65, %c0_66, %c0_67], %96 {strides = array<i32>} : memref<1x192x128xf32, #tpu.memory_space<vmem>>, vector<1x192x128xf32>,
    return
  }
  func.func @transform_1(%arg0: i32, %arg1: i32) -> (i32, i32, i32) {
    %c0_i32 = arith.constant 0 : i32
    %c0_i32_0 = arith.constant 0 : i32
    %c0_i32_1 = arith.constant 0 : i32
    %c0_i32_2 = arith.constant 0 : i32
    return %c0_i32, %c0_i32_0, %c0_i32_1 : i32, i32, i32
  }
  func.func @transform_2(%arg0: i32, %arg1: i32) -> (i32, i32, i32) {
    %c0_i32 = arith.constant 0 : i32
    %c0_i32_0 = arith.constant 0 : i32
    %c0_i32_1 = arith.constant 0 : i32
    %c0_i32_2 = arith.constant 0 : i32
    return %c0_i32, %c0_i32_0, %c0_i32_1 : i32, i32, i32
  }
  func.func @transform_3(%arg0: i32, %arg1: i32) -> (i32, i32, i32) {
    %c0_i32 = arith.constant 0 : i32
    %c0_i32_0 = arith.constant 0 : i32
    return %arg0, %arg1, %c0_i32 : i32, i32, i32
  }
}

module attributes {stable_mosaic.version = 11 : i64} {
  func.func @_double_conv_kernel(%arg0: i32, %arg1: i32, %arg2: memref<2x272x128xf32, #tpu.memory_space<any>>, %arg3: memref<3x384x128xf32, #tpu.memory_space<vmem>>, %arg4: memref<3x384x128xf32, #tpu.memory_space<vmem>>, %arg5: memref<1x192x128xf32, #tpu.memory_space<vmem>>, %arg6: memref<2x272x128xf32, #tpu.memory_space<vmem>>, %arg7: memref<232x128xf32, #tpu.memory_space<vmem>>, %arg8: memref<2x!tpu.dma_semaphore, #tpu.memory_space<semaphore_mem>>) attributes {dimension_semantics = [#tpu.dimension_semantics<parallel>, #tpu.dimension_semantics<arbitrary>], iteration_bounds = array<i64: 2, 1>, scalar_prefetch = 0 : i64, scratch_operands = 3 : i64, tpu.core_type = #tpu.core_type<tc>, window_params = [{}, {pipeline_mode = #tpu.pipeline_mode<synchronous>, transform_indices = @transform_1, window_bounds = array<i64: 3, 384, 128>}, {pipeline_mode = #tpu.pipeline_mode<synchronous>, transform_indices = @transform_2, window_bounds = array<i64: 3, 384, 128>}, {transform_indices = @transform_3, window_bounds = array<i64: 1, 192, 128>}]} {
    %c2_i32 = arith.constant 2 : i32
    %c0_i32 = arith.constant 0 : i32
    %0 = arith.cmpi eq, %c2_i32, %c0_i32 : i32
    %c1_i32 = arith.constant 1 : i32
    %1 = arith.select %0, %c1_i32, %c2_i32 : i32
    %2 = arith.remsi %arg1, %1 : i32
    %c0_i32_0 = arith.constant 0 : i32
    %3 = arith.cmpi ne, %2, %c0_i32_0 : i32
    %c0_i32_1 = arith.constant 0 : i32
    %4 = arith.cmpi slt, %2, %c0_i32_1 : i32
    %c0_i32_2 = arith.constant 0 : i32
    %5 = arith.cmpi slt, %1, %c0_i32_2 : i32
    %6 = arith.xori %4, %5 : i1
    %7 = arith.andi %6, %3 : i1
    %8 = arith.addi %2, %1 : i32
    %9 = arith.select %7, %8, %2 : i32
    %c0_i32_3 = arith.constant 0 : i32
    %10 = arith.cmpi eq, %arg1, %c0_i32_3 : i32
    %11 = arith.extui %10 : i1 to i32
    %c0_i32_4 = arith.constant 0 : i32
    %12 = arith.cmpi ne, %11, %c0_i32_4 : i32
    scf.if %12 {
      %c192_i32_68 = arith.constant 192 : i32
      %97 = arith.muli %arg1, %c192_i32_68 : i32
      %98 = tpu.assume_multiple %97, 8 : i32
      %c0_i32_69 = arith.constant 0 : i32
      %99 = tpu.memref_slice %arg2[%arg0, %98, %c0_i32_69] : memref<2x272x128xf32, #tpu.memory_space<any>> -> memref<1x272x128xf32, #tpu.memory_space<any>>
      %100 = tpu.memref_squeeze %99 : memref<1x272x128xf32, #tpu.memory_space<any>> -> memref<272x128xf32, #tpu.memory_space<any>>
      %c0_i32_70 = arith.constant 0 : i32
      %c0_i32_71 = arith.constant 0 : i32
      %101 = tpu.memref_slice %arg6[%9, %c0_i32_70, %c0_i32_71] : memref<2x272x128xf32, #tpu.memory_space<vmem>> -> memref<1x272x128xf32, #tpu.memory_space<vmem>>
      %102 = tpu.memref_squeeze %101 : memref<1x272x128xf32, #tpu.memory_space<vmem>> -> memref<272x128xf32, #tpu.memory_space<vmem>>
      %103 = tpu.memref_slice %arg8[%9] : memref<2x!tpu.dma_semaphore, #tpu.memory_space<semaphore_mem>> -> memref<1x!tpu.dma_semaphore, #tpu.memory_space<semaphore_mem>>
      %104 = tpu.memref_squeeze %103 : memref<1x!tpu.dma_semaphore, #tpu.memory_space<semaphore_mem>> -> memref<!tpu.dma_semaphore, #tpu.memory_space<semaphore_mem>>
      tpu.enqueue_dma source(%100 : memref<272x128xf32, #tpu.memory_space<any>>) target(%102 : memref<272x128xf32, #tpu.memory_space<vmem>>) target_semaphore(%104 : memref<!tpu.dma_semaphore, #tpu.memory_space<semaphore_mem>>)
      %cst_72 = arith.constant 0.000000e+00 : f32
      %105 = vector.broadcast %cst_72 : f32 to vector<8x128xf32>
      %c224 = arith.constant 224 : index
      %c0_73 = arith.constant 0 : index
      %106 = vector.load %arg7[%c224, %c0_73] : memref<232x128xf32, #tpu.memory_space<vmem>>, vector<8x128xf32>
      tpu.vector_store %arg7[%c224, %c0_73], %105 {strides = array<i32>} : memref<232x128xf32, #tpu.memory_space<vmem>>, vector<8x128xf32>,
    } else {
    }
    %c192_i32 = arith.constant 192 : i32
    %13 = arith.muli %arg1, %c192_i32 : i32
    %14 = tpu.assume_multiple %13, 8 : i32
    %c0_i32_5 = arith.constant 0 : i32
    %15 = tpu.memref_slice %arg2[%arg0, %14, %c0_i32_5] : memref<2x272x128xf32, #tpu.memory_space<any>> -> memref<1x272x128xf32, #tpu.memory_space<any>>
    %16 = tpu.memref_squeeze %15 : memref<1x272x128xf32, #tpu.memory_space<any>> -> memref<272x128xf32, #tpu.memory_space<any>>
    %c0_i32_6 = arith.constant 0 : i32
    %c0_i32_7 = arith.constant 0 : i32
    %17 = tpu.memref_slice %arg6[%9, %c0_i32_6, %c0_i32_7] : memref<2x272x128xf32, #tpu.memory_space<vmem>> -> memref<1x272x128xf32, #tpu.memory_space<vmem>>
    %18 = tpu.memref_squeeze %17 : memref<1x272x128xf32, #tpu.memory_space<vmem>> -> memref<272x128xf32, #tpu.memory_space<vmem>>
    %19 = tpu.memref_slice %arg8[%9] : memref<2x!tpu.dma_semaphore, #tpu.memory_space<semaphore_mem>> -> memref<1x!tpu.dma_semaphore, #tpu.memory_space<semaphore_mem>>
    %20 = tpu.memref_squeeze %19 : memref<1x!tpu.dma_semaphore, #tpu.memory_space<semaphore_mem>> -> memref<!tpu.dma_semaphore, #tpu.memory_space<semaphore_mem>>
    tpu.wait_dma2 semaphore(%20 : memref<!tpu.dma_semaphore, #tpu.memory_space<semaphore_mem>>) src(%16 : memref<272x128xf32, #tpu.memory_space<any>>) dst(%18 : memref<272x128xf32, #tpu.memory_space<vmem>>)
    %c1_i32_8 = arith.constant 1 : i32
    %21 = arith.addi %arg1, %c1_i32_8 : i32
    %c1_i32_9 = arith.constant 1 : i32
    %22 = arith.cmpi slt, %21, %c1_i32_9 : i32
    %23 = arith.extui %22 : i1 to i32
    %c0_i32_10 = arith.constant 0 : i32
    %24 = arith.cmpi ne, %23, %c0_i32_10 : i32
    scf.if %24 {
      %c1_i32_68 = arith.constant 1 : i32
      %97 = arith.addi %arg1, %c1_i32_68 : i32
      %c1_i32_69 = arith.constant 1 : i32
      %98 = arith.subi %c1_i32_69, %9 : i32
      %c192_i32_70 = arith.constant 192 : i32
      %99 = arith.muli %97, %c192_i32_70 : i32
      %100 = tpu.assume_multiple %99, 8 : i32
      %c0_i32_71 = arith.constant 0 : i32
      %101 = tpu.memref_slice %arg2[%arg0, %100, %c0_i32_71] : memref<2x272x128xf32, #tpu.memory_space<any>> -> memref<1x272x128xf32, #tpu.memory_space<any>>
      %102 = tpu.memref_squeeze %101 : memref<1x272x128xf32, #tpu.memory_space<any>> -> memref<272x128xf32, #tpu.memory_space<any>>
      %c0_i32_72 = arith.constant 0 : i32
      %c0_i32_73 = arith.constant 0 : i32
      %103 = tpu.memref_slice %arg6[%98, %c0_i32_72, %c0_i32_73] : memref<2x272x128xf32, #tpu.memory_space<vmem>> -> memref<1x272x128xf32, #tpu.memory_space<vmem>>
      %104 = tpu.memref_squeeze %103 : memref<1x272x128xf32, #tpu.memory_space<vmem>> -> memref<272x128xf32, #tpu.memory_space<vmem>>
      %105 = tpu.memref_slice %arg8[%98] : memref<2x!tpu.dma_semaphore, #tpu.memory_space<semaphore_mem>> -> memref<1x!tpu.dma_semaphore, #tpu.memory_space<semaphore_mem>>
      %106 = tpu.memref_squeeze %105 : memref<1x!tpu.dma_semaphore, #tpu.memory_space<semaphore_mem>> -> memref<!tpu.dma_semaphore, #tpu.memory_space<semaphore_mem>>
      tpu.enqueue_dma source(%102 : memref<272x128xf32, #tpu.memory_space<any>>) target(%104 : memref<272x128xf32, #tpu.memory_space<vmem>>) target_semaphore(%106 : memref<!tpu.dma_semaphore, #tpu.memory_space<semaphore_mem>>)
    } else {
    }
    %25 = arith.index_cast %9 : i32 to index
    %c0 = arith.constant 0 : index
    %c0_11 = arith.constant 0 : index
    %26 = vector.load %arg6[%25, %c0, %c0_11] : memref<2x272x128xf32, #tpu.memory_space<vmem>>, vector<1x224x128xf32>
    %27 = vector.shape_cast %26 : vector<1x224x128xf32> to vector<224x128xf32>
    %28 = arith.index_cast %9 : i32 to index
    %c1 = arith.constant 1 : index
    %c0_12 = arith.constant 0 : index
    %29 = vector.load %arg6[%28, %c1, %c0_12] : memref<2x272x128xf32, #tpu.memory_space<vmem>>, vector<1x224x128xf32>
    %30 = vector.shape_cast %29 : vector<1x224x128xf32> to vector<224x128xf32>
    %31 = arith.index_cast %9 : i32 to index
    %c2 = arith.constant 2 : index
    %c0_13 = arith.constant 0 : index
    %32 = vector.load %arg6[%31, %c2, %c0_13] : memref<2x272x128xf32, #tpu.memory_space<vmem>>, vector<1x224x128xf32>
    %33 = vector.shape_cast %32 : vector<1x224x128xf32> to vector<224x128xf32>
    %34 = tpu.concatenate %27, %30, %33 in 1 : vector<224x128xf32>, vector<224x128xf32>, vector<224x128xf32> -> vector<224x384xf32>
    %c0_14 = arith.constant 0 : index
    %c0_15 = arith.constant 0 : index
    %c0_16 = arith.constant 0 : index
    %35 = vector.load %arg3[%c0_14, %c0_15, %c0_16] : memref<3x384x128xf32, #tpu.memory_space<vmem>>, vector<1x384x128xf32>
    %36 = vector.shape_cast %35 : vector<1x384x128xf32> to vector<384x128xf32>
    %cst = arith.constant dense<0.000000e+00> : vector<224x128xf32>
    %37 = tpu.matmul %34, %36, %cst {dimension_numbers = #tpu.dot_dimension_numbers<[1], [0], [0], [1], [0, 0, 1, 1], [], []>} : vector<224x384xf32>, vector<384x128xf32>, vector<224x128xf32> -> vector<224x128xf32>
    %38 = arith.index_cast %9 : i32 to index
    %c16 = arith.constant 16 : index
    %c0_17 = arith.constant 0 : index
    %39 = vector.load %arg6[%38, %c16, %c0_17] : memref<2x272x128xf32, #tpu.memory_space<vmem>>, vector<1x224x128xf32>
    %40 = vector.shape_cast %39 : vector<1x224x128xf32> to vector<224x128xf32>
    %41 = arith.index_cast %9 : i32 to index
    %c17 = arith.constant 17 : index
    %c0_18 = arith.constant 0 : index
    %42 = vector.load %arg6[%41, %c17, %c0_18] : memref<2x272x128xf32, #tpu.memory_space<vmem>>, vector<1x224x128xf32>
    %43 = vector.shape_cast %42 : vector<1x224x128xf32> to vector<224x128xf32>
    %44 = arith.index_cast %9 : i32 to index
    %c18 = arith.constant 18 : index
    %c0_19 = arith.constant 0 : index
    %45 = vector.load %arg6[%44, %c18, %c0_19] : memref<2x272x128xf32, #tpu.memory_space<vmem>>, vector<1x224x128xf32>
    %46 = vector.shape_cast %45 : vector<1x224x128xf32> to vector<224x128xf32>
    %47 = tpu.concatenate %40, %43, %46 in 1 : vector<224x128xf32>, vector<224x128xf32>, vector<224x128xf32> -> vector<224x384xf32>
    %c1_20 = arith.constant 1 : index
    %c0_21 = arith.constant 0 : index
    %c0_22 = arith.constant 0 : index
    %48 = vector.load %arg3[%c1_20, %c0_21, %c0_22] : memref<3x384x128xf32, #tpu.memory_space<vmem>>, vector<1x384x128xf32>
    %49 = vector.shape_cast %48 : vector<1x384x128xf32> to vector<384x128xf32>
    %cst_23 = arith.constant dense<0.000000e+00> : vector<224x128xf32>
    %50 = tpu.matmul %47, %49, %cst_23 {dimension_numbers = #tpu.dot_dimension_numbers<[1], [0], [0], [1], [0, 0, 1, 1], [], []>} : vector<224x384xf32>, vector<384x128xf32>, vector<224x128xf32> -> vector<224x128xf32>
    %51 = arith.addf %37, %50 : vector<224x128xf32>
    %52 = arith.index_cast %9 : i32 to index
    %c32 = arith.constant 32 : index
    %c0_24 = arith.constant 0 : index
    %53 = vector.load %arg6[%52, %c32, %c0_24] : memref<2x272x128xf32, #tpu.memory_space<vmem>>, vector<1x224x128xf32>
    %54 = vector.shape_cast %53 : vector<1x224x128xf32> to vector<224x128xf32>
    %55 = arith.index_cast %9 : i32 to index
    %c33 = arith.constant 33 : index
    %c0_25 = arith.constant 0 : index
    %56 = vector.load %arg6[%55, %c33, %c0_25] : memref<2x272x128xf32, #tpu.memory_space<vmem>>, vector<1x224x128xf32>
    %57 = vector.shape_cast %56 : vector<1x224x128xf32> to vector<224x128xf32>
    %58 = arith.index_cast %9 : i32 to index
    %c34 = arith.constant 34 : index
    %c0_26 = arith.constant 0 : index
    %59 = vector.load %arg6[%58, %c34, %c0_26] : memref<2x272x128xf32, #tpu.memory_space<vmem>>, vector<1x224x128xf32>
    %60 = vector.shape_cast %59 : vector<1x224x128xf32> to vector<224x128xf32>
    %61 = tpu.concatenate %54, %57, %60 in 1 : vector<224x128xf32>, vector<224x128xf32>, vector<224x128xf32> -> vector<224x384xf32>
    %c2_27 = arith.constant 2 : index
    %c0_28 = arith.constant 0 : index
    %c0_29 = arith.constant 0 : index
    %62 = vector.load %arg3[%c2_27, %c0_28, %c0_29] : memref<3x384x128xf32, #tpu.memory_space<vmem>>, vector<1x384x128xf32>
    %63 = vector.shape_cast %62 : vector<1x384x128xf32> to vector<384x128xf32>
    %cst_30 = arith.constant dense<0.000000e+00> : vector<224x128xf32>
    %64 = tpu.matmul %61, %63, %cst_30 {dimension_numbers = #tpu.dot_dimension_numbers<[1], [0], [0], [1], [0, 0, 1, 1], [], []>} : vector<224x384xf32>, vector<384x128xf32>, vector<224x128xf32> -> vector<224x128xf32>
    %65 = arith.addf %51, %64 : vector<224x128xf32>
    %cst_31 = arith.constant 0.000000e+00 : f32
    %66 = vector.broadcast %cst_31 : f32 to vector<224x128xf32>
    %67 = arith.maximumf %65, %66 : vector<224x128xf32>
    %c0_32 = arith.constant 0 : index
    %c0_33 = arith.constant 0 : index
    %68 = vector.load %arg7[%c0_32, %c0_33] : memref<232x128xf32, #tpu.memory_space<vmem>>, vector<224x128xf32>
    tpu.vector_store %arg7[%c0_32, %c0_33], %67 {strides = array<i32>} : memref<232x128xf32, #tpu.memory_space<vmem>>, vector<224x128xf32>,
    %c0_34 = arith.constant 0 : index
    %c0_35 = arith.constant 0 : index
    %69 = vector.load %arg7[%c0_34, %c0_35] : memref<232x128xf32, #tpu.memory_space<vmem>>, vector<192x128xf32>
    %c1_36 = arith.constant 1 : index
    %c0_37 = arith.constant 0 : index
    %70 = vector.load %arg7[%c1_36, %c0_37] : memref<232x128xf32, #tpu.memory_space<vmem>>, vector<192x128xf32>
    %c2_38 = arith.constant 2 : index
    %c0_39 = arith.constant 0 : index
    %71 = vector.load %arg7[%c2_38, %c0_39] : memref<232x128xf32, #tpu.memory_space<vmem>>, vector<192x128xf32>
    %72 = tpu.concatenate %69, %70, %71 in 1 : vector<192x128xf32>, vector<192x128xf32>, vector<192x128xf32> -> vector<192x384xf32>
    %c0_40 = arith.constant 0 : index
    %c0_41 = arith.constant 0 : index
    %c0_42 = arith.constant 0 : index
    %73 = vector.load %arg4[%c0_40, %c0_41, %c0_42] : memref<3x384x128xf32, #tpu.memory_space<vmem>>, vector<1x384x128xf32>
    %74 = vector.shape_cast %73 : vector<1x384x128xf32> to vector<384x128xf32>
    %cst_43 = arith.constant dense<0.000000e+00> : vector<192x128xf32>
    %75 = tpu.matmul %72, %74, %cst_43 {dimension_numbers = #tpu.dot_dimension_numbers<[1], [0], [0], [1], [0, 0, 1, 1], [], []>} : vector<192x384xf32>, vector<384x128xf32>, vector<192x128xf32> -> vector<192x128xf32>
    %c16_44 = arith.constant 16 : index
    %c0_45 = arith.constant 0 : index
    %76 = vector.load %arg7[%c16_44, %c0_45] : memref<232x128xf32, #tpu.memory_space<vmem>>, vector<192x128xf32>
    %c17_46 = arith.constant 17 : index
    %c0_47 = arith.constant 0 : index
    %77 = vector.load %arg7[%c17_46, %c0_47] : memref<232x128xf32, #tpu.memory_space<vmem>>, vector<192x128xf32>
    %c18_48 = arith.constant 18 : index
    %c0_49 = arith.constant 0 : index
    %78 = vector.load %arg7[%c18_48, %c0_49] : memref<232x128xf32, #tpu.memory_space<vmem>>, vector<192x128xf32>
    %79 = tpu.concatenate %76, %77, %78 in 1 : vector<192x128xf32>, vector<192x128xf32>, vector<192x128xf32> -> vector<192x384xf32>
    %c1_50 = arith.constant 1 : index
    %c0_51 = arith.constant 0 : index
    %c0_52 = arith.constant 0 : index
    %80 = vector.load %arg4[%c1_50, %c0_51, %c0_52] : memref<3x384x128xf32, #tpu.memory_space<vmem>>, vector<1x384x128xf32>
    %81 = vector.shape_cast %80 : vector<1x384x128xf32> to vector<384x128xf32>
    %cst_53 = arith.constant dense<0.000000e+00> : vector<192x128xf32>
    %82 = tpu.matmul %79, %81, %cst_53 {dimension_numbers = #tpu.dot_dimension_numbers<[1], [0], [0], [1], [0, 0, 1, 1], [], []>} : vector<192x384xf32>, vector<384x128xf32>, vector<192x128xf32> -> vector<192x128xf32>
    %83 = arith.addf %75, %82 : vector<192x128xf32>
    %c32_54 = arith.constant 32 : index
    %c0_55 = arith.constant 0 : index
    %84 = vector.load %arg7[%c32_54, %c0_55] : memref<232x128xf32, #tpu.memory_space<vmem>>, vector<192x128xf32>
    %c33_56 = arith.constant 33 : index
    %c0_57 = arith.constant 0 : index
    %85 = vector.load %arg7[%c33_56, %c0_57] : memref<232x128xf32, #tpu.memory_space<vmem>>, vector<192x128xf32>
    %c34_58 = arith.constant 34 : index
    %c0_59 = arith.constant 0 : index
    %86 = vector.load %arg7[%c34_58, %c0_59] : memref<232x128xf32, #tpu.memory_space<vmem>>, vector<192x128xf32>
    %87 = tpu.concatenate %84, %85, %86 in 1 : vector<192x128xf32>, vector<192x128xf32>, vector<192x128xf32> -> vector<192x384xf32>
    %c2_60 = arith.constant 2 : index
    %c0_61 = arith.constant 0 : index
    %c0_62 = arith.constant 0 : index
    %88 = vector.load %arg4[%c2_60, %c0_61, %c0_62] : memref<3x384x128xf32, #tpu.memory_space<vmem>>, vector<1x384x128xf32>
    %89 = vector.shape_cast %88 : vector<1x384x128xf32> to vector<384x128xf32>
    %cst_63 = arith.constant dense<0.000000e+00> : vector<192x128xf32>
    %90 = tpu.matmul %87, %89, %cst_63 {dimension_numbers = #tpu.dot_dimension_numbers<[1], [0], [0], [1], [0, 0, 1, 1], [], []>} : vector<192x384xf32>, vector<384x128xf32>, vector<192x128xf32> -> vector<192x128xf32>
    %91 = arith.addf %83, %90 : vector<192x128xf32>
    %cst_64 = arith.constant 0.000000e+00 : f32
    %92 = vector.broadcast %cst_64 : f32 to vector<192x128xf32>
    %93 = arith.maximumf %91, %92 : vector<192x128xf32>
    %c0_65 = arith.constant 0 : index
    %c0_66 = arith.constant 0 : index
    %c0_67 = arith.constant 0 : index
    %94 = vector.load %arg5[%c0_65, %c0_66, %c0_67] : memref<1x192x128xf32, #tpu.memory_space<vmem>>, vector<1x192x128xf32>
    %95 = vector.shape_cast %94 : vector<1x192x128xf32> to vector<192x128xf32>
    %96 = vector.shape_cast %93 : vector<192x128xf32> to vector<1x192x128xf32>
    tpu.vector_store %arg5[%c0_65, %c0_66, %c0_67], %96 {strides = array<i32>} : memref<1x192x128xf32, #tpu.memory_space<vmem>>, vector<1x192x128xf32>,
    return
  }
  func.func @transform_1(%arg0: i32, %arg1: i32) -> (i32, i32, i32) {
    %c0_i32 = arith.constant 0 : i32
    %c0_i32_0 = arith.constant 0 : i32
    %c0_i32_1 = arith.constant 0 : i32
    %c0_i32_2 = arith.constant 0 : i32
    return %c0_i32, %c0_i32_0, %c0_i32_1 : i32, i32, i32
  }
  func.func @transform_2(%arg0: i32, %arg1: i32) -> (i32, i32, i32) {
    %c0_i32 = arith.constant 0 : i32
    %c0_i32_0 = arith.constant 0 : i32
    %c0_i32_1 = arith.constant 0 : i32
    %c0_i32_2 = arith.constant 0 : i32
    return %c0_i32, %c0_i32_0, %c0_i32_1 : i32, i32, i32
  }
  func.func @transform_3(%arg0: i32, %arg1: i32) -> (i32, i32, i32) {
    %c0_i32 = arith.constant 0 : i32
    %c0_i32_0 = arith.constant 0 : i32
    return %arg0, %arg1, %c0_i32 : i32, i32, i32
  }
}

</mosaic_0001>

<llo_original>
// kernel: tpu_custom_call.1
$region0: #{tpu_custom_call.1}
  #allocation0 [shape = 'u32[]', space=smem, size = 0x4, offset = 0x4, fixed_abs, tag = 'smem constant byte address 0x4 - core index']
  #allocation1 [shape = 'u32[72,128]{1,0:T(1,128)}', space=vmem, size = 0x9000, scoped, tag = 'internal scratch']
  #allocation2 [shape = 'f32[2,272,128]{2,1,0:T(8,128)}', space=vmem, size = 0x44000, scoped, tag = 'scratch operand']
  #allocation3 [shape = 'f32[232,128]{1,0:T(8,128)}', space=vmem, size = 0x1d000, scoped, tag = 'scratch operand']
  #allocation4 [shape = 's32[2]{0}', space=sflag, size = 0x8, scoped, tag = 'scratch operand']
  #allocation11 [shape = 's32[]', space=sflag, size = 0x4, offset = 0, fixed_abs, tag = 'sflag constant byte address 0x0 - dummy sync flag']
  #allocation12 [shape = 's32[]', space=sflag, size = 0x4, offset = 0, fixed_abs, tag = 'sflag constant byte address 0x0 - dummy sync flag']
  #allocation13 [shape = 'u32[]', space=smem, size = 0x4, offset = 0x44, fixed_abs, tag = 'smem constant byte address 0x44 - assertion arg 0']
  #allocation14 [shape = 'u32[]', space=smem, size = 0x4, offset = 0x48, fixed_abs, tag = 'smem constant byte address 0x48 - assertion arg 1']
  #allocation15 [shape = 's32[]', space=sflag, size = 0x4, offset = 0, fixed_abs, tag = 'sflag constant byte address 0x0 - dummy sync flag']
  #allocation16 [shape = 's32[]', space=sflag, size = 0x4, offset = 0, fixed_abs, tag = 'sflag constant byte address 0x0 - dummy sync flag']
  %s0 = inlined_call_operand.hbm [shape: f32[2,272,128], index: 0, kind: input, shape index: {}]
  %s1 = inlined_call_operand.hbm [shape: f32[3,384,128], index: 1, kind: input, shape index: {}]
  %s2 = inlined_call_operand.hbm [shape: f32[3,384,128], index: 2, kind: input, shape index: {}]
  %s3 = inlined_call_operand.hbm [shape: f32[2,192,128], index: 3, kind: output, shape index: {}]
  %s4 = sld [smem:[#allocation0]]
  $region65: #{tpu_custom_call.1} parent=0
    _
  %s6 = ssub.s32 1, %s4
  %s7 = scalar_select 0, %s6, %s4
  $region1: #{tpu_custom_call.1} parent=0
    #allocation5 [shape = 'u8[589824]{0}', space=vmem, size = 0x90000, scoped, tag = 'input window, operand 1, single buffered']
    #allocation6 [shape = 's32[2]{0}', space=sflag, size = 0x8, scoped, tag = 'scoped memory for tpu_custom_call.1']
    #allocation7 [shape = 's32[2]{0}', space=sflag, size = 0x8, scoped, tag = 'scoped memory for tpu_custom_call.1']
    #allocation8 [shape = 'u8[589824]{0}', space=vmem, size = 0x90000, scoped, tag = 'input window, operand 2, single buffered']
    #allocation9 [shape = 's32[1]{0}', space=sflag, size = 0x4, scoped, tag = 'scoped memory for tpu_custom_call.1']
    #allocation10 [shape = 'u8[196608]{0}', space=vmem, size = 0x30000, scoped, tag = 'output window, operand 0']
    %8 = vsyncpa [#allocation6], 0
    %9 = vsyncpa [#allocation9], 0
    %10 = vsyncpa [#allocation7], 0
    %s11 = scalar_lea.sflag [#allocation7], 1
    %12 = vsyncpa %s11, 0
    loop: start=0, step=1, limit=4
    $region2: #{tpu_custom_call.1} parent=1 // loop_pre_header
      _
    $region3: #{tpu_custom_call.1} parent=1 // loop_header
      %s14 = sphi 0, %s18
      %p15 = scmp.ge.s32.totalorder %s14, 4
      %s21 = sphi 0, %s33
      %s22 = sphi 0, %s29
      %s23 = sphi 0, %s21
      %s24 = sphi 0, %s22
      %s25 = sphi 0, %s23
      %s26 = sphi 0, %s24
      %s34 = sphi 0, %s34
      %s36 = sphi 0, %s34
      %s37 = sphi 0, %s36
      %s51 = sphi 0, %s37
      %s55 = sphi 0, %s55
      %s57 = sphi 0, %s55
      %s58 = sphi 0, %s57
      %s72 = sphi 0, %s58
      %s80 = sphi 0, %s82
      %s83 = sphi 0, %s80
      %s84 = sphi 0, %s83
      %s100 = sphi 0, %s84
    $region4: #{tpu_custom_call.1} parent=1 // loop_header_branch
      %17 = sbr.rel (%p15) target = $region8
    $region5: #{tpu_custom_call.1} parent=1 // loop_body
      %s19 = ssub.s32 %s14, 1
      %s20 = ssub.s32 %s14, 2
      %s27 = sadd.s32 1, %s22
      %p28 = scmp.ge.s32.totalorder %s27, 1
      %s29 = scalar_select %p28, 0, %s27
      %s30 = sadd.s32 1, %s21
      %s31 = scalar_select %p28, %s30, %s21
      %p32 = scmp.ge.s32.totalorder %s31, 2
      %s33 = scalar_select %p32, 0, %s31
      %s35 = sadd.s32 %s34, 1
      %p38 = scmp.eq.s32.totalorder %s14, 1
      %p39 = scmp.ne.s32.totalorder %s34, %s36
      %p40 = scmp.eq.s32.totalorder %s14, 0
      %p41 = por %p39, %p40
      %p42 = scmp.ne.s32.totalorder %s34, %s36
      %p43 = scmp.eq.s32.totalorder %s19, 1
      %p44 = por %p42, %p43
      %p45 = scmp.ne.s32.totalorder %s36, %s37
      %p46 = scmp.eq.s32.totalorder %s19, 0
      %p47 = por %p45, %p46
      %p48 = scmp.ne.s32.totalorder %s36, %s37
      %p49 = scmp.eq.s32.totalorder %s20, 1
      %p50 = por %p48, %p49
      %p52 = scmp.ne.s32.totalorder %s37, %s51
      %p53 = scmp.eq.s32.totalorder %s20, 0
      %p54 = por %p52, %p53
      %s56 = sadd.s32 %s55, 1
      %p59 = scmp.eq.s32.totalorder %s14, 1
      %p60 = scmp.ne.s32.totalorder %s55, %s57
      %p61 = scmp.eq.s32.totalorder %s14, 0
      %p62 = por %p60, %p61
      %p63 = scmp.ne.s32.totalorder %s55, %s57
      %p64 = scmp.eq.s32.totalorder %s19, 1
      %p65 = por %p63, %p64
      %p66 = scmp.ne.s32.totalorder %s57, %s58
      %p67 = scmp.eq.s32.totalorder %s19, 0
      %p68 = por %p66, %p67
      %p69 = scmp.ne.s32.totalorder %s57, %s58
      %p70 = scmp.eq.s32.totalorder %s20, 1
      %p71 = por %p69, %p70
      %p73 = scmp.ne.s32.totalorder %s58, %s72
      %p74 = scmp.eq.s32.totalorder %s20, 0
      %p75 = por %p73, %p74
      %s76 = ssub.s32 %s21, %s33
      %s77 = ssub.s32 %s22, %s29
      %s78 = sor.u32 %s76, %s77
      %p79 = scmp.eq.s32.totalorder %s78, 0
      %s81 = sadd.s32 %s80, 1
      %s82 = scalar_select %p79, %s80, %s81
      %p85 = pneg %p79
      %p86 = scmp.eq.s32.totalorder %s14, 1
      %p87 = por %p85, %p86
      %p88 = scmp.ne.s32.totalorder %s80, %s83
      %p89 = scmp.eq.s32.totalorder %s14, 0
      %p90 = por %p88, %p89
      %p91 = scmp.ne.s32.totalorder %s80, %s83
      %p92 = scmp.eq.s32.totalorder %s19, 1
      %p93 = por %p91, %p92
      %p94 = scmp.ne.s32.totalorder %s83, %s84
      %p95 = scmp.eq.s32.totalorder %s19, 0
      %p96 = por %p94, %p95
      %p97 = scmp.ne.s32.totalorder %s83, %s84
      %p98 = scmp.eq.s32.totalorder %s20, 1
      %p99 = por %p97, %p98
      %p101 = scmp.ne.s32.totalorder %s84, %s100
      %p102 = scmp.eq.s32.totalorder %s20, 0
      %p103 = por %p101, %p102
      %p104 = scmp.le.s32.totalorder 1, %s14
      %p105 = scmp.lt.s32.totalorder %s14, 3
      %p106 = pnand %p104, %p105
      %p107 = pneg %p106
      // Predicated region
      $region9: #{tpu_custom_call.1} parent=5 // pred_check
        _
      $region10: #{tpu_custom_call.1} parent=5 // pred_check_branch
        %109 = sbr.rel (%p106) target = $region12
      $region11: #{tpu_custom_call.1} parent=5 // pred_region
        %s110 = ssub.s32 %s14, 1
        // Predicated region
        $region13: #{tpu_custom_call.1} parent=11 // pred_check
          %p111 = pneg %p47
        $region14: #{tpu_custom_call.1} parent=11 // pred_check_branch
          %113 = sbr.rel (%p111) target = $region16
        $region15: #{tpu_custom_call.1} parent=11 // pred_region
          %115 = vsyncadd [#allocation6], 0
          %s116 = sshll.u32 %s1, 4
          %s117 = int_to_ptr.hbm [resolvable:$true] %s116
          %s118 = sshll.u32 [#allocation5], 4
          %s119 = int_to_ptr.vmem [resolvable:$true] %s118
          %124 = dma.hbm_to_vmem [thread:$0]  %s117, 18432, %s119, [#allocation6], 128, 128, 8
        $region16: #{tpu_custom_call.1} parent=11 // pred_fallthru
          _
        // Predicated region
        $region17: #{tpu_custom_call.1} parent=11 // pred_check
          %p125 = pneg %p68
        $region18: #{tpu_custom_call.1} parent=11 // pred_check_branch
          %127 = sbr.rel (%p125) target = $region20
        $region19: #{tpu_custom_call.1} parent=11 // pred_region
          %129 = vsyncadd [#allocation9], 0
          %s130 = sshll.u32 %s2, 4
          %s131 = int_to_ptr.hbm [resolvable:$true] %s130
          %s132 = sshll.u32 [#allocation8], 4
          %s133 = int_to_ptr.vmem [resolvable:$true] %s132
          %138 = dma.hbm_to_vmem [thread:$0]  %s131, 18432, %s133, [#allocation9], 128, 128, 8
        $region20: #{tpu_custom_call.1} parent=11 // pred_fallthru
          _
      $region12: #{tpu_custom_call.1} parent=5 // pred_fallthru
        _
      %p139 = scmp.lt.s32.totalorder %s14, 2
      // Predicated region
      $region21: #{tpu_custom_call.1} parent=5 // pred_check
        %p140 = pneg %p139
      $region22: #{tpu_custom_call.1} parent=5 // pred_check_branch
        %142 = sbr.rel (%p140) target = $region24
      $region23: #{tpu_custom_call.1} parent=5 // pred_region
        _
      $region24: #{tpu_custom_call.1} parent=5 // pred_fallthru
        _
      %p143 = scmp.le.s32.totalorder 1, %s14
      %p144 = scmp.lt.s32.totalorder %s14, 3
      %p145 = pnand %p143, %p144
      %p146 = pneg %p145
      // Predicated region
      $region25: #{tpu_custom_call.1} parent=5 // pred_check
        _
      $region26: #{tpu_custom_call.1} parent=5 // pred_check_branch
        %148 = sbr.rel (%p145) target = $region28
      $region27: #{tpu_custom_call.1} parent=5 // pred_region
        %s149 = ssub.s32 %s14, 1
        // Predicated region
        $region29: #{tpu_custom_call.1} parent=27 // pred_check
          %p150 = pneg %p47
        $region30: #{tpu_custom_call.1} parent=27 // pred_check_branch
          %152 = sbr.rel (%p150) target = $region32
        $region31: #{tpu_custom_call.1} parent=27 // pred_region
          %154 = dma.done [#allocation6], 18432
        $region32: #{tpu_custom_call.1} parent=27 // pred_fallthru
          _
        // Predicated region
        $region33: #{tpu_custom_call.1} parent=27 // pred_check
          %p155 = pneg %p68
        $region34: #{tpu_custom_call.1} parent=27 // pred_check_branch
          %157 = sbr.rel (%p155) target = $region36
        $region35: #{tpu_custom_call.1} parent=27 // pred_region
          %159 = dma.done [#allocation9], 18432
        $region36: #{tpu_custom_call.1} parent=27 // pred_fallthru
          _
        %p160 = pneg %p47
        %p161 = pneg %p44
        %p162 = pneg %p68
        %p163 = pneg %p65
        %p164 = pneg %p96
        %p165 = pneg %p93
        %s166 = sand.u32 %s83, 1
        %s167 = scalar_lea.sflag [#allocation7], %s166
        %s168 = sand.u32 %s83, 1
        %s169 = smul.addr %s168, 192
        %s170 = scalar_lea.vmem [#allocation10], %s169
        %s171 = smul.u32 24, %s24
        %p172 = scmp.lt.s32.totalorder %s24, 0
        %s173 = ssub.s32 0, %s24
        %s174 = scalar_select %p172, %s173, %s24
        %s175 = sand.u32 %s174, 1
        %s176 = ssub.s32 0, %s175
        %s177 = scalar_select %p172, %s176, %s175
        %p178 = scmp.ne.s32.totalorder %s177, 0
        %p179 = scmp.lt.s32.totalorder %s177, 0
        %p180 = pnand %p179, %p178
        %p181 = pneg %p180
        %s182 = sadd.s32 %s177, 2
        %s183 = scalar_select %p181, %s182, %s177
        %p184 = scmp.eq.s32.totalorder %s24, 0
        // Predicated region
        $region37: #{tpu_custom_call.1} parent=27 // pred_check
          %p185 = pneg %p184
        $region38: #{tpu_custom_call.1} parent=27 // pred_check_branch
          %187 = sbr.rel (%p185) target = $region40
        $region39: #{tpu_custom_call.1} parent=27 // pred_region
          %s188 = smul.u32 %s24, 192
          %s189 = smul.u32 %s23, 272
          %s190 = sadd.s32 %s188, %s189
          %s191 = scalar_lea.hbm %s0, %s190
          %s192 = smul.u32 %s183, 272
          %s193 = scalar_lea.vmem [#allocation2], %s192
          %s194 = scalar_lea.sflag [#allocation4], %s183
          // Predicated region
          $region41: #{tpu_custom_call.1} parent=39 // pred_check
            _
          $region42: #{tpu_custom_call.1} parent=39 // pred_check_branch
            %196 = sbr.rel target = $region44
          $region43: #{tpu_custom_call.1} parent=39 // pred_region
            %197 = sst [smem:[#allocation13]] [#allocation12]
            %198 = sst [smem:[#allocation14]] [#allocation11]
          $region44: #{tpu_custom_call.1} parent=39 // pred_fallthru
            _
          %200 = shalt.err (0)
          %s202 = sshll.u32 %s191, 4
          %s203 = int_to_ptr.hbm [resolvable:$true] %s202
          %s204 = sshll.u32 %s193, 4
          %s205 = int_to_ptr.vmem [resolvable:$true] %s204
          %207 = dma.hbm_to_vmem [thread:$0]  %s203, 4352, %s205, %s194
          %208 = vst [vmem:[#allocation3 + $0xe0] sm:$0xff] 0.0
        $region40: #{tpu_custom_call.1} parent=27 // pred_fallthru
          _
        %s209 = smul.u32 %s24, 192
        %s210 = scalar_lea.sflag [#allocation4], %s183
        %s211 = smul.u32 272, 1
        %s212 = sshll.u32 %s211, 4
        %213 = dma.done %s210, %s212
        %s214 = sadd.s32 %s24, 1
        %p215 = scmp.lt.s32.totalorder %s214, 1
        // Predicated region
        $region45: #{tpu_custom_call.1} parent=27 // pred_check
          %p216 = pneg %p215
        $region46: #{tpu_custom_call.1} parent=27 // pred_check_branch
          %218 = sbr.rel (%p216) target = $region48
        $region47: #{tpu_custom_call.1} parent=27 // pred_region
          %s219 = ssub.s32 1, %s183
          %s220 = smul.u32 %s214, 192
          %s221 = smul.u32 %s23, 272
          %s222 = sadd.s32 %s220, %s221
          %s223 = scalar_lea.hbm %s0, %s222
          %s224 = smul.u32 %s219, 272
          %s225 = scalar_lea.vmem [#allocation2], %s224
          %s226 = scalar_lea.sflag [#allocation4], %s219
          // Predicated region
          $region49: #{tpu_custom_call.1} parent=47 // pred_check
            _
          $region50: #{tpu_custom_call.1} parent=47 // pred_check_branch
            %228 = sbr.rel target = $region52
          $region51: #{tpu_custom_call.1} parent=47 // pred_region
            %229 = sst [smem:[#allocation13]] [#allocation16]
            %230 = sst [smem:[#allocation14]] [#allocation15]
          $region52: #{tpu_custom_call.1} parent=47 // pred_fallthru
            _
          %232 = shalt.err (0)
          %s234 = sshll.u32 %s223, 4
          %s235 = int_to_ptr.hbm [resolvable:$true] %s234
          %s236 = sshll.u32 %s225, 4
          %s237 = int_to_ptr.vmem [resolvable:$true] %s236
          %239 = dma.hbm_to_vmem [thread:$0]  %s235, 4352, %s237, %s226
        $region48: #{tpu_custom_call.1} parent=27 // pred_fallthru
          _
        %s240 = smul.u32 %s183, 272
        %s241 = scalar_lea.vmem [#allocation2], %s240
        %v242 = vld [vmem:[%s241] sm:$0xff]
        %v243 = vld [vmem:[%s241 + $0x8] sm:$0xff]
        %v244 = vld [vmem:[%s241 + $0x10] sm:$0xff]
        %v245 = vld [vmem:[%s241 + $0x18] sm:$0xff]
        %v246 = vld [vmem:[%s241 + $0x20] sm:$0xff]
        %v247 = vld [vmem:[%s241 + $0x28] sm:$0xff]
        %v248 = vld [vmem:[%s241 + $0x30] sm:$0xff]
        %v249 = vld [vmem:[%s241 + $0x38] sm:$0xff]
        %v250 = vld [vmem:[%s241 + $0x40] sm:$0xff]
        %v251 = vld [vmem:[%s241 + $0x48] sm:$0xff]
        %v252 = vld [vmem:[%s241 + $0x50] sm:$0xff]
        %v253 = vld [vmem:[%s241 + $0x58] sm:$0xff]
        %v254 = vld [vmem:[%s241 + $0x60] sm:$0xff]
        %v255 = vld [vmem:[%s241 + $0x68] sm:$0xff]
        %v256 = vld [vmem:[%s241 + $0x70] sm:$0xff]
        %v257 = vld [vmem:[%s241 + $0x78] sm:$0xff]
        %v258 = vld [vmem:[%s241 + $0x80] sm:$0xff]
        %v259 = vld [vmem:[%s241 + $0x88] sm:$0xff]
        %v260 = vld [vmem:[%s241 + $0x90] sm:$0xff]
        %v261 = vld [vmem:[%s241 + $0x98] sm:$0xff]
        %v262 = vld [vmem:[%s241 + $0xa0] sm:$0xff]
        %v263 = vld [vmem:[%s241 + $0xa8] sm:$0xff]
        %v264 = vld [vmem:[%s241 + $0xb0] sm:$0xff]
        %v265 = vld [vmem:[%s241 + $0xb8] sm:$0xff]
        %v266 = vld [vmem:[%s241 + $0xc0] sm:$0xff]
        %v267 = vld [vmem:[%s241 + $0xc8] sm:$0xff]
        %v268 = vld [vmem:[%s241 + $0xd0] sm:$0xff]
        %v269 = vld [vmem:[%s241 + $0xd8] sm:$0xff]
        %v270 = vld [vmem:[%s241 + $0x1] sm:$0xff]
        %v271 = vld [vmem:[%s241 + $0x9] sm:$0xff]
        %v272 = vld [vmem:[%s241 + $0x11] sm:$0xff]
        %v273 = vld [vmem:[%s241 + $0x19] sm:$0xff]
        %v274 = vld [vmem:[%s241 + $0x21] sm:$0xff]
        %v275 = vld [vmem:[%s241 + $0x29] sm:$0xff]
        %v276 = vld [vmem:[%s241 + $0x31] sm:$0xff]
        %v277 = vld [vmem:[%s241 + $0x39] sm:$0xff]
        %v278 = vld [vmem:[%s241 + $0x41] sm:$0xff]
        %v279 = vld [vmem:[%s241 + $0x49] sm:$0xff]
        %v280 = vld [vmem:[%s241 + $0x51] sm:$0xff]
        %v281 = vld [vmem:[%s241 + $0x59] sm:$0xff]
        %v282 = vld [vmem:[%s241 + $0x61] sm:$0xff]
        %v283 = vld [vmem:[%s241 + $0x69] sm:$0xff]
        %v284 = vld [vmem:[%s241 + $0x71] sm:$0xff]
        %v285 = vld [vmem:[%s241 + $0x79] sm:$0xff]
        %v286 = vld [vmem:[%s241 + $0x81] sm:$0xff]
        %v287 = vld [vmem:[%s241 + $0x89] sm:$0xff]
        %v288 = vld [vmem:[%s241 + $0x91] sm:$0xff]
        %v289 = vld [vmem:[%s241 + $0x99] sm:$0xff]
        %v290 = vld [vmem:[%s241 + $0xa1] sm:$0xff]
        %v291 = vld [vmem:[%s241 + $0xa9] sm:$0xff]
        %v292 = vld [vmem:[%s241 + $0xb1] sm:$0xff]
        %v293 = vld [vmem:[%s241 + $0xb9] sm:$0xff]
        %v294 = vld [vmem:[%s241 + $0xc1] sm:$0xff]
        %v295 = vld [vmem:[%s241 + $0xc9] sm:$0xff]
        %v296 = vld [vmem:[%s241 + $0xd1] sm:$0xff]
        %v297 = vld [vmem:[%s241 + $0xd9] sm:$0xff]
        %v298 = vld [vmem:[%s241 + $0x2] sm:$0xff]
        %v299 = vld [vmem:[%s241 + $0xa] sm:$0xff]
        %v300 = vld [vmem:[%s241 + $0x12] sm:$0xff]
        %v301 = vld [vmem:[%s241 + $0x1a] sm:$0xff]
        %v302 = vld [vmem:[%s241 + $0x22] sm:$0xff]
        %v303 = vld [vmem:[%s241 + $0x2a] sm:$0xff]
        %v304 = vld [vmem:[%s241 + $0x32] sm:$0xff]
        %v305 = vld [vmem:[%s241 + $0x3a] sm:$0xff]
        %v306 = vld [vmem:[%s241 + $0x42] sm:$0xff]
        %v307 = vld [vmem:[%s241 + $0x4a] sm:$0xff]
        %v308 = vld [vmem:[%s241 + $0x52] sm:$0xff]
        %v309 = vld [vmem:[%s241 + $0x5a] sm:$0xff]
        %v310 = vld [vmem:[%s241 + $0x62] sm:$0xff]
        %v311 = vld [vmem:[%s241 + $0x6a] sm:$0xff]
        %v312 = vld [vmem:[%s241 + $0x72] sm:$0xff]
        %v313 = vld [vmem:[%s241 + $0x7a] sm:$0xff]
        %v314 = vld [vmem:[%s241 + $0x82] sm:$0xff]
        %v315 = vld [vmem:[%s241 + $0x8a] sm:$0xff]
        %v316 = vld [vmem:[%s241 + $0x92] sm:$0xff]
        %v317 = vld [vmem:[%s241 + $0x9a] sm:$0xff]
        %v318 = vld [vmem:[%s241 + $0xa2] sm:$0xff]
        %v319 = vld [vmem:[%s241 + $0xaa] sm:$0xff]
        %v320 = vld [vmem:[%s241 + $0xb2] sm:$0xff]
        %v321 = vld [vmem:[%s241 + $0xba] sm:$0xff]
        %v322 = vld [vmem:[%s241 + $0xc2] sm:$0xff]
        %v323 = vld [vmem:[%s241 + $0xca] sm:$0xff]
        %v324 = vld [vmem:[%s241 + $0xd2] sm:$0xff]
        %v325 = vld [vmem:[%s241 + $0xda] sm:$0xff]
        %v326 = vld [vmem:[#allocation5] sm:$0xff]
        %v327 = vld [vmem:[#allocation5 + $0x8] sm:$0xff]
        %v328 = vld [vmem:[#allocation5 + $0x10] sm:$0xff]
        %v329 = vld [vmem:[#allocation5 + $0x18] sm:$0xff]
        %v330 = vld [vmem:[#allocation5 + $0x20] sm:$0xff]
        %v331 = vld [vmem:[#allocation5 + $0x28] sm:$0xff]
        %v332 = vld [vmem:[#allocation5 + $0x30] sm:$0xff]
        %v333 = vld [vmem:[#allocation5 + $0x38] sm:$0xff]
        %v334 = vld [vmem:[#allocation5 + $0x40] sm:$0xff]
        %v335 = vld [vmem:[#allocation5 + $0x48] sm:$0xff]
        %v336 = vld [vmem:[#allocation5 + $0x50] sm:$0xff]
        %v337 = vld [vmem:[#allocation5 + $0x58] sm:$0xff]
        %v338 = vld [vmem:[#allocation5 + $0x60] sm:$0xff]
        %v339 = vld [vmem:[#allocation5 + $0x68] sm:$0xff]
        %v340 = vld [vmem:[#allocation5 + $0x70] sm:$0xff]
        %v341 = vld [vmem:[#allocation5 + $0x78] sm:$0xff]
        %v342 = vld [vmem:[#allocation5 + $0x80] sm:$0xff]
        %v343 = vld [vmem:[#allocation5 + $0x88] sm:$0xff]
        %v344 = vld [vmem:[#allocation5 + $0x90] sm:$0xff]
        %v345 = vld [vmem:[#allocation5 + $0x98] sm:$0xff]
        %v346 = vld [vmem:[#allocation5 + $0xa0] sm:$0xff]
        %v347 = vld [vmem:[#allocation5 + $0xa8] sm:$0xff]
        %v348 = vld [vmem:[#allocation5 + $0xb0] sm:$0xff]
        %v349 = vld [vmem:[#allocation5 + $0xb8] sm:$0xff]
        %v350 = vld [vmem:[#allocation5 + $0xc0] sm:$0xff]
        %v351 = vld [vmem:[#allocation5 + $0xc8] sm:$0xff]
        %v352 = vld [vmem:[#allocation5 + $0xd0] sm:$0xff]
        %v353 = vld [vmem:[#allocation5 + $0xd8] sm:$0xff]
        %v354 = vld [vmem:[#allocation5 + $0xe0] sm:$0xff]
        %v355 = vld [vmem:[#allocation5 + $0xe8] sm:$0xff]
        %v356 = vld [vmem:[#allocation5 + $0xf0] sm:$0xff]
        %v357 = vld [vmem:[#allocation5 + $0xf8] sm:$0xff]
        %v358 = vld [vmem:[#allocation5 + $0x100] sm:$0xff]
        %v359 = vld [vmem:[#allocation5 + $0x108] sm:$0xff]
        %v360 = vld [vmem:[#allocation5 + $0x110] sm:$0xff]
        %v361 = vld [vmem:[#allocation5 + $0x118] sm:$0xff]
        %v362 = vld [vmem:[#allocation5 + $0x120] sm:$0xff]
        %v363 = vld [vmem:[#allocation5 + $0x128] sm:$0xff]
        %v364 = vld [vmem:[#allocation5 + $0x130] sm:$0xff]
        %v365 = vld [vmem:[#allocation5 + $0x138] sm:$0xff]
        %v366 = vld [vmem:[#allocation5 + $0x140] sm:$0xff]
        %v367 = vld [vmem:[#allocation5 + $0x148] sm:$0xff]
        %v368 = vld [vmem:[#allocation5 + $0x150] sm:$0xff]
        %v369 = vld [vmem:[#allocation5 + $0x158] sm:$0xff]
        %v370 = vld [vmem:[#allocation5 + $0x160] sm:$0xff]
        %v371 = vld [vmem:[#allocation5 + $0x168] sm:$0xff]
        %v372 = vld [vmem:[#allocation5 + $0x170] sm:$0xff]
        %v373 = vld [vmem:[#allocation5 + $0x178] sm:$0xff]
        %v374 = vld [vmem:[%s241 + $0xe0] sm:$0xff]
        %v375 = vld [vmem:[%s241 + $0xe8] sm:$0xff]
        %v376 = vld [vmem:[%s241 + $0xe1] sm:$0xff]
        %v377 = vld [vmem:[%s241 + $0xe9] sm:$0xff]
        %v378 = vld [vmem:[%s241 + $0xe2] sm:$0xff]
        %v379 = vld [vmem:[%s241 + $0xea] sm:$0xff]
        %s380 = scalar_lea.vmem [#allocation5], 384
        %v381 = vld [vmem:[%s380] sm:$0xff]
        %v382 = vld [vmem:[%s380 + $0x8] sm:$0xff]
        %v383 = vld [vmem:[%s380 + $0x10] sm:$0xff]
        %v384 = vld [vmem:[%s380 + $0x18] sm:$0xff]
        %v385 = vld [vmem:[%s380 + $0x20] sm:$0xff]
        %v386 = vld [vmem:[%s380 + $0x28] sm:$0xff]
        %v387 = vld [vmem:[%s380 + $0x30] sm:$0xff]
        %v388 = vld [vmem:[%s380 + $0x38] sm:$0xff]
        %v389 = vld [vmem:[%s380 + $0x40] sm:$0xff]
        %v390 = vld [vmem:[%s380 + $0x48] sm:$0xff]
        %v391 = vld [vmem:[%s380 + $0x50] sm:$0xff]
        %v392 = vld [vmem:[%s380 + $0x58] sm:$0xff]
        %v393 = vld [vmem:[%s380 + $0x60] sm:$0xff]
        %v394 = vld [vmem:[%s380 + $0x68] sm:$0xff]
        %v395 = vld [vmem:[%s380 + $0x70] sm:$0xff]
        %v396 = vld [vmem:[%s380 + $0x78] sm:$0xff]
        %v397 = vld [vmem:[%s380 + $0x80] sm:$0xff]
        %v398 = vld [vmem:[%s380 + $0x88] sm:$0xff]
        %v399 = vld [vmem:[%s380 + $0x90] sm:$0xff]
        %v400 = vld [vmem:[%s380 + $0x98] sm:$0xff]
        %v401 = vld [vmem:[%s380 + $0xa0] sm:$0xff]
        %v402 = vld [vmem:[%s380 + $0xa8] sm:$0xff]
        %v403 = vld [vmem:[%s380 + $0xb0] sm:$0xff]
        %v404 = vld [vmem:[%s380 + $0xb8] sm:$0xff]
        %v405 = vld [vmem:[%s380 + $0xc0] sm:$0xff]
        %v406 = vld [vmem:[%s380 + $0xc8] sm:$0xff]
        %v407 = vld [vmem:[%s380 + $0xd0] sm:$0xff]
        %v408 = vld [vmem:[%s380 + $0xd8] sm:$0xff]
        %v409 = vld [vmem:[%s380 + $0xe0] sm:$0xff]
        %v410 = vld [vmem:[%s380 + $0xe8] sm:$0xff]
        %v411 = vld [vmem:[%s380 + $0xf0] sm:$0xff]
        %v412 = vld [vmem:[%s380 + $0xf8] sm:$0xff]
        %v413 = vld [vmem:[%s380 + $0x100] sm:$0xff]
        %v414 = vld [vmem:[%s380 + $0x108] sm:$0xff]
        %v415 = vld [vmem:[%s380 + $0x110] sm:$0xff]
        %v416 = vld [vmem:[%s380 + $0x118] sm:$0xff]
        %v417 = vld [vmem:[%s380 + $0x120] sm:$0xff]
        %v418 = vld [vmem:[%s380 + $0x128] sm:$0xff]
        %v419 = vld [vmem:[%s380 + $0x130] sm:$0xff]
        %v420 = vld [vmem:[%s380 + $0x138] sm:$0xff]
        %v421 = vld [vmem:[%s380 + $0x140] sm:$0xff]
        %v422 = vld [vmem:[%s380 + $0x148] sm:$0xff]
        %v423 = vld [vmem:[%s380 + $0x150] sm:$0xff]
        %v424 = vld [vmem:[%s380 + $0x158] sm:$0xff]
        %v425 = vld [vmem:[%s380 + $0x160] sm:$0xff]
        %v426 = vld [vmem:[%s380 + $0x168] sm:$0xff]
        %v427 = vld [vmem:[%s380 + $0x170] sm:$0xff]
        %v428 = vld [vmem:[%s380 + $0x178] sm:$0xff]
        %429 = vmatpush.msra.mxu0 %v396
        %430 = vmatpush.msra.mxu0 %v395
        %431 = vmatpush.msra.mxu0 %v394
        %432 = vmatpush.msra.mxu0 %v393
        %433 = vmatpush.msra.mxu0 %v392
        %434 = vmatpush.msra.mxu0 %v391
        %435 = vmatpush.msra.mxu0 %v390
        %436 = vmatpush.msra.mxu0 %v389
        %437 = vmatpush.msra.mxu0 %v388
        %438 = vmatpush.msra.mxu0 %v387
        %439 = vmatpush.msra.mxu0 %v386
        %440 = vmatpush.msra.mxu0 %v385
        %441 = vmatpush.msra.mxu0 %v384
        %442 = vmatpush.msra.mxu0 %v383
        %443 = vmatpush.msra.mxu0 %v382
        %444 = vmatpush.msra.mxu0 %v381
        %445 = vmatmul.f32.gmra.mxu0 %v244
        %v446 = vpop.f32.mrf.mxu0
        %v447 = vadd.f32 0.0, %v446
        %448 = vmatmul.f32.gmra.mxu0 %v245
        %v449 = vpop.f32.mrf.mxu0
        %v450 = vadd.f32 0.0, %v449
        %451 = vmatmul.f32.gmra.mxu0 %v246
        %v452 = vpop.f32.mrf.mxu0
        %v453 = vadd.f32 0.0, %v452
        %454 = vmatmul.f32.gmra.mxu0 %v247
        %v455 = vpop.f32.mrf.mxu0
        %v456 = vadd.f32 0.0, %v455
        %457 = vmatmul.f32.gmra.mxu0 %v248
        %v458 = vpop.f32.mrf.mxu0
        %v459 = vadd.f32 0.0, %v458
        %460 = vmatmul.f32.gmra.mxu0 %v249
        %v461 = vpop.f32.mrf.mxu0
        %v462 = vadd.f32 0.0, %v461
        %463 = vmatmul.f32.gmra.mxu0 %v250
        %v464 = vpop.f32.mrf.mxu0
        %v465 = vadd.f32 0.0, %v464
        %466 = vmatmul.f32.gmra.mxu0 %v251
        %v467 = vpop.f32.mrf.mxu0
        %v468 = vadd.f32 0.0, %v467
        %469 = vmatmul.f32.gmra.mxu0 %v252
        %v470 = vpop.f32.mrf.mxu0
        %v471 = vadd.f32 0.0, %v470
        %472 = vmatmul.f32.gmra.mxu0 %v253
        %v473 = vpop.f32.mrf.mxu0
        %v474 = vadd.f32 0.0, %v473
        %475 = vmatmul.f32.gmra.mxu0 %v254
        %v476 = vpop.f32.mrf.mxu0
        %v477 = vadd.f32 0.0, %v476
        %478 = vmatmul.f32.gmra.mxu0 %v255
        %v479 = vpop.f32.mrf.mxu0
        %v480 = vadd.f32 0.0, %v479
        %481 = vmatmul.f32.gmra.mxu0 %v256
        %v482 = vpop.f32.mrf.mxu0
        %v483 = vadd.f32 0.0, %v482
        %484 = vmatmul.f32.gmra.mxu0 %v257
        %v485 = vpop.f32.mrf.mxu0
        %v486 = vadd.f32 0.0, %v485
        %487 = vmatmul.f32.gmra.mxu0 %v258
        %v488 = vpop.f32.mrf.mxu0
        %v489 = vadd.f32 0.0, %v488
        %490 = vmatmul.f32.gmra.mxu0 %v259
        %v491 = vpop.f32.mrf.mxu0
        %v492 = vadd.f32 0.0, %v491
        %493 = vmatmul.f32.gmra.mxu0 %v260
        %v494 = vpop.f32.mrf.mxu0
        %v495 = vadd.f32 0.0, %v494
        %496 = vmatmul.f32.gmra.mxu0 %v261
        %v497 = vpop.f32.mrf.mxu0
        %v498 = vadd.f32 0.0, %v497
        %499 = vmatmul.f32.gmra.mxu0 %v262
        %v500 = vpop.f32.mrf.mxu0
        %v501 = vadd.f32 0.0, %v500
        %502 = vmatmul.f32.gmra.mxu0 %v263
        %v503 = vpop.f32.mrf.mxu0
        %v504 = vadd.f32 0.0, %v503
        %505 = vmatmul.f32.gmra.mxu0 %v264
        %v506 = vpop.f32.mrf.mxu0
        %v507 = vadd.f32 0.0, %v506
        %508 = vmatmul.f32.gmra.mxu0 %v265
        %v509 = vpop.f32.mrf.mxu0
        %v510 = vadd.f32 0.0, %v509
        %511 = vmatmul.f32.gmra.mxu0 %v266
        %v512 = vpop.f32.mrf.mxu0
        %v513 = vadd.f32 0.0, %v512
        %514 = vmatmul.f32.gmra.mxu0 %v267
        %v515 = vpop.f32.mrf.mxu0
        %v516 = vadd.f32 0.0, %v515
        %517 = vmatmul.f32.gmra.mxu0 %v268
        %v518 = vpop.f32.mrf.mxu0
        %v519 = vadd.f32 0.0, %v518
        %520 = vmatmul.f32.gmra.mxu0 %v269
        %v521 = vpop.f32.mrf.mxu0
        %v522 = vadd.f32 0.0, %v521
        %523 = vmatmul.f32.gmra.mxu0 %v374
        %v524 = vpop.f32.mrf.mxu0
        %v525 = vadd.f32 0.0, %v524
        %526 = vmatmul.f32.gmra.mxu0 %v375
        %v527 = vpop.f32.mrf.mxu0
        %v528 = vadd.f32 0.0, %v527
        %529 = vdwg.mxu0
        %530 = vmatpush.msra.mxu0 %v412
        %531 = vmatpush.msra.mxu0 %v411
        %532 = vmatpush.msra.mxu0 %v410
        %533 = vmatpush.msra.mxu0 %v409
        %534 = vmatpush.msra.mxu0 %v408
        %535 = vmatpush.msra.mxu0 %v407
        %536 = vmatpush.msra.mxu0 %v406
        %537 = vmatpush.msra.mxu0 %v405
        %538 = vmatpush.msra.mxu0 %v404
        %539 = vmatpush.msra.mxu0 %v403
        %540 = vmatpush.msra.mxu0 %v402
        %541 = vmatpush.msra.mxu0 %v401
        %542 = vmatpush.msra.mxu0 %v400
        %543 = vmatpush.msra.mxu0 %v399
        %544 = vmatpush.msra.mxu0 %v398
        %545 = vmatpush.msra.mxu0 %v397
        %546 = vmatmul.f32.gmra.mxu0 %v272
        %v547 = vpop.f32.mrf.mxu0
        %v548 = vadd.f32 %v447, %v547
        %549 = vmatmul.f32.gmra.mxu0 %v273
        %v550 = vpop.f32.mrf.mxu0
        %v551 = vadd.f32 %v450, %v550
        %552 = vmatmul.f32.gmra.mxu0 %v274
        %v553 = vpop.f32.mrf.mxu0
        %v554 = vadd.f32 %v453, %v553
        %555 = vmatmul.f32.gmra.mxu0 %v275
        %v556 = vpop.f32.mrf.mxu0
        %v557 = vadd.f32 %v456, %v556
        %558 = vmatmul.f32.gmra.mxu0 %v276
        %v559 = vpop.f32.mrf.mxu0
        %v560 = vadd.f32 %v459, %v559
        %561 = vmatmul.f32.gmra.mxu0 %v277
        %v562 = vpop.f32.mrf.mxu0
        %v563 = vadd.f32 %v462, %v562
        %564 = vmatmul.f32.gmra.mxu0 %v278
        %v565 = vpop.f32.mrf.mxu0
        %v566 = vadd.f32 %v465, %v565
        %567 = vmatmul.f32.gmra.mxu0 %v279
        %v568 = vpop.f32.mrf.mxu0
        %v569 = vadd.f32 %v468, %v568
        %570 = vmatmul.f32.gmra.mxu0 %v280
        %v571 = vpop.f32.mrf.mxu0
        %v572 = vadd.f32 %v471, %v571
        %573 = vmatmul.f32.gmra.mxu0 %v281
        %v574 = vpop.f32.mrf.mxu0
        %v575 = vadd.f32 %v474, %v574
        %576 = vmatmul.f32.gmra.mxu0 %v282
        %v577 = vpop.f32.mrf.mxu0
        %v578 = vadd.f32 %v477, %v577
        %579 = vmatmul.f32.gmra.mxu0 %v283
        %v580 = vpop.f32.mrf.mxu0
        %v581 = vadd.f32 %v480, %v580
        %582 = vmatmul.f32.gmra.mxu0 %v284
        %v583 = vpop.f32.mrf.mxu0
        %v584 = vadd.f32 %v483, %v583
        %585 = vmatmul.f32.gmra.mxu0 %v285
        %v586 = vpop.f32.mrf.mxu0
        %v587 = vadd.f32 %v486, %v586
        %588 = vmatmul.f32.gmra.mxu0 %v286
        %v589 = vpop.f32.mrf.mxu0
        %v590 = vadd.f32 %v489, %v589
        %591 = vmatmul.f32.gmra.mxu0 %v287
        %v592 = vpop.f32.mrf.mxu0
        %v593 = vadd.f32 %v492, %v592
        %594 = vmatmul.f32.gmra.mxu0 %v288
        %v595 = vpop.f32.mrf.mxu0
        %v596 = vadd.f32 %v495, %v595
        %597 = vmatmul.f32.gmra.mxu0 %v289
        %v598 = vpop.f32.mrf.mxu0
        %v599 = vadd.f32 %v498, %v598
        %600 = vmatmul.f32.gmra.mxu0 %v290
        %v601 = vpop.f32.mrf.mxu0
        %v602 = vadd.f32 %v501, %v601
        %603 = vmatmul.f32.gmra.mxu0 %v291
        %v604 = vpop.f32.mrf.mxu0
        %v605 = vadd.f32 %v504, %v604
        %606 = vmatmul.f32.gmra.mxu0 %v292
        %v607 = vpop.f32.mrf.mxu0
        %v608 = vadd.f32 %v507, %v607
        %609 = vmatmul.f32.gmra.mxu0 %v293
        %v610 = vpop.f32.mrf.mxu0
        %v611 = vadd.f32 %v510, %v610
        %612 = vmatmul.f32.gmra.mxu0 %v294
        %v613 = vpop.f32.mrf.mxu0
        %v614 = vadd.f32 %v513, %v613
        %615 = vmatmul.f32.gmra.mxu0 %v295
        %v616 = vpop.f32.mrf.mxu0
        %v617 = vadd.f32 %v516, %v616
        %618 = vmatmul.f32.gmra.mxu0 %v296
        %v619 = vpop.f32.mrf.mxu0
        %v620 = vadd.f32 %v519, %v619
        %621 = vmatmul.f32.gmra.mxu0 %v297
        %v622 = vpop.f32.mrf.mxu0
        %v623 = vadd.f32 %v522, %v622
        %624 = vmatmul.f32.gmra.mxu0 %v376
        %v625 = vpop.f32.mrf.mxu0
        %v626 = vadd.f32 %v525, %v625
        %627 = vmatmul.f32.gmra.mxu0 %v377
        %v628 = vpop.f32.mrf.mxu0
        %v629 = vadd.f32 %v528, %v628
        %630 = vdwg.mxu0
        %631 = vmatpush.msra.mxu0 %v428
        %632 = vmatpush.msra.mxu0 %v427
        %633 = vmatpush.msra.mxu0 %v426
        %634 = vmatpush.msra.mxu0 %v425
        %635 = vmatpush.msra.mxu0 %v424
        %636 = vmatpush.msra.mxu0 %v423
        %637 = vmatpush.msra.mxu0 %v422
        %638 = vmatpush.msra.mxu0 %v421
        %639 = vmatpush.msra.mxu0 %v420
        %640 = vmatpush.msra.mxu0 %v419
        %641 = vmatpush.msra.mxu0 %v418
        %642 = vmatpush.msra.mxu0 %v417
        %643 = vmatpush.msra.mxu0 %v416
        %644 = vmatpush.msra.mxu0 %v415
        %645 = vmatpush.msra.mxu0 %v414
        %646 = vmatpush.msra.mxu0 %v413
        %647 = vmatmul.f32.gmra.mxu0 %v300
        %v648 = vpop.f32.mrf.mxu0
        %v649 = vadd.f32 %v548, %v648
        %650 = vmatmul.f32.gmra.mxu0 %v301
        %v651 = vpop.f32.mrf.mxu0
        %v652 = vadd.f32 %v551, %v651
        %653 = vmatmul.f32.gmra.mxu0 %v302
        %v654 = vpop.f32.mrf.mxu0
        %v655 = vadd.f32 %v554, %v654
        %656 = vmatmul.f32.gmra.mxu0 %v303
        %v657 = vpop.f32.mrf.mxu0
        %v658 = vadd.f32 %v557, %v657
        %659 = vmatmul.f32.gmra.mxu0 %v304
        %v660 = vpop.f32.mrf.mxu0
        %v661 = vadd.f32 %v560, %v660
        %662 = vmatmul.f32.gmra.mxu0 %v305
        %v663 = vpop.f32.mrf.mxu0
        %v664 = vadd.f32 %v563, %v663
        %665 = vmatmul.f32.gmra.mxu0 %v306
        %v666 = vpop.f32.mrf.mxu0
        %v667 = vadd.f32 %v566, %v666
        %668 = vmatmul.f32.gmra.mxu0 %v307
        %v669 = vpop.f32.mrf.mxu0
        %v670 = vadd.f32 %v569, %v669
        %671 = vmatmul.f32.gmra.mxu0 %v308
        %v672 = vpop.f32.mrf.mxu0
        %v673 = vadd.f32 %v572, %v672
        %674 = vmatmul.f32.gmra.mxu0 %v309
        %v675 = vpop.f32.mrf.mxu0
        %v676 = vadd.f32 %v575, %v675
        %677 = vmatmul.f32.gmra.mxu0 %v310
        %v678 = vpop.f32.mrf.mxu0
        %v679 = vadd.f32 %v578, %v678
        %680 = vmatmul.f32.gmra.mxu0 %v311
        %v681 = vpop.f32.mrf.mxu0
        %v682 = vadd.f32 %v581, %v681
        %683 = vmatmul.f32.gmra.mxu0 %v312
        %v684 = vpop.f32.mrf.mxu0
        %v685 = vadd.f32 %v584, %v684
        %686 = vmatmul.f32.gmra.mxu0 %v313
        %v687 = vpop.f32.mrf.mxu0
        %v688 = vadd.f32 %v587, %v687
        %689 = vmatmul.f32.gmra.mxu0 %v314
        %v690 = vpop.f32.mrf.mxu0
        %v691 = vadd.f32 %v590, %v690
        %692 = vmatmul.f32.gmra.mxu0 %v315
        %v693 = vpop.f32.mrf.mxu0
        %v694 = vadd.f32 %v593, %v693
        %695 = vmatmul.f32.gmra.mxu0 %v316
        %v696 = vpop.f32.mrf.mxu0
        %v697 = vadd.f32 %v596, %v696
        %698 = vmatmul.f32.gmra.mxu0 %v317
        %v699 = vpop.f32.mrf.mxu0
        %v700 = vadd.f32 %v599, %v699
        %701 = vmatmul.f32.gmra.mxu0 %v318
        %v702 = vpop.f32.mrf.mxu0
        %v703 = vadd.f32 %v602, %v702
        %704 = vmatmul.f32.gmra.mxu0 %v319
        %v705 = vpop.f32.mrf.mxu0
        %v706 = vadd.f32 %v605, %v705
        %707 = vmatmul.f32.gmra.mxu0 %v320
        %v708 = vpop.f32.mrf.mxu0
        %v709 = vadd.f32 %v608, %v708
        %710 = vmatmul.f32.gmra.mxu0 %v321
        %v711 = vpop.f32.mrf.mxu0
        %v712 = vadd.f32 %v611, %v711
        %713 = vmatmul.f32.gmra.mxu0 %v322
        %v714 = vpop.f32.mrf.mxu0
        %v715 = vadd.f32 %v614, %v714
        %716 = vmatmul.f32.gmra.mxu0 %v323
        %v717 = vpop.f32.mrf.mxu0
        %v718 = vadd.f32 %v617, %v717
        %719 = vmatmul.f32.gmra.mxu0 %v324
        %v720 = vpop.f32.mrf.mxu0
        %v721 = vadd.f32 %v620, %v720
        %722 = vmatmul.f32.gmra.mxu0 %v325
        %v723 = vpop.f32.mrf.mxu0
        %v724 = vadd.f32 %v623, %v723
        %725 = vmatmul.f32.gmra.mxu0 %v378
        %v726 = vpop.f32.mrf.mxu0
        %v727 = vadd.f32 %v626, %v726
        %728 = vmatmul.f32.gmra.mxu0 %v379
        %v729 = vpop.f32.mrf.mxu0
        %v730 = vadd.f32 %v629, %v729
        %731 = vdwg.mxu0
        %732 = vmatpush.msra.mxu0 %v341
        %733 = vmatpush.msra.mxu0 %v340
        %734 = vmatpush.msra.mxu0 %v339
        %735 = vmatpush.msra.mxu0 %v338
        %736 = vmatpush.msra.mxu0 %v337
        %737 = vmatpush.msra.mxu0 %v336
        %738 = vmatpush.msra.mxu0 %v335
        %739 = vmatpush.msra.mxu0 %v334
        %740 = vmatpush.msra.mxu0 %v333
        %741 = vmatpush.msra.mxu0 %v332
        %742 = vmatpush.msra.mxu0 %v331
        %743 = vmatpush.msra.mxu0 %v330
        %744 = vmatpush.msra.mxu0 %v329
        %745 = vmatpush.msra.mxu0 %v328
        %746 = vmatpush.msra.mxu0 %v327
        %747 = vmatpush.msra.mxu0 %v326
        %748 = vmatmul.f32.gmra.mxu0 %v242
        %v749 = vpop.f32.mrf.mxu0
        %v750 = vadd.f32 %v649, %v749
        %751 = vmatmul.f32.gmra.mxu0 %v243
        %v752 = vpop.f32.mrf.mxu0
        %v753 = vadd.f32 %v652, %v752
        %754 = vmatmul.f32.gmra.mxu0 %v244
        %v755 = vpop.f32.mrf.mxu0
        %v756 = vadd.f32 %v655, %v755
        %757 = vmatmul.f32.gmra.mxu0 %v245
        %v758 = vpop.f32.mrf.mxu0
        %v759 = vadd.f32 %v658, %v758
        %760 = vmatmul.f32.gmra.mxu0 %v246
        %v761 = vpop.f32.mrf.mxu0
        %v762 = vadd.f32 %v661, %v761
        %763 = vmatmul.f32.gmra.mxu0 %v247
        %v764 = vpop.f32.mrf.mxu0
        %v765 = vadd.f32 %v664, %v764
        %766 = vmatmul.f32.gmra.mxu0 %v248
        %v767 = vpop.f32.mrf.mxu0
        %v768 = vadd.f32 %v667, %v767
        %769 = vmatmul.f32.gmra.mxu0 %v249
        %v770 = vpop.f32.mrf.mxu0
        %v771 = vadd.f32 %v670, %v770
        %772 = vmatmul.f32.gmra.mxu0 %v250
        %v773 = vpop.f32.mrf.mxu0
        %v774 = vadd.f32 %v673, %v773
        %775 = vmatmul.f32.gmra.mxu0 %v251
        %v776 = vpop.f32.mrf.mxu0
        %v777 = vadd.f32 %v676, %v776
        %778 = vmatmul.f32.gmra.mxu0 %v252
        %v779 = vpop.f32.mrf.mxu0
        %v780 = vadd.f32 %v679, %v779
        %781 = vmatmul.f32.gmra.mxu0 %v253
        %v782 = vpop.f32.mrf.mxu0
        %v783 = vadd.f32 %v682, %v782
        %784 = vmatmul.f32.gmra.mxu0 %v254
        %v785 = vpop.f32.mrf.mxu0
        %v786 = vadd.f32 %v685, %v785
        %787 = vmatmul.f32.gmra.mxu0 %v255
        %v788 = vpop.f32.mrf.mxu0
        %v789 = vadd.f32 %v688, %v788
        %790 = vmatmul.f32.gmra.mxu0 %v256
        %v791 = vpop.f32.mrf.mxu0
        %v792 = vadd.f32 %v691, %v791
        %793 = vmatmul.f32.gmra.mxu0 %v257
        %v794 = vpop.f32.mrf.mxu0
        %v795 = vadd.f32 %v694, %v794
        %796 = vmatmul.f32.gmra.mxu0 %v258
        %v797 = vpop.f32.mrf.mxu0
        %v798 = vadd.f32 %v697, %v797
        %799 = vmatmul.f32.gmra.mxu0 %v259
        %v800 = vpop.f32.mrf.mxu0
        %v801 = vadd.f32 %v700, %v800
        %802 = vmatmul.f32.gmra.mxu0 %v260
        %v803 = vpop.f32.mrf.mxu0
        %v804 = vadd.f32 %v703, %v803
        %805 = vmatmul.f32.gmra.mxu0 %v261
        %v806 = vpop.f32.mrf.mxu0
        %v807 = vadd.f32 %v706, %v806
        %808 = vmatmul.f32.gmra.mxu0 %v262
        %v809 = vpop.f32.mrf.mxu0
        %v810 = vadd.f32 %v709, %v809
        %811 = vmatmul.f32.gmra.mxu0 %v263
        %v812 = vpop.f32.mrf.mxu0
        %v813 = vadd.f32 %v712, %v812
        %814 = vmatmul.f32.gmra.mxu0 %v264
        %v815 = vpop.f32.mrf.mxu0
        %v816 = vadd.f32 %v715, %v815
        %817 = vmatmul.f32.gmra.mxu0 %v265
        %v818 = vpop.f32.mrf.mxu0
        %v819 = vadd.f32 %v718, %v818
        %820 = vmatmul.f32.gmra.mxu0 %v266
        %v821 = vpop.f32.mrf.mxu0
        %v822 = vadd.f32 %v721, %v821
        %823 = vmatmul.f32.gmra.mxu0 %v267
        %v824 = vpop.f32.mrf.mxu0
        %v825 = vadd.f32 %v724, %v824
        %826 = vmatmul.f32.gmra.mxu0 %v268
        %v827 = vpop.f32.mrf.mxu0
        %v828 = vadd.f32 %v727, %v827
        %829 = vmatmul.f32.gmra.mxu0 %v269
        %v830 = vpop.f32.mrf.mxu0
        %v831 = vadd.f32 %v730, %v830
        %832 = vdwg.mxu0
        %833 = vmatpush.msra.mxu0 %v357
        %834 = vmatpush.msra.mxu0 %v356
        %835 = vmatpush.msra.mxu0 %v355
        %836 = vmatpush.msra.mxu0 %v354
        %837 = vmatpush.msra.mxu0 %v353
        %838 = vmatpush.msra.mxu0 %v352
        %839 = vmatpush.msra.mxu0 %v351
        %840 = vmatpush.msra.mxu0 %v350
        %841 = vmatpush.msra.mxu0 %v349
        %842 = vmatpush.msra.mxu0 %v348
        %843 = vmatpush.msra.mxu0 %v347
        %844 = vmatpush.msra.mxu0 %v346
        %845 = vmatpush.msra.mxu0 %v345
        %846 = vmatpush.msra.mxu0 %v344
        %847 = vmatpush.msra.mxu0 %v343
        %848 = vmatpush.msra.mxu0 %v342
        %849 = vmatmul.f32.gmra.mxu0 %v270
        %v850 = vpop.f32.mrf.mxu0
        %v851 = vadd.f32 %v750, %v850
        %852 = vmatmul.f32.gmra.mxu0 %v271
        %v853 = vpop.f32.mrf.mxu0
        %v854 = vadd.f32 %v753, %v853
        %855 = vmatmul.f32.gmra.mxu0 %v272
        %v856 = vpop.f32.mrf.mxu0
        %v857 = vadd.f32 %v756, %v856
        %858 = vmatmul.f32.gmra.mxu0 %v273
        %v859 = vpop.f32.mrf.mxu0
        %v860 = vadd.f32 %v759, %v859
        %861 = vmatmul.f32.gmra.mxu0 %v274
        %v862 = vpop.f32.mrf.mxu0
        %v863 = vadd.f32 %v762, %v862
        %864 = vmatmul.f32.gmra.mxu0 %v275
        %v865 = vpop.f32.mrf.mxu0
        %v866 = vadd.f32 %v765, %v865
        %867 = vmatmul.f32.gmra.mxu0 %v276
        %v868 = vpop.f32.mrf.mxu0
        %v869 = vadd.f32 %v768, %v868
        %870 = vmatmul.f32.gmra.mxu0 %v277
        %v871 = vpop.f32.mrf.mxu0
        %v872 = vadd.f32 %v771, %v871
        %873 = vmatmul.f32.gmra.mxu0 %v278
        %v874 = vpop.f32.mrf.mxu0
        %v875 = vadd.f32 %v774, %v874
        %876 = vmatmul.f32.gmra.mxu0 %v279
        %v877 = vpop.f32.mrf.mxu0
        %v878 = vadd.f32 %v777, %v877
        %879 = vmatmul.f32.gmra.mxu0 %v280
        %v880 = vpop.f32.mrf.mxu0
        %v881 = vadd.f32 %v780, %v880
        %882 = vmatmul.f32.gmra.mxu0 %v281
        %v883 = vpop.f32.mrf.mxu0
        %v884 = vadd.f32 %v783, %v883
        %885 = vmatmul.f32.gmra.mxu0 %v282
        %v886 = vpop.f32.mrf.mxu0
        %v887 = vadd.f32 %v786, %v886
        %888 = vmatmul.f32.gmra.mxu0 %v283
        %v889 = vpop.f32.mrf.mxu0
        %v890 = vadd.f32 %v789, %v889
        %891 = vmatmul.f32.gmra.mxu0 %v284
        %v892 = vpop.f32.mrf.mxu0
        %v893 = vadd.f32 %v792, %v892
        %894 = vmatmul.f32.gmra.mxu0 %v285
        %v895 = vpop.f32.mrf.mxu0
        %v896 = vadd.f32 %v795, %v895
        %897 = vmatmul.f32.gmra.mxu0 %v286
        %v898 = vpop.f32.mrf.mxu0
        %v899 = vadd.f32 %v798, %v898
        %900 = vmatmul.f32.gmra.mxu0 %v287
        %v901 = vpop.f32.mrf.mxu0
        %v902 = vadd.f32 %v801, %v901
        %903 = vmatmul.f32.gmra.mxu0 %v288
        %v904 = vpop.f32.mrf.mxu0
        %v905 = vadd.f32 %v804, %v904
        %906 = vmatmul.f32.gmra.mxu0 %v289
        %v907 = vpop.f32.mrf.mxu0
        %v908 = vadd.f32 %v807, %v907
        %909 = vmatmul.f32.gmra.mxu0 %v290
        %v910 = vpop.f32.mrf.mxu0
        %v911 = vadd.f32 %v810, %v910
        %912 = vmatmul.f32.gmra.mxu0 %v291
        %v913 = vpop.f32.mrf.mxu0
        %v914 = vadd.f32 %v813, %v913
        %915 = vmatmul.f32.gmra.mxu0 %v292
        %v916 = vpop.f32.mrf.mxu0
        %v917 = vadd.f32 %v816, %v916
        %918 = vmatmul.f32.gmra.mxu0 %v293
        %v919 = vpop.f32.mrf.mxu0
        %v920 = vadd.f32 %v819, %v919
        %921 = vmatmul.f32.gmra.mxu0 %v294
        %v922 = vpop.f32.mrf.mxu0
        %v923 = vadd.f32 %v822, %v922
        %924 = vmatmul.f32.gmra.mxu0 %v295
        %v925 = vpop.f32.mrf.mxu0
        %v926 = vadd.f32 %v825, %v925
        %927 = vmatmul.f32.gmra.mxu0 %v296
        %v928 = vpop.f32.mrf.mxu0
        %v929 = vadd.f32 %v828, %v928
        %930 = vmatmul.f32.gmra.mxu0 %v297
        %v931 = vpop.f32.mrf.mxu0
        %v932 = vadd.f32 %v831, %v931
        %933 = vdwg.mxu0
        %934 = vmatpush.msra.mxu0 %v373
        %935 = vmatpush.msra.mxu0 %v372
        %936 = vmatpush.msra.mxu0 %v371
        %937 = vmatpush.msra.mxu0 %v370
        %938 = vmatpush.msra.mxu0 %v369
        %939 = vmatpush.msra.mxu0 %v368
        %940 = vmatpush.msra.mxu0 %v367
        %941 = vmatpush.msra.mxu0 %v366
        %942 = vmatpush.msra.mxu0 %v365
        %943 = vmatpush.msra.mxu0 %v364
        %944 = vmatpush.msra.mxu0 %v363
        %945 = vmatpush.msra.mxu0 %v362
        %946 = vmatpush.msra.mxu0 %v361
        %947 = vmatpush.msra.mxu0 %v360
        %948 = vmatpush.msra.mxu0 %v359
        %949 = vmatpush.msra.mxu0 %v358
        %950 = vmatmul.f32.gmra.mxu0 %v298
        %v951 = vpop.f32.mrf.mxu0
        %v952 = vadd.f32 %v851, %v951
        %953 = vmatmul.f32.gmra.mxu0 %v299
        %v954 = vpop.f32.mrf.mxu0
        %v955 = vadd.f32 %v854, %v954
        %956 = vmatmul.f32.gmra.mxu0 %v300
        %v957 = vpop.f32.mrf.mxu0
        %v958 = vadd.f32 %v857, %v957
        %959 = vmatmul.f32.gmra.mxu0 %v301
        %v960 = vpop.f32.mrf.mxu0
        %v961 = vadd.f32 %v860, %v960
        %962 = vmatmul.f32.gmra.mxu0 %v302
        %v963 = vpop.f32.mrf.mxu0
        %v964 = vadd.f32 %v863, %v963
        %965 = vmatmul.f32.gmra.mxu0 %v303
        %v966 = vpop.f32.mrf.mxu0
        %v967 = vadd.f32 %v866, %v966
        %968 = vmatmul.f32.gmra.mxu0 %v304
        %v969 = vpop.f32.mrf.mxu0
        %v970 = vadd.f32 %v869, %v969
        %971 = vmatmul.f32.gmra.mxu0 %v305
        %v972 = vpop.f32.mrf.mxu0
        %v973 = vadd.f32 %v872, %v972
        %974 = vmatmul.f32.gmra.mxu0 %v306
        %v975 = vpop.f32.mrf.mxu0
        %v976 = vadd.f32 %v875, %v975
        %977 = vmatmul.f32.gmra.mxu0 %v307
        %v978 = vpop.f32.mrf.mxu0
        %v979 = vadd.f32 %v878, %v978
        %980 = vmatmul.f32.gmra.mxu0 %v308
        %v981 = vpop.f32.mrf.mxu0
        %v982 = vadd.f32 %v881, %v981
        %983 = vmatmul.f32.gmra.mxu0 %v309
        %v984 = vpop.f32.mrf.mxu0
        %v985 = vadd.f32 %v884, %v984
        %986 = vmatmul.f32.gmra.mxu0 %v310
        %v987 = vpop.f32.mrf.mxu0
        %v988 = vadd.f32 %v887, %v987
        %989 = vmatmul.f32.gmra.mxu0 %v311
        %v990 = vpop.f32.mrf.mxu0
        %v991 = vadd.f32 %v890, %v990
        %992 = vmatmul.f32.gmra.mxu0 %v312
        %v993 = vpop.f32.mrf.mxu0
        %v994 = vadd.f32 %v893, %v993
        %995 = vmatmul.f32.gmra.mxu0 %v313
        %v996 = vpop.f32.mrf.mxu0
        %v997 = vadd.f32 %v896, %v996
        %998 = vmatmul.f32.gmra.mxu0 %v314
        %v999 = vpop.f32.mrf.mxu0
        %v1000 = vadd.f32 %v899, %v999
        %1001 = vmatmul.f32.gmra.mxu0 %v315
        %v1002 = vpop.f32.mrf.mxu0
        %v1003 = vadd.f32 %v902, %v1002
        %1004 = vmatmul.f32.gmra.mxu0 %v316
        %v1005 = vpop.f32.mrf.mxu0
        %v1006 = vadd.f32 %v905, %v1005
        %1007 = vmatmul.f32.gmra.mxu0 %v317
        %v1008 = vpop.f32.mrf.mxu0
        %v1009 = vadd.f32 %v908, %v1008
        %1010 = vmatmul.f32.gmra.mxu0 %v318
        %v1011 = vpop.f32.mrf.mxu0
        %v1012 = vadd.f32 %v911, %v1011
        %1013 = vmatmul.f32.gmra.mxu0 %v319
        %v1014 = vpop.f32.mrf.mxu0
        %v1015 = vadd.f32 %v914, %v1014
        %1016 = vmatmul.f32.gmra.mxu0 %v320
        %v1017 = vpop.f32.mrf.mxu0
        %v1018 = vadd.f32 %v917, %v1017
        %1019 = vmatmul.f32.gmra.mxu0 %v321
        %v1020 = vpop.f32.mrf.mxu0
        %v1021 = vadd.f32 %v920, %v1020
        %1022 = vmatmul.f32.gmra.mxu0 %v322
        %v1023 = vpop.f32.mrf.mxu0
        %v1024 = vadd.f32 %v923, %v1023
        %1025 = vmatmul.f32.gmra.mxu0 %v323
        %v1026 = vpop.f32.mrf.mxu0
        %v1027 = vadd.f32 %v926, %v1026
        %1028 = vmatmul.f32.gmra.mxu0 %v324
        %v1029 = vpop.f32.mrf.mxu0
        %v1030 = vadd.f32 %v929, %v1029
        %1031 = vmatmul.f32.gmra.mxu0 %v325
        %v1032 = vpop.f32.mrf.mxu0
        %v1033 = vadd.f32 %v932, %v1032
        %1034 = vdwg.mxu0
        %v1035 = vld [vmem:[%s241 + $0x20] sm:$0xff]
        %v1036 = vld [vmem:[%s241 + $0x28] sm:$0xff]
        %v1037 = vld [vmem:[%s241 + $0x30] sm:$0xff]
        %v1038 = vld [vmem:[%s241 + $0x38] sm:$0xff]
        %v1039 = vld [vmem:[%s241 + $0x40] sm:$0xff]
        %v1040 = vld [vmem:[%s241 + $0x48] sm:$0xff]
        %v1041 = vld [vmem:[%s241 + $0x50] sm:$0xff]
        %v1042 = vld [vmem:[%s241 + $0x58] sm:$0xff]
        %v1043 = vld [vmem:[%s241 + $0x60] sm:$0xff]
        %v1044 = vld [vmem:[%s241 + $0x68] sm:$0xff]
        %v1045 = vld [vmem:[%s241 + $0x70] sm:$0xff]
        %v1046 = vld [vmem:[%s241 + $0x78] sm:$0xff]
        %v1047 = vld [vmem:[%s241 + $0x80] sm:$0xff]
        %v1048 = vld [vmem:[%s241 + $0x88] sm:$0xff]
        %v1049 = vld [vmem:[%s241 + $0x90] sm:$0xff]
        %v1050 = vld [vmem:[%s241 + $0x98] sm:$0xff]
        %v1051 = vld [vmem:[%s241 + $0xa0] sm:$0xff]
        %v1052 = vld [vmem:[%s241 + $0xa8] sm:$0xff]
        %v1053 = vld [vmem:[%s241 + $0xb0] sm:$0xff]
        %v1054 = vld [vmem:[%s241 + $0xb8] sm:$0xff]
        %v1055 = vld [vmem:[%s241 + $0xc0] sm:$0xff]
        %v1056 = vld [vmem:[%s241 + $0xc8] sm:$0xff]
        %v1057 = vld [vmem:[%s241 + $0xd0] sm:$0xff]
        %v1058 = vld [vmem:[%s241 + $0xd8] sm:$0xff]
        %v1059 = vld [vmem:[%s241 + $0xe0] sm:$0xff]
        %v1060 = vld [vmem:[%s241 + $0xe8] sm:$0xff]
        %v1061 = vld [vmem:[%s241 + $0xf0] sm:$0xff]
        %v1062 = vld [vmem:[%s241 + $0xf8] sm:$0xff]
        %v1063 = vld [vmem:[%s241 + $0x21] sm:$0xff]
        %v1064 = vld [vmem:[%s241 + $0x29] sm:$0xff]
        %v1065 = vld [vmem:[%s241 + $0x31] sm:$0xff]
        %v1066 = vld [vmem:[%s241 + $0x39] sm:$0xff]
        %v1067 = vld [vmem:[%s241 + $0x41] sm:$0xff]
        %v1068 = vld [vmem:[%s241 + $0x49] sm:$0xff]
        %v1069 = vld [vmem:[%s241 + $0x51] sm:$0xff]
        %v1070 = vld [vmem:[%s241 + $0x59] sm:$0xff]
        %v1071 = vld [vmem:[%s241 + $0x61] sm:$0xff]
        %v1072 = vld [vmem:[%s241 + $0x69] sm:$0xff]
        %v1073 = vld [vmem:[%s241 + $0x71] sm:$0xff]
        %v1074 = vld [vmem:[%s241 + $0x79] sm:$0xff]
        %v1075 = vld [vmem:[%s241 + $0x81] sm:$0xff]
        %v1076 = vld [vmem:[%s241 + $0x89] sm:$0xff]
        %v1077 = vld [vmem:[%s241 + $0x91] sm:$0xff]
        %v1078 = vld [vmem:[%s241 + $0x99] sm:$0xff]
        %v1079 = vld [vmem:[%s241 + $0xa1] sm:$0xff]
        %v1080 = vld [vmem:[%s241 + $0xa9] sm:$0xff]
        %v1081 = vld [vmem:[%s241 + $0xb1] sm:$0xff]
        %v1082 = vld [vmem:[%s241 + $0xb9] sm:$0xff]
        %v1083 = vld [vmem:[%s241 + $0xc1] sm:$0xff]
        %v1084 = vld [vmem:[%s241 + $0xc9] sm:$0xff]
        %v1085 = vld [vmem:[%s241 + $0xd1] sm:$0xff]
        %v1086 = vld [vmem:[%s241 + $0xd9] sm:$0xff]
        %v1087 = vld [vmem:[%s241 + $0xe1] sm:$0xff]
        %v1088 = vld [vmem:[%s241 + $0xe9] sm:$0xff]
        %v1089 = vld [vmem:[%s241 + $0xf1] sm:$0xff]
        %v1090 = vld [vmem:[%s241 + $0xf9] sm:$0xff]
        %v1091 = vld [vmem:[%s241 + $0x22] sm:$0xff]
        %v1092 = vld [vmem:[%s241 + $0x2a] sm:$0xff]
        %v1093 = vld [vmem:[%s241 + $0x32] sm:$0xff]
        %v1094 = vld [vmem:[%s241 + $0x3a] sm:$0xff]
        %v1095 = vld [vmem:[%s241 + $0x42] sm:$0xff]
        %v1096 = vld [vmem:[%s241 + $0x4a] sm:$0xff]
        %v1097 = vld [vmem:[%s241 + $0x52] sm:$0xff]
        %v1098 = vld [vmem:[%s241 + $0x5a] sm:$0xff]
        %v1099 = vld [vmem:[%s241 + $0x62] sm:$0xff]
        %v1100 = vld [vmem:[%s241 + $0x6a] sm:$0xff]
        %v1101 = vld [vmem:[%s241 + $0x72] sm:$0xff]
        %v1102 = vld [vmem:[%s241 + $0x7a] sm:$0xff]
        %v1103 = vld [vmem:[%s241 + $0x82] sm:$0xff]
        %v1104 = vld [vmem:[%s241 + $0x8a] sm:$0xff]
        %v1105 = vld [vmem:[%s241 + $0x92] sm:$0xff]
        %v1106 = vld [vmem:[%s241 + $0x9a] sm:$0xff]
        %v1107 = vld [vmem:[%s241 + $0xa2] sm:$0xff]
        %v1108 = vld [vmem:[%s241 + $0xaa] sm:$0xff]
        %v1109 = vld [vmem:[%s241 + $0xb2] sm:$0xff]
        %v1110 = vld [vmem:[%s241 + $0xba] sm:$0xff]
        %v1111 = vld [vmem:[%s241 + $0xc2] sm:$0xff]
        %v1112 = vld [vmem:[%s241 + $0xca] sm:$0xff]
        %v1113 = vld [vmem:[%s241 + $0xd2] sm:$0xff]
        %v1114 = vld [vmem:[%s241 + $0xda] sm:$0xff]
        %v1115 = vld [vmem:[%s241 + $0xe2] sm:$0xff]
        %v1116 = vld [vmem:[%s241 + $0xea] sm:$0xff]
        %v1117 = vld [vmem:[%s241 + $0xf2] sm:$0xff]
        %v1118 = vld [vmem:[%s241 + $0xfa] sm:$0xff]
        %s1119 = scalar_lea.vmem [#allocation5], 768
        %v1120 = vld [vmem:[%s1119] sm:$0xff]
        %v1121 = vld [vmem:[%s1119 + $0x8] sm:$0xff]
        %v1122 = vld [vmem:[%s1119 + $0x10] sm:$0xff]
        %v1123 = vld [vmem:[%s1119 + $0x18] sm:$0xff]
        %v1124 = vld [vmem:[%s1119 + $0x20] sm:$0xff]
        %v1125 = vld [vmem:[%s1119 + $0x28] sm:$0xff]
        %v1126 = vld [vmem:[%s1119 + $0x30] sm:$0xff]
        %v1127 = vld [vmem:[%s1119 + $0x38] sm:$0xff]
        %v1128 = vld [vmem:[%s1119 + $0x40] sm:$0xff]
        %v1129 = vld [vmem:[%s1119 + $0x48] sm:$0xff]
        %v1130 = vld [vmem:[%s1119 + $0x50] sm:$0xff]
        %v1131 = vld [vmem:[%s1119 + $0x58] sm:$0xff]
        %v1132 = vld [vmem:[%s1119 + $0x60] sm:$0xff]
        %v1133 = vld [vmem:[%s1119 + $0x68] sm:$0xff]
        %v1134 = vld [vmem:[%s1119 + $0x70] sm:$0xff]
        %v1135 = vld [vmem:[%s1119 + $0x78] sm:$0xff]
        %v1136 = vld [vmem:[%s1119 + $0x80] sm:$0xff]
        %v1137 = vld [vmem:[%s1119 + $0x88] sm:$0xff]
        %v1138 = vld [vmem:[%s1119 + $0x90] sm:$0xff]
        %v1139 = vld [vmem:[%s1119 + $0x98] sm:$0xff]
        %v1140 = vld [vmem:[%s1119 + $0xa0] sm:$0xff]
        %v1141 = vld [vmem:[%s1119 + $0xa8] sm:$0xff]
        %v1142 = vld [vmem:[%s1119 + $0xb0] sm:$0xff]
        %v1143 = vld [vmem:[%s1119 + $0xb8] sm:$0xff]
        %v1144 = vld [vmem:[%s1119 + $0xc0] sm:$0xff]
        %v1145 = vld [vmem:[%s1119 + $0xc8] sm:$0xff]
        %v1146 = vld [vmem:[%s1119 + $0xd0] sm:$0xff]
        %v1147 = vld [vmem:[%s1119 + $0xd8] sm:$0xff]
        %v1148 = vld [vmem:[%s1119 + $0xe0] sm:$0xff]
        %v1149 = vld [vmem:[%s1119 + $0xe8] sm:$0xff]
        %v1150 = vld [vmem:[%s1119 + $0xf0] sm:$0xff]
        %v1151 = vld [vmem:[%s1119 + $0xf8] sm:$0xff]
        %v1152 = vld [vmem:[%s1119 + $0x100] sm:$0xff]
        %v1153 = vld [vmem:[%s1119 + $0x108] sm:$0xff]
        %v1154 = vld [vmem:[%s1119 + $0x110] sm:$0xff]
        %v1155 = vld [vmem:[%s1119 + $0x118] sm:$0xff]
        %v1156 = vld [vmem:[%s1119 + $0x120] sm:$0xff]
        %v1157 = vld [vmem:[%s1119 + $0x128] sm:$0xff]
        %v1158 = vld [vmem:[%s1119 + $0x130] sm:$0xff]
        %v1159 = vld [vmem:[%s1119 + $0x138] sm:$0xff]
        %v1160 = vld [vmem:[%s1119 + $0x140] sm:$0xff]
        %v1161 = vld [vmem:[%s1119 + $0x148] sm:$0xff]
        %v1162 = vld [vmem:[%s1119 + $0x150] sm:$0xff]
        %v1163 = vld [vmem:[%s1119 + $0x158] sm:$0xff]
        %v1164 = vld [vmem:[%s1119 + $0x160] sm:$0xff]
        %v1165 = vld [vmem:[%s1119 + $0x168] sm:$0xff]
        %v1166 = vld [vmem:[%s1119 + $0x170] sm:$0xff]
        %v1167 = vld [vmem:[%s1119 + $0x178] sm:$0xff]
        %1168 = vmatpush.msra.mxu0 %v1135
        %1169 = vmatpush.msra.mxu0 %v1134
        %1170 = vmatpush.msra.mxu0 %v1133
        %1171 = vmatpush.msra.mxu0 %v1132
        %1172 = vmatpush.msra.mxu0 %v1131
        %1173 = vmatpush.msra.mxu0 %v1130
        %1174 = vmatpush.msra.mxu0 %v1129
        %1175 = vmatpush.msra.mxu0 %v1128
        %1176 = vmatpush.msra.mxu0 %v1127
        %1177 = vmatpush.msra.mxu0 %v1126
        %1178 = vmatpush.msra.mxu0 %v1125
        %1179 = vmatpush.msra.mxu0 %v1124
        %1180 = vmatpush.msra.mxu0 %v1123
        %1181 = vmatpush.msra.mxu0 %v1122
        %1182 = vmatpush.msra.mxu0 %v1121
        %1183 = vmatpush.msra.mxu0 %v1120
        %1184 = vmatmul.f32.gmra.mxu0 %v1035
        %v1185 = vpop.f32.mrf.mxu0
        %v1186 = vadd.f32 0.0, %v1185
        %1187 = vmatmul.f32.gmra.mxu0 %v1036
        %v1188 = vpop.f32.mrf.mxu0
        %v1189 = vadd.f32 0.0, %v1188
        %1190 = vmatmul.f32.gmra.mxu0 %v1037
        %v1191 = vpop.f32.mrf.mxu0
        %v1192 = vadd.f32 0.0, %v1191
        %1193 = vmatmul.f32.gmra.mxu0 %v1038
        %v1194 = vpop.f32.mrf.mxu0
        %v1195 = vadd.f32 0.0, %v1194
        %1196 = vmatmul.f32.gmra.mxu0 %v1039
        %v1197 = vpop.f32.mrf.mxu0
        %v1198 = vadd.f32 0.0, %v1197
        %1199 = vmatmul.f32.gmra.mxu0 %v1040
        %v1200 = vpop.f32.mrf.mxu0
        %v1201 = vadd.f32 0.0, %v1200
        %1202 = vmatmul.f32.gmra.mxu0 %v1041
        %v1203 = vpop.f32.mrf.mxu0
        %v1204 = vadd.f32 0.0, %v1203
        %1205 = vmatmul.f32.gmra.mxu0 %v1042
        %v1206 = vpop.f32.mrf.mxu0
        %v1207 = vadd.f32 0.0, %v1206
        %1208 = vmatmul.f32.gmra.mxu0 %v1043
        %v1209 = vpop.f32.mrf.mxu0
        %v1210 = vadd.f32 0.0, %v1209
        %1211 = vmatmul.f32.gmra.mxu0 %v1044
        %v1212 = vpop.f32.mrf.mxu0
        %v1213 = vadd.f32 0.0, %v1212
        %1214 = vmatmul.f32.gmra.mxu0 %v1045
        %v1215 = vpop.f32.mrf.mxu0
        %v1216 = vadd.f32 0.0, %v1215
        %1217 = vmatmul.f32.gmra.mxu0 %v1046
        %v1218 = vpop.f32.mrf.mxu0
        %v1219 = vadd.f32 0.0, %v1218
        %1220 = vmatmul.f32.gmra.mxu0 %v1047
        %v1221 = vpop.f32.mrf.mxu0
        %v1222 = vadd.f32 0.0, %v1221
        %1223 = vmatmul.f32.gmra.mxu0 %v1048
        %v1224 = vpop.f32.mrf.mxu0
        %v1225 = vadd.f32 0.0, %v1224
        %1226 = vmatmul.f32.gmra.mxu0 %v1049
        %v1227 = vpop.f32.mrf.mxu0
        %v1228 = vadd.f32 0.0, %v1227
        %1229 = vmatmul.f32.gmra.mxu0 %v1050
        %v1230 = vpop.f32.mrf.mxu0
        %v1231 = vadd.f32 0.0, %v1230
        %1232 = vmatmul.f32.gmra.mxu0 %v1051
        %v1233 = vpop.f32.mrf.mxu0
        %v1234 = vadd.f32 0.0, %v1233
        %1235 = vmatmul.f32.gmra.mxu0 %v1052
        %v1236 = vpop.f32.mrf.mxu0
        %v1237 = vadd.f32 0.0, %v1236
        %1238 = vmatmul.f32.gmra.mxu0 %v1053
        %v1239 = vpop.f32.mrf.mxu0
        %v1240 = vadd.f32 0.0, %v1239
        %1241 = vmatmul.f32.gmra.mxu0 %v1054
        %v1242 = vpop.f32.mrf.mxu0
        %v1243 = vadd.f32 0.0, %v1242
        %1244 = vmatmul.f32.gmra.mxu0 %v1055
        %v1245 = vpop.f32.mrf.mxu0
        %v1246 = vadd.f32 0.0, %v1245
        %1247 = vmatmul.f32.gmra.mxu0 %v1056
        %v1248 = vpop.f32.mrf.mxu0
        %v1249 = vadd.f32 0.0, %v1248
        %1250 = vmatmul.f32.gmra.mxu0 %v1057
        %v1251 = vpop.f32.mrf.mxu0
        %v1252 = vadd.f32 0.0, %v1251
        %1253 = vmatmul.f32.gmra.mxu0 %v1058
        %v1254 = vpop.f32.mrf.mxu0
        %v1255 = vadd.f32 0.0, %v1254
        %1256 = vmatmul.f32.gmra.mxu0 %v1059
        %v1257 = vpop.f32.mrf.mxu0
        %v1258 = vadd.f32 0.0, %v1257
        %1259 = vmatmul.f32.gmra.mxu0 %v1060
        %v1260 = vpop.f32.mrf.mxu0
        %v1261 = vadd.f32 0.0, %v1260
        %1262 = vmatmul.f32.gmra.mxu0 %v1061
        %v1263 = vpop.f32.mrf.mxu0
        %v1264 = vadd.f32 0.0, %v1263
        %1265 = vmatmul.f32.gmra.mxu0 %v1062
        %v1266 = vpop.f32.mrf.mxu0
        %v1267 = vadd.f32 0.0, %v1266
        %1268 = vdwg.mxu0
        %1269 = vmatpush.msra.mxu0 %v1151
        %1270 = vmatpush.msra.mxu0 %v1150
        %1271 = vmatpush.msra.mxu0 %v1149
        %1272 = vmatpush.msra.mxu0 %v1148
        %1273 = vmatpush.msra.mxu0 %v1147
        %1274 = vmatpush.msra.mxu0 %v1146
        %1275 = vmatpush.msra.mxu0 %v1145
        %1276 = vmatpush.msra.mxu0 %v1144
        %1277 = vmatpush.msra.mxu0 %v1143
        %1278 = vmatpush.msra.mxu0 %v1142
        %1279 = vmatpush.msra.mxu0 %v1141
        %1280 = vmatpush.msra.mxu0 %v1140
        %1281 = vmatpush.msra.mxu0 %v1139
        %1282 = vmatpush.msra.mxu0 %v1138
        %1283 = vmatpush.msra.mxu0 %v1137
        %1284 = vmatpush.msra.mxu0 %v1136
        %1285 = vmatmul.f32.gmra.mxu0 %v1063
        %v1286 = vpop.f32.mrf.mxu0
        %v1287 = vadd.f32 %v1186, %v1286
        %1288 = vmatmul.f32.gmra.mxu0 %v1064
        %v1289 = vpop.f32.mrf.mxu0
        %v1290 = vadd.f32 %v1189, %v1289
        %1291 = vmatmul.f32.gmra.mxu0 %v1065
        %v1292 = vpop.f32.mrf.mxu0
        %v1293 = vadd.f32 %v1192, %v1292
        %1294 = vmatmul.f32.gmra.mxu0 %v1066
        %v1295 = vpop.f32.mrf.mxu0
        %v1296 = vadd.f32 %v1195, %v1295
        %1297 = vmatmul.f32.gmra.mxu0 %v1067
        %v1298 = vpop.f32.mrf.mxu0
        %v1299 = vadd.f32 %v1198, %v1298
        %1300 = vmatmul.f32.gmra.mxu0 %v1068
        %v1301 = vpop.f32.mrf.mxu0
        %v1302 = vadd.f32 %v1201, %v1301
        %1303 = vmatmul.f32.gmra.mxu0 %v1069
        %v1304 = vpop.f32.mrf.mxu0
        %v1305 = vadd.f32 %v1204, %v1304
        %1306 = vmatmul.f32.gmra.mxu0 %v1070
        %v1307 = vpop.f32.mrf.mxu0
        %v1308 = vadd.f32 %v1207, %v1307
        %1309 = vmatmul.f32.gmra.mxu0 %v1071
        %v1310 = vpop.f32.mrf.mxu0
        %v1311 = vadd.f32 %v1210, %v1310
        %1312 = vmatmul.f32.gmra.mxu0 %v1072
        %v1313 = vpop.f32.mrf.mxu0
        %v1314 = vadd.f32 %v1213, %v1313
        %1315 = vmatmul.f32.gmra.mxu0 %v1073
        %v1316 = vpop.f32.mrf.mxu0
        %v1317 = vadd.f32 %v1216, %v1316
        %1318 = vmatmul.f32.gmra.mxu0 %v1074
        %v1319 = vpop.f32.mrf.mxu0
        %v1320 = vadd.f32 %v1219, %v1319
        %1321 = vmatmul.f32.gmra.mxu0 %v1075
        %v1322 = vpop.f32.mrf.mxu0
        %v1323 = vadd.f32 %v1222, %v1322
        %1324 = vmatmul.f32.gmra.mxu0 %v1076
        %v1325 = vpop.f32.mrf.mxu0
        %v1326 = vadd.f32 %v1225, %v1325
        %1327 = vmatmul.f32.gmra.mxu0 %v1077
        %v1328 = vpop.f32.mrf.mxu0
        %v1329 = vadd.f32 %v1228, %v1328
        %1330 = vmatmul.f32.gmra.mxu0 %v1078
        %v1331 = vpop.f32.mrf.mxu0
        %v1332 = vadd.f32 %v1231, %v1331
        %1333 = vmatmul.f32.gmra.mxu0 %v1079
        %v1334 = vpop.f32.mrf.mxu0
        %v1335 = vadd.f32 %v1234, %v1334
        %1336 = vmatmul.f32.gmra.mxu0 %v1080
        %v1337 = vpop.f32.mrf.mxu0
        %v1338 = vadd.f32 %v1237, %v1337
        %1339 = vmatmul.f32.gmra.mxu0 %v1081
        %v1340 = vpop.f32.mrf.mxu0
        %v1341 = vadd.f32 %v1240, %v1340
        %1342 = vmatmul.f32.gmra.mxu0 %v1082
        %v1343 = vpop.f32.mrf.mxu0
        %v1344 = vadd.f32 %v1243, %v1343
        %1345 = vmatmul.f32.gmra.mxu0 %v1083
        %v1346 = vpop.f32.mrf.mxu0
        %v1347 = vadd.f32 %v1246, %v1346
        %1348 = vmatmul.f32.gmra.mxu0 %v1084
        %v1349 = vpop.f32.mrf.mxu0
        %v1350 = vadd.f32 %v1249, %v1349
        %1351 = vmatmul.f32.gmra.mxu0 %v1085
        %v1352 = vpop.f32.mrf.mxu0
        %v1353 = vadd.f32 %v1252, %v1352
        %1354 = vmatmul.f32.gmra.mxu0 %v1086
        %v1355 = vpop.f32.mrf.mxu0
        %v1356 = vadd.f32 %v1255, %v1355
        %1357 = vmatmul.f32.gmra.mxu0 %v1087
        %v1358 = vpop.f32.mrf.mxu0
        %v1359 = vadd.f32 %v1258, %v1358
        %1360 = vmatmul.f32.gmra.mxu0 %v1088
        %v1361 = vpop.f32.mrf.mxu0
        %v1362 = vadd.f32 %v1261, %v1361
        %1363 = vmatmul.f32.gmra.mxu0 %v1089
        %v1364 = vpop.f32.mrf.mxu0
        %v1365 = vadd.f32 %v1264, %v1364
        %1366 = vmatmul.f32.gmra.mxu0 %v1090
        %v1367 = vpop.f32.mrf.mxu0
        %v1368 = vadd.f32 %v1267, %v1367
        %1369 = vdwg.mxu0
        %1370 = vmatpush.msra.mxu0 %v1167
        %1371 = vmatpush.msra.mxu0 %v1166
        %1372 = vmatpush.msra.mxu0 %v1165
        %1373 = vmatpush.msra.mxu0 %v1164
        %1374 = vmatpush.msra.mxu0 %v1163
        %1375 = vmatpush.msra.mxu0 %v1162
        %1376 = vmatpush.msra.mxu0 %v1161
        %1377 = vmatpush.msra.mxu0 %v1160
        %1378 = vmatpush.msra.mxu0 %v1159
        %1379 = vmatpush.msra.mxu0 %v1158
        %1380 = vmatpush.msra.mxu0 %v1157
        %1381 = vmatpush.msra.mxu0 %v1156
        %1382 = vmatpush.msra.mxu0 %v1155
        %1383 = vmatpush.msra.mxu0 %v1154
        %1384 = vmatpush.msra.mxu0 %v1153
        %1385 = vmatpush.msra.mxu0 %v1152
        %1386 = vmatmul.f32.gmra.mxu0 %v1091
        %v1387 = vpop.f32.mrf.mxu0
        %v1388 = vadd.f32 %v1287, %v1387
        %1389 = vmatmul.f32.gmra.mxu0 %v1092
        %v1390 = vpop.f32.mrf.mxu0
        %v1391 = vadd.f32 %v1290, %v1390
        %1392 = vmatmul.f32.gmra.mxu0 %v1093
        %v1393 = vpop.f32.mrf.mxu0
        %v1394 = vadd.f32 %v1293, %v1393
        %1395 = vmatmul.f32.gmra.mxu0 %v1094
        %v1396 = vpop.f32.mrf.mxu0
        %v1397 = vadd.f32 %v1296, %v1396
        %1398 = vmatmul.f32.gmra.mxu0 %v1095
        %v1399 = vpop.f32.mrf.mxu0
        %v1400 = vadd.f32 %v1299, %v1399
        %1401 = vmatmul.f32.gmra.mxu0 %v1096
        %v1402 = vpop.f32.mrf.mxu0
        %v1403 = vadd.f32 %v1302, %v1402
        %1404 = vmatmul.f32.gmra.mxu0 %v1097
        %v1405 = vpop.f32.mrf.mxu0
        %v1406 = vadd.f32 %v1305, %v1405
        %1407 = vmatmul.f32.gmra.mxu0 %v1098
        %v1408 = vpop.f32.mrf.mxu0
        %v1409 = vadd.f32 %v1308, %v1408
        %1410 = vmatmul.f32.gmra.mxu0 %v1099
        %v1411 = vpop.f32.mrf.mxu0
        %v1412 = vadd.f32 %v1311, %v1411
        %1413 = vmatmul.f32.gmra.mxu0 %v1100
        %v1414 = vpop.f32.mrf.mxu0
        %v1415 = vadd.f32 %v1314, %v1414
        %1416 = vmatmul.f32.gmra.mxu0 %v1101
        %v1417 = vpop.f32.mrf.mxu0
        %v1418 = vadd.f32 %v1317, %v1417
        %1419 = vmatmul.f32.gmra.mxu0 %v1102
        %v1420 = vpop.f32.mrf.mxu0
        %v1421 = vadd.f32 %v1320, %v1420
        %1422 = vmatmul.f32.gmra.mxu0 %v1103
        %v1423 = vpop.f32.mrf.mxu0
        %v1424 = vadd.f32 %v1323, %v1423
        %1425 = vmatmul.f32.gmra.mxu0 %v1104
        %v1426 = vpop.f32.mrf.mxu0
        %v1427 = vadd.f32 %v1326, %v1426
        %1428 = vmatmul.f32.gmra.mxu0 %v1105
        %v1429 = vpop.f32.mrf.mxu0
        %v1430 = vadd.f32 %v1329, %v1429
        %1431 = vmatmul.f32.gmra.mxu0 %v1106
        %v1432 = vpop.f32.mrf.mxu0
        %v1433 = vadd.f32 %v1332, %v1432
        %1434 = vmatmul.f32.gmra.mxu0 %v1107
        %v1435 = vpop.f32.mrf.mxu0
        %v1436 = vadd.f32 %v1335, %v1435
        %1437 = vmatmul.f32.gmra.mxu0 %v1108
        %v1438 = vpop.f32.mrf.mxu0
        %v1439 = vadd.f32 %v1338, %v1438
        %1440 = vmatmul.f32.gmra.mxu0 %v1109
        %v1441 = vpop.f32.mrf.mxu0
        %v1442 = vadd.f32 %v1341, %v1441
        %1443 = vmatmul.f32.gmra.mxu0 %v1110
        %v1444 = vpop.f32.mrf.mxu0
        %v1445 = vadd.f32 %v1344, %v1444
        %1446 = vmatmul.f32.gmra.mxu0 %v1111
        %v1447 = vpop.f32.mrf.mxu0
        %v1448 = vadd.f32 %v1347, %v1447
        %1449 = vmatmul.f32.gmra.mxu0 %v1112
        %v1450 = vpop.f32.mrf.mxu0
        %v1451 = vadd.f32 %v1350, %v1450
        %1452 = vmatmul.f32.gmra.mxu0 %v1113
        %v1453 = vpop.f32.mrf.mxu0
        %v1454 = vadd.f32 %v1353, %v1453
        %1455 = vmatmul.f32.gmra.mxu0 %v1114
        %v1456 = vpop.f32.mrf.mxu0
        %v1457 = vadd.f32 %v1356, %v1456
        %1458 = vmatmul.f32.gmra.mxu0 %v1115
        %v1459 = vpop.f32.mrf.mxu0
        %v1460 = vadd.f32 %v1359, %v1459
        %1461 = vmatmul.f32.gmra.mxu0 %v1116
        %v1462 = vpop.f32.mrf.mxu0
        %v1463 = vadd.f32 %v1362, %v1462
        %1464 = vmatmul.f32.gmra.mxu0 %v1117
        %v1465 = vpop.f32.mrf.mxu0
        %v1466 = vadd.f32 %v1365, %v1465
        %1467 = vmatmul.f32.gmra.mxu0 %v1118
        %v1468 = vpop.f32.mrf.mxu0
        %v1469 = vadd.f32 %v1368, %v1468
        %1470 = vdwg.mxu0
        %v1471 = vadd.f32 %v952, %v1388
        %v1472 = vadd.f32 %v955, %v1391
        %v1473 = vadd.f32 %v958, %v1394
        %v1474 = vadd.f32 %v961, %v1397
        %v1475 = vadd.f32 %v964, %v1400
        %v1476 = vadd.f32 %v967, %v1403
        %v1477 = vadd.f32 %v970, %v1406
        %v1478 = vadd.f32 %v973, %v1409
        %v1479 = vadd.f32 %v976, %v1412
        %v1480 = vadd.f32 %v979, %v1415
        %v1481 = vadd.f32 %v982, %v1418
        %v1482 = vadd.f32 %v985, %v1421
        %v1483 = vadd.f32 %v988, %v1424
        %v1484 = vadd.f32 %v991, %v1427
        %v1485 = vadd.f32 %v994, %v1430
        %v1486 = vadd.f32 %v997, %v1433
        %v1487 = vadd.f32 %v1000, %v1436
        %v1488 = vadd.f32 %v1003, %v1439
        %v1489 = vadd.f32 %v1006, %v1442
        %v1490 = vadd.f32 %v1009, %v1445
        %v1491 = vadd.f32 %v1012, %v1448
        %v1492 = vadd.f32 %v1015, %v1451
        %v1493 = vadd.f32 %v1018, %v1454
        %v1494 = vadd.f32 %v1021, %v1457
        %v1495 = vadd.f32 %v1024, %v1460
        %v1496 = vadd.f32 %v1027, %v1463
        %v1497 = vadd.f32 %v1030, %v1466
        %v1498 = vadd.f32 %v1033, %v1469
        %v1499 = vmax.f32 %v1471, 0.0
        %v1500 = vmax.f32 %v1472, 0.0
        %v1501 = vmax.f32 %v1473, 0.0
        %v1502 = vmax.f32 %v1474, 0.0
        %v1503 = vmax.f32 %v1475, 0.0
        %v1504 = vmax.f32 %v1476, 0.0
        %v1505 = vmax.f32 %v1477, 0.0
        %v1506 = vmax.f32 %v1478, 0.0
        %v1507 = vmax.f32 %v1479, 0.0
        %v1508 = vmax.f32 %v1480, 0.0
        %v1509 = vmax.f32 %v1481, 0.0
        %v1510 = vmax.f32 %v1482, 0.0
        %v1511 = vmax.f32 %v1483, 0.0
        %v1512 = vmax.f32 %v1484, 0.0
        %v1513 = vmax.f32 %v1485, 0.0
        %v1514 = vmax.f32 %v1486, 0.0
        %v1515 = vmax.f32 %v1487, 0.0
        %v1516 = vmax.f32 %v1488, 0.0
        %v1517 = vmax.f32 %v1489, 0.0
        %v1518 = vmax.f32 %v1490, 0.0
        %v1519 = vmax.f32 %v1491, 0.0
        %v1520 = vmax.f32 %v1492, 0.0
        %v1521 = vmax.f32 %v1493, 0.0
        %v1522 = vmax.f32 %v1494, 0.0
        %v1523 = vmax.f32 %v1495, 0.0
        %v1524 = vmax.f32 %v1496, 0.0
        %v1525 = vmax.f32 %v1497, 0.0
        %v1526 = vmax.f32 %v1498, 0.0
        %1527 = vst [vmem:[#allocation3] sm:$0xff] %v1499
        %1528 = vst [vmem:[#allocation3 + $0x8] sm:$0xff] %v1500
        %1529 = vst [vmem:[#allocation3 + $0x10] sm:$0xff] %v1501
        %1530 = vst [vmem:[#allocation3 + $0x18] sm:$0xff] %v1502
        %1531 = vst [vmem:[#allocation3 + $0x20] sm:$0xff] %v1503
        %1532 = vst [vmem:[#allocation3 + $0x28] sm:$0xff] %v1504
        %1533 = vst [vmem:[#allocation3 + $0x30] sm:$0xff] %v1505
        %1534 = vst [vmem:[#allocation3 + $0x38] sm:$0xff] %v1506
        %1535 = vst [vmem:[#allocation3 + $0x40] sm:$0xff] %v1507
        %1536 = vst [vmem:[#allocation3 + $0x48] sm:$0xff] %v1508
        %1537 = vst [vmem:[#allocation3 + $0x50] sm:$0xff] %v1509
        %1538 = vst [vmem:[#allocation3 + $0x58] sm:$0xff] %v1510
        %1539 = vst [vmem:[#allocation3 + $0x60] sm:$0xff] %v1511
        %1540 = vst [vmem:[#allocation3 + $0x68] sm:$0xff] %v1512
        %1541 = vst [vmem:[#allocation3 + $0x70] sm:$0xff] %v1513
        %1542 = vst [vmem:[#allocation3 + $0x78] sm:$0xff] %v1514
        %1543 = vst [vmem:[#allocation3 + $0x80] sm:$0xff] %v1515
        %1544 = vst [vmem:[#allocation3 + $0x88] sm:$0xff] %v1516
        %1545 = vst [vmem:[#allocation3 + $0x90] sm:$0xff] %v1517
        %1546 = vst [vmem:[#allocation3 + $0x98] sm:$0xff] %v1518
        %1547 = vst [vmem:[#allocation3 + $0xa0] sm:$0xff] %v1519
        %1548 = vst [vmem:[#allocation3 + $0xa8] sm:$0xff] %v1520
        %1549 = vst [vmem:[#allocation3 + $0xb0] sm:$0xff] %v1521
        %1550 = vst [vmem:[#allocation3 + $0xb8] sm:$0xff] %v1522
        %1551 = vst [vmem:[#allocation3 + $0xc0] sm:$0xff] %v1523
        %1552 = vst [vmem:[#allocation3 + $0xc8] sm:$0xff] %v1524
        %1553 = vst [vmem:[#allocation3 + $0xd0] sm:$0xff] %v1525
        %1554 = vst [vmem:[#allocation3 + $0xd8] sm:$0xff] %v1526
        %v1555 = vld [vmem:[#allocation3] sm:$0xff]
        %v1556 = vld [vmem:[#allocation3 + $0x8] sm:$0xff]
        %v1557 = vld [vmem:[#allocation3 + $0x10] sm:$0xff]
        %v1558 = vld [vmem:[#allocation3 + $0x18] sm:$0xff]
        %v1559 = vld [vmem:[#allocation3 + $0x20] sm:$0xff]
        %v1560 = vld [vmem:[#allocation3 + $0x28] sm:$0xff]
        %v1561 = vld [vmem:[#allocation3 + $0x30] sm:$0xff]
        %v1562 = vld [vmem:[#allocation3 + $0x38] sm:$0xff]
        %v1563 = vld [vmem:[#allocation3 + $0x40] sm:$0xff]
        %v1564 = vld [vmem:[#allocation3 + $0x48] sm:$0xff]
        %v1565 = vld [vmem:[#allocation3 + $0x50] sm:$0xff]
        %v1566 = vld [vmem:[#allocation3 + $0x58] sm:$0xff]
        %v1567 = vld [vmem:[#allocation3 + $0x60] sm:$0xff]
        %v1568 = vld [vmem:[#allocation3 + $0x68] sm:$0xff]
        %v1569 = vld [vmem:[#allocation3 + $0x70] sm:$0xff]
        %v1570 = vld [vmem:[#allocation3 + $0x78] sm:$0xff]
        %v1571 = vld [vmem:[#allocation3 + $0x80] sm:$0xff]
        %v1572 = vld [vmem:[#allocation3 + $0x88] sm:$0xff]
        %v1573 = vld [vmem:[#allocation3 + $0x90] sm:$0xff]
        %v1574 = vld [vmem:[#allocation3 + $0x98] sm:$0xff]
        %v1575 = vld [vmem:[#allocation3 + $0xa0] sm:$0xff]
        %v1576 = vld [vmem:[#allocation3 + $0xa8] sm:$0xff]
        %v1577 = vld [vmem:[#allocation3 + $0xb0] sm:$0xff]
        %v1578 = vld [vmem:[#allocation3 + $0xb8] sm:$0xff]
        %v1579 = vld [vmem:[#allocation3 + $0x1] sm:$0xff]
        %v1580 = vld [vmem:[#allocation3 + $0x9] sm:$0xff]
        %v1581 = vld [vmem:[#allocation3 + $0x11] sm:$0xff]
        %v1582 = vld [vmem:[#allocation3 + $0x19] sm:$0xff]
        %v1583 = vld [vmem:[#allocation3 + $0x21] sm:$0xff]
        %v1584 = vld [vmem:[#allocation3 + $0x29] sm:$0xff]
        %v1585 = vld [vmem:[#allocation3 + $0x31] sm:$0xff]
        %v1586 = vld [vmem:[#allocation3 + $0x39] sm:$0xff]
        %v1587 = vld [vmem:[#allocation3 + $0x41] sm:$0xff]
        %v1588 = vld [vmem:[#allocation3 + $0x49] sm:$0xff]
        %v1589 = vld [vmem:[#allocation3 + $0x51] sm:$0xff]
        %v1590 = vld [vmem:[#allocation3 + $0x59] sm:$0xff]
        %v1591 = vld [vmem:[#allocation3 + $0x61] sm:$0xff]
        %v1592 = vld [vmem:[#allocation3 + $0x69] sm:$0xff]
        %v1593 = vld [vmem:[#allocation3 + $0x71] sm:$0xff]
        %v1594 = vld [vmem:[#allocation3 + $0x79] sm:$0xff]
        %v1595 = vld [vmem:[#allocation3 + $0x81] sm:$0xff]
        %v1596 = vld [vmem:[#allocation3 + $0x89] sm:$0xff]
        %v1597 = vld [vmem:[#allocation3 + $0x91] sm:$0xff]
        %v1598 = vld [vmem:[#allocation3 + $0x99] sm:$0xff]
        %v1599 = vld [vmem:[#allocation3 + $0xa1] sm:$0xff]
        %v1600 = vld [vmem:[#allocation3 + $0xa9] sm:$0xff]
        %v1601 = vld [vmem:[#allocation3 + $0xb1] sm:$0xff]
        %v1602 = vld [vmem:[#allocation3 + $0xb9] sm:$0xff]
        %v1603 = vld [vmem:[#allocation3 + $0x2] sm:$0xff]
        %v1604 = vld [vmem:[#allocation3 + $0xa] sm:$0xff]
        %v1605 = vld [vmem:[#allocation3 + $0x12] sm:$0xff]
        %v1606 = vld [vmem:[#allocation3 + $0x1a] sm:$0xff]
        %v1607 = vld [vmem:[#allocation3 + $0x22] sm:$0xff]
        %v1608 = vld [vmem:[#allocation3 + $0x2a] sm:$0xff]
        %v1609 = vld [vmem:[#allocation3 + $0x32] sm:$0xff]
        %v1610 = vld [vmem:[#allocation3 + $0x3a] sm:$0xff]
        %v1611 = vld [vmem:[#allocation3 + $0x42] sm:$0xff]
        %v1612 = vld [vmem:[#allocation3 + $0x4a] sm:$0xff]
        %v1613 = vld [vmem:[#allocation3 + $0x52] sm:$0xff]
        %v1614 = vld [vmem:[#allocation3 + $0x5a] sm:$0xff]
        %v1615 = vld [vmem:[#allocation3 + $0x62] sm:$0xff]
        %v1616 = vld [vmem:[#allocation3 + $0x6a] sm:$0xff]
        %v1617 = vld [vmem:[#allocation3 + $0x72] sm:$0xff]
        %v1618 = vld [vmem:[#allocation3 + $0x7a] sm:$0xff]
        %v1619 = vld [vmem:[#allocation3 + $0x82] sm:$0xff]
        %v1620 = vld [vmem:[#allocation3 + $0x8a] sm:$0xff]
        %v1621 = vld [vmem:[#allocation3 + $0x92] sm:$0xff]
        %v1622 = vld [vmem:[#allocation3 + $0x9a] sm:$0xff]
        %v1623 = vld [vmem:[#allocation3 + $0xa2] sm:$0xff]
        %v1624 = vld [vmem:[#allocation3 + $0xaa] sm:$0xff]
        %v1625 = vld [vmem:[#allocation3 + $0xb2] sm:$0xff]
        %v1626 = vld [vmem:[#allocation3 + $0xba] sm:$0xff]
        %v1627 = vld [vmem:[#allocation8] sm:$0xff]
        %v1628 = vld [vmem:[#allocation8 + $0x8] sm:$0xff]
        %v1629 = vld [vmem:[#allocation8 + $0x10] sm:$0xff]
        %v1630 = vld [vmem:[#allocation8 + $0x18] sm:$0xff]
        %v1631 = vld [vmem:[#allocation8 + $0x20] sm:$0xff]
        %v1632 = vld [vmem:[#allocation8 + $0x28] sm:$0xff]
        %v1633 = vld [vmem:[#allocation8 + $0x30] sm:$0xff]
        %v1634 = vld [vmem:[#allocation8 + $0x38] sm:$0xff]
        %v1635 = vld [vmem:[#allocation8 + $0x40] sm:$0xff]
        %v1636 = vld [vmem:[#allocation8 + $0x48] sm:$0xff]
        %v1637 = vld [vmem:[#allocation8 + $0x50] sm:$0xff]
        %v1638 = vld [vmem:[#allocation8 + $0x58] sm:$0xff]
        %v1639 = vld [vmem:[#allocation8 + $0x60] sm:$0xff]
        %v1640 = vld [vmem:[#allocation8 + $0x68] sm:$0xff]
        %v1641 = vld [vmem:[#allocation8 + $0x70] sm:$0xff]
        %v1642 = vld [vmem:[#allocation8 + $0x78] sm:$0xff]
        %v1643 = vld [vmem:[#allocation8 + $0x80] sm:$0xff]
        %v1644 = vld [vmem:[#allocation8 + $0x88] sm:$0xff]
        %v1645 = vld [vmem:[#allocation8 + $0x90] sm:$0xff]
        %v1646 = vld [vmem:[#allocation8 + $0x98] sm:$0xff]
        %v1647 = vld [vmem:[#allocation8 + $0xa0] sm:$0xff]
        %v1648 = vld [vmem:[#allocation8 + $0xa8] sm:$0xff]
        %v1649 = vld [vmem:[#allocation8 + $0xb0] sm:$0xff]
        %v1650 = vld [vmem:[#allocation8 + $0xb8] sm:$0xff]
        %v1651 = vld [vmem:[#allocation8 + $0xc0] sm:$0xff]
        %v1652 = vld [vmem:[#allocation8 + $0xc8] sm:$0xff]
        %v1653 = vld [vmem:[#allocation8 + $0xd0] sm:$0xff]
        %v1654 = vld [vmem:[#allocation8 + $0xd8] sm:$0xff]
        %v1655 = vld [vmem:[#allocation8 + $0xe0] sm:$0xff]
        %v1656 = vld [vmem:[#allocation8 + $0xe8] sm:$0xff]
        %v1657 = vld [vmem:[#allocation8 + $0xf0] sm:$0xff]
        %v1658 = vld [vmem:[#allocation8 + $0xf8] sm:$0xff]
        %v1659 = vld [vmem:[#allocation8 + $0x100] sm:$0xff]
        %v1660 = vld [vmem:[#allocation8 + $0x108] sm:$0xff]
        %v1661 = vld [vmem:[#allocation8 + $0x110] sm:$0xff]
        %v1662 = vld [vmem:[#allocation8 + $0x118] sm:$0xff]
        %v1663 = vld [vmem:[#allocation8 + $0x120] sm:$0xff]
        %v1664 = vld [vmem:[#allocation8 + $0x128] sm:$0xff]
        %v1665 = vld [vmem:[#allocation8 + $0x130] sm:$0xff]
        %v1666 = vld [vmem:[#allocation8 + $0x138] sm:$0xff]
        %v1667 = vld [vmem:[#allocation8 + $0x140] sm:$0xff]
        %v1668 = vld [vmem:[#allocation8 + $0x148] sm:$0xff]
        %v1669 = vld [vmem:[#allocation8 + $0x150] sm:$0xff]
        %v1670 = vld [vmem:[#allocation8 + $0x158] sm:$0xff]
        %v1671 = vld [vmem:[#allocation8 + $0x160] sm:$0xff]
        %v1672 = vld [vmem:[#allocation8 + $0x168] sm:$0xff]
        %v1673 = vld [vmem:[#allocation8 + $0x170] sm:$0xff]
        %v1674 = vld [vmem:[#allocation8 + $0x178] sm:$0xff]
        %v1675 = vld [vmem:[#allocation3 + $0xc0] sm:$0xff]
        %v1676 = vld [vmem:[#allocation3 + $0xc8] sm:$0xff]
        %v1677 = vld [vmem:[#allocation3 + $0xc1] sm:$0xff]
        %v1678 = vld [vmem:[#allocation3 + $0xc9] sm:$0xff]
        %v1679 = vld [vmem:[#allocation3 + $0xc2] sm:$0xff]
        %v1680 = vld [vmem:[#allocation3 + $0xca] sm:$0xff]
        %s1681 = scalar_lea.vmem [#allocation8], 384
        %v1682 = vld [vmem:[%s1681] sm:$0xff]
        %v1683 = vld [vmem:[%s1681 + $0x8] sm:$0xff]
        %v1684 = vld [vmem:[%s1681 + $0x10] sm:$0xff]
        %v1685 = vld [vmem:[%s1681 + $0x18] sm:$0xff]
        %v1686 = vld [vmem:[%s1681 + $0x20] sm:$0xff]
        %v1687 = vld [vmem:[%s1681 + $0x28] sm:$0xff]
        %v1688 = vld [vmem:[%s1681 + $0x30] sm:$0xff]
        %v1689 = vld [vmem:[%s1681 + $0x38] sm:$0xff]
        %v1690 = vld [vmem:[%s1681 + $0x40] sm:$0xff]
        %v1691 = vld [vmem:[%s1681 + $0x48] sm:$0xff]
        %v1692 = vld [vmem:[%s1681 + $0x50] sm:$0xff]
        %v1693 = vld [vmem:[%s1681 + $0x58] sm:$0xff]
        %v1694 = vld [vmem:[%s1681 + $0x60] sm:$0xff]
        %v1695 = vld [vmem:[%s1681 + $0x68] sm:$0xff]
        %v1696 = vld [vmem:[%s1681 + $0x70] sm:$0xff]
        %v1697 = vld [vmem:[%s1681 + $0x78] sm:$0xff]
        %v1698 = vld [vmem:[%s1681 + $0x80] sm:$0xff]
        %v1699 = vld [vmem:[%s1681 + $0x88] sm:$0xff]
        %v1700 = vld [vmem:[%s1681 + $0x90] sm:$0xff]
        %v1701 = vld [vmem:[%s1681 + $0x98] sm:$0xff]
        %v1702 = vld [vmem:[%s1681 + $0xa0] sm:$0xff]
        %v1703 = vld [vmem:[%s1681 + $0xa8] sm:$0xff]
        %v1704 = vld [vmem:[%s1681 + $0xb0] sm:$0xff]
        %v1705 = vld [vmem:[%s1681 + $0xb8] sm:$0xff]
        %v1706 = vld [vmem:[%s1681 + $0xc0] sm:$0xff]
        %v1707 = vld [vmem:[%s1681 + $0xc8] sm:$0xff]
        %v1708 = vld [vmem:[%s1681 + $0xd0] sm:$0xff]
        %v1709 = vld [vmem:[%s1681 + $0xd8] sm:$0xff]
        %v1710 = vld [vmem:[%s1681 + $0xe0] sm:$0xff]
        %v1711 = vld [vmem:[%s1681 + $0xe8] sm:$0xff]
        %v1712 = vld [vmem:[%s1681 + $0xf0] sm:$0xff]
        %v1713 = vld [vmem:[%s1681 + $0xf8] sm:$0xff]
        %v1714 = vld [vmem:[%s1681 + $0x100] sm:$0xff]
        %v1715 = vld [vmem:[%s1681 + $0x108] sm:$0xff]
        %v1716 = vld [vmem:[%s1681 + $0x110] sm:$0xff]
        %v1717 = vld [vmem:[%s1681 + $0x118] sm:$0xff]
        %v1718 = vld [vmem:[%s1681 + $0x120] sm:$0xff]
        %v1719 = vld [vmem:[%s1681 + $0x128] sm:$0xff]
        %v1720 = vld [vmem:[%s1681 + $0x130] sm:$0xff]
        %v1721 = vld [vmem:[%s1681 + $0x138] sm:$0xff]
        %v1722 = vld [vmem:[%s1681 + $0x140] sm:$0xff]
        %v1723 = vld [vmem:[%s1681 + $0x148] sm:$0xff]
        %v1724 = vld [vmem:[%s1681 + $0x150] sm:$0xff]
        %v1725 = vld [vmem:[%s1681 + $0x158] sm:$0xff]
        %v1726 = vld [vmem:[%s1681 + $0x160] sm:$0xff]
        %v1727 = vld [vmem:[%s1681 + $0x168] sm:$0xff]
        %v1728 = vld [vmem:[%s1681 + $0x170] sm:$0xff]
        %v1729 = vld [vmem:[%s1681 + $0x178] sm:$0xff]
        %1730 = vmatpush.msra.mxu0 %v1697
        %1731 = vmatpush.msra.mxu0 %v1696
        %1732 = vmatpush.msra.mxu0 %v1695
        %1733 = vmatpush.msra.mxu0 %v1694
        %1734 = vmatpush.msra.mxu0 %v1693
        %1735 = vmatpush.msra.mxu0 %v1692
        %1736 = vmatpush.msra.mxu0 %v1691
        %1737 = vmatpush.msra.mxu0 %v1690
        %1738 = vmatpush.msra.mxu0 %v1689
        %1739 = vmatpush.msra.mxu0 %v1688
        %1740 = vmatpush.msra.mxu0 %v1687
        %1741 = vmatpush.msra.mxu0 %v1686
        %1742 = vmatpush.msra.mxu0 %v1685
        %1743 = vmatpush.msra.mxu0 %v1684
        %1744 = vmatpush.msra.mxu0 %v1683
        %1745 = vmatpush.msra.mxu0 %v1682
        %1746 = vmatmul.f32.gmra.mxu0 %v1557
        %v1747 = vpop.f32.mrf.mxu0
        %v1748 = vadd.f32 0.0, %v1747
        %1749 = vmatmul.f32.gmra.mxu0 %v1558
        %v1750 = vpop.f32.mrf.mxu0
        %v1751 = vadd.f32 0.0, %v1750
        %1752 = vmatmul.f32.gmra.mxu0 %v1559
        %v1753 = vpop.f32.mrf.mxu0
        %v1754 = vadd.f32 0.0, %v1753
        %1755 = vmatmul.f32.gmra.mxu0 %v1560
        %v1756 = vpop.f32.mrf.mxu0
        %v1757 = vadd.f32 0.0, %v1756
        %1758 = vmatmul.f32.gmra.mxu0 %v1561
        %v1759 = vpop.f32.mrf.mxu0
        %v1760 = vadd.f32 0.0, %v1759
        %1761 = vmatmul.f32.gmra.mxu0 %v1562
        %v1762 = vpop.f32.mrf.mxu0
        %v1763 = vadd.f32 0.0, %v1762
        %1764 = vmatmul.f32.gmra.mxu0 %v1563
        %v1765 = vpop.f32.mrf.mxu0
        %v1766 = vadd.f32 0.0, %v1765
        %1767 = vmatmul.f32.gmra.mxu0 %v1564
        %v1768 = vpop.f32.mrf.mxu0
        %v1769 = vadd.f32 0.0, %v1768
        %1770 = vmatmul.f32.gmra.mxu0 %v1565
        %v1771 = vpop.f32.mrf.mxu0
        %v1772 = vadd.f32 0.0, %v1771
        %1773 = vmatmul.f32.gmra.mxu0 %v1566
        %v1774 = vpop.f32.mrf.mxu0
        %v1775 = vadd.f32 0.0, %v1774
        %1776 = vmatmul.f32.gmra.mxu0 %v1567
        %v1777 = vpop.f32.mrf.mxu0
        %v1778 = vadd.f32 0.0, %v1777
        %1779 = vmatmul.f32.gmra.mxu0 %v1568
        %v1780 = vpop.f32.mrf.mxu0
        %v1781 = vadd.f32 0.0, %v1780
        %1782 = vmatmul.f32.gmra.mxu0 %v1569
        %v1783 = vpop.f32.mrf.mxu0
        %v1784 = vadd.f32 0.0, %v1783
        %1785 = vmatmul.f32.gmra.mxu0 %v1570
        %v1786 = vpop.f32.mrf.mxu0
        %v1787 = vadd.f32 0.0, %v1786
        %1788 = vmatmul.f32.gmra.mxu0 %v1571
        %v1789 = vpop.f32.mrf.mxu0
        %v1790 = vadd.f32 0.0, %v1789
        %1791 = vmatmul.f32.gmra.mxu0 %v1572
        %v1792 = vpop.f32.mrf.mxu0
        %v1793 = vadd.f32 0.0, %v1792
        %1794 = vmatmul.f32.gmra.mxu0 %v1573
        %v1795 = vpop.f32.mrf.mxu0
        %v1796 = vadd.f32 0.0, %v1795
        %1797 = vmatmul.f32.gmra.mxu0 %v1574
        %v1798 = vpop.f32.mrf.mxu0
        %v1799 = vadd.f32 0.0, %v1798
        %1800 = vmatmul.f32.gmra.mxu0 %v1575
        %v1801 = vpop.f32.mrf.mxu0
        %v1802 = vadd.f32 0.0, %v1801
        %1803 = vmatmul.f32.gmra.mxu0 %v1576
        %v1804 = vpop.f32.mrf.mxu0
        %v1805 = vadd.f32 0.0, %v1804
        %1806 = vmatmul.f32.gmra.mxu0 %v1577
        %v1807 = vpop.f32.mrf.mxu0
        %v1808 = vadd.f32 0.0, %v1807
        %1809 = vmatmul.f32.gmra.mxu0 %v1578
        %v1810 = vpop.f32.mrf.mxu0
        %v1811 = vadd.f32 0.0, %v1810
        %1812 = vmatmul.f32.gmra.mxu0 %v1675
        %v1813 = vpop.f32.mrf.mxu0
        %v1814 = vadd.f32 0.0, %v1813
        %1815 = vmatmul.f32.gmra.mxu0 %v1676
        %v1816 = vpop.f32.mrf.mxu0
        %v1817 = vadd.f32 0.0, %v1816
        %1818 = vdwg.mxu0
        %1819 = vmatpush.msra.mxu0 %v1713
        %1820 = vmatpush.msra.mxu0 %v1712
        %1821 = vmatpush.msra.mxu0 %v1711
        %1822 = vmatpush.msra.mxu0 %v1710
        %1823 = vmatpush.msra.mxu0 %v1709
        %1824 = vmatpush.msra.mxu0 %v1708
        %1825 = vmatpush.msra.mxu0 %v1707
        %1826 = vmatpush.msra.mxu0 %v1706
        %1827 = vmatpush.msra.mxu0 %v1705
        %1828 = vmatpush.msra.mxu0 %v1704
        %1829 = vmatpush.msra.mxu0 %v1703
        %1830 = vmatpush.msra.mxu0 %v1702
        %1831 = vmatpush.msra.mxu0 %v1701
        %1832 = vmatpush.msra.mxu0 %v1700
        %1833 = vmatpush.msra.mxu0 %v1699
        %1834 = vmatpush.msra.mxu0 %v1698
        %1835 = vmatmul.f32.gmra.mxu0 %v1581
        %v1836 = vpop.f32.mrf.mxu0
        %v1837 = vadd.f32 %v1748, %v1836
        %1838 = vmatmul.f32.gmra.mxu0 %v1582
        %v1839 = vpop.f32.mrf.mxu0
        %v1840 = vadd.f32 %v1751, %v1839
        %1841 = vmatmul.f32.gmra.mxu0 %v1583
        %v1842 = vpop.f32.mrf.mxu0
        %v1843 = vadd.f32 %v1754, %v1842
        %1844 = vmatmul.f32.gmra.mxu0 %v1584
        %v1845 = vpop.f32.mrf.mxu0
        %v1846 = vadd.f32 %v1757, %v1845
        %1847 = vmatmul.f32.gmra.mxu0 %v1585
        %v1848 = vpop.f32.mrf.mxu0
        %v1849 = vadd.f32 %v1760, %v1848
        %1850 = vmatmul.f32.gmra.mxu0 %v1586
        %v1851 = vpop.f32.mrf.mxu0
        %v1852 = vadd.f32 %v1763, %v1851
        %1853 = vmatmul.f32.gmra.mxu0 %v1587
        %v1854 = vpop.f32.mrf.mxu0
        %v1855 = vadd.f32 %v1766, %v1854
        %1856 = vmatmul.f32.gmra.mxu0 %v1588
        %v1857 = vpop.f32.mrf.mxu0
        %v1858 = vadd.f32 %v1769, %v1857
        %1859 = vmatmul.f32.gmra.mxu0 %v1589
        %v1860 = vpop.f32.mrf.mxu0
        %v1861 = vadd.f32 %v1772, %v1860
        %1862 = vmatmul.f32.gmra.mxu0 %v1590
        %v1863 = vpop.f32.mrf.mxu0
        %v1864 = vadd.f32 %v1775, %v1863
        %1865 = vmatmul.f32.gmra.mxu0 %v1591
        %v1866 = vpop.f32.mrf.mxu0
        %v1867 = vadd.f32 %v1778, %v1866
        %1868 = vmatmul.f32.gmra.mxu0 %v1592
        %v1869 = vpop.f32.mrf.mxu0
        %v1870 = vadd.f32 %v1781, %v1869
        %1871 = vmatmul.f32.gmra.mxu0 %v1593
        %v1872 = vpop.f32.mrf.mxu0
        %v1873 = vadd.f32 %v1784, %v1872
        %1874 = vmatmul.f32.gmra.mxu0 %v1594
        %v1875 = vpop.f32.mrf.mxu0
        %v1876 = vadd.f32 %v1787, %v1875
        %1877 = vmatmul.f32.gmra.mxu0 %v1595
        %v1878 = vpop.f32.mrf.mxu0
        %v1879 = vadd.f32 %v1790, %v1878
        %1880 = vmatmul.f32.gmra.mxu0 %v1596
        %v1881 = vpop.f32.mrf.mxu0
        %v1882 = vadd.f32 %v1793, %v1881
        %1883 = vmatmul.f32.gmra.mxu0 %v1597
        %v1884 = vpop.f32.mrf.mxu0
        %v1885 = vadd.f32 %v1796, %v1884
        %1886 = vmatmul.f32.gmra.mxu0 %v1598
        %v1887 = vpop.f32.mrf.mxu0
        %v1888 = vadd.f32 %v1799, %v1887
        %1889 = vmatmul.f32.gmra.mxu0 %v1599
        %v1890 = vpop.f32.mrf.mxu0
        %v1891 = vadd.f32 %v1802, %v1890
        %1892 = vmatmul.f32.gmra.mxu0 %v1600
        %v1893 = vpop.f32.mrf.mxu0
        %v1894 = vadd.f32 %v1805, %v1893
        %1895 = vmatmul.f32.gmra.mxu0 %v1601
        %v1896 = vpop.f32.mrf.mxu0
        %v1897 = vadd.f32 %v1808, %v1896
        %1898 = vmatmul.f32.gmra.mxu0 %v1602
        %v1899 = vpop.f32.mrf.mxu0
        %v1900 = vadd.f32 %v1811, %v1899
        %1901 = vmatmul.f32.gmra.mxu0 %v1677
        %v1902 = vpop.f32.mrf.mxu0
        %v1903 = vadd.f32 %v1814, %v1902
        %1904 = vmatmul.f32.gmra.mxu0 %v1678
        %v1905 = vpop.f32.mrf.mxu0
        %v1906 = vadd.f32 %v1817, %v1905
        %1907 = vdwg.mxu0
        %1908 = vmatpush.msra.mxu0 %v1729
        %1909 = vmatpush.msra.mxu0 %v1728
        %1910 = vmatpush.msra.mxu0 %v1727
        %1911 = vmatpush.msra.mxu0 %v1726
        %1912 = vmatpush.msra.mxu0 %v1725
        %1913 = vmatpush.msra.mxu0 %v1724
        %1914 = vmatpush.msra.mxu0 %v1723
        %1915 = vmatpush.msra.mxu0 %v1722
        %1916 = vmatpush.msra.mxu0 %v1721
        %1917 = vmatpush.msra.mxu0 %v1720
        %1918 = vmatpush.msra.mxu0 %v1719
        %1919 = vmatpush.msra.mxu0 %v1718
        %1920 = vmatpush.msra.mxu0 %v1717
        %1921 = vmatpush.msra.mxu0 %v1716
        %1922 = vmatpush.msra.mxu0 %v1715
        %1923 = vmatpush.msra.mxu0 %v1714
        %1924 = vmatmul.f32.gmra.mxu0 %v1605
        %v1925 = vpop.f32.mrf.mxu0
        %v1926 = vadd.f32 %v1837, %v1925
        %1927 = vmatmul.f32.gmra.mxu0 %v1606
        %v1928 = vpop.f32.mrf.mxu0
        %v1929 = vadd.f32 %v1840, %v1928
        %1930 = vmatmul.f32.gmra.mxu0 %v1607
        %v1931 = vpop.f32.mrf.mxu0
        %v1932 = vadd.f32 %v1843, %v1931
        %1933 = vmatmul.f32.gmra.mxu0 %v1608
        %v1934 = vpop.f32.mrf.mxu0
        %v1935 = vadd.f32 %v1846, %v1934
        %1936 = vmatmul.f32.gmra.mxu0 %v1609
        %v1937 = vpop.f32.mrf.mxu0
        %v1938 = vadd.f32 %v1849, %v1937
        %1939 = vmatmul.f32.gmra.mxu0 %v1610
        %v1940 = vpop.f32.mrf.mxu0
        %v1941 = vadd.f32 %v1852, %v1940
        %1942 = vmatmul.f32.gmra.mxu0 %v1611
        %v1943 = vpop.f32.mrf.mxu0
        %v1944 = vadd.f32 %v1855, %v1943
        %1945 = vmatmul.f32.gmra.mxu0 %v1612
        %v1946 = vpop.f32.mrf.mxu0
        %v1947 = vadd.f32 %v1858, %v1946
        %1948 = vmatmul.f32.gmra.mxu0 %v1613
        %v1949 = vpop.f32.mrf.mxu0
        %v1950 = vadd.f32 %v1861, %v1949
        %1951 = vmatmul.f32.gmra.mxu0 %v1614
        %v1952 = vpop.f32.mrf.mxu0
        %v1953 = vadd.f32 %v1864, %v1952
        %1954 = vmatmul.f32.gmra.mxu0 %v1615
        %v1955 = vpop.f32.mrf.mxu0
        %v1956 = vadd.f32 %v1867, %v1955
        %1957 = vmatmul.f32.gmra.mxu0 %v1616
        %v1958 = vpop.f32.mrf.mxu0
        %v1959 = vadd.f32 %v1870, %v1958
        %1960 = vmatmul.f32.gmra.mxu0 %v1617
        %v1961 = vpop.f32.mrf.mxu0
        %v1962 = vadd.f32 %v1873, %v1961
        %1963 = vmatmul.f32.gmra.mxu0 %v1618
        %v1964 = vpop.f32.mrf.mxu0
        %v1965 = vadd.f32 %v1876, %v1964
        %1966 = vmatmul.f32.gmra.mxu0 %v1619
        %v1967 = vpop.f32.mrf.mxu0
        %v1968 = vadd.f32 %v1879, %v1967
        %1969 = vmatmul.f32.gmra.mxu0 %v1620
        %v1970 = vpop.f32.mrf.mxu0
        %v1971 = vadd.f32 %v1882, %v1970
        %1972 = vmatmul.f32.gmra.mxu0 %v1621
        %v1973 = vpop.f32.mrf.mxu0
        %v1974 = vadd.f32 %v1885, %v1973
        %1975 = vmatmul.f32.gmra.mxu0 %v1622
        %v1976 = vpop.f32.mrf.mxu0
        %v1977 = vadd.f32 %v1888, %v1976
        %1978 = vmatmul.f32.gmra.mxu0 %v1623
        %v1979 = vpop.f32.mrf.mxu0
        %v1980 = vadd.f32 %v1891, %v1979
        %1981 = vmatmul.f32.gmra.mxu0 %v1624
        %v1982 = vpop.f32.mrf.mxu0
        %v1983 = vadd.f32 %v1894, %v1982
        %1984 = vmatmul.f32.gmra.mxu0 %v1625
        %v1985 = vpop.f32.mrf.mxu0
        %v1986 = vadd.f32 %v1897, %v1985
        %1987 = vmatmul.f32.gmra.mxu0 %v1626
        %v1988 = vpop.f32.mrf.mxu0
        %v1989 = vadd.f32 %v1900, %v1988
        %1990 = vmatmul.f32.gmra.mxu0 %v1679
        %v1991 = vpop.f32.mrf.mxu0
        %v1992 = vadd.f32 %v1903, %v1991
        %1993 = vmatmul.f32.gmra.mxu0 %v1680
        %v1994 = vpop.f32.mrf.mxu0
        %v1995 = vadd.f32 %v1906, %v1994
        %1996 = vdwg.mxu0
        %1997 = vmatpush.msra.mxu0 %v1642
        %1998 = vmatpush.msra.mxu0 %v1641
        %1999 = vmatpush.msra.mxu0 %v1640
        %2000 = vmatpush.msra.mxu0 %v1639
        %2001 = vmatpush.msra.mxu0 %v1638
        %2002 = vmatpush.msra.mxu0 %v1637
        %2003 = vmatpush.msra.mxu0 %v1636
        %2004 = vmatpush.msra.mxu0 %v1635
        %2005 = vmatpush.msra.mxu0 %v1634
        %2006 = vmatpush.msra.mxu0 %v1633
        %2007 = vmatpush.msra.mxu0 %v1632
        %2008 = vmatpush.msra.mxu0 %v1631
        %2009 = vmatpush.msra.mxu0 %v1630
        %2010 = vmatpush.msra.mxu0 %v1629
        %2011 = vmatpush.msra.mxu0 %v1628
        %2012 = vmatpush.msra.mxu0 %v1627
        %2013 = vmatmul.f32.gmra.mxu0 %v1555
        %v2014 = vpop.f32.mrf.mxu0
        %v2015 = vadd.f32 %v1926, %v2014
        %2016 = vmatmul.f32.gmra.mxu0 %v1556
        %v2017 = vpop.f32.mrf.mxu0
        %v2018 = vadd.f32 %v1929, %v2017
        %2019 = vmatmul.f32.gmra.mxu0 %v1557
        %v2020 = vpop.f32.mrf.mxu0
        %v2021 = vadd.f32 %v1932, %v2020
        %2022 = vmatmul.f32.gmra.mxu0 %v1558
        %v2023 = vpop.f32.mrf.mxu0
        %v2024 = vadd.f32 %v1935, %v2023
        %2025 = vmatmul.f32.gmra.mxu0 %v1559
        %v2026 = vpop.f32.mrf.mxu0
        %v2027 = vadd.f32 %v1938, %v2026
        %2028 = vmatmul.f32.gmra.mxu0 %v1560
        %v2029 = vpop.f32.mrf.mxu0
        %v2030 = vadd.f32 %v1941, %v2029
        %2031 = vmatmul.f32.gmra.mxu0 %v1561
        %v2032 = vpop.f32.mrf.mxu0
        %v2033 = vadd.f32 %v1944, %v2032
        %2034 = vmatmul.f32.gmra.mxu0 %v1562
        %v2035 = vpop.f32.mrf.mxu0
        %v2036 = vadd.f32 %v1947, %v2035
        %2037 = vmatmul.f32.gmra.mxu0 %v1563
        %v2038 = vpop.f32.mrf.mxu0
        %v2039 = vadd.f32 %v1950, %v2038
        %2040 = vmatmul.f32.gmra.mxu0 %v1564
        %v2041 = vpop.f32.mrf.mxu0
        %v2042 = vadd.f32 %v1953, %v2041
        %2043 = vmatmul.f32.gmra.mxu0 %v1565
        %v2044 = vpop.f32.mrf.mxu0
        %v2045 = vadd.f32 %v1956, %v2044
        %2046 = vmatmul.f32.gmra.mxu0 %v1566
        %v2047 = vpop.f32.mrf.mxu0
        %v2048 = vadd.f32 %v1959, %v2047
        %2049 = vmatmul.f32.gmra.mxu0 %v1567
        %v2050 = vpop.f32.mrf.mxu0
        %v2051 = vadd.f32 %v1962, %v2050
        %2052 = vmatmul.f32.gmra.mxu0 %v1568
        %v2053 = vpop.f32.mrf.mxu0
        %v2054 = vadd.f32 %v1965, %v2053
        %2055 = vmatmul.f32.gmra.mxu0 %v1569
        %v2056 = vpop.f32.mrf.mxu0
        %v2057 = vadd.f32 %v1968, %v2056
        %2058 = vmatmul.f32.gmra.mxu0 %v1570
        %v2059 = vpop.f32.mrf.mxu0
        %v2060 = vadd.f32 %v1971, %v2059
        %2061 = vmatmul.f32.gmra.mxu0 %v1571
        %v2062 = vpop.f32.mrf.mxu0
        %v2063 = vadd.f32 %v1974, %v2062
        %2064 = vmatmul.f32.gmra.mxu0 %v1572
        %v2065 = vpop.f32.mrf.mxu0
        %v2066 = vadd.f32 %v1977, %v2065
        %2067 = vmatmul.f32.gmra.mxu0 %v1573
        %v2068 = vpop.f32.mrf.mxu0
        %v2069 = vadd.f32 %v1980, %v2068
        %2070 = vmatmul.f32.gmra.mxu0 %v1574
        %v2071 = vpop.f32.mrf.mxu0
        %v2072 = vadd.f32 %v1983, %v2071
        %2073 = vmatmul.f32.gmra.mxu0 %v1575
        %v2074 = vpop.f32.mrf.mxu0
        %v2075 = vadd.f32 %v1986, %v2074
        %2076 = vmatmul.f32.gmra.mxu0 %v1576
        %v2077 = vpop.f32.mrf.mxu0
        %v2078 = vadd.f32 %v1989, %v2077
        %2079 = vmatmul.f32.gmra.mxu0 %v1577
        %v2080 = vpop.f32.mrf.mxu0
        %v2081 = vadd.f32 %v1992, %v2080
        %2082 = vmatmul.f32.gmra.mxu0 %v1578
        %v2083 = vpop.f32.mrf.mxu0
        %v2084 = vadd.f32 %v1995, %v2083
        %2085 = vdwg.mxu0
        %2086 = vmatpush.msra.mxu0 %v1658
        %2087 = vmatpush.msra.mxu0 %v1657
        %2088 = vmatpush.msra.mxu0 %v1656
        %2089 = vmatpush.msra.mxu0 %v1655
        %2090 = vmatpush.msra.mxu0 %v1654
        %2091 = vmatpush.msra.mxu0 %v1653
        %2092 = vmatpush.msra.mxu0 %v1652
        %2093 = vmatpush.msra.mxu0 %v1651
        %2094 = vmatpush.msra.mxu0 %v1650
        %2095 = vmatpush.msra.mxu0 %v1649
        %2096 = vmatpush.msra.mxu0 %v1648
        %2097 = vmatpush.msra.mxu0 %v1647
        %2098 = vmatpush.msra.mxu0 %v1646
        %2099 = vmatpush.msra.mxu0 %v1645
        %2100 = vmatpush.msra.mxu0 %v1644
        %2101 = vmatpush.msra.mxu0 %v1643
        %2102 = vmatmul.f32.gmra.mxu0 %v1579
        %v2103 = vpop.f32.mrf.mxu0
        %v2104 = vadd.f32 %v2015, %v2103
        %2105 = vmatmul.f32.gmra.mxu0 %v1580
        %v2106 = vpop.f32.mrf.mxu0
        %v2107 = vadd.f32 %v2018, %v2106
        %2108 = vmatmul.f32.gmra.mxu0 %v1581
        %v2109 = vpop.f32.mrf.mxu0
        %v2110 = vadd.f32 %v2021, %v2109
        %2111 = vmatmul.f32.gmra.mxu0 %v1582
        %v2112 = vpop.f32.mrf.mxu0
        %v2113 = vadd.f32 %v2024, %v2112
        %2114 = vmatmul.f32.gmra.mxu0 %v1583
        %v2115 = vpop.f32.mrf.mxu0
        %v2116 = vadd.f32 %v2027, %v2115
        %2117 = vmatmul.f32.gmra.mxu0 %v1584
        %v2118 = vpop.f32.mrf.mxu0
        %v2119 = vadd.f32 %v2030, %v2118
        %2120 = vmatmul.f32.gmra.mxu0 %v1585
        %v2121 = vpop.f32.mrf.mxu0
        %v2122 = vadd.f32 %v2033, %v2121
        %2123 = vmatmul.f32.gmra.mxu0 %v1586
        %v2124 = vpop.f32.mrf.mxu0
        %v2125 = vadd.f32 %v2036, %v2124
        %2126 = vmatmul.f32.gmra.mxu0 %v1587
        %v2127 = vpop.f32.mrf.mxu0
        %v2128 = vadd.f32 %v2039, %v2127
        %2129 = vmatmul.f32.gmra.mxu0 %v1588
        %v2130 = vpop.f32.mrf.mxu0
        %v2131 = vadd.f32 %v2042, %v2130
        %2132 = vmatmul.f32.gmra.mxu0 %v1589
        %v2133 = vpop.f32.mrf.mxu0
        %v2134 = vadd.f32 %v2045, %v2133
        %2135 = vmatmul.f32.gmra.mxu0 %v1590
        %v2136 = vpop.f32.mrf.mxu0
        %v2137 = vadd.f32 %v2048, %v2136
        %2138 = vmatmul.f32.gmra.mxu0 %v1591
        %v2139 = vpop.f32.mrf.mxu0
        %v2140 = vadd.f32 %v2051, %v2139
        %2141 = vmatmul.f32.gmra.mxu0 %v1592
        %v2142 = vpop.f32.mrf.mxu0
        %v2143 = vadd.f32 %v2054, %v2142
        %2144 = vmatmul.f32.gmra.mxu0 %v1593
        %v2145 = vpop.f32.mrf.mxu0
        %v2146 = vadd.f32 %v2057, %v2145
        %2147 = vmatmul.f32.gmra.mxu0 %v1594
        %v2148 = vpop.f32.mrf.mxu0
        %v2149 = vadd.f32 %v2060, %v2148
        %2150 = vmatmul.f32.gmra.mxu0 %v1595
        %v2151 = vpop.f32.mrf.mxu0
        %v2152 = vadd.f32 %v2063, %v2151
        %2153 = vmatmul.f32.gmra.mxu0 %v1596
        %v2154 = vpop.f32.mrf.mxu0
        %v2155 = vadd.f32 %v2066, %v2154
        %2156 = vmatmul.f32.gmra.mxu0 %v1597
        %v2157 = vpop.f32.mrf.mxu0
        %v2158 = vadd.f32 %v2069, %v2157
        %2159 = vmatmul.f32.gmra.mxu0 %v1598
        %v2160 = vpop.f32.mrf.mxu0
        %v2161 = vadd.f32 %v2072, %v2160
        %2162 = vmatmul.f32.gmra.mxu0 %v1599
        %v2163 = vpop.f32.mrf.mxu0
        %v2164 = vadd.f32 %v2075, %v2163
        %2165 = vmatmul.f32.gmra.mxu0 %v1600
        %v2166 = vpop.f32.mrf.mxu0
        %v2167 = vadd.f32 %v2078, %v2166
        %2168 = vmatmul.f32.gmra.mxu0 %v1601
        %v2169 = vpop.f32.mrf.mxu0
        %v2170 = vadd.f32 %v2081, %v2169
        %2171 = vmatmul.f32.gmra.mxu0 %v1602
        %v2172 = vpop.f32.mrf.mxu0
        %v2173 = vadd.f32 %v2084, %v2172
        %2174 = vdwg.mxu0
        %2175 = vmatpush.msra.mxu0 %v1674
        %2176 = vmatpush.msra.mxu0 %v1673
        %2177 = vmatpush.msra.mxu0 %v1672
        %2178 = vmatpush.msra.mxu0 %v1671
        %2179 = vmatpush.msra.mxu0 %v1670
        %2180 = vmatpush.msra.mxu0 %v1669
        %2181 = vmatpush.msra.mxu0 %v1668
        %2182 = vmatpush.msra.mxu0 %v1667
        %2183 = vmatpush.msra.mxu0 %v1666
        %2184 = vmatpush.msra.mxu0 %v1665
        %2185 = vmatpush.msra.mxu0 %v1664
        %2186 = vmatpush.msra.mxu0 %v1663
        %2187 = vmatpush.msra.mxu0 %v1662
        %2188 = vmatpush.msra.mxu0 %v1661
        %2189 = vmatpush.msra.mxu0 %v1660
        %2190 = vmatpush.msra.mxu0 %v1659
        %2191 = vmatmul.f32.gmra.mxu0 %v1603
        %v2192 = vpop.f32.mrf.mxu0
        %v2193 = vadd.f32 %v2104, %v2192
        %2194 = vmatmul.f32.gmra.mxu0 %v1604
        %v2195 = vpop.f32.mrf.mxu0
        %v2196 = vadd.f32 %v2107, %v2195
        %2197 = vmatmul.f32.gmra.mxu0 %v1605
        %v2198 = vpop.f32.mrf.mxu0
        %v2199 = vadd.f32 %v2110, %v2198
        %2200 = vmatmul.f32.gmra.mxu0 %v1606
        %v2201 = vpop.f32.mrf.mxu0
        %v2202 = vadd.f32 %v2113, %v2201
        %2203 = vmatmul.f32.gmra.mxu0 %v1607
        %v2204 = vpop.f32.mrf.mxu0
        %v2205 = vadd.f32 %v2116, %v2204
        %2206 = vmatmul.f32.gmra.mxu0 %v1608
        %v2207 = vpop.f32.mrf.mxu0
        %v2208 = vadd.f32 %v2119, %v2207
        %2209 = vmatmul.f32.gmra.mxu0 %v1609
        %v2210 = vpop.f32.mrf.mxu0
        %v2211 = vadd.f32 %v2122, %v2210
        %2212 = vmatmul.f32.gmra.mxu0 %v1610
        %v2213 = vpop.f32.mrf.mxu0
        %v2214 = vadd.f32 %v2125, %v2213
        %2215 = vmatmul.f32.gmra.mxu0 %v1611
        %v2216 = vpop.f32.mrf.mxu0
        %v2217 = vadd.f32 %v2128, %v2216
        %2218 = vmatmul.f32.gmra.mxu0 %v1612
        %v2219 = vpop.f32.mrf.mxu0
        %v2220 = vadd.f32 %v2131, %v2219
        %2221 = vmatmul.f32.gmra.mxu0 %v1613
        %v2222 = vpop.f32.mrf.mxu0
        %v2223 = vadd.f32 %v2134, %v2222
        %2224 = vmatmul.f32.gmra.mxu0 %v1614
        %v2225 = vpop.f32.mrf.mxu0
        %v2226 = vadd.f32 %v2137, %v2225
        %2227 = vmatmul.f32.gmra.mxu0 %v1615
        %v2228 = vpop.f32.mrf.mxu0
        %v2229 = vadd.f32 %v2140, %v2228
        %2230 = vmatmul.f32.gmra.mxu0 %v1616
        %v2231 = vpop.f32.mrf.mxu0
        %v2232 = vadd.f32 %v2143, %v2231
        %2233 = vmatmul.f32.gmra.mxu0 %v1617
        %v2234 = vpop.f32.mrf.mxu0
        %v2235 = vadd.f32 %v2146, %v2234
        %2236 = vmatmul.f32.gmra.mxu0 %v1618
        %v2237 = vpop.f32.mrf.mxu0
        %v2238 = vadd.f32 %v2149, %v2237
        %2239 = vmatmul.f32.gmra.mxu0 %v1619
        %v2240 = vpop.f32.mrf.mxu0
        %v2241 = vadd.f32 %v2152, %v2240
        %2242 = vmatmul.f32.gmra.mxu0 %v1620
        %v2243 = vpop.f32.mrf.mxu0
        %v2244 = vadd.f32 %v2155, %v2243
        %2245 = vmatmul.f32.gmra.mxu0 %v1621
        %v2246 = vpop.f32.mrf.mxu0
        %v2247 = vadd.f32 %v2158, %v2246
        %2248 = vmatmul.f32.gmra.mxu0 %v1622
        %v2249 = vpop.f32.mrf.mxu0
        %v2250 = vadd.f32 %v2161, %v2249
        %2251 = vmatmul.f32.gmra.mxu0 %v1623
        %v2252 = vpop.f32.mrf.mxu0
        %v2253 = vadd.f32 %v2164, %v2252
        %2254 = vmatmul.f32.gmra.mxu0 %v1624
        %v2255 = vpop.f32.mrf.mxu0
        %v2256 = vadd.f32 %v2167, %v2255
        %2257 = vmatmul.f32.gmra.mxu0 %v1625
        %v2258 = vpop.f32.mrf.mxu0
        %v2259 = vadd.f32 %v2170, %v2258
        %2260 = vmatmul.f32.gmra.mxu0 %v1626
        %v2261 = vpop.f32.mrf.mxu0
        %v2262 = vadd.f32 %v2173, %v2261
        %2263 = vdwg.mxu0
        %v2264 = vld [vmem:[#allocation3 + $0x20] sm:$0xff]
        %v2265 = vld [vmem:[#allocation3 + $0x28] sm:$0xff]
        %v2266 = vld [vmem:[#allocation3 + $0x30] sm:$0xff]
        %v2267 = vld [vmem:[#allocation3 + $0x38] sm:$0xff]
        %v2268 = vld [vmem:[#allocation3 + $0x40] sm:$0xff]
        %v2269 = vld [vmem:[#allocation3 + $0x48] sm:$0xff]
        %v2270 = vld [vmem:[#allocation3 + $0x50] sm:$0xff]
        %v2271 = vld [vmem:[#allocation3 + $0x58] sm:$0xff]
        %v2272 = vld [vmem:[#allocation3 + $0x60] sm:$0xff]
        %v2273 = vld [vmem:[#allocation3 + $0x68] sm:$0xff]
        %v2274 = vld [vmem:[#allocation3 + $0x70] sm:$0xff]
        %v2275 = vld [vmem:[#allocation3 + $0x78] sm:$0xff]
        %v2276 = vld [vmem:[#allocation3 + $0x80] sm:$0xff]
        %v2277 = vld [vmem:[#allocation3 + $0x88] sm:$0xff]
        %v2278 = vld [vmem:[#allocation3 + $0x90] sm:$0xff]
        %v2279 = vld [vmem:[#allocation3 + $0x98] sm:$0xff]
        %v2280 = vld [vmem:[#allocation3 + $0xa0] sm:$0xff]
        %v2281 = vld [vmem:[#allocation3 + $0xa8] sm:$0xff]
        %v2282 = vld [vmem:[#allocation3 + $0xb0] sm:$0xff]
        %v2283 = vld [vmem:[#allocation3 + $0xb8] sm:$0xff]
        %v2284 = vld [vmem:[#allocation3 + $0xc0] sm:$0xff]
        %v2285 = vld [vmem:[#allocation3 + $0xc8] sm:$0xff]
        %v2286 = vld [vmem:[#allocation3 + $0xd0] sm:$0xff]
        %v2287 = vld [vmem:[#allocation3 + $0xd8] sm:$0xff]
        %v2288 = vld [vmem:[#allocation3 + $0x21] sm:$0xff]
        %v2289 = vld [vmem:[#allocation3 + $0x29] sm:$0xff]
        %v2290 = vld [vmem:[#allocation3 + $0x31] sm:$0xff]
        %v2291 = vld [vmem:[#allocation3 + $0x39] sm:$0xff]
        %v2292 = vld [vmem:[#allocation3 + $0x41] sm:$0xff]
        %v2293 = vld [vmem:[#allocation3 + $0x49] sm:$0xff]
        %v2294 = vld [vmem:[#allocation3 + $0x51] sm:$0xff]
        %v2295 = vld [vmem:[#allocation3 + $0x59] sm:$0xff]
        %v2296 = vld [vmem:[#allocation3 + $0x61] sm:$0xff]
        %v2297 = vld [vmem:[#allocation3 + $0x69] sm:$0xff]
        %v2298 = vld [vmem:[#allocation3 + $0x71] sm:$0xff]
        %v2299 = vld [vmem:[#allocation3 + $0x79] sm:$0xff]
        %v2300 = vld [vmem:[#allocation3 + $0x81] sm:$0xff]
        %v2301 = vld [vmem:[#allocation3 + $0x89] sm:$0xff]
        %v2302 = vld [vmem:[#allocation3 + $0x91] sm:$0xff]
        %v2303 = vld [vmem:[#allocation3 + $0x99] sm:$0xff]
        %v2304 = vld [vmem:[#allocation3 + $0xa1] sm:$0xff]
        %v2305 = vld [vmem:[#allocation3 + $0xa9] sm:$0xff]
        %v2306 = vld [vmem:[#allocation3 + $0xb1] sm:$0xff]
        %v2307 = vld [vmem:[#allocation3 + $0xb9] sm:$0xff]
        %v2308 = vld [vmem:[#allocation3 + $0xc1] sm:$0xff]
        %v2309 = vld [vmem:[#allocation3 + $0xc9] sm:$0xff]
        %v2310 = vld [vmem:[#allocation3 + $0xd1] sm:$0xff]
        %v2311 = vld [vmem:[#allocation3 + $0xd9] sm:$0xff]
        %v2312 = vld [vmem:[#allocation3 + $0x22] sm:$0xff]
        %v2313 = vld [vmem:[#allocation3 + $0x2a] sm:$0xff]
        %v2314 = vld [vmem:[#allocation3 + $0x32] sm:$0xff]
        %v2315 = vld [vmem:[#allocation3 + $0x3a] sm:$0xff]
        %v2316 = vld [vmem:[#allocation3 + $0x42] sm:$0xff]
        %v2317 = vld [vmem:[#allocation3 + $0x4a] sm:$0xff]
        %v2318 = vld [vmem:[#allocation3 + $0x52] sm:$0xff]
        %v2319 = vld [vmem:[#allocation3 + $0x5a] sm:$0xff]
        %v2320 = vld [vmem:[#allocation3 + $0x62] sm:$0xff]
        %v2321 = vld [vmem:[#allocation3 + $0x6a] sm:$0xff]
        %v2322 = vld [vmem:[#allocation3 + $0x72] sm:$0xff]
        %v2323 = vld [vmem:[#allocation3 + $0x7a] sm:$0xff]
        %v2324 = vld [vmem:[#allocation3 + $0x82] sm:$0xff]
        %v2325 = vld [vmem:[#allocation3 + $0x8a] sm:$0xff]
        %v2326 = vld [vmem:[#allocation3 + $0x92] sm:$0xff]
        %v2327 = vld [vmem:[#allocation3 + $0x9a] sm:$0xff]
        %v2328 = vld [vmem:[#allocation3 + $0xa2] sm:$0xff]
        %v2329 = vld [vmem:[#allocation3 + $0xaa] sm:$0xff]
        %v2330 = vld [vmem:[#allocation3 + $0xb2] sm:$0xff]
        %v2331 = vld [vmem:[#allocation3 + $0xba] sm:$0xff]
        %v2332 = vld [vmem:[#allocation3 + $0xc2] sm:$0xff]
        %v2333 = vld [vmem:[#allocation3 + $0xca] sm:$0xff]
        %v2334 = vld [vmem:[#allocation3 + $0xd2] sm:$0xff]
        %v2335 = vld [vmem:[#allocation3 + $0xda] sm:$0xff]
        %s2336 = scalar_lea.vmem [#allocation8], 768
        %v2337 = vld [vmem:[%s2336] sm:$0xff]
        %v2338 = vld [vmem:[%s2336 + $0x8] sm:$0xff]
        %v2339 = vld [vmem:[%s2336 + $0x10] sm:$0xff]
        %v2340 = vld [vmem:[%s2336 + $0x18] sm:$0xff]
        %v2341 = vld [vmem:[%s2336 + $0x20] sm:$0xff]
        %v2342 = vld [vmem:[%s2336 + $0x28] sm:$0xff]
        %v2343 = vld [vmem:[%s2336 + $0x30] sm:$0xff]
        %v2344 = vld [vmem:[%s2336 + $0x38] sm:$0xff]
        %v2345 = vld [vmem:[%s2336 + $0x40] sm:$0xff]
        %v2346 = vld [vmem:[%s2336 + $0x48] sm:$0xff]
        %v2347 = vld [vmem:[%s2336 + $0x50] sm:$0xff]
        %v2348 = vld [vmem:[%s2336 + $0x58] sm:$0xff]
        %v2349 = vld [vmem:[%s2336 + $0x60] sm:$0xff]
        %v2350 = vld [vmem:[%s2336 + $0x68] sm:$0xff]
        %v2351 = vld [vmem:[%s2336 + $0x70] sm:$0xff]
        %v2352 = vld [vmem:[%s2336 + $0x78] sm:$0xff]
        %v2353 = vld [vmem:[%s2336 + $0x80] sm:$0xff]
        %v2354 = vld [vmem:[%s2336 + $0x88] sm:$0xff]
        %v2355 = vld [vmem:[%s2336 + $0x90] sm:$0xff]
        %v2356 = vld [vmem:[%s2336 + $0x98] sm:$0xff]
        %v2357 = vld [vmem:[%s2336 + $0xa0] sm:$0xff]
        %v2358 = vld [vmem:[%s2336 + $0xa8] sm:$0xff]
        %v2359 = vld [vmem:[%s2336 + $0xb0] sm:$0xff]
        %v2360 = vld [vmem:[%s2336 + $0xb8] sm:$0xff]
        %v2361 = vld [vmem:[%s2336 + $0xc0] sm:$0xff]
        %v2362 = vld [vmem:[%s2336 + $0xc8] sm:$0xff]
        %v2363 = vld [vmem:[%s2336 + $0xd0] sm:$0xff]
        %v2364 = vld [vmem:[%s2336 + $0xd8] sm:$0xff]
        %v2365 = vld [vmem:[%s2336 + $0xe0] sm:$0xff]
        %v2366 = vld [vmem:[%s2336 + $0xe8] sm:$0xff]
        %v2367 = vld [vmem:[%s2336 + $0xf0] sm:$0xff]
        %v2368 = vld [vmem:[%s2336 + $0xf8] sm:$0xff]
        %v2369 = vld [vmem:[%s2336 + $0x100] sm:$0xff]
        %v2370 = vld [vmem:[%s2336 + $0x108] sm:$0xff]
        %v2371 = vld [vmem:[%s2336 + $0x110] sm:$0xff]
        %v2372 = vld [vmem:[%s2336 + $0x118] sm:$0xff]
        %v2373 = vld [vmem:[%s2336 + $0x120] sm:$0xff]
        %v2374 = vld [vmem:[%s2336 + $0x128] sm:$0xff]
        %v2375 = vld [vmem:[%s2336 + $0x130] sm:$0xff]
        %v2376 = vld [vmem:[%s2336 + $0x138] sm:$0xff]
        %v2377 = vld [vmem:[%s2336 + $0x140] sm:$0xff]
        %v2378 = vld [vmem:[%s2336 + $0x148] sm:$0xff]
        %v2379 = vld [vmem:[%s2336 + $0x150] sm:$0xff]
        %v2380 = vld [vmem:[%s2336 + $0x158] sm:$0xff]
        %v2381 = vld [vmem:[%s2336 + $0x160] sm:$0xff]
        %v2382 = vld [vmem:[%s2336 + $0x168] sm:$0xff]
        %v2383 = vld [vmem:[%s2336 + $0x170] sm:$0xff]
        %v2384 = vld [vmem:[%s2336 + $0x178] sm:$0xff]
        %2385 = vmatpush.msra.mxu0 %v2352
        %2386 = vmatpush.msra.mxu0 %v2351
        %2387 = vmatpush.msra.mxu0 %v2350
        %2388 = vmatpush.msra.mxu0 %v2349
        %2389 = vmatpush.msra.mxu0 %v2348
        %2390 = vmatpush.msra.mxu0 %v2347
        %2391 = vmatpush.msra.mxu0 %v2346
        %2392 = vmatpush.msra.mxu0 %v2345
        %2393 = vmatpush.msra.mxu0 %v2344
        %2394 = vmatpush.msra.mxu0 %v2343
        %2395 = vmatpush.msra.mxu0 %v2342
        %2396 = vmatpush.msra.mxu0 %v2341
        %2397 = vmatpush.msra.mxu0 %v2340
        %2398 = vmatpush.msra.mxu0 %v2339
        %2399 = vmatpush.msra.mxu0 %v2338
        %2400 = vmatpush.msra.mxu0 %v2337
        %2401 = vmatmul.f32.gmra.mxu0 %v2264
        %v2402 = vpop.f32.mrf.mxu0
        %v2403 = vadd.f32 0.0, %v2402
        %2404 = vmatmul.f32.gmra.mxu0 %v2265
        %v2405 = vpop.f32.mrf.mxu0
        %v2406 = vadd.f32 0.0, %v2405
        %2407 = vmatmul.f32.gmra.mxu0 %v2266
        %v2408 = vpop.f32.mrf.mxu0
        %v2409 = vadd.f32 0.0, %v2408
        %2410 = vmatmul.f32.gmra.mxu0 %v2267
        %v2411 = vpop.f32.mrf.mxu0
        %v2412 = vadd.f32 0.0, %v2411
        %2413 = vmatmul.f32.gmra.mxu0 %v2268
        %v2414 = vpop.f32.mrf.mxu0
        %v2415 = vadd.f32 0.0, %v2414
        %2416 = vmatmul.f32.gmra.mxu0 %v2269
        %v2417 = vpop.f32.mrf.mxu0
        %v2418 = vadd.f32 0.0, %v2417
        %2419 = vmatmul.f32.gmra.mxu0 %v2270
        %v2420 = vpop.f32.mrf.mxu0
        %v2421 = vadd.f32 0.0, %v2420
        %2422 = vmatmul.f32.gmra.mxu0 %v2271
        %v2423 = vpop.f32.mrf.mxu0
        %v2424 = vadd.f32 0.0, %v2423
        %2425 = vmatmul.f32.gmra.mxu0 %v2272
        %v2426 = vpop.f32.mrf.mxu0
        %v2427 = vadd.f32 0.0, %v2426
        %2428 = vmatmul.f32.gmra.mxu0 %v2273
        %v2429 = vpop.f32.mrf.mxu0
        %v2430 = vadd.f32 0.0, %v2429
        %2431 = vmatmul.f32.gmra.mxu0 %v2274
        %v2432 = vpop.f32.mrf.mxu0
        %v2433 = vadd.f32 0.0, %v2432
        %2434 = vmatmul.f32.gmra.mxu0 %v2275
        %v2435 = vpop.f32.mrf.mxu0
        %v2436 = vadd.f32 0.0, %v2435
        %2437 = vmatmul.f32.gmra.mxu0 %v2276
        %v2438 = vpop.f32.mrf.mxu0
        %v2439 = vadd.f32 0.0, %v2438
        %2440 = vmatmul.f32.gmra.mxu0 %v2277
        %v2441 = vpop.f32.mrf.mxu0
        %v2442 = vadd.f32 0.0, %v2441
        %2443 = vmatmul.f32.gmra.mxu0 %v2278
        %v2444 = vpop.f32.mrf.mxu0
        %v2445 = vadd.f32 0.0, %v2444
        %2446 = vmatmul.f32.gmra.mxu0 %v2279
        %v2447 = vpop.f32.mrf.mxu0
        %v2448 = vadd.f32 0.0, %v2447
        %2449 = vmatmul.f32.gmra.mxu0 %v2280
        %v2450 = vpop.f32.mrf.mxu0
        %v2451 = vadd.f32 0.0, %v2450
        %2452 = vmatmul.f32.gmra.mxu0 %v2281
        %v2453 = vpop.f32.mrf.mxu0
        %v2454 = vadd.f32 0.0, %v2453
        %2455 = vmatmul.f32.gmra.mxu0 %v2282
        %v2456 = vpop.f32.mrf.mxu0
        %v2457 = vadd.f32 0.0, %v2456
        %2458 = vmatmul.f32.gmra.mxu0 %v2283
        %v2459 = vpop.f32.mrf.mxu0
        %v2460 = vadd.f32 0.0, %v2459
        %2461 = vmatmul.f32.gmra.mxu0 %v2284
        %v2462 = vpop.f32.mrf.mxu0
        %v2463 = vadd.f32 0.0, %v2462
        %2464 = vmatmul.f32.gmra.mxu0 %v2285
        %v2465 = vpop.f32.mrf.mxu0
        %v2466 = vadd.f32 0.0, %v2465
        %2467 = vmatmul.f32.gmra.mxu0 %v2286
        %v2468 = vpop.f32.mrf.mxu0
        %v2469 = vadd.f32 0.0, %v2468
        %2470 = vmatmul.f32.gmra.mxu0 %v2287
        %v2471 = vpop.f32.mrf.mxu0
        %v2472 = vadd.f32 0.0, %v2471
        %2473 = vdwg.mxu0
        %2474 = vmatpush.msra.mxu0 %v2368
        %2475 = vmatpush.msra.mxu0 %v2367
        %2476 = vmatpush.msra.mxu0 %v2366
        %2477 = vmatpush.msra.mxu0 %v2365
        %2478 = vmatpush.msra.mxu0 %v2364
        %2479 = vmatpush.msra.mxu0 %v2363
        %2480 = vmatpush.msra.mxu0 %v2362
        %2481 = vmatpush.msra.mxu0 %v2361
        %2482 = vmatpush.msra.mxu0 %v2360
        %2483 = vmatpush.msra.mxu0 %v2359
        %2484 = vmatpush.msra.mxu0 %v2358
        %2485 = vmatpush.msra.mxu0 %v2357
        %2486 = vmatpush.msra.mxu0 %v2356
        %2487 = vmatpush.msra.mxu0 %v2355
        %2488 = vmatpush.msra.mxu0 %v2354
        %2489 = vmatpush.msra.mxu0 %v2353
        %2490 = vmatmul.f32.gmra.mxu0 %v2288
        %v2491 = vpop.f32.mrf.mxu0
        %v2492 = vadd.f32 %v2403, %v2491
        %2493 = vmatmul.f32.gmra.mxu0 %v2289
        %v2494 = vpop.f32.mrf.mxu0
        %v2495 = vadd.f32 %v2406, %v2494
        %2496 = vmatmul.f32.gmra.mxu0 %v2290
        %v2497 = vpop.f32.mrf.mxu0
        %v2498 = vadd.f32 %v2409, %v2497
        %2499 = vmatmul.f32.gmra.mxu0 %v2291
        %v2500 = vpop.f32.mrf.mxu0
        %v2501 = vadd.f32 %v2412, %v2500
        %2502 = vmatmul.f32.gmra.mxu0 %v2292
        %v2503 = vpop.f32.mrf.mxu0
        %v2504 = vadd.f32 %v2415, %v2503
        %2505 = vmatmul.f32.gmra.mxu0 %v2293
        %v2506 = vpop.f32.mrf.mxu0
        %v2507 = vadd.f32 %v2418, %v2506
        %2508 = vmatmul.f32.gmra.mxu0 %v2294
        %v2509 = vpop.f32.mrf.mxu0
        %v2510 = vadd.f32 %v2421, %v2509
        %2511 = vmatmul.f32.gmra.mxu0 %v2295
        %v2512 = vpop.f32.mrf.mxu0
        %v2513 = vadd.f32 %v2424, %v2512
        %2514 = vmatmul.f32.gmra.mxu0 %v2296
        %v2515 = vpop.f32.mrf.mxu0
        %v2516 = vadd.f32 %v2427, %v2515
        %2517 = vmatmul.f32.gmra.mxu0 %v2297
        %v2518 = vpop.f32.mrf.mxu0
        %v2519 = vadd.f32 %v2430, %v2518
        %2520 = vmatmul.f32.gmra.mxu0 %v2298
        %v2521 = vpop.f32.mrf.mxu0
        %v2522 = vadd.f32 %v2433, %v2521
        %2523 = vmatmul.f32.gmra.mxu0 %v2299
        %v2524 = vpop.f32.mrf.mxu0
        %v2525 = vadd.f32 %v2436, %v2524
        %2526 = vmatmul.f32.gmra.mxu0 %v2300
        %v2527 = vpop.f32.mrf.mxu0
        %v2528 = vadd.f32 %v2439, %v2527
        %2529 = vmatmul.f32.gmra.mxu0 %v2301
        %v2530 = vpop.f32.mrf.mxu0
        %v2531 = vadd.f32 %v2442, %v2530
        %2532 = vmatmul.f32.gmra.mxu0 %v2302
        %v2533 = vpop.f32.mrf.mxu0
        %v2534 = vadd.f32 %v2445, %v2533
        %2535 = vmatmul.f32.gmra.mxu0 %v2303
        %v2536 = vpop.f32.mrf.mxu0
        %v2537 = vadd.f32 %v2448, %v2536
        %2538 = vmatmul.f32.gmra.mxu0 %v2304
        %v2539 = vpop.f32.mrf.mxu0
        %v2540 = vadd.f32 %v2451, %v2539
        %2541 = vmatmul.f32.gmra.mxu0 %v2305
        %v2542 = vpop.f32.mrf.mxu0
        %v2543 = vadd.f32 %v2454, %v2542
        %2544 = vmatmul.f32.gmra.mxu0 %v2306
        %v2545 = vpop.f32.mrf.mxu0
        %v2546 = vadd.f32 %v2457, %v2545
        %2547 = vmatmul.f32.gmra.mxu0 %v2307
        %v2548 = vpop.f32.mrf.mxu0
        %v2549 = vadd.f32 %v2460, %v2548
        %2550 = vmatmul.f32.gmra.mxu0 %v2308
        %v2551 = vpop.f32.mrf.mxu0
        %v2552 = vadd.f32 %v2463, %v2551
        %2553 = vmatmul.f32.gmra.mxu0 %v2309
        %v2554 = vpop.f32.mrf.mxu0
        %v2555 = vadd.f32 %v2466, %v2554
        %2556 = vmatmul.f32.gmra.mxu0 %v2310
        %v2557 = vpop.f32.mrf.mxu0
        %v2558 = vadd.f32 %v2469, %v2557
        %2559 = vmatmul.f32.gmra.mxu0 %v2311
        %v2560 = vpop.f32.mrf.mxu0
        %v2561 = vadd.f32 %v2472, %v2560
        %2562 = vdwg.mxu0
        %2563 = vmatpush.msra.mxu0 %v2384
        %2564 = vmatpush.msra.mxu0 %v2383
        %2565 = vmatpush.msra.mxu0 %v2382
        %2566 = vmatpush.msra.mxu0 %v2381
        %2567 = vmatpush.msra.mxu0 %v2380
        %2568 = vmatpush.msra.mxu0 %v2379
        %2569 = vmatpush.msra.mxu0 %v2378
        %2570 = vmatpush.msra.mxu0 %v2377
        %2571 = vmatpush.msra.mxu0 %v2376
        %2572 = vmatpush.msra.mxu0 %v2375
        %2573 = vmatpush.msra.mxu0 %v2374
        %2574 = vmatpush.msra.mxu0 %v2373
        %2575 = vmatpush.msra.mxu0 %v2372
        %2576 = vmatpush.msra.mxu0 %v2371
        %2577 = vmatpush.msra.mxu0 %v2370
        %2578 = vmatpush.msra.mxu0 %v2369
        %2579 = vmatmul.f32.gmra.mxu0 %v2312
        %v2580 = vpop.f32.mrf.mxu0
        %v2581 = vadd.f32 %v2492, %v2580
        %2582 = vmatmul.f32.gmra.mxu0 %v2313
        %v2583 = vpop.f32.mrf.mxu0
        %v2584 = vadd.f32 %v2495, %v2583
        %2585 = vmatmul.f32.gmra.mxu0 %v2314
        %v2586 = vpop.f32.mrf.mxu0
        %v2587 = vadd.f32 %v2498, %v2586
        %2588 = vmatmul.f32.gmra.mxu0 %v2315
        %v2589 = vpop.f32.mrf.mxu0
        %v2590 = vadd.f32 %v2501, %v2589
        %2591 = vmatmul.f32.gmra.mxu0 %v2316
        %v2592 = vpop.f32.mrf.mxu0
        %v2593 = vadd.f32 %v2504, %v2592
        %2594 = vmatmul.f32.gmra.mxu0 %v2317
        %v2595 = vpop.f32.mrf.mxu0
        %v2596 = vadd.f32 %v2507, %v2595
        %2597 = vmatmul.f32.gmra.mxu0 %v2318
        %v2598 = vpop.f32.mrf.mxu0
        %v2599 = vadd.f32 %v2510, %v2598
        %2600 = vmatmul.f32.gmra.mxu0 %v2319
        %v2601 = vpop.f32.mrf.mxu0
        %v2602 = vadd.f32 %v2513, %v2601
        %2603 = vmatmul.f32.gmra.mxu0 %v2320
        %v2604 = vpop.f32.mrf.mxu0
        %v2605 = vadd.f32 %v2516, %v2604
        %2606 = vmatmul.f32.gmra.mxu0 %v2321
        %v2607 = vpop.f32.mrf.mxu0
        %v2608 = vadd.f32 %v2519, %v2607
        %2609 = vmatmul.f32.gmra.mxu0 %v2322
        %v2610 = vpop.f32.mrf.mxu0
        %v2611 = vadd.f32 %v2522, %v2610
        %2612 = vmatmul.f32.gmra.mxu0 %v2323
        %v2613 = vpop.f32.mrf.mxu0
        %v2614 = vadd.f32 %v2525, %v2613
        %2615 = vmatmul.f32.gmra.mxu0 %v2324
        %v2616 = vpop.f32.mrf.mxu0
        %v2617 = vadd.f32 %v2528, %v2616
        %2618 = vmatmul.f32.gmra.mxu0 %v2325
        %v2619 = vpop.f32.mrf.mxu0
        %v2620 = vadd.f32 %v2531, %v2619
        %2621 = vmatmul.f32.gmra.mxu0 %v2326
        %v2622 = vpop.f32.mrf.mxu0
        %v2623 = vadd.f32 %v2534, %v2622
        %2624 = vmatmul.f32.gmra.mxu0 %v2327
        %v2625 = vpop.f32.mrf.mxu0
        %v2626 = vadd.f32 %v2537, %v2625
        %2627 = vmatmul.f32.gmra.mxu0 %v2328
        %v2628 = vpop.f32.mrf.mxu0
        %v2629 = vadd.f32 %v2540, %v2628
        %2630 = vmatmul.f32.gmra.mxu0 %v2329
        %v2631 = vpop.f32.mrf.mxu0
        %v2632 = vadd.f32 %v2543, %v2631
        %2633 = vmatmul.f32.gmra.mxu0 %v2330
        %v2634 = vpop.f32.mrf.mxu0
        %v2635 = vadd.f32 %v2546, %v2634
        %2636 = vmatmul.f32.gmra.mxu0 %v2331
        %v2637 = vpop.f32.mrf.mxu0
        %v2638 = vadd.f32 %v2549, %v2637
        %2639 = vmatmul.f32.gmra.mxu0 %v2332
        %v2640 = vpop.f32.mrf.mxu0
        %v2641 = vadd.f32 %v2552, %v2640
        %2642 = vmatmul.f32.gmra.mxu0 %v2333
        %v2643 = vpop.f32.mrf.mxu0
        %v2644 = vadd.f32 %v2555, %v2643
        %2645 = vmatmul.f32.gmra.mxu0 %v2334
        %v2646 = vpop.f32.mrf.mxu0
        %v2647 = vadd.f32 %v2558, %v2646
        %2648 = vmatmul.f32.gmra.mxu0 %v2335
        %v2649 = vpop.f32.mrf.mxu0
        %v2650 = vadd.f32 %v2561, %v2649
        %2651 = vdwg.mxu0
        %v2652 = vadd.f32 %v2193, %v2581
        %v2653 = vadd.f32 %v2196, %v2584
        %v2654 = vadd.f32 %v2199, %v2587
        %v2655 = vadd.f32 %v2202, %v2590
        %v2656 = vadd.f32 %v2205, %v2593
        %v2657 = vadd.f32 %v2208, %v2596
        %v2658 = vadd.f32 %v2211, %v2599
        %v2659 = vadd.f32 %v2214, %v2602
        %v2660 = vadd.f32 %v2217, %v2605
        %v2661 = vadd.f32 %v2220, %v2608
        %v2662 = vadd.f32 %v2223, %v2611
        %v2663 = vadd.f32 %v2226, %v2614
        %v2664 = vadd.f32 %v2229, %v2617
        %v2665 = vadd.f32 %v2232, %v2620
        %v2666 = vadd.f32 %v2235, %v2623
        %v2667 = vadd.f32 %v2238, %v2626
        %v2668 = vadd.f32 %v2241, %v2629
        %v2669 = vadd.f32 %v2244, %v2632
        %v2670 = vadd.f32 %v2247, %v2635
        %v2671 = vadd.f32 %v2250, %v2638
        %v2672 = vadd.f32 %v2253, %v2641
        %v2673 = vadd.f32 %v2256, %v2644
        %v2674 = vadd.f32 %v2259, %v2647
        %v2675 = vadd.f32 %v2262, %v2650
        %v2676 = vmax.f32 %v2652, 0.0
        %v2677 = vmax.f32 %v2653, 0.0
        %v2678 = vmax.f32 %v2654, 0.0
        %v2679 = vmax.f32 %v2655, 0.0
        %v2680 = vmax.f32 %v2656, 0.0
        %v2681 = vmax.f32 %v2657, 0.0
        %v2682 = vmax.f32 %v2658, 0.0
        %v2683 = vmax.f32 %v2659, 0.0
        %v2684 = vmax.f32 %v2660, 0.0
        %v2685 = vmax.f32 %v2661, 0.0
        %v2686 = vmax.f32 %v2662, 0.0
        %v2687 = vmax.f32 %v2663, 0.0
        %v2688 = vmax.f32 %v2664, 0.0
        %v2689 = vmax.f32 %v2665, 0.0
        %v2690 = vmax.f32 %v2666, 0.0
        %v2691 = vmax.f32 %v2667, 0.0
        %v2692 = vmax.f32 %v2668, 0.0
        %v2693 = vmax.f32 %v2669, 0.0
        %v2694 = vmax.f32 %v2670, 0.0
        %v2695 = vmax.f32 %v2671, 0.0
        %v2696 = vmax.f32 %v2672, 0.0
        %v2697 = vmax.f32 %v2673, 0.0
        %v2698 = vmax.f32 %v2674, 0.0
        %v2699 = vmax.f32 %v2675, 0.0
        %2700 = vst [vmem:[%s170] sm:$0xff] %v2676
        %2701 = vst [vmem:[%s170 + $0x8] sm:$0xff] %v2677
        %2702 = vst [vmem:[%s170 + $0x10] sm:$0xff] %v2678
        %2703 = vst [vmem:[%s170 + $0x18] sm:$0xff] %v2679
        %2704 = vst [vmem:[%s170 + $0x20] sm:$0xff] %v2680
        %2705 = vst [vmem:[%s170 + $0x28] sm:$0xff] %v2681
        %2706 = vst [vmem:[%s170 + $0x30] sm:$0xff] %v2682
        %2707 = vst [vmem:[%s170 + $0x38] sm:$0xff] %v2683
        %2708 = vst [vmem:[%s170 + $0x40] sm:$0xff] %v2684
        %2709 = vst [vmem:[%s170 + $0x48] sm:$0xff] %v2685
        %2710 = vst [vmem:[%s170 + $0x50] sm:$0xff] %v2686
        %2711 = vst [vmem:[%s170 + $0x58] sm:$0xff] %v2687
        %2712 = vst [vmem:[%s170 + $0x60] sm:$0xff] %v2688
        %2713 = vst [vmem:[%s170 + $0x68] sm:$0xff] %v2689
        %2714 = vst [vmem:[%s170 + $0x70] sm:$0xff] %v2690
        %2715 = vst [vmem:[%s170 + $0x78] sm:$0xff] %v2691
        %2716 = vst [vmem:[%s170 + $0x80] sm:$0xff] %v2692
        %2717 = vst [vmem:[%s170 + $0x88] sm:$0xff] %v2693
        %2718 = vst [vmem:[%s170 + $0x90] sm:$0xff] %v2694
        %2719 = vst [vmem:[%s170 + $0x98] sm:$0xff] %v2695
        %2720 = vst [vmem:[%s170 + $0xa0] sm:$0xff] %v2696
        %2721 = vst [vmem:[%s170 + $0xa8] sm:$0xff] %v2697
        %2722 = vst [vmem:[%s170 + $0xb0] sm:$0xff] %v2698
        %2723 = vst [vmem:[%s170 + $0xb8] sm:$0xff] %v2699
        %s2724 = sand.u32 %s83, 1
        %s2725 = scalar_lea.sflag [#allocation7], %s2724
        %s2726 = sand.u32 %s83, 1
        %s2727 = smul.addr %s2726, 192
        %s2728 = scalar_lea.vmem [#allocation10], %s2727
        // Predicated region
        $region53: #{tpu_custom_call.1} parent=27 // pred_check
          %p2729 = pneg %p93
        $region54: #{tpu_custom_call.1} parent=27 // pred_check_branch
          %2731 = sbr.rel (%p2729) target = $region56
        $region55: #{tpu_custom_call.1} parent=27 // pred_region
          %s2732 = smul.u32 24, %s24
          %2734 = vsyncadd %s2725, 0
          %s2735 = smul.addr %s23, 24
          %s2736 = sadd.s32 %s2732, %s2735
          %s2737 = smul.addr %s2736, 8
          %s2738 = scalar_lea.hbm %s3, %s2737
          %s2739 = sshll.u32 %s2728, 4
          %s2740 = int_to_ptr.vmem [resolvable:$true] %s2739
          %s2741 = sshll.u32 %s2738, 4
          %s2742 = int_to_ptr.hbm [resolvable:$true] %s2741
          %2747 = dma.vmem_to_hbm [thread:$0]  %s2740, 3072, %s2742, %s2725, 128, 128, 8
        $region56: #{tpu_custom_call.1} parent=27 // pred_fallthru
          _
      $region28: #{tpu_custom_call.1} parent=5 // pred_fallthru
        _
      %p2748 = scmp.le.s32.totalorder 2, %s14
      // Predicated region
      $region57: #{tpu_custom_call.1} parent=5 // pred_check
        %p2749 = pneg %p2748
      $region58: #{tpu_custom_call.1} parent=5 // pred_check_branch
        %2751 = sbr.rel (%p2749) target = $region60
      $region59: #{tpu_custom_call.1} parent=5 // pred_region
        %s2752 = ssub.s32 %s14, 2
        // Predicated region
        $region61: #{tpu_custom_call.1} parent=59 // pred_check
          %p2753 = pneg %p99
        $region62: #{tpu_custom_call.1} parent=59 // pred_check_branch
          %2755 = sbr.rel (%p2753) target = $region64
        $region63: #{tpu_custom_call.1} parent=59 // pred_region
          %s2756 = sand.u32 %s84, 1
          %s2757 = scalar_lea.sflag [#allocation7], %s2756
          %s2758 = sand.u32 %s84, 1
          %s2759 = smul.addr %s2758, 192
          %s2760 = scalar_lea.vmem [#allocation10], %s2759
          %2762 = dma.done %s2757, 3072
        $region64: #{tpu_custom_call.1} parent=59 // pred_fallthru
          _
      $region60: #{tpu_custom_call.1} parent=5 // pred_fallthru
        _
    $region6: #{tpu_custom_call.1} parent=1 // loop_footer
      %s18 = sadd.s32 1, %s14
    $region7: #{tpu_custom_call.1} parent=1 // loop_footer_branch
      %13 = sbr.rel target = $region3
    $region8: #{tpu_custom_call.1} parent=1 // loop_exit
      _
    %2763 = vsyncpa [#allocation6], 1
    %s2764 = scalar_lea.sflag [#allocation6], 1
    %2765 = vsyncpa %s2764, 1
    %2766 = vsyncpa [#allocation9], 1
    %2767 = vsyncpa [#allocation7], 1
    %s2768 = scalar_lea.sflag [#allocation7], 1
    %2769 = vsyncpa %s2768, 1
  %2770 = vsyncmov [#allocation4]
  %s2771 = vpop.sfrf %2770
  %p2772 = scmp.eq.s32.totalorder %s2771, 0
  %p2773 = pneg %p2772
  %2775 = shalt.err (%p2773)
  %s2776 = scalar_lea.sflag [#allocation4], 1
  %2777 = vsyncmov %s2776
  %s2778 = vpop.sfrf %2777
  %p2779 = scmp.eq.s32.totalorder %s2778, 0
  %p2780 = pneg %p2779
  %2782 = shalt.err (%p2780)

// kernel: tpu_custom_call.1
$region0: #{tpu_custom_call.1}
  #allocation0 [shape = 'u32[]', space=smem, size = 0x4, offset = 0x4, fixed_abs, tag = 'smem constant byte address 0x4 - core index']
  #allocation1 [shape = 'u32[72,128]{1,0:T(1,128)}', space=vmem, size = 0x9000, scoped, tag = 'internal scratch']
  #allocation2 [shape = 'f32[2,272,128]{2,1,0:T(8,128)}', space=vmem, size = 0x44000, scoped, tag = 'scratch operand']
  #allocation3 [shape = 'f32[232,128]{1,0:T(8,128)}', space=vmem, size = 0x1d000, scoped, tag = 'scratch operand']
  #allocation4 [shape = 's32[2]{0}', space=sflag, size = 0x8, scoped, tag = 'scratch operand']
  #allocation11 [shape = 's32[]', space=sflag, size = 0x4, offset = 0, fixed_abs, tag = 'sflag constant byte address 0x0 - dummy sync flag']
  #allocation12 [shape = 's32[]', space=sflag, size = 0x4, offset = 0, fixed_abs, tag = 'sflag constant byte address 0x0 - dummy sync flag']
  #allocation13 [shape = 'u32[]', space=smem, size = 0x4, offset = 0x44, fixed_abs, tag = 'smem constant byte address 0x44 - assertion arg 0']
  #allocation14 [shape = 'u32[]', space=smem, size = 0x4, offset = 0x48, fixed_abs, tag = 'smem constant byte address 0x48 - assertion arg 1']
  #allocation15 [shape = 's32[]', space=sflag, size = 0x4, offset = 0, fixed_abs, tag = 'sflag constant byte address 0x0 - dummy sync flag']
  #allocation16 [shape = 's32[]', space=sflag, size = 0x4, offset = 0, fixed_abs, tag = 'sflag constant byte address 0x0 - dummy sync flag']
  %s0 = inlined_call_operand.hbm [shape: f32[2,272,128], index: 0, kind: input, shape index: {}]
  %s1 = inlined_call_operand.hbm [shape: f32[3,384,128], index: 1, kind: input, shape index: {}]
  %s2 = inlined_call_operand.hbm [shape: f32[3,384,128], index: 2, kind: input, shape index: {}]
  %s3 = inlined_call_operand.hbm [shape: f32[2,192,128], index: 3, kind: output, shape index: {}]
  %s4 = sld [smem:[#allocation0]]
  $region65: #{tpu_custom_call.1} parent=0
    _
  %s6 = ssub.s32 1, %s4
  %s7 = scalar_select 0, %s6, %s4
  $region1: #{tpu_custom_call.1} parent=0
    #allocation5 [shape = 'u8[589824]{0}', space=vmem, size = 0x90000, scoped, tag = 'input window, operand 1, single buffered']
    #allocation6 [shape = 's32[2]{0}', space=sflag, size = 0x8, scoped, tag = 'scoped memory for tpu_custom_call.1']
    #allocation7 [shape = 's32[2]{0}', space=sflag, size = 0x8, scoped, tag = 'scoped memory for tpu_custom_call.1']
    #allocation8 [shape = 'u8[589824]{0}', space=vmem, size = 0x90000, scoped, tag = 'input window, operand 2, single buffered']
    #allocation9 [shape = 's32[1]{0}', space=sflag, size = 0x4, scoped, tag = 'scoped memory for tpu_custom_call.1']
    #allocation10 [shape = 'u8[196608]{0}', space=vmem, size = 0x30000, scoped, tag = 'output window, operand 0']
    %8 = vsyncpa [#allocation6], 0
    %9 = vsyncpa [#allocation9], 0
    %10 = vsyncpa [#allocation7], 0
    %s11 = scalar_lea.sflag [#allocation7], 1
    %12 = vsyncpa %s11, 0
    loop: start=0, step=1, limit=4
    $region2: #{tpu_custom_call.1} parent=1 // loop_pre_header
      _
    $region3: #{tpu_custom_call.1} parent=1 // loop_header
      %s14 = sphi 0, %s18
      %p15 = scmp.ge.s32.totalorder %s14, 4
      %s21 = sphi 0, %s33
      %s22 = sphi 0, %s29
      %s23 = sphi 0, %s21
      %s24 = sphi 0, %s22
      %s25 = sphi 0, %s23
      %s26 = sphi 0, %s24
      %s34 = sphi 0, %s34
      %s36 = sphi 0, %s34
      %s37 = sphi 0, %s36
      %s51 = sphi 0, %s37
      %s55 = sphi 0, %s55
      %s57 = sphi 0, %s55
      %s58 = sphi 0, %s57
      %s72 = sphi 0, %s58
      %s80 = sphi 0, %s82
      %s83 = sphi 0, %s80
      %s84 = sphi 0, %s83
      %s100 = sphi 0, %s84
    $region4: #{tpu_custom_call.1} parent=1 // loop_header_branch
      %17 = sbr.rel (%p15) target = $region8
    $region5: #{tpu_custom_call.1} parent=1 // loop_body
      %s19 = ssub.s32 %s14, 1
      %s20 = ssub.s32 %s14, 2
      %s27 = sadd.s32 1, %s22
      %p28 = scmp.ge.s32.totalorder %s27, 1
      %s29 = scalar_select %p28, 0, %s27
      %s30 = sadd.s32 1, %s21
      %s31 = scalar_select %p28, %s30, %s21
      %p32 = scmp.ge.s32.totalorder %s31, 2
      %s33 = scalar_select %p32, 0, %s31
      %s35 = sadd.s32 %s34, 1
      %p38 = scmp.eq.s32.totalorder %s14, 1
      %p39 = scmp.ne.s32.totalorder %s34, %s36
      %p40 = scmp.eq.s32.totalorder %s14, 0
      %p41 = por %p39, %p40
      %p42 = scmp.ne.s32.totalorder %s34, %s36
      %p43 = scmp.eq.s32.totalorder %s19, 1
      %p44 = por %p42, %p43
      %p45 = scmp.ne.s32.totalorder %s36, %s37
      %p46 = scmp.eq.s32.totalorder %s19, 0
      %p47 = por %p45, %p46
      %p48 = scmp.ne.s32.totalorder %s36, %s37
      %p49 = scmp.eq.s32.totalorder %s20, 1
      %p50 = por %p48, %p49
      %p52 = scmp.ne.s32.totalorder %s37, %s51
      %p53 = scmp.eq.s32.totalorder %s20, 0
      %p54 = por %p52, %p53
      %s56 = sadd.s32 %s55, 1
      %p59 = scmp.eq.s32.totalorder %s14, 1
      %p60 = scmp.ne.s32.totalorder %s55, %s57
      %p61 = scmp.eq.s32.totalorder %s14, 0
      %p62 = por %p60, %p61
      %p63 = scmp.ne.s32.totalorder %s55, %s57
      %p64 = scmp.eq.s32.totalorder %s19, 1
      %p65 = por %p63, %p64
      %p66 = scmp.ne.s32.totalorder %s57, %s58
      %p67 = scmp.eq.s32.totalorder %s19, 0
      %p68 = por %p66, %p67
      %p69 = scmp.ne.s32.totalorder %s57, %s58
      %p70 = scmp.eq.s32.totalorder %s20, 1
      %p71 = por %p69, %p70
      %p73 = scmp.ne.s32.totalorder %s58, %s72
      %p74 = scmp.eq.s32.totalorder %s20, 0
      %p75 = por %p73, %p74
      %s76 = ssub.s32 %s21, %s33
      %s77 = ssub.s32 %s22, %s29
      %s78 = sor.u32 %s76, %s77
      %p79 = scmp.eq.s32.totalorder %s78, 0
      %s81 = sadd.s32 %s80, 1
      %s82 = scalar_select %p79, %s80, %s81
      %p85 = pneg %p79
      %p86 = scmp.eq.s32.totalorder %s14, 1
      %p87 = por %p85, %p86
      %p88 = scmp.ne.s32.totalorder %s80, %s83
      %p89 = scmp.eq.s32.totalorder %s14, 0
      %p90 = por %p88, %p89
      %p91 = scmp.ne.s32.totalorder %s80, %s83
      %p92 = scmp.eq.s32.totalorder %s19, 1
      %p93 = por %p91, %p92
      %p94 = scmp.ne.s32.totalorder %s83, %s84
      %p95 = scmp.eq.s32.totalorder %s19, 0
      %p96 = por %p94, %p95
      %p97 = scmp.ne.s32.totalorder %s83, %s84
      %p98 = scmp.eq.s32.totalorder %s20, 1
      %p99 = por %p97, %p98
      %p101 = scmp.ne.s32.totalorder %s84, %s100
      %p102 = scmp.eq.s32.totalorder %s20, 0
      %p103 = por %p101, %p102
      %p104 = scmp.le.s32.totalorder 1, %s14
      %p105 = scmp.lt.s32.totalorder %s14, 3
      %p106 = pnand %p104, %p105
      %p107 = pneg %p106
      // Predicated region
      $region9: #{tpu_custom_call.1} parent=5 // pred_check
        _
      $region10: #{tpu_custom_call.1} parent=5 // pred_check_branch
        %109 = sbr.rel (%p106) target = $region12
      $region11: #{tpu_custom_call.1} parent=5 // pred_region
        %s110 = ssub.s32 %s14, 1
        // Predicated region
        $region13: #{tpu_custom_call.1} parent=11 // pred_check
          %p111 = pneg %p47
        $region14: #{tpu_custom_call.1} parent=11 // pred_check_branch
          %113 = sbr.rel (%p111) target = $region16
        $region15: #{tpu_custom_call.1} parent=11 // pred_region
          %115 = vsyncadd [#allocation6], 0
          %s116 = sshll.u32 %s1, 4
          %s117 = int_to_ptr.hbm [resolvable:$true] %s116
          %s118 = sshll.u32 [#allocation5], 4
          %s119 = int_to_ptr.vmem [resolvable:$true] %s118
          %124 = dma.hbm_to_vmem [thread:$0]  %s117, 18432, %s119, [#allocation6], 128, 128, 8
        $region16: #{tpu_custom_call.1} parent=11 // pred_fallthru
          _
        // Predicated region
        $region17: #{tpu_custom_call.1} parent=11 // pred_check
          %p125 = pneg %p68
        $region18: #{tpu_custom_call.1} parent=11 // pred_check_branch
          %127 = sbr.rel (%p125) target = $region20
        $region19: #{tpu_custom_call.1} parent=11 // pred_region
          %129 = vsyncadd [#allocation9], 0
          %s130 = sshll.u32 %s2, 4
          %s131 = int_to_ptr.hbm [resolvable:$true] %s130
          %s132 = sshll.u32 [#allocation8], 4
          %s133 = int_to_ptr.vmem [resolvable:$true] %s132
          %138 = dma.hbm_to_vmem [thread:$0]  %s131, 18432, %s133, [#allocation9], 128, 128, 8
        $region20: #{tpu_custom_call.1} parent=11 // pred_fallthru
          _
      $region12: #{tpu_custom_call.1} parent=5 // pred_fallthru
        _
      %p139 = scmp.lt.s32.totalorder %s14, 2
      // Predicated region
      $region21: #{tpu_custom_call.1} parent=5 // pred_check
        %p140 = pneg %p139
      $region22: #{tpu_custom_call.1} parent=5 // pred_check_branch
        %142 = sbr.rel (%p140) target = $region24
      $region23: #{tpu_custom_call.1} parent=5 // pred_region
        _
      $region24: #{tpu_custom_call.1} parent=5 // pred_fallthru
        _
      %p143 = scmp.le.s32.totalorder 1, %s14
      %p144 = scmp.lt.s32.totalorder %s14, 3
      %p145 = pnand %p143, %p144
      %p146 = pneg %p145
      // Predicated region
      $region25: #{tpu_custom_call.1} parent=5 // pred_check
        _
      $region26: #{tpu_custom_call.1} parent=5 // pred_check_branch
        %148 = sbr.rel (%p145) target = $region28
      $region27: #{tpu_custom_call.1} parent=5 // pred_region
        %s149 = ssub.s32 %s14, 1
        // Predicated region
        $region29: #{tpu_custom_call.1} parent=27 // pred_check
          %p150 = pneg %p47
        $region30: #{tpu_custom_call.1} parent=27 // pred_check_branch
          %152 = sbr.rel (%p150) target = $region32
        $region31: #{tpu_custom_call.1} parent=27 // pred_region
          %154 = dma.done [#allocation6], 18432
        $region32: #{tpu_custom_call.1} parent=27 // pred_fallthru
          _
        // Predicated region
        $region33: #{tpu_custom_call.1} parent=27 // pred_check
          %p155 = pneg %p68
        $region34: #{tpu_custom_call.1} parent=27 // pred_check_branch
          %157 = sbr.rel (%p155) target = $region36
        $region35: #{tpu_custom_call.1} parent=27 // pred_region
          %159 = dma.done [#allocation9], 18432
        $region36: #{tpu_custom_call.1} parent=27 // pred_fallthru
          _
        %p160 = pneg %p47
        %p161 = pneg %p44
        %p162 = pneg %p68
        %p163 = pneg %p65
        %p164 = pneg %p96
        %p165 = pneg %p93
        %s166 = sand.u32 %s83, 1
        %s167 = scalar_lea.sflag [#allocation7], %s166
        %s168 = sand.u32 %s83, 1
        %s169 = smul.addr %s168, 192
        %s170 = scalar_lea.vmem [#allocation10], %s169
        %s171 = smul.u32 24, %s24
        %p172 = scmp.lt.s32.totalorder %s24, 0
        %s173 = ssub.s32 0, %s24
        %s174 = scalar_select %p172, %s173, %s24
        %s175 = sand.u32 %s174, 1
        %s176 = ssub.s32 0, %s175
        %s177 = scalar_select %p172, %s176, %s175
        %p178 = scmp.ne.s32.totalorder %s177, 0
        %p179 = scmp.lt.s32.totalorder %s177, 0
        %p180 = pnand %p179, %p178
        %p181 = pneg %p180
        %s182 = sadd.s32 %s177, 2
        %s183 = scalar_select %p181, %s182, %s177
        %p184 = scmp.eq.s32.totalorder %s24, 0
        // Predicated region
        $region37: #{tpu_custom_call.1} parent=27 // pred_check
          %p185 = pneg %p184
        $region38: #{tpu_custom_call.1} parent=27 // pred_check_branch
          %187 = sbr.rel (%p185) target = $region40
        $region39: #{tpu_custom_call.1} parent=27 // pred_region
          %s188 = smul.u32 %s24, 192
          %s189 = smul.u32 %s23, 272
          %s190 = sadd.s32 %s188, %s189
          %s191 = scalar_lea.hbm %s0, %s190
          %s192 = smul.u32 %s183, 272
          %s193 = scalar_lea.vmem [#allocation2], %s192
          %s194 = scalar_lea.sflag [#allocation4], %s183
          // Predicated region
          $region41: #{tpu_custom_call.1} parent=39 // pred_check
            _
          $region42: #{tpu_custom_call.1} parent=39 // pred_check_branch
            %196 = sbr.rel target = $region44
          $region43: #{tpu_custom_call.1} parent=39 // pred_region
            %197 = sst [smem:[#allocation13]] [#allocation12]
            %198 = sst [smem:[#allocation14]] [#allocation11]
          $region44: #{tpu_custom_call.1} parent=39 // pred_fallthru
            _
          %200 = shalt.err (0)
          %s202 = sshll.u32 %s191, 4
          %s203 = int_to_ptr.hbm [resolvable:$true] %s202
          %s204 = sshll.u32 %s193, 4
          %s205 = int_to_ptr.vmem [resolvable:$true] %s204
          %207 = dma.hbm_to_vmem [thread:$0]  %s203, 4352, %s205, %s194
          %208 = vst [vmem:[#allocation3 + $0xe0] sm:$0xff] 0.0
        $region40: #{tpu_custom_call.1} parent=27 // pred_fallthru
          _
        %s209 = smul.u32 %s24, 192
        %s210 = scalar_lea.sflag [#allocation4], %s183
        %s211 = smul.u32 272, 1
        %s212 = sshll.u32 %s211, 4
        %213 = dma.done %s210, %s212
        %s214 = sadd.s32 %s24, 1
        %p215 = scmp.lt.s32.totalorder %s214, 1
        // Predicated region
        $region45: #{tpu_custom_call.1} parent=27 // pred_check
          %p216 = pneg %p215
        $region46: #{tpu_custom_call.1} parent=27 // pred_check_branch
          %218 = sbr.rel (%p216) target = $region48
        $region47: #{tpu_custom_call.1} parent=27 // pred_region
          %s219 = ssub.s32 1, %s183
          %s220 = smul.u32 %s214, 192
          %s221 = smul.u32 %s23, 272
          %s222 = sadd.s32 %s220, %s221
          %s223 = scalar_lea.hbm %s0, %s222
          %s224 = smul.u32 %s219, 272
          %s225 = scalar_lea.vmem [#allocation2], %s224
          %s226 = scalar_lea.sflag [#allocation4], %s219
          // Predicated region
          $region49: #{tpu_custom_call.1} parent=47 // pred_check
            _
          $region50: #{tpu_custom_call.1} parent=47 // pred_check_branch
            %228 = sbr.rel target = $region52
          $region51: #{tpu_custom_call.1} parent=47 // pred_region
            %229 = sst [smem:[#allocation13]] [#allocation16]
            %230 = sst [smem:[#allocation14]] [#allocation15]
          $region52: #{tpu_custom_call.1} parent=47 // pred_fallthru
            _
          %232 = shalt.err (0)
          %s234 = sshll.u32 %s223, 4
          %s235 = int_to_ptr.hbm [resolvable:$true] %s234
          %s236 = sshll.u32 %s225, 4
          %s237 = int_to_ptr.vmem [resolvable:$true] %s236
          %239 = dma.hbm_to_vmem [thread:$0]  %s235, 4352, %s237, %s226
        $region48: #{tpu_custom_call.1} parent=27 // pred_fallthru
          _
        %s240 = smul.u32 %s183, 272
        %s241 = scalar_lea.vmem [#allocation2], %s240
        %v242 = vld [vmem:[%s241] sm:$0xff]
        %v243 = vld [vmem:[%s241 + $0x8] sm:$0xff]
        %v244 = vld [vmem:[%s241 + $0x10] sm:$0xff]
        %v245 = vld [vmem:[%s241 + $0x18] sm:$0xff]
        %v246 = vld [vmem:[%s241 + $0x20] sm:$0xff]
        %v247 = vld [vmem:[%s241 + $0x28] sm:$0xff]
        %v248 = vld [vmem:[%s241 + $0x30] sm:$0xff]
        %v249 = vld [vmem:[%s241 + $0x38] sm:$0xff]
        %v250 = vld [vmem:[%s241 + $0x40] sm:$0xff]
        %v251 = vld [vmem:[%s241 + $0x48] sm:$0xff]
        %v252 = vld [vmem:[%s241 + $0x50] sm:$0xff]
        %v253 = vld [vmem:[%s241 + $0x58] sm:$0xff]
        %v254 = vld [vmem:[%s241 + $0x60] sm:$0xff]
        %v255 = vld [vmem:[%s241 + $0x68] sm:$0xff]
        %v256 = vld [vmem:[%s241 + $0x70] sm:$0xff]
        %v257 = vld [vmem:[%s241 + $0x78] sm:$0xff]
        %v258 = vld [vmem:[%s241 + $0x80] sm:$0xff]
        %v259 = vld [vmem:[%s241 + $0x88] sm:$0xff]
        %v260 = vld [vmem:[%s241 + $0x90] sm:$0xff]
        %v261 = vld [vmem:[%s241 + $0x98] sm:$0xff]
        %v262 = vld [vmem:[%s241 + $0xa0] sm:$0xff]
        %v263 = vld [vmem:[%s241 + $0xa8] sm:$0xff]
        %v264 = vld [vmem:[%s241 + $0xb0] sm:$0xff]
        %v265 = vld [vmem:[%s241 + $0xb8] sm:$0xff]
        %v266 = vld [vmem:[%s241 + $0xc0] sm:$0xff]
        %v267 = vld [vmem:[%s241 + $0xc8] sm:$0xff]
        %v268 = vld [vmem:[%s241 + $0xd0] sm:$0xff]
        %v269 = vld [vmem:[%s241 + $0xd8] sm:$0xff]
        %v270 = vld [vmem:[%s241 + $0x1] sm:$0xff]
        %v271 = vld [vmem:[%s241 + $0x9] sm:$0xff]
        %v272 = vld [vmem:[%s241 + $0x11] sm:$0xff]
        %v273 = vld [vmem:[%s241 + $0x19] sm:$0xff]
        %v274 = vld [vmem:[%s241 + $0x21] sm:$0xff]
        %v275 = vld [vmem:[%s241 + $0x29] sm:$0xff]
        %v276 = vld [vmem:[%s241 + $0x31] sm:$0xff]
        %v277 = vld [vmem:[%s241 + $0x39] sm:$0xff]
        %v278 = vld [vmem:[%s241 + $0x41] sm:$0xff]
        %v279 = vld [vmem:[%s241 + $0x49] sm:$0xff]
        %v280 = vld [vmem:[%s241 + $0x51] sm:$0xff]
        %v281 = vld [vmem:[%s241 + $0x59] sm:$0xff]
        %v282 = vld [vmem:[%s241 + $0x61] sm:$0xff]
        %v283 = vld [vmem:[%s241 + $0x69] sm:$0xff]
        %v284 = vld [vmem:[%s241 + $0x71] sm:$0xff]
        %v285 = vld [vmem:[%s241 + $0x79] sm:$0xff]
        %v286 = vld [vmem:[%s241 + $0x81] sm:$0xff]
        %v287 = vld [vmem:[%s241 + $0x89] sm:$0xff]
        %v288 = vld [vmem:[%s241 + $0x91] sm:$0xff]
        %v289 = vld [vmem:[%s241 + $0x99] sm:$0xff]
        %v290 = vld [vmem:[%s241 + $0xa1] sm:$0xff]
        %v291 = vld [vmem:[%s241 + $0xa9] sm:$0xff]
        %v292 = vld [vmem:[%s241 + $0xb1] sm:$0xff]
        %v293 = vld [vmem:[%s241 + $0xb9] sm:$0xff]
        %v294 = vld [vmem:[%s241 + $0xc1] sm:$0xff]
        %v295 = vld [vmem:[%s241 + $0xc9] sm:$0xff]
        %v296 = vld [vmem:[%s241 + $0xd1] sm:$0xff]
        %v297 = vld [vmem:[%s241 + $0xd9] sm:$0xff]
        %v298 = vld [vmem:[%s241 + $0x2] sm:$0xff]
        %v299 = vld [vmem:[%s241 + $0xa] sm:$0xff]
        %v300 = vld [vmem:[%s241 + $0x12] sm:$0xff]
        %v301 = vld [vmem:[%s241 + $0x1a] sm:$0xff]
        %v302 = vld [vmem:[%s241 + $0x22] sm:$0xff]
        %v303 = vld [vmem:[%s241 + $0x2a] sm:$0xff]
        %v304 = vld [vmem:[%s241 + $0x32] sm:$0xff]
        %v305 = vld [vmem:[%s241 + $0x3a] sm:$0xff]
        %v306 = vld [vmem:[%s241 + $0x42] sm:$0xff]
        %v307 = vld [vmem:[%s241 + $0x4a] sm:$0xff]
        %v308 = vld [vmem:[%s241 + $0x52] sm:$0xff]
        %v309 = vld [vmem:[%s241 + $0x5a] sm:$0xff]
        %v310 = vld [vmem:[%s241 + $0x62] sm:$0xff]
        %v311 = vld [vmem:[%s241 + $0x6a] sm:$0xff]
        %v312 = vld [vmem:[%s241 + $0x72] sm:$0xff]
        %v313 = vld [vmem:[%s241 + $0x7a] sm:$0xff]
        %v314 = vld [vmem:[%s241 + $0x82] sm:$0xff]
        %v315 = vld [vmem:[%s241 + $0x8a] sm:$0xff]
        %v316 = vld [vmem:[%s241 + $0x92] sm:$0xff]
        %v317 = vld [vmem:[%s241 + $0x9a] sm:$0xff]
        %v318 = vld [vmem:[%s241 + $0xa2] sm:$0xff]
        %v319 = vld [vmem:[%s241 + $0xaa] sm:$0xff]
        %v320 = vld [vmem:[%s241 + $0xb2] sm:$0xff]
        %v321 = vld [vmem:[%s241 + $0xba] sm:$0xff]
        %v322 = vld [vmem:[%s241 + $0xc2] sm:$0xff]
        %v323 = vld [vmem:[%s241 + $0xca] sm:$0xff]
        %v324 = vld [vmem:[%s241 + $0xd2] sm:$0xff]
        %v325 = vld [vmem:[%s241 + $0xda] sm:$0xff]
        %v326 = vld [vmem:[#allocation5] sm:$0xff]
        %v327 = vld [vmem:[#allocation5 + $0x8] sm:$0xff]
        %v328 = vld [vmem:[#allocation5 + $0x10] sm:$0xff]
        %v329 = vld [vmem:[#allocation5 + $0x18] sm:$0xff]
        %v330 = vld [vmem:[#allocation5 + $0x20] sm:$0xff]
        %v331 = vld [vmem:[#allocation5 + $0x28] sm:$0xff]
        %v332 = vld [vmem:[#allocation5 + $0x30] sm:$0xff]
        %v333 = vld [vmem:[#allocation5 + $0x38] sm:$0xff]
        %v334 = vld [vmem:[#allocation5 + $0x40] sm:$0xff]
        %v335 = vld [vmem:[#allocation5 + $0x48] sm:$0xff]
        %v336 = vld [vmem:[#allocation5 + $0x50] sm:$0xff]
        %v337 = vld [vmem:[#allocation5 + $0x58] sm:$0xff]
        %v338 = vld [vmem:[#allocation5 + $0x60] sm:$0xff]
        %v339 = vld [vmem:[#allocation5 + $0x68] sm:$0xff]
        %v340 = vld [vmem:[#allocation5 + $0x70] sm:$0xff]
        %v341 = vld [vmem:[#allocation5 + $0x78] sm:$0xff]
        %v342 = vld [vmem:[#allocation5 + $0x80] sm:$0xff]
        %v343 = vld [vmem:[#allocation5 + $0x88] sm:$0xff]
        %v344 = vld [vmem:[#allocation5 + $0x90] sm:$0xff]
        %v345 = vld [vmem:[#allocation5 + $0x98] sm:$0xff]
        %v346 = vld [vmem:[#allocation5 + $0xa0] sm:$0xff]
        %v347 = vld [vmem:[#allocation5 + $0xa8] sm:$0xff]
        %v348 = vld [vmem:[#allocation5 + $0xb0] sm:$0xff]
        %v349 = vld [vmem:[#allocation5 + $0xb8] sm:$0xff]
        %v350 = vld [vmem:[#allocation5 + $0xc0] sm:$0xff]
        %v351 = vld [vmem:[#allocation5 + $0xc8] sm:$0xff]
        %v352 = vld [vmem:[#allocation5 + $0xd0] sm:$0xff]
        %v353 = vld [vmem:[#allocation5 + $0xd8] sm:$0xff]
        %v354 = vld [vmem:[#allocation5 + $0xe0] sm:$0xff]
        %v355 = vld [vmem:[#allocation5 + $0xe8] sm:$0xff]
        %v356 = vld [vmem:[#allocation5 + $0xf0] sm:$0xff]
        %v357 = vld [vmem:[#allocation5 + $0xf8] sm:$0xff]
        %v358 = vld [vmem:[#allocation5 + $0x100] sm:$0xff]
        %v359 = vld [vmem:[#allocation5 + $0x108] sm:$0xff]
        %v360 = vld [vmem:[#allocation5 + $0x110] sm:$0xff]
        %v361 = vld [vmem:[#allocation5 + $0x118] sm:$0xff]
        %v362 = vld [vmem:[#allocation5 + $0x120] sm:$0xff]
        %v363 = vld [vmem:[#allocation5 + $0x128] sm:$0xff]
        %v364 = vld [vmem:[#allocation5 + $0x130] sm:$0xff]
        %v365 = vld [vmem:[#allocation5 + $0x138] sm:$0xff]
        %v366 = vld [vmem:[#allocation5 + $0x140] sm:$0xff]
        %v367 = vld [vmem:[#allocation5 + $0x148] sm:$0xff]
        %v368 = vld [vmem:[#allocation5 + $0x150] sm:$0xff]
        %v369 = vld [vmem:[#allocation5 + $0x158] sm:$0xff]
        %v370 = vld [vmem:[#allocation5 + $0x160] sm:$0xff]
        %v371 = vld [vmem:[#allocation5 + $0x168] sm:$0xff]
        %v372 = vld [vmem:[#allocation5 + $0x170] sm:$0xff]
        %v373 = vld [vmem:[#allocation5 + $0x178] sm:$0xff]
        %v374 = vld [vmem:[%s241 + $0xe0] sm:$0xff]
        %v375 = vld [vmem:[%s241 + $0xe8] sm:$0xff]
        %v376 = vld [vmem:[%s241 + $0xe1] sm:$0xff]
        %v377 = vld [vmem:[%s241 + $0xe9] sm:$0xff]
        %v378 = vld [vmem:[%s241 + $0xe2] sm:$0xff]
        %v379 = vld [vmem:[%s241 + $0xea] sm:$0xff]
        %s380 = scalar_lea.vmem [#allocation5], 384
        %v381 = vld [vmem:[%s380] sm:$0xff]
        %v382 = vld [vmem:[%s380 + $0x8] sm:$0xff]
        %v383 = vld [vmem:[%s380 + $0x10] sm:$0xff]
        %v384 = vld [vmem:[%s380 + $0x18] sm:$0xff]
        %v385 = vld [vmem:[%s380 + $0x20] sm:$0xff]
        %v386 = vld [vmem:[%s380 + $0x28] sm:$0xff]
        %v387 = vld [vmem:[%s380 + $0x30] sm:$0xff]
        %v388 = vld [vmem:[%s380 + $0x38] sm:$0xff]
        %v389 = vld [vmem:[%s380 + $0x40] sm:$0xff]
        %v390 = vld [vmem:[%s380 + $0x48] sm:$0xff]
        %v391 = vld [vmem:[%s380 + $0x50] sm:$0xff]
        %v392 = vld [vmem:[%s380 + $0x58] sm:$0xff]
        %v393 = vld [vmem:[%s380 + $0x60] sm:$0xff]
        %v394 = vld [vmem:[%s380 + $0x68] sm:$0xff]
        %v395 = vld [vmem:[%s380 + $0x70] sm:$0xff]
        %v396 = vld [vmem:[%s380 + $0x78] sm:$0xff]
        %v397 = vld [vmem:[%s380 + $0x80] sm:$0xff]
        %v398 = vld [vmem:[%s380 + $0x88] sm:$0xff]
        %v399 = vld [vmem:[%s380 + $0x90] sm:$0xff]
        %v400 = vld [vmem:[%s380 + $0x98] sm:$0xff]
        %v401 = vld [vmem:[%s380 + $0xa0] sm:$0xff]
        %v402 = vld [vmem:[%s380 + $0xa8] sm:$0xff]
        %v403 = vld [vmem:[%s380 + $0xb0] sm:$0xff]
        %v404 = vld [vmem:[%s380 + $0xb8] sm:$0xff]
        %v405 = vld [vmem:[%s380 + $0xc0] sm:$0xff]
        %v406 = vld [vmem:[%s380 + $0xc8] sm:$0xff]
        %v407 = vld [vmem:[%s380 + $0xd0] sm:$0xff]
        %v408 = vld [vmem:[%s380 + $0xd8] sm:$0xff]
        %v409 = vld [vmem:[%s380 + $0xe0] sm:$0xff]
        %v410 = vld [vmem:[%s380 + $0xe8] sm:$0xff]
        %v411 = vld [vmem:[%s380 + $0xf0] sm:$0xff]
        %v412 = vld [vmem:[%s380 + $0xf8] sm:$0xff]
        %v413 = vld [vmem:[%s380 + $0x100] sm:$0xff]
        %v414 = vld [vmem:[%s380 + $0x108] sm:$0xff]
        %v415 = vld [vmem:[%s380 + $0x110] sm:$0xff]
        %v416 = vld [vmem:[%s380 + $0x118] sm:$0xff]
        %v417 = vld [vmem:[%s380 + $0x120] sm:$0xff]
        %v418 = vld [vmem:[%s380 + $0x128] sm:$0xff]
        %v419 = vld [vmem:[%s380 + $0x130] sm:$0xff]
        %v420 = vld [vmem:[%s380 + $0x138] sm:$0xff]
        %v421 = vld [vmem:[%s380 + $0x140] sm:$0xff]
        %v422 = vld [vmem:[%s380 + $0x148] sm:$0xff]
        %v423 = vld [vmem:[%s380 + $0x150] sm:$0xff]
        %v424 = vld [vmem:[%s380 + $0x158] sm:$0xff]
        %v425 = vld [vmem:[%s380 + $0x160] sm:$0xff]
        %v426 = vld [vmem:[%s380 + $0x168] sm:$0xff]
        %v427 = vld [vmem:[%s380 + $0x170] sm:$0xff]
        %v428 = vld [vmem:[%s380 + $0x178] sm:$0xff]
        %429 = vmatpush.msra.mxu0 %v396
        %430 = vmatpush.msra.mxu0 %v395
        %431 = vmatpush.msra.mxu0 %v394
        %432 = vmatpush.msra.mxu0 %v393
        %433 = vmatpush.msra.mxu0 %v392
        %434 = vmatpush.msra.mxu0 %v391
        %435 = vmatpush.msra.mxu0 %v390
        %436 = vmatpush.msra.mxu0 %v389
        %437 = vmatpush.msra.mxu0 %v388
        %438 = vmatpush.msra.mxu0 %v387
        %439 = vmatpush.msra.mxu0 %v386
        %440 = vmatpush.msra.mxu0 %v385
        %441 = vmatpush.msra.mxu0 %v384
        %442 = vmatpush.msra.mxu0 %v383
        %443 = vmatpush.msra.mxu0 %v382
        %444 = vmatpush.msra.mxu0 %v381
        %445 = vmatmul.f32.gmra.mxu0 %v244
        %v446 = vpop.f32.mrf.mxu0
        %v447 = vadd.f32 0.0, %v446
        %448 = vmatmul.f32.gmra.mxu0 %v245
        %v449 = vpop.f32.mrf.mxu0
        %v450 = vadd.f32 0.0, %v449
        %451 = vmatmul.f32.gmra.mxu0 %v246
        %v452 = vpop.f32.mrf.mxu0
        %v453 = vadd.f32 0.0, %v452
        %454 = vmatmul.f32.gmra.mxu0 %v247
        %v455 = vpop.f32.mrf.mxu0
        %v456 = vadd.f32 0.0, %v455
        %457 = vmatmul.f32.gmra.mxu0 %v248
        %v458 = vpop.f32.mrf.mxu0
        %v459 = vadd.f32 0.0, %v458
        %460 = vmatmul.f32.gmra.mxu0 %v249
        %v461 = vpop.f32.mrf.mxu0
        %v462 = vadd.f32 0.0, %v461
        %463 = vmatmul.f32.gmra.mxu0 %v250
        %v464 = vpop.f32.mrf.mxu0
        %v465 = vadd.f32 0.0, %v464
        %466 = vmatmul.f32.gmra.mxu0 %v251
        %v467 = vpop.f32.mrf.mxu0
        %v468 = vadd.f32 0.0, %v467
        %469 = vmatmul.f32.gmra.mxu0 %v252
        %v470 = vpop.f32.mrf.mxu0
        %v471 = vadd.f32 0.0, %v470
        %472 = vmatmul.f32.gmra.mxu0 %v253
        %v473 = vpop.f32.mrf.mxu0
        %v474 = vadd.f32 0.0, %v473
        %475 = vmatmul.f32.gmra.mxu0 %v254
        %v476 = vpop.f32.mrf.mxu0
        %v477 = vadd.f32 0.0, %v476
        %478 = vmatmul.f32.gmra.mxu0 %v255
        %v479 = vpop.f32.mrf.mxu0
        %v480 = vadd.f32 0.0, %v479
        %481 = vmatmul.f32.gmra.mxu0 %v256
        %v482 = vpop.f32.mrf.mxu0
        %v483 = vadd.f32 0.0, %v482
        %484 = vmatmul.f32.gmra.mxu0 %v257
        %v485 = vpop.f32.mrf.mxu0
        %v486 = vadd.f32 0.0, %v485
        %487 = vmatmul.f32.gmra.mxu0 %v258
        %v488 = vpop.f32.mrf.mxu0
        %v489 = vadd.f32 0.0, %v488
        %490 = vmatmul.f32.gmra.mxu0 %v259
        %v491 = vpop.f32.mrf.mxu0
        %v492 = vadd.f32 0.0, %v491
        %493 = vmatmul.f32.gmra.mxu0 %v260
        %v494 = vpop.f32.mrf.mxu0
        %v495 = vadd.f32 0.0, %v494
        %496 = vmatmul.f32.gmra.mxu0 %v261
        %v497 = vpop.f32.mrf.mxu0
        %v498 = vadd.f32 0.0, %v497
        %499 = vmatmul.f32.gmra.mxu0 %v262
        %v500 = vpop.f32.mrf.mxu0
        %v501 = vadd.f32 0.0, %v500
        %502 = vmatmul.f32.gmra.mxu0 %v263
        %v503 = vpop.f32.mrf.mxu0
        %v504 = vadd.f32 0.0, %v503
        %505 = vmatmul.f32.gmra.mxu0 %v264
        %v506 = vpop.f32.mrf.mxu0
        %v507 = vadd.f32 0.0, %v506
        %508 = vmatmul.f32.gmra.mxu0 %v265
        %v509 = vpop.f32.mrf.mxu0
        %v510 = vadd.f32 0.0, %v509
        %511 = vmatmul.f32.gmra.mxu0 %v266
        %v512 = vpop.f32.mrf.mxu0
        %v513 = vadd.f32 0.0, %v512
        %514 = vmatmul.f32.gmra.mxu0 %v267
        %v515 = vpop.f32.mrf.mxu0
        %v516 = vadd.f32 0.0, %v515
        %517 = vmatmul.f32.gmra.mxu0 %v268
        %v518 = vpop.f32.mrf.mxu0
        %v519 = vadd.f32 0.0, %v518
        %520 = vmatmul.f32.gmra.mxu0 %v269
        %v521 = vpop.f32.mrf.mxu0
        %v522 = vadd.f32 0.0, %v521
        %523 = vmatmul.f32.gmra.mxu0 %v374
        %v524 = vpop.f32.mrf.mxu0
        %v525 = vadd.f32 0.0, %v524
        %526 = vmatmul.f32.gmra.mxu0 %v375
        %v527 = vpop.f32.mrf.mxu0
        %v528 = vadd.f32 0.0, %v527
        %529 = vdwg.mxu0
        %530 = vmatpush.msra.mxu0 %v412
        %531 = vmatpush.msra.mxu0 %v411
        %532 = vmatpush.msra.mxu0 %v410
        %533 = vmatpush.msra.mxu0 %v409
        %534 = vmatpush.msra.mxu0 %v408
        %535 = vmatpush.msra.mxu0 %v407
        %536 = vmatpush.msra.mxu0 %v406
        %537 = vmatpush.msra.mxu0 %v405
        %538 = vmatpush.msra.mxu0 %v404
        %539 = vmatpush.msra.mxu0 %v403
        %540 = vmatpush.msra.mxu0 %v402
        %541 = vmatpush.msra.mxu0 %v401
        %542 = vmatpush.msra.mxu0 %v400
        %543 = vmatpush.msra.mxu0 %v399
        %544 = vmatpush.msra.mxu0 %v398
        %545 = vmatpush.msra.mxu0 %v397
        %546 = vmatmul.f32.gmra.mxu0 %v272
        %v547 = vpop.f32.mrf.mxu0
        %v548 = vadd.f32 %v447, %v547
        %549 = vmatmul.f32.gmra.mxu0 %v273
        %v550 = vpop.f32.mrf.mxu0
        %v551 = vadd.f32 %v450, %v550
        %552 = vmatmul.f32.gmra.mxu0 %v274
        %v553 = vpop.f32.mrf.mxu0
        %v554 = vadd.f32 %v453, %v553
        %555 = vmatmul.f32.gmra.mxu0 %v275
        %v556 = vpop.f32.mrf.mxu0
        %v557 = vadd.f32 %v456, %v556
        %558 = vmatmul.f32.gmra.mxu0 %v276
        %v559 = vpop.f32.mrf.mxu0
        %v560 = vadd.f32 %v459, %v559
        %561 = vmatmul.f32.gmra.mxu0 %v277
        %v562 = vpop.f32.mrf.mxu0
        %v563 = vadd.f32 %v462, %v562
        %564 = vmatmul.f32.gmra.mxu0 %v278
        %v565 = vpop.f32.mrf.mxu0
        %v566 = vadd.f32 %v465, %v565
        %567 = vmatmul.f32.gmra.mxu0 %v279
        %v568 = vpop.f32.mrf.mxu0
        %v569 = vadd.f32 %v468, %v568
        %570 = vmatmul.f32.gmra.mxu0 %v280
        %v571 = vpop.f32.mrf.mxu0
        %v572 = vadd.f32 %v471, %v571
        %573 = vmatmul.f32.gmra.mxu0 %v281
        %v574 = vpop.f32.mrf.mxu0
        %v575 = vadd.f32 %v474, %v574
        %576 = vmatmul.f32.gmra.mxu0 %v282
        %v577 = vpop.f32.mrf.mxu0
        %v578 = vadd.f32 %v477, %v577
        %579 = vmatmul.f32.gmra.mxu0 %v283
        %v580 = vpop.f32.mrf.mxu0
        %v581 = vadd.f32 %v480, %v580
        %582 = vmatmul.f32.gmra.mxu0 %v284
        %v583 = vpop.f32.mrf.mxu0
        %v584 = vadd.f32 %v483, %v583
        %585 = vmatmul.f32.gmra.mxu0 %v285
        %v586 = vpop.f32.mrf.mxu0
        %v587 = vadd.f32 %v486, %v586
        %588 = vmatmul.f32.gmra.mxu0 %v286
        %v589 = vpop.f32.mrf.mxu0
        %v590 = vadd.f32 %v489, %v589
        %591 = vmatmul.f32.gmra.mxu0 %v287
        %v592 = vpop.f32.mrf.mxu0
        %v593 = vadd.f32 %v492, %v592
        %594 = vmatmul.f32.gmra.mxu0 %v288
        %v595 = vpop.f32.mrf.mxu0
        %v596 = vadd.f32 %v495, %v595
        %597 = vmatmul.f32.gmra.mxu0 %v289
        %v598 = vpop.f32.mrf.mxu0
        %v599 = vadd.f32 %v498, %v598
        %600 = vmatmul.f32.gmra.mxu0 %v290
        %v601 = vpop.f32.mrf.mxu0
        %v602 = vadd.f32 %v501, %v601
        %603 = vmatmul.f32.gmra.mxu0 %v291
        %v604 = vpop.f32.mrf.mxu0
        %v605 = vadd.f32 %v504, %v604
        %606 = vmatmul.f32.gmra.mxu0 %v292
        %v607 = vpop.f32.mrf.mxu0
        %v608 = vadd.f32 %v507, %v607
        %609 = vmatmul.f32.gmra.mxu0 %v293
        %v610 = vpop.f32.mrf.mxu0
        %v611 = vadd.f32 %v510, %v610
        %612 = vmatmul.f32.gmra.mxu0 %v294
        %v613 = vpop.f32.mrf.mxu0
        %v614 = vadd.f32 %v513, %v613
        %615 = vmatmul.f32.gmra.mxu0 %v295
        %v616 = vpop.f32.mrf.mxu0
        %v617 = vadd.f32 %v516, %v616
        %618 = vmatmul.f32.gmra.mxu0 %v296
        %v619 = vpop.f32.mrf.mxu0
        %v620 = vadd.f32 %v519, %v619
        %621 = vmatmul.f32.gmra.mxu0 %v297
        %v622 = vpop.f32.mrf.mxu0
        %v623 = vadd.f32 %v522, %v622
        %624 = vmatmul.f32.gmra.mxu0 %v376
        %v625 = vpop.f32.mrf.mxu0
        %v626 = vadd.f32 %v525, %v625
        %627 = vmatmul.f32.gmra.mxu0 %v377
        %v628 = vpop.f32.mrf.mxu0
        %v629 = vadd.f32 %v528, %v628
        %630 = vdwg.mxu0
        %631 = vmatpush.msra.mxu0 %v428
        %632 = vmatpush.msra.mxu0 %v427
        %633 = vmatpush.msra.mxu0 %v426
        %634 = vmatpush.msra.mxu0 %v425
        %635 = vmatpush.msra.mxu0 %v424
        %636 = vmatpush.msra.mxu0 %v423
        %637 = vmatpush.msra.mxu0 %v422
        %638 = vmatpush.msra.mxu0 %v421
        %639 = vmatpush.msra.mxu0 %v420
        %640 = vmatpush.msra.mxu0 %v419
        %641 = vmatpush.msra.mxu0 %v418
        %642 = vmatpush.msra.mxu0 %v417
        %643 = vmatpush.msra.mxu0 %v416
        %644 = vmatpush.msra.mxu0 %v415
        %645 = vmatpush.msra.mxu0 %v414
        %646 = vmatpush.msra.mxu0 %v413
        %647 = vmatmul.f32.gmra.mxu0 %v300
        %v648 = vpop.f32.mrf.mxu0
        %v649 = vadd.f32 %v548, %v648
        %650 = vmatmul.f32.gmra.mxu0 %v301
        %v651 = vpop.f32.mrf.mxu0
        %v652 = vadd.f32 %v551, %v651
        %653 = vmatmul.f32.gmra.mxu0 %v302
        %v654 = vpop.f32.mrf.mxu0
        %v655 = vadd.f32 %v554, %v654
        %656 = vmatmul.f32.gmra.mxu0 %v303
        %v657 = vpop.f32.mrf.mxu0
        %v658 = vadd.f32 %v557, %v657
        %659 = vmatmul.f32.gmra.mxu0 %v304
        %v660 = vpop.f32.mrf.mxu0
        %v661 = vadd.f32 %v560, %v660
        %662 = vmatmul.f32.gmra.mxu0 %v305
        %v663 = vpop.f32.mrf.mxu0
        %v664 = vadd.f32 %v563, %v663
        %665 = vmatmul.f32.gmra.mxu0 %v306
        %v666 = vpop.f32.mrf.mxu0
        %v667 = vadd.f32 %v566, %v666
        %668 = vmatmul.f32.gmra.mxu0 %v307
        %v669 = vpop.f32.mrf.mxu0
        %v670 = vadd.f32 %v569, %v669
        %671 = vmatmul.f32.gmra.mxu0 %v308
        %v672 = vpop.f32.mrf.mxu0
        %v673 = vadd.f32 %v572, %v672
        %674 = vmatmul.f32.gmra.mxu0 %v309
        %v675 = vpop.f32.mrf.mxu0
        %v676 = vadd.f32 %v575, %v675
        %677 = vmatmul.f32.gmra.mxu0 %v310
        %v678 = vpop.f32.mrf.mxu0
        %v679 = vadd.f32 %v578, %v678
        %680 = vmatmul.f32.gmra.mxu0 %v311
        %v681 = vpop.f32.mrf.mxu0
        %v682 = vadd.f32 %v581, %v681
        %683 = vmatmul.f32.gmra.mxu0 %v312
        %v684 = vpop.f32.mrf.mxu0
        %v685 = vadd.f32 %v584, %v684
        %686 = vmatmul.f32.gmra.mxu0 %v313
        %v687 = vpop.f32.mrf.mxu0
        %v688 = vadd.f32 %v587, %v687
        %689 = vmatmul.f32.gmra.mxu0 %v314
        %v690 = vpop.f32.mrf.mxu0
        %v691 = vadd.f32 %v590, %v690
        %692 = vmatmul.f32.gmra.mxu0 %v315
        %v693 = vpop.f32.mrf.mxu0
        %v694 = vadd.f32 %v593, %v693
        %695 = vmatmul.f32.gmra.mxu0 %v316
        %v696 = vpop.f32.mrf.mxu0
        %v697 = vadd.f32 %v596, %v696
        %698 = vmatmul.f32.gmra.mxu0 %v317
        %v699 = vpop.f32.mrf.mxu0
        %v700 = vadd.f32 %v599, %v699
        %701 = vmatmul.f32.gmra.mxu0 %v318
        %v702 = vpop.f32.mrf.mxu0
        %v703 = vadd.f32 %v602, %v702
        %704 = vmatmul.f32.gmra.mxu0 %v319
        %v705 = vpop.f32.mrf.mxu0
        %v706 = vadd.f32 %v605, %v705
        %707 = vmatmul.f32.gmra.mxu0 %v320
        %v708 = vpop.f32.mrf.mxu0
        %v709 = vadd.f32 %v608, %v708
        %710 = vmatmul.f32.gmra.mxu0 %v321
        %v711 = vpop.f32.mrf.mxu0
        %v712 = vadd.f32 %v611, %v711
        %713 = vmatmul.f32.gmra.mxu0 %v322
        %v714 = vpop.f32.mrf.mxu0
        %v715 = vadd.f32 %v614, %v714
        %716 = vmatmul.f32.gmra.mxu0 %v323
        %v717 = vpop.f32.mrf.mxu0
        %v718 = vadd.f32 %v617, %v717
        %719 = vmatmul.f32.gmra.mxu0 %v324
        %v720 = vpop.f32.mrf.mxu0
        %v721 = vadd.f32 %v620, %v720
        %722 = vmatmul.f32.gmra.mxu0 %v325
        %v723 = vpop.f32.mrf.mxu0
        %v724 = vadd.f32 %v623, %v723
        %725 = vmatmul.f32.gmra.mxu0 %v378
        %v726 = vpop.f32.mrf.mxu0
        %v727 = vadd.f32 %v626, %v726
        %728 = vmatmul.f32.gmra.mxu0 %v379
        %v729 = vpop.f32.mrf.mxu0
        %v730 = vadd.f32 %v629, %v729
        %731 = vdwg.mxu0
        %732 = vmatpush.msra.mxu0 %v341
        %733 = vmatpush.msra.mxu0 %v340
        %734 = vmatpush.msra.mxu0 %v339
        %735 = vmatpush.msra.mxu0 %v338
        %736 = vmatpush.msra.mxu0 %v337
        %737 = vmatpush.msra.mxu0 %v336
        %738 = vmatpush.msra.mxu0 %v335
        %739 = vmatpush.msra.mxu0 %v334
        %740 = vmatpush.msra.mxu0 %v333
        %741 = vmatpush.msra.mxu0 %v332
        %742 = vmatpush.msra.mxu0 %v331
        %743 = vmatpush.msra.mxu0 %v330
        %744 = vmatpush.msra.mxu0 %v329
        %745 = vmatpush.msra.mxu0 %v328
        %746 = vmatpush.msra.mxu0 %v327
        %747 = vmatpush.msra.mxu0 %v326
        %748 = vmatmul.f32.gmra.mxu0 %v242
        %v749 = vpop.f32.mrf.mxu0
        %v750 = vadd.f32 %v649, %v749
        %751 = vmatmul.f32.gmra.mxu0 %v243
        %v752 = vpop.f32.mrf.mxu0
        %v753 = vadd.f32 %v652, %v752
        %754 = vmatmul.f32.gmra.mxu0 %v244
        %v755 = vpop.f32.mrf.mxu0
        %v756 = vadd.f32 %v655, %v755
        %757 = vmatmul.f32.gmra.mxu0 %v245
        %v758 = vpop.f32.mrf.mxu0
        %v759 = vadd.f32 %v658, %v758
        %760 = vmatmul.f32.gmra.mxu0 %v246
        %v761 = vpop.f32.mrf.mxu0
        %v762 = vadd.f32 %v661, %v761
        %763 = vmatmul.f32.gmra.mxu0 %v247
        %v764 = vpop.f32.mrf.mxu0
        %v765 = vadd.f32 %v664, %v764
        %766 = vmatmul.f32.gmra.mxu0 %v248
        %v767 = vpop.f32.mrf.mxu0
        %v768 = vadd.f32 %v667, %v767
        %769 = vmatmul.f32.gmra.mxu0 %v249
        %v770 = vpop.f32.mrf.mxu0
        %v771 = vadd.f32 %v670, %v770
        %772 = vmatmul.f32.gmra.mxu0 %v250
        %v773 = vpop.f32.mrf.mxu0
        %v774 = vadd.f32 %v673, %v773
        %775 = vmatmul.f32.gmra.mxu0 %v251
        %v776 = vpop.f32.mrf.mxu0
        %v777 = vadd.f32 %v676, %v776
        %778 = vmatmul.f32.gmra.mxu0 %v252
        %v779 = vpop.f32.mrf.mxu0
        %v780 = vadd.f32 %v679, %v779
        %781 = vmatmul.f32.gmra.mxu0 %v253
        %v782 = vpop.f32.mrf.mxu0
        %v783 = vadd.f32 %v682, %v782
        %784 = vmatmul.f32.gmra.mxu0 %v254
        %v785 = vpop.f32.mrf.mxu0
        %v786 = vadd.f32 %v685, %v785
        %787 = vmatmul.f32.gmra.mxu0 %v255
        %v788 = vpop.f32.mrf.mxu0
        %v789 = vadd.f32 %v688, %v788
        %790 = vmatmul.f32.gmra.mxu0 %v256
        %v791 = vpop.f32.mrf.mxu0
        %v792 = vadd.f32 %v691, %v791
        %793 = vmatmul.f32.gmra.mxu0 %v257
        %v794 = vpop.f32.mrf.mxu0
        %v795 = vadd.f32 %v694, %v794
        %796 = vmatmul.f32.gmra.mxu0 %v258
        %v797 = vpop.f32.mrf.mxu0
        %v798 = vadd.f32 %v697, %v797
        %799 = vmatmul.f32.gmra.mxu0 %v259
        %v800 = vpop.f32.mrf.mxu0
        %v801 = vadd.f32 %v700, %v800
        %802 = vmatmul.f32.gmra.mxu0 %v260
        %v803 = vpop.f32.mrf.mxu0
        %v804 = vadd.f32 %v703, %v803
        %805 = vmatmul.f32.gmra.mxu0 %v261
        %v806 = vpop.f32.mrf.mxu0
        %v807 = vadd.f32 %v706, %v806
        %808 = vmatmul.f32.gmra.mxu0 %v262
        %v809 = vpop.f32.mrf.mxu0
        %v810 = vadd.f32 %v709, %v809
        %811 = vmatmul.f32.gmra.mxu0 %v263
        %v812 = vpop.f32.mrf.mxu0
        %v813 = vadd.f32 %v712, %v812
        %814 = vmatmul.f32.gmra.mxu0 %v264
        %v815 = vpop.f32.mrf.mxu0
        %v816 = vadd.f32 %v715, %v815
        %817 = vmatmul.f32.gmra.mxu0 %v265
        %v818 = vpop.f32.mrf.mxu0
        %v819 = vadd.f32 %v718, %v818
        %820 = vmatmul.f32.gmra.mxu0 %v266
        %v821 = vpop.f32.mrf.mxu0
        %v822 = vadd.f32 %v721, %v821
        %823 = vmatmul.f32.gmra.mxu0 %v267
        %v824 = vpop.f32.mrf.mxu0
        %v825 = vadd.f32 %v724, %v824
        %826 = vmatmul.f32.gmra.mxu0 %v268
        %v827 = vpop.f32.mrf.mxu0
        %v828 = vadd.f32 %v727, %v827
        %829 = vmatmul.f32.gmra.mxu0 %v269
        %v830 = vpop.f32.mrf.mxu0
        %v831 = vadd.f32 %v730, %v830
        %832 = vdwg.mxu0
        %833 = vmatpush.msra.mxu0 %v357
        %834 = vmatpush.msra.mxu0 %v356
        %835 = vmatpush.msra.mxu0 %v355
        %836 = vmatpush.msra.mxu0 %v354
        %837 = vmatpush.msra.mxu0 %v353
        %838 = vmatpush.msra.mxu0 %v352
        %839 = vmatpush.msra.mxu0 %v351
        %840 = vmatpush.msra.mxu0 %v350
        %841 = vmatpush.msra.mxu0 %v349
        %842 = vmatpush.msra.mxu0 %v348
        %843 = vmatpush.msra.mxu0 %v347
        %844 = vmatpush.msra.mxu0 %v346
        %845 = vmatpush.msra.mxu0 %v345
        %846 = vmatpush.msra.mxu0 %v344
        %847 = vmatpush.msra.mxu0 %v343
        %848 = vmatpush.msra.mxu0 %v342
        %849 = vmatmul.f32.gmra.mxu0 %v270
        %v850 = vpop.f32.mrf.mxu0
        %v851 = vadd.f32 %v750, %v850
        %852 = vmatmul.f32.gmra.mxu0 %v271
        %v853 = vpop.f32.mrf.mxu0
        %v854 = vadd.f32 %v753, %v853
        %855 = vmatmul.f32.gmra.mxu0 %v272
        %v856 = vpop.f32.mrf.mxu0
        %v857 = vadd.f32 %v756, %v856
        %858 = vmatmul.f32.gmra.mxu0 %v273
        %v859 = vpop.f32.mrf.mxu0
        %v860 = vadd.f32 %v759, %v859
        %861 = vmatmul.f32.gmra.mxu0 %v274
        %v862 = vpop.f32.mrf.mxu0
        %v863 = vadd.f32 %v762, %v862
        %864 = vmatmul.f32.gmra.mxu0 %v275
        %v865 = vpop.f32.mrf.mxu0
        %v866 = vadd.f32 %v765, %v865
        %867 = vmatmul.f32.gmra.mxu0 %v276
        %v868 = vpop.f32.mrf.mxu0
        %v869 = vadd.f32 %v768, %v868
        %870 = vmatmul.f32.gmra.mxu0 %v277
        %v871 = vpop.f32.mrf.mxu0
        %v872 = vadd.f32 %v771, %v871
        %873 = vmatmul.f32.gmra.mxu0 %v278
        %v874 = vpop.f32.mrf.mxu0
        %v875 = vadd.f32 %v774, %v874
        %876 = vmatmul.f32.gmra.mxu0 %v279
        %v877 = vpop.f32.mrf.mxu0
        %v878 = vadd.f32 %v777, %v877
        %879 = vmatmul.f32.gmra.mxu0 %v280
        %v880 = vpop.f32.mrf.mxu0
        %v881 = vadd.f32 %v780, %v880
        %882 = vmatmul.f32.gmra.mxu0 %v281
        %v883 = vpop.f32.mrf.mxu0
        %v884 = vadd.f32 %v783, %v883
        %885 = vmatmul.f32.gmra.mxu0 %v282
        %v886 = vpop.f32.mrf.mxu0
        %v887 = vadd.f32 %v786, %v886
        %888 = vmatmul.f32.gmra.mxu0 %v283
        %v889 = vpop.f32.mrf.mxu0
        %v890 = vadd.f32 %v789, %v889
        %891 = vmatmul.f32.gmra.mxu0 %v284
        %v892 = vpop.f32.mrf.mxu0
        %v893 = vadd.f32 %v792, %v892
        %894 = vmatmul.f32.gmra.mxu0 %v285
        %v895 = vpop.f32.mrf.mxu0
        %v896 = vadd.f32 %v795, %v895
        %897 = vmatmul.f32.gmra.mxu0 %v286
        %v898 = vpop.f32.mrf.mxu0
        %v899 = vadd.f32 %v798, %v898
        %900 = vmatmul.f32.gmra.mxu0 %v287
        %v901 = vpop.f32.mrf.mxu0
        %v902 = vadd.f32 %v801, %v901
        %903 = vmatmul.f32.gmra.mxu0 %v288
        %v904 = vpop.f32.mrf.mxu0
        %v905 = vadd.f32 %v804, %v904
        %906 = vmatmul.f32.gmra.mxu0 %v289
        %v907 = vpop.f32.mrf.mxu0
        %v908 = vadd.f32 %v807, %v907
        %909 = vmatmul.f32.gmra.mxu0 %v290
        %v910 = vpop.f32.mrf.mxu0
        %v911 = vadd.f32 %v810, %v910
        %912 = vmatmul.f32.gmra.mxu0 %v291
        %v913 = vpop.f32.mrf.mxu0
        %v914 = vadd.f32 %v813, %v913
        %915 = vmatmul.f32.gmra.mxu0 %v292
        %v916 = vpop.f32.mrf.mxu0
        %v917 = vadd.f32 %v816, %v916
        %918 = vmatmul.f32.gmra.mxu0 %v293
        %v919 = vpop.f32.mrf.mxu0
        %v920 = vadd.f32 %v819, %v919
        %921 = vmatmul.f32.gmra.mxu0 %v294
        %v922 = vpop.f32.mrf.mxu0
        %v923 = vadd.f32 %v822, %v922
        %924 = vmatmul.f32.gmra.mxu0 %v295
        %v925 = vpop.f32.mrf.mxu0
        %v926 = vadd.f32 %v825, %v925
        %927 = vmatmul.f32.gmra.mxu0 %v296
        %v928 = vpop.f32.mrf.mxu0
        %v929 = vadd.f32 %v828, %v928
        %930 = vmatmul.f32.gmra.mxu0 %v297
        %v931 = vpop.f32.mrf.mxu0
        %v932 = vadd.f32 %v831, %v931
        %933 = vdwg.mxu0
        %934 = vmatpush.msra.mxu0 %v373
        %935 = vmatpush.msra.mxu0 %v372
        %936 = vmatpush.msra.mxu0 %v371
        %937 = vmatpush.msra.mxu0 %v370
        %938 = vmatpush.msra.mxu0 %v369
        %939 = vmatpush.msra.mxu0 %v368
        %940 = vmatpush.msra.mxu0 %v367
        %941 = vmatpush.msra.mxu0 %v366
        %942 = vmatpush.msra.mxu0 %v365
        %943 = vmatpush.msra.mxu0 %v364
        %944 = vmatpush.msra.mxu0 %v363
        %945 = vmatpush.msra.mxu0 %v362
        %946 = vmatpush.msra.mxu0 %v361
        %947 = vmatpush.msra.mxu0 %v360
        %948 = vmatpush.msra.mxu0 %v359
        %949 = vmatpush.msra.mxu0 %v358
        %950 = vmatmul.f32.gmra.mxu0 %v298
        %v951 = vpop.f32.mrf.mxu0
        %v952 = vadd.f32 %v851, %v951
        %953 = vmatmul.f32.gmra.mxu0 %v299
        %v954 = vpop.f32.mrf.mxu0
        %v955 = vadd.f32 %v854, %v954
        %956 = vmatmul.f32.gmra.mxu0 %v300
        %v957 = vpop.f32.mrf.mxu0
        %v958 = vadd.f32 %v857, %v957
        %959 = vmatmul.f32.gmra.mxu0 %v301
        %v960 = vpop.f32.mrf.mxu0
        %v961 = vadd.f32 %v860, %v960
        %962 = vmatmul.f32.gmra.mxu0 %v302
        %v963 = vpop.f32.mrf.mxu0
        %v964 = vadd.f32 %v863, %v963
        %965 = vmatmul.f32.gmra.mxu0 %v303
        %v966 = vpop.f32.mrf.mxu0
        %v967 = vadd.f32 %v866, %v966
        %968 = vmatmul.f32.gmra.mxu0 %v304
        %v969 = vpop.f32.mrf.mxu0
        %v970 = vadd.f32 %v869, %v969
        %971 = vmatmul.f32.gmra.mxu0 %v305
        %v972 = vpop.f32.mrf.mxu0
        %v973 = vadd.f32 %v872, %v972
        %974 = vmatmul.f32.gmra.mxu0 %v306
        %v975 = vpop.f32.mrf.mxu0
        %v976 = vadd.f32 %v875, %v975
        %977 = vmatmul.f32.gmra.mxu0 %v307
        %v978 = vpop.f32.mrf.mxu0
        %v979 = vadd.f32 %v878, %v978
        %980 = vmatmul.f32.gmra.mxu0 %v308
        %v981 = vpop.f32.mrf.mxu0
        %v982 = vadd.f32 %v881, %v981
        %983 = vmatmul.f32.gmra.mxu0 %v309
        %v984 = vpop.f32.mrf.mxu0
        %v985 = vadd.f32 %v884, %v984
        %986 = vmatmul.f32.gmra.mxu0 %v310
        %v987 = vpop.f32.mrf.mxu0
        %v988 = vadd.f32 %v887, %v987
        %989 = vmatmul.f32.gmra.mxu0 %v311
        %v990 = vpop.f32.mrf.mxu0
        %v991 = vadd.f32 %v890, %v990
        %992 = vmatmul.f32.gmra.mxu0 %v312
        %v993 = vpop.f32.mrf.mxu0
        %v994 = vadd.f32 %v893, %v993
        %995 = vmatmul.f32.gmra.mxu0 %v313
        %v996 = vpop.f32.mrf.mxu0
        %v997 = vadd.f32 %v896, %v996
        %998 = vmatmul.f32.gmra.mxu0 %v314
        %v999 = vpop.f32.mrf.mxu0
        %v1000 = vadd.f32 %v899, %v999
        %1001 = vmatmul.f32.gmra.mxu0 %v315
        %v1002 = vpop.f32.mrf.mxu0
        %v1003 = vadd.f32 %v902, %v1002
        %1004 = vmatmul.f32.gmra.mxu0 %v316
        %v1005 = vpop.f32.mrf.mxu0
        %v1006 = vadd.f32 %v905, %v1005
        %1007 = vmatmul.f32.gmra.mxu0 %v317
        %v1008 = vpop.f32.mrf.mxu0
        %v1009 = vadd.f32 %v908, %v1008
        %1010 = vmatmul.f32.gmra.mxu0 %v318
        %v1011 = vpop.f32.mrf.mxu0
        %v1012 = vadd.f32 %v911, %v1011
        %1013 = vmatmul.f32.gmra.mxu0 %v319
        %v1014 = vpop.f32.mrf.mxu0
        %v1015 = vadd.f32 %v914, %v1014
        %1016 = vmatmul.f32.gmra.mxu0 %v320
        %v1017 = vpop.f32.mrf.mxu0
        %v1018 = vadd.f32 %v917, %v1017
        %1019 = vmatmul.f32.gmra.mxu0 %v321
        %v1020 = vpop.f32.mrf.mxu0
        %v1021 = vadd.f32 %v920, %v1020
        %1022 = vmatmul.f32.gmra.mxu0 %v322
        %v1023 = vpop.f32.mrf.mxu0
        %v1024 = vadd.f32 %v923, %v1023
        %1025 = vmatmul.f32.gmra.mxu0 %v323
        %v1026 = vpop.f32.mrf.mxu0
        %v1027 = vadd.f32 %v926, %v1026
        %1028 = vmatmul.f32.gmra.mxu0 %v324
        %v1029 = vpop.f32.mrf.mxu0
        %v1030 = vadd.f32 %v929, %v1029
        %1031 = vmatmul.f32.gmra.mxu0 %v325
        %v1032 = vpop.f32.mrf.mxu0
        %v1033 = vadd.f32 %v932, %v1032
        %1034 = vdwg.mxu0
        %v1035 = vld [vmem:[%s241 + $0x20] sm:$0xff]
        %v1036 = vld [vmem:[%s241 + $0x28] sm:$0xff]
        %v1037 = vld [vmem:[%s241 + $0x30] sm:$0xff]
        %v1038 = vld [vmem:[%s241 + $0x38] sm:$0xff]
        %v1039 = vld [vmem:[%s241 + $0x40] sm:$0xff]
        %v1040 = vld [vmem:[%s241 + $0x48] sm:$0xff]
        %v1041 = vld [vmem:[%s241 + $0x50] sm:$0xff]
        %v1042 = vld [vmem:[%s241 + $0x58] sm:$0xff]
        %v1043 = vld [vmem:[%s241 + $0x60] sm:$0xff]
        %v1044 = vld [vmem:[%s241 + $0x68] sm:$0xff]
        %v1045 = vld [vmem:[%s241 + $0x70] sm:$0xff]
        %v1046 = vld [vmem:[%s241 + $0x78] sm:$0xff]
        %v1047 = vld [vmem:[%s241 + $0x80] sm:$0xff]
        %v1048 = vld [vmem:[%s241 + $0x88] sm:$0xff]
        %v1049 = vld [vmem:[%s241 + $0x90] sm:$0xff]
        %v1050 = vld [vmem:[%s241 + $0x98] sm:$0xff]
        %v1051 = vld [vmem:[%s241 + $0xa0] sm:$0xff]
        %v1052 = vld [vmem:[%s241 + $0xa8] sm:$0xff]
        %v1053 = vld [vmem:[%s241 + $0xb0] sm:$0xff]
        %v1054 = vld [vmem:[%s241 + $0xb8] sm:$0xff]
        %v1055 = vld [vmem:[%s241 + $0xc0] sm:$0xff]
        %v1056 = vld [vmem:[%s241 + $0xc8] sm:$0xff]
        %v1057 = vld [vmem:[%s241 + $0xd0] sm:$0xff]
        %v1058 = vld [vmem:[%s241 + $0xd8] sm:$0xff]
        %v1059 = vld [vmem:[%s241 + $0xe0] sm:$0xff]
        %v1060 = vld [vmem:[%s241 + $0xe8] sm:$0xff]
        %v1061 = vld [vmem:[%s241 + $0xf0] sm:$0xff]
        %v1062 = vld [vmem:[%s241 + $0xf8] sm:$0xff]
        %v1063 = vld [vmem:[%s241 + $0x21] sm:$0xff]
        %v1064 = vld [vmem:[%s241 + $0x29] sm:$0xff]
        %v1065 = vld [vmem:[%s241 + $0x31] sm:$0xff]
        %v1066 = vld [vmem:[%s241 + $0x39] sm:$0xff]
        %v1067 = vld [vmem:[%s241 + $0x41] sm:$0xff]
        %v1068 = vld [vmem:[%s241 + $0x49] sm:$0xff]
        %v1069 = vld [vmem:[%s241 + $0x51] sm:$0xff]
        %v1070 = vld [vmem:[%s241 + $0x59] sm:$0xff]
        %v1071 = vld [vmem:[%s241 + $0x61] sm:$0xff]
        %v1072 = vld [vmem:[%s241 + $0x69] sm:$0xff]
        %v1073 = vld [vmem:[%s241 + $0x71] sm:$0xff]
        %v1074 = vld [vmem:[%s241 + $0x79] sm:$0xff]
        %v1075 = vld [vmem:[%s241 + $0x81] sm:$0xff]
        %v1076 = vld [vmem:[%s241 + $0x89] sm:$0xff]
        %v1077 = vld [vmem:[%s241 + $0x91] sm:$0xff]
        %v1078 = vld [vmem:[%s241 + $0x99] sm:$0xff]
        %v1079 = vld [vmem:[%s241 + $0xa1] sm:$0xff]
        %v1080 = vld [vmem:[%s241 + $0xa9] sm:$0xff]
        %v1081 = vld [vmem:[%s241 + $0xb1] sm:$0xff]
        %v1082 = vld [vmem:[%s241 + $0xb9] sm:$0xff]
        %v1083 = vld [vmem:[%s241 + $0xc1] sm:$0xff]
        %v1084 = vld [vmem:[%s241 + $0xc9] sm:$0xff]
        %v1085 = vld [vmem:[%s241 + $0xd1] sm:$0xff]
        %v1086 = vld [vmem:[%s241 + $0xd9] sm:$0xff]
        %v1087 = vld [vmem:[%s241 + $0xe1] sm:$0xff]
        %v1088 = vld [vmem:[%s241 + $0xe9] sm:$0xff]
        %v1089 = vld [vmem:[%s241 + $0xf1] sm:$0xff]
        %v1090 = vld [vmem:[%s241 + $0xf9] sm:$0xff]
        %v1091 = vld [vmem:[%s241 + $0x22] sm:$0xff]
        %v1092 = vld [vmem:[%s241 + $0x2a] sm:$0xff]
        %v1093 = vld [vmem:[%s241 + $0x32] sm:$0xff]
        %v1094 = vld [vmem:[%s241 + $0x3a] sm:$0xff]
        %v1095 = vld [vmem:[%s241 + $0x42] sm:$0xff]
        %v1096 = vld [vmem:[%s241 + $0x4a] sm:$0xff]
        %v1097 = vld [vmem:[%s241 + $0x52] sm:$0xff]
        %v1098 = vld [vmem:[%s241 + $0x5a] sm:$0xff]
        %v1099 = vld [vmem:[%s241 + $0x62] sm:$0xff]
        %v1100 = vld [vmem:[%s241 + $0x6a] sm:$0xff]
        %v1101 = vld [vmem:[%s241 + $0x72] sm:$0xff]
        %v1102 = vld [vmem:[%s241 + $0x7a] sm:$0xff]
        %v1103 = vld [vmem:[%s241 + $0x82] sm:$0xff]
        %v1104 = vld [vmem:[%s241 + $0x8a] sm:$0xff]
        %v1105 = vld [vmem:[%s241 + $0x92] sm:$0xff]
        %v1106 = vld [vmem:[%s241 + $0x9a] sm:$0xff]
        %v1107 = vld [vmem:[%s241 + $0xa2] sm:$0xff]
        %v1108 = vld [vmem:[%s241 + $0xaa] sm:$0xff]
        %v1109 = vld [vmem:[%s241 + $0xb2] sm:$0xff]
        %v1110 = vld [vmem:[%s241 + $0xba] sm:$0xff]
        %v1111 = vld [vmem:[%s241 + $0xc2] sm:$0xff]
        %v1112 = vld [vmem:[%s241 + $0xca] sm:$0xff]
        %v1113 = vld [vmem:[%s241 + $0xd2] sm:$0xff]
        %v1114 = vld [vmem:[%s241 + $0xda] sm:$0xff]
        %v1115 = vld [vmem:[%s241 + $0xe2] sm:$0xff]
        %v1116 = vld [vmem:[%s241 + $0xea] sm:$0xff]
        %v1117 = vld [vmem:[%s241 + $0xf2] sm:$0xff]
        %v1118 = vld [vmem:[%s241 + $0xfa] sm:$0xff]
        %s1119 = scalar_lea.vmem [#allocation5], 768
        %v1120 = vld [vmem:[%s1119] sm:$0xff]
        %v1121 = vld [vmem:[%s1119 + $0x8] sm:$0xff]
        %v1122 = vld [vmem:[%s1119 + $0x10] sm:$0xff]
        %v1123 = vld [vmem:[%s1119 + $0x18] sm:$0xff]
        %v1124 = vld [vmem:[%s1119 + $0x20] sm:$0xff]
        %v1125 = vld [vmem:[%s1119 + $0x28] sm:$0xff]
        %v1126 = vld [vmem:[%s1119 + $0x30] sm:$0xff]
        %v1127 = vld [vmem:[%s1119 + $0x38] sm:$0xff]
        %v1128 = vld [vmem:[%s1119 + $0x40] sm:$0xff]
        %v1129 = vld [vmem:[%s1119 + $0x48] sm:$0xff]
        %v1130 = vld [vmem:[%s1119 + $0x50] sm:$0xff]
        %v1131 = vld [vmem:[%s1119 + $0x58] sm:$0xff]
        %v1132 = vld [vmem:[%s1119 + $0x60] sm:$0xff]
        %v1133 = vld [vmem:[%s1119 + $0x68] sm:$0xff]
        %v1134 = vld [vmem:[%s1119 + $0x70] sm:$0xff]
        %v1135 = vld [vmem:[%s1119 + $0x78] sm:$0xff]
        %v1136 = vld [vmem:[%s1119 + $0x80] sm:$0xff]
        %v1137 = vld [vmem:[%s1119 + $0x88] sm:$0xff]
        %v1138 = vld [vmem:[%s1119 + $0x90] sm:$0xff]
        %v1139 = vld [vmem:[%s1119 + $0x98] sm:$0xff]
        %v1140 = vld [vmem:[%s1119 + $0xa0] sm:$0xff]
        %v1141 = vld [vmem:[%s1119 + $0xa8] sm:$0xff]
        %v1142 = vld [vmem:[%s1119 + $0xb0] sm:$0xff]
        %v1143 = vld [vmem:[%s1119 + $0xb8] sm:$0xff]
        %v1144 = vld [vmem:[%s1119 + $0xc0] sm:$0xff]
        %v1145 = vld [vmem:[%s1119 + $0xc8] sm:$0xff]
        %v1146 = vld [vmem:[%s1119 + $0xd0] sm:$0xff]
        %v1147 = vld [vmem:[%s1119 + $0xd8] sm:$0xff]
        %v1148 = vld [vmem:[%s1119 + $0xe0] sm:$0xff]
        %v1149 = vld [vmem:[%s1119 + $0xe8] sm:$0xff]
        %v1150 = vld [vmem:[%s1119 + $0xf0] sm:$0xff]
        %v1151 = vld [vmem:[%s1119 + $0xf8] sm:$0xff]
        %v1152 = vld [vmem:[%s1119 + $0x100] sm:$0xff]
        %v1153 = vld [vmem:[%s1119 + $0x108] sm:$0xff]
        %v1154 = vld [vmem:[%s1119 + $0x110] sm:$0xff]
        %v1155 = vld [vmem:[%s1119 + $0x118] sm:$0xff]
        %v1156 = vld [vmem:[%s1119 + $0x120] sm:$0xff]
        %v1157 = vld [vmem:[%s1119 + $0x128] sm:$0xff]
        %v1158 = vld [vmem:[%s1119 + $0x130] sm:$0xff]
        %v1159 = vld [vmem:[%s1119 + $0x138] sm:$0xff]
        %v1160 = vld [vmem:[%s1119 + $0x140] sm:$0xff]
        %v1161 = vld [vmem:[%s1119 + $0x148] sm:$0xff]
        %v1162 = vld [vmem:[%s1119 + $0x150] sm:$0xff]
        %v1163 = vld [vmem:[%s1119 + $0x158] sm:$0xff]
        %v1164 = vld [vmem:[%s1119 + $0x160] sm:$0xff]
        %v1165 = vld [vmem:[%s1119 + $0x168] sm:$0xff]
        %v1166 = vld [vmem:[%s1119 + $0x170] sm:$0xff]
        %v1167 = vld [vmem:[%s1119 + $0x178] sm:$0xff]
        %1168 = vmatpush.msra.mxu0 %v1135
        %1169 = vmatpush.msra.mxu0 %v1134
        %1170 = vmatpush.msra.mxu0 %v1133
        %1171 = vmatpush.msra.mxu0 %v1132
        %1172 = vmatpush.msra.mxu0 %v1131
        %1173 = vmatpush.msra.mxu0 %v1130
        %1174 = vmatpush.msra.mxu0 %v1129
        %1175 = vmatpush.msra.mxu0 %v1128
        %1176 = vmatpush.msra.mxu0 %v1127
        %1177 = vmatpush.msra.mxu0 %v1126
        %1178 = vmatpush.msra.mxu0 %v1125
        %1179 = vmatpush.msra.mxu0 %v1124
        %1180 = vmatpush.msra.mxu0 %v1123
        %1181 = vmatpush.msra.mxu0 %v1122
        %1182 = vmatpush.msra.mxu0 %v1121
        %1183 = vmatpush.msra.mxu0 %v1120
        %1184 = vmatmul.f32.gmra.mxu0 %v1035
        %v1185 = vpop.f32.mrf.mxu0
        %v1186 = vadd.f32 0.0, %v1185
        %1187 = vmatmul.f32.gmra.mxu0 %v1036
        %v1188 = vpop.f32.mrf.mxu0
        %v1189 = vadd.f32 0.0, %v1188
        %1190 = vmatmul.f32.gmra.mxu0 %v1037
        %v1191 = vpop.f32.mrf.mxu0
        %v1192 = vadd.f32 0.0, %v1191
        %1193 = vmatmul.f32.gmra.mxu0 %v1038
        %v1194 = vpop.f32.mrf.mxu0
        %v1195 = vadd.f32 0.0, %v1194
        %1196 = vmatmul.f32.gmra.mxu0 %v1039
        %v1197 = vpop.f32.mrf.mxu0
        %v1198 = vadd.f32 0.0, %v1197
        %1199 = vmatmul.f32.gmra.mxu0 %v1040
        %v1200 = vpop.f32.mrf.mxu0
        %v1201 = vadd.f32 0.0, %v1200
        %1202 = vmatmul.f32.gmra.mxu0 %v1041
        %v1203 = vpop.f32.mrf.mxu0
        %v1204 = vadd.f32 0.0, %v1203
        %1205 = vmatmul.f32.gmra.mxu0 %v1042
        %v1206 = vpop.f32.mrf.mxu0
        %v1207 = vadd.f32 0.0, %v1206
        %1208 = vmatmul.f32.gmra.mxu0 %v1043
        %v1209 = vpop.f32.mrf.mxu0
        %v1210 = vadd.f32 0.0, %v1209
        %1211 = vmatmul.f32.gmra.mxu0 %v1044
        %v1212 = vpop.f32.mrf.mxu0
        %v1213 = vadd.f32 0.0, %v1212
        %1214 = vmatmul.f32.gmra.mxu0 %v1045
        %v1215 = vpop.f32.mrf.mxu0
        %v1216 = vadd.f32 0.0, %v1215
        %1217 = vmatmul.f32.gmra.mxu0 %v1046
        %v1218 = vpop.f32.mrf.mxu0
        %v1219 = vadd.f32 0.0, %v1218
        %1220 = vmatmul.f32.gmra.mxu0 %v1047
        %v1221 = vpop.f32.mrf.mxu0
        %v1222 = vadd.f32 0.0, %v1221
        %1223 = vmatmul.f32.gmra.mxu0 %v1048
        %v1224 = vpop.f32.mrf.mxu0
        %v1225 = vadd.f32 0.0, %v1224
        %1226 = vmatmul.f32.gmra.mxu0 %v1049
        %v1227 = vpop.f32.mrf.mxu0
        %v1228 = vadd.f32 0.0, %v1227
        %1229 = vmatmul.f32.gmra.mxu0 %v1050
        %v1230 = vpop.f32.mrf.mxu0
        %v1231 = vadd.f32 0.0, %v1230
        %1232 = vmatmul.f32.gmra.mxu0 %v1051
        %v1233 = vpop.f32.mrf.mxu0
        %v1234 = vadd.f32 0.0, %v1233
        %1235 = vmatmul.f32.gmra.mxu0 %v1052
        %v1236 = vpop.f32.mrf.mxu0
        %v1237 = vadd.f32 0.0, %v1236
        %1238 = vmatmul.f32.gmra.mxu0 %v1053
        %v1239 = vpop.f32.mrf.mxu0
        %v1240 = vadd.f32 0.0, %v1239
        %1241 = vmatmul.f32.gmra.mxu0 %v1054
        %v1242 = vpop.f32.mrf.mxu0
        %v1243 = vadd.f32 0.0, %v1242
        %1244 = vmatmul.f32.gmra.mxu0 %v1055
        %v1245 = vpop.f32.mrf.mxu0
        %v1246 = vadd.f32 0.0, %v1245
        %1247 = vmatmul.f32.gmra.mxu0 %v1056
        %v1248 = vpop.f32.mrf.mxu0
        %v1249 = vadd.f32 0.0, %v1248
        %1250 = vmatmul.f32.gmra.mxu0 %v1057
        %v1251 = vpop.f32.mrf.mxu0
        %v1252 = vadd.f32 0.0, %v1251
        %1253 = vmatmul.f32.gmra.mxu0 %v1058
        %v1254 = vpop.f32.mrf.mxu0
        %v1255 = vadd.f32 0.0, %v1254
        %1256 = vmatmul.f32.gmra.mxu0 %v1059
        %v1257 = vpop.f32.mrf.mxu0
        %v1258 = vadd.f32 0.0, %v1257
        %1259 = vmatmul.f32.gmra.mxu0 %v1060
        %v1260 = vpop.f32.mrf.mxu0
        %v1261 = vadd.f32 0.0, %v1260
        %1262 = vmatmul.f32.gmra.mxu0 %v1061
        %v1263 = vpop.f32.mrf.mxu0
        %v1264 = vadd.f32 0.0, %v1263
        %1265 = vmatmul.f32.gmra.mxu0 %v1062
        %v1266 = vpop.f32.mrf.mxu0
        %v1267 = vadd.f32 0.0, %v1266
        %1268 = vdwg.mxu0
        %1269 = vmatpush.msra.mxu0 %v1151
        %1270 = vmatpush.msra.mxu0 %v1150
        %1271 = vmatpush.msra.mxu0 %v1149
        %1272 = vmatpush.msra.mxu0 %v1148
        %1273 = vmatpush.msra.mxu0 %v1147
        %1274 = vmatpush.msra.mxu0 %v1146
        %1275 = vmatpush.msra.mxu0 %v1145
        %1276 = vmatpush.msra.mxu0 %v1144
        %1277 = vmatpush.msra.mxu0 %v1143
        %1278 = vmatpush.msra.mxu0 %v1142
        %1279 = vmatpush.msra.mxu0 %v1141
        %1280 = vmatpush.msra.mxu0 %v1140
        %1281 = vmatpush.msra.mxu0 %v1139
        %1282 = vmatpush.msra.mxu0 %v1138
        %1283 = vmatpush.msra.mxu0 %v1137
        %1284 = vmatpush.msra.mxu0 %v1136
        %1285 = vmatmul.f32.gmra.mxu0 %v1063
        %v1286 = vpop.f32.mrf.mxu0
        %v1287 = vadd.f32 %v1186, %v1286
        %1288 = vmatmul.f32.gmra.mxu0 %v1064
        %v1289 = vpop.f32.mrf.mxu0
        %v1290 = vadd.f32 %v1189, %v1289
        %1291 = vmatmul.f32.gmra.mxu0 %v1065
        %v1292 = vpop.f32.mrf.mxu0
        %v1293 = vadd.f32 %v1192, %v1292
        %1294 = vmatmul.f32.gmra.mxu0 %v1066
        %v1295 = vpop.f32.mrf.mxu0
        %v1296 = vadd.f32 %v1195, %v1295
        %1297 = vmatmul.f32.gmra.mxu0 %v1067
        %v1298 = vpop.f32.mrf.mxu0
        %v1299 = vadd.f32 %v1198, %v1298
        %1300 = vmatmul.f32.gmra.mxu0 %v1068
        %v1301 = vpop.f32.mrf.mxu0
        %v1302 = vadd.f32 %v1201, %v1301
        %1303 = vmatmul.f32.gmra.mxu0 %v1069
        %v1304 = vpop.f32.mrf.mxu0
        %v1305 = vadd.f32 %v1204, %v1304
        %1306 = vmatmul.f32.gmra.mxu0 %v1070
        %v1307 = vpop.f32.mrf.mxu0
        %v1308 = vadd.f32 %v1207, %v1307
        %1309 = vmatmul.f32.gmra.mxu0 %v1071
        %v1310 = vpop.f32.mrf.mxu0
        %v1311 = vadd.f32 %v1210, %v1310
        %1312 = vmatmul.f32.gmra.mxu0 %v1072
        %v1313 = vpop.f32.mrf.mxu0
        %v1314 = vadd.f32 %v1213, %v1313
        %1315 = vmatmul.f32.gmra.mxu0 %v1073
        %v1316 = vpop.f32.mrf.mxu0
        %v1317 = vadd.f32 %v1216, %v1316
        %1318 = vmatmul.f32.gmra.mxu0 %v1074
        %v1319 = vpop.f32.mrf.mxu0
        %v1320 = vadd.f32 %v1219, %v1319
        %1321 = vmatmul.f32.gmra.mxu0 %v1075
        %v1322 = vpop.f32.mrf.mxu0
        %v1323 = vadd.f32 %v1222, %v1322
        %1324 = vmatmul.f32.gmra.mxu0 %v1076
        %v1325 = vpop.f32.mrf.mxu0
        %v1326 = vadd.f32 %v1225, %v1325
        %1327 = vmatmul.f32.gmra.mxu0 %v1077
        %v1328 = vpop.f32.mrf.mxu0
        %v1329 = vadd.f32 %v1228, %v1328
        %1330 = vmatmul.f32.gmra.mxu0 %v1078
        %v1331 = vpop.f32.mrf.mxu0
        %v1332 = vadd.f32 %v1231, %v1331
        %1333 = vmatmul.f32.gmra.mxu0 %v1079
        %v1334 = vpop.f32.mrf.mxu0
        %v1335 = vadd.f32 %v1234, %v1334
        %1336 = vmatmul.f32.gmra.mxu0 %v1080
        %v1337 = vpop.f32.mrf.mxu0
        %v1338 = vadd.f32 %v1237, %v1337
        %1339 = vmatmul.f32.gmra.mxu0 %v1081
        %v1340 = vpop.f32.mrf.mxu0
        %v1341 = vadd.f32 %v1240, %v1340
        %1342 = vmatmul.f32.gmra.mxu0 %v1082
        %v1343 = vpop.f32.mrf.mxu0
        %v1344 = vadd.f32 %v1243, %v1343
        %1345 = vmatmul.f32.gmra.mxu0 %v1083
        %v1346 = vpop.f32.mrf.mxu0
        %v1347 = vadd.f32 %v1246, %v1346
        %1348 = vmatmul.f32.gmra.mxu0 %v1084
        %v1349 = vpop.f32.mrf.mxu0
        %v1350 = vadd.f32 %v1249, %v1349
        %1351 = vmatmul.f32.gmra.mxu0 %v1085
        %v1352 = vpop.f32.mrf.mxu0
        %v1353 = vadd.f32 %v1252, %v1352
        %1354 = vmatmul.f32.gmra.mxu0 %v1086
        %v1355 = vpop.f32.mrf.mxu0
        %v1356 = vadd.f32 %v1255, %v1355
        %1357 = vmatmul.f32.gmra.mxu0 %v1087
        %v1358 = vpop.f32.mrf.mxu0
        %v1359 = vadd.f32 %v1258, %v1358
        %1360 = vmatmul.f32.gmra.mxu0 %v1088
        %v1361 = vpop.f32.mrf.mxu0
        %v1362 = vadd.f32 %v1261, %v1361
        %1363 = vmatmul.f32.gmra.mxu0 %v1089
        %v1364 = vpop.f32.mrf.mxu0
        %v1365 = vadd.f32 %v1264, %v1364
        %1366 = vmatmul.f32.gmra.mxu0 %v1090
        %v1367 = vpop.f32.mrf.mxu0
        %v1368 = vadd.f32 %v1267, %v1367
        %1369 = vdwg.mxu0
        %1370 = vmatpush.msra.mxu0 %v1167
        %1371 = vmatpush.msra.mxu0 %v1166
        %1372 = vmatpush.msra.mxu0 %v1165
        %1373 = vmatpush.msra.mxu0 %v1164
        %1374 = vmatpush.msra.mxu0 %v1163
        %1375 = vmatpush.msra.mxu0 %v1162
        %1376 = vmatpush.msra.mxu0 %v1161
        %1377 = vmatpush.msra.mxu0 %v1160
        %1378 = vmatpush.msra.mxu0 %v1159
        %1379 = vmatpush.msra.mxu0 %v1158
        %1380 = vmatpush.msra.mxu0 %v1157
        %1381 = vmatpush.msra.mxu0 %v1156
        %1382 = vmatpush.msra.mxu0 %v1155
        %1383 = vmatpush.msra.mxu0 %v1154
        %1384 = vmatpush.msra.mxu0 %v1153
        %1385 = vmatpush.msra.mxu0 %v1152
        %1386 = vmatmul.f32.gmra.mxu0 %v1091
        %v1387 = vpop.f32.mrf.mxu0
        %v1388 = vadd.f32 %v1287, %v1387
        %1389 = vmatmul.f32.gmra.mxu0 %v1092
        %v1390 = vpop.f32.mrf.mxu0
        %v1391 = vadd.f32 %v1290, %v1390
        %1392 = vmatmul.f32.gmra.mxu0 %v1093
        %v1393 = vpop.f32.mrf.mxu0
        %v1394 = vadd.f32 %v1293, %v1393
        %1395 = vmatmul.f32.gmra.mxu0 %v1094
        %v1396 = vpop.f32.mrf.mxu0
        %v1397 = vadd.f32 %v1296, %v1396
        %1398 = vmatmul.f32.gmra.mxu0 %v1095
        %v1399 = vpop.f32.mrf.mxu0
        %v1400 = vadd.f32 %v1299, %v1399
        %1401 = vmatmul.f32.gmra.mxu0 %v1096
        %v1402 = vpop.f32.mrf.mxu0
        %v1403 = vadd.f32 %v1302, %v1402
        %1404 = vmatmul.f32.gmra.mxu0 %v1097
        %v1405 = vpop.f32.mrf.mxu0
        %v1406 = vadd.f32 %v1305, %v1405
        %1407 = vmatmul.f32.gmra.mxu0 %v1098
        %v1408 = vpop.f32.mrf.mxu0
        %v1409 = vadd.f32 %v1308, %v1408
        %1410 = vmatmul.f32.gmra.mxu0 %v1099
        %v1411 = vpop.f32.mrf.mxu0
        %v1412 = vadd.f32 %v1311, %v1411
        %1413 = vmatmul.f32.gmra.mxu0 %v1100
        %v1414 = vpop.f32.mrf.mxu0
        %v1415 = vadd.f32 %v1314, %v1414
        %1416 = vmatmul.f32.gmra.mxu0 %v1101
        %v1417 = vpop.f32.mrf.mxu0
        %v1418 = vadd.f32 %v1317, %v1417
        %1419 = vmatmul.f32.gmra.mxu0 %v1102
        %v1420 = vpop.f32.mrf.mxu0
        %v1421 = vadd.f32 %v1320, %v1420
        %1422 = vmatmul.f32.gmra.mxu0 %v1103
        %v1423 = vpop.f32.mrf.mxu0
        %v1424 = vadd.f32 %v1323, %v1423
        %1425 = vmatmul.f32.gmra.mxu0 %v1104
        %v1426 = vpop.f32.mrf.mxu0
        %v1427 = vadd.f32 %v1326, %v1426
        %1428 = vmatmul.f32.gmra.mxu0 %v1105
        %v1429 = vpop.f32.mrf.mxu0
        %v1430 = vadd.f32 %v1329, %v1429
        %1431 = vmatmul.f32.gmra.mxu0 %v1106
        %v1432 = vpop.f32.mrf.mxu0
        %v1433 = vadd.f32 %v1332, %v1432
        %1434 = vmatmul.f32.gmra.mxu0 %v1107
        %v1435 = vpop.f32.mrf.mxu0
        %v1436 = vadd.f32 %v1335, %v1435
        %1437 = vmatmul.f32.gmra.mxu0 %v1108
        %v1438 = vpop.f32.mrf.mxu0
        %v1439 = vadd.f32 %v1338, %v1438
        %1440 = vmatmul.f32.gmra.mxu0 %v1109
        %v1441 = vpop.f32.mrf.mxu0
        %v1442 = vadd.f32 %v1341, %v1441
        %1443 = vmatmul.f32.gmra.mxu0 %v1110
        %v1444 = vpop.f32.mrf.mxu0
        %v1445 = vadd.f32 %v1344, %v1444
        %1446 = vmatmul.f32.gmra.mxu0 %v1111
        %v1447 = vpop.f32.mrf.mxu0
        %v1448 = vadd.f32 %v1347, %v1447
        %1449 = vmatmul.f32.gmra.mxu0 %v1112
        %v1450 = vpop.f32.mrf.mxu0
        %v1451 = vadd.f32 %v1350, %v1450
        %1452 = vmatmul.f32.gmra.mxu0 %v1113
        %v1453 = vpop.f32.mrf.mxu0
        %v1454 = vadd.f32 %v1353, %v1453
        %1455 = vmatmul.f32.gmra.mxu0 %v1114
        %v1456 = vpop.f32.mrf.mxu0
        %v1457 = vadd.f32 %v1356, %v1456
        %1458 = vmatmul.f32.gmra.mxu0 %v1115
        %v1459 = vpop.f32.mrf.mxu0
        %v1460 = vadd.f32 %v1359, %v1459
        %1461 = vmatmul.f32.gmra.mxu0 %v1116
        %v1462 = vpop.f32.mrf.mxu0
        %v1463 = vadd.f32 %v1362, %v1462
        %1464 = vmatmul.f32.gmra.mxu0 %v1117
        %v1465 = vpop.f32.mrf.mxu0
        %v1466 = vadd.f32 %v1365, %v1465
        %1467 = vmatmul.f32.gmra.mxu0 %v1118
        %v1468 = vpop.f32.mrf.mxu0
        %v1469 = vadd.f32 %v1368, %v1468
        %1470 = vdwg.mxu0
        %v1471 = vadd.f32 %v952, %v1388
        %v1472 = vadd.f32 %v955, %v1391
        %v1473 = vadd.f32 %v958, %v1394
        %v1474 = vadd.f32 %v961, %v1397
        %v1475 = vadd.f32 %v964, %v1400
        %v1476 = vadd.f32 %v967, %v1403
        %v1477 = vadd.f32 %v970, %v1406
        %v1478 = vadd.f32 %v973, %v1409
        %v1479 = vadd.f32 %v976, %v1412
        %v1480 = vadd.f32 %v979, %v1415
        %v1481 = vadd.f32 %v982, %v1418
        %v1482 = vadd.f32 %v985, %v1421
        %v1483 = vadd.f32 %v988, %v1424
        %v1484 = vadd.f32 %v991, %v1427
        %v1485 = vadd.f32 %v994, %v1430
        %v1486 = vadd.f32 %v997, %v1433
        %v1487 = vadd.f32 %v1000, %v1436
        %v1488 = vadd.f32 %v1003, %v1439
        %v1489 = vadd.f32 %v1006, %v1442
        %v1490 = vadd.f32 %v1009, %v1445
        %v1491 = vadd.f32 %v1012, %v1448
        %v1492 = vadd.f32 %v1015, %v1451
        %v1493 = vadd.f32 %v1018, %v1454
        %v1494 = vadd.f32 %v1021, %v1457
        %v1495 = vadd.f32 %v1024, %v1460
        %v1496 = vadd.f32 %v1027, %v1463
        %v1497 = vadd.f32 %v1030, %v1466
        %v1498 = vadd.f32 %v1033, %v1469
        %v1499 = vmax.f32 %v1471, 0.0
        %v1500 = vmax.f32 %v1472, 0.0
        %v1501 = vmax.f32 %v1473, 0.0
        %v1502 = vmax.f32 %v1474, 0.0
        %v1503 = vmax.f32 %v1475, 0.0
        %v1504 = vmax.f32 %v1476, 0.0
        %v1505 = vmax.f32 %v1477, 0.0
        %v1506 = vmax.f32 %v1478, 0.0
        %v1507 = vmax.f32 %v1479, 0.0
        %v1508 = vmax.f32 %v1480, 0.0
        %v1509 = vmax.f32 %v1481, 0.0
        %v1510 = vmax.f32 %v1482, 0.0
        %v1511 = vmax.f32 %v1483, 0.0
        %v1512 = vmax.f32 %v1484, 0.0
        %v1513 = vmax.f32 %v1485, 0.0
        %v1514 = vmax.f32 %v1486, 0.0
        %v1515 = vmax.f32 %v1487, 0.0
        %v1516 = vmax.f32 %v1488, 0.0
        %v1517 = vmax.f32 %v1489, 0.0
        %v1518 = vmax.f32 %v1490, 0.0
        %v1519 = vmax.f32 %v1491, 0.0
        %v1520 = vmax.f32 %v1492, 0.0
        %v1521 = vmax.f32 %v1493, 0.0
        %v1522 = vmax.f32 %v1494, 0.0
        %v1523 = vmax.f32 %v1495, 0.0
        %v1524 = vmax.f32 %v1496, 0.0
        %v1525 = vmax.f32 %v1497, 0.0
        %v1526 = vmax.f32 %v1498, 0.0
        %1527 = vst [vmem:[#allocation3] sm:$0xff] %v1499
        %1528 = vst [vmem:[#allocation3 + $0x8] sm:$0xff] %v1500
        %1529 = vst [vmem:[#allocation3 + $0x10] sm:$0xff] %v1501
        %1530 = vst [vmem:[#allocation3 + $0x18] sm:$0xff] %v1502
        %1531 = vst [vmem:[#allocation3 + $0x20] sm:$0xff] %v1503
        %1532 = vst [vmem:[#allocation3 + $0x28] sm:$0xff] %v1504
        %1533 = vst [vmem:[#allocation3 + $0x30] sm:$0xff] %v1505
        %1534 = vst [vmem:[#allocation3 + $0x38] sm:$0xff] %v1506
        %1535 = vst [vmem:[#allocation3 + $0x40] sm:$0xff] %v1507
        %1536 = vst [vmem:[#allocation3 + $0x48] sm:$0xff] %v1508
        %1537 = vst [vmem:[#allocation3 + $0x50] sm:$0xff] %v1509
        %1538 = vst [vmem:[#allocation3 + $0x58] sm:$0xff] %v1510
        %1539 = vst [vmem:[#allocation3 + $0x60] sm:$0xff] %v1511
        %1540 = vst [vmem:[#allocation3 + $0x68] sm:$0xff] %v1512
        %1541 = vst [vmem:[#allocation3 + $0x70] sm:$0xff] %v1513
        %1542 = vst [vmem:[#allocation3 + $0x78] sm:$0xff] %v1514
        %1543 = vst [vmem:[#allocation3 + $0x80] sm:$0xff] %v1515
        %1544 = vst [vmem:[#allocation3 + $0x88] sm:$0xff] %v1516
        %1545 = vst [vmem:[#allocation3 + $0x90] sm:$0xff] %v1517
        %1546 = vst [vmem:[#allocation3 + $0x98] sm:$0xff] %v1518
        %1547 = vst [vmem:[#allocation3 + $0xa0] sm:$0xff] %v1519
        %1548 = vst [vmem:[#allocation3 + $0xa8] sm:$0xff] %v1520
        %1549 = vst [vmem:[#allocation3 + $0xb0] sm:$0xff] %v1521
        %1550 = vst [vmem:[#allocation3 + $0xb8] sm:$0xff] %v1522
        %1551 = vst [vmem:[#allocation3 + $0xc0] sm:$0xff] %v1523
        %1552 = vst [vmem:[#allocation3 + $0xc8] sm:$0xff] %v1524
        %1553 = vst [vmem:[#allocation3 + $0xd0] sm:$0xff] %v1525
        %1554 = vst [vmem:[#allocation3 + $0xd8] sm:$0xff] %v1526
        %v1555 = vld [vmem:[#allocation3] sm:$0xff]
        %v1556 = vld [vmem:[#allocation3 + $0x8] sm:$0xff]
        %v1557 = vld [vmem:[#allocation3 + $0x10] sm:$0xff]
        %v1558 = vld [vmem:[#allocation3 + $0x18] sm:$0xff]
        %v1559 = vld [vmem:[#allocation3 + $0x20] sm:$0xff]
        %v1560 = vld [vmem:[#allocation3 + $0x28] sm:$0xff]
        %v1561 = vld [vmem:[#allocation3 + $0x30] sm:$0xff]
        %v1562 = vld [vmem:[#allocation3 + $0x38] sm:$0xff]
        %v1563 = vld [vmem:[#allocation3 + $0x40] sm:$0xff]
        %v1564 = vld [vmem:[#allocation3 + $0x48] sm:$0xff]
        %v1565 = vld [vmem:[#allocation3 + $0x50] sm:$0xff]
        %v1566 = vld [vmem:[#allocation3 + $0x58] sm:$0xff]
        %v1567 = vld [vmem:[#allocation3 + $0x60] sm:$0xff]
        %v1568 = vld [vmem:[#allocation3 + $0x68] sm:$0xff]
        %v1569 = vld [vmem:[#allocation3 + $0x70] sm:$0xff]
        %v1570 = vld [vmem:[#allocation3 + $0x78] sm:$0xff]
        %v1571 = vld [vmem:[#allocation3 + $0x80] sm:$0xff]
        %v1572 = vld [vmem:[#allocation3 + $0x88] sm:$0xff]
        %v1573 = vld [vmem:[#allocation3 + $0x90] sm:$0xff]
        %v1574 = vld [vmem:[#allocation3 + $0x98] sm:$0xff]
        %v1575 = vld [vmem:[#allocation3 + $0xa0] sm:$0xff]
        %v1576 = vld [vmem:[#allocation3 + $0xa8] sm:$0xff]
        %v1577 = vld [vmem:[#allocation3 + $0xb0] sm:$0xff]
        %v1578 = vld [vmem:[#allocation3 + $0xb8] sm:$0xff]
        %v1579 = vld [vmem:[#allocation3 + $0x1] sm:$0xff]
        %v1580 = vld [vmem:[#allocation3 + $0x9] sm:$0xff]
        %v1581 = vld [vmem:[#allocation3 + $0x11] sm:$0xff]
        %v1582 = vld [vmem:[#allocation3 + $0x19] sm:$0xff]
        %v1583 = vld [vmem:[#allocation3 + $0x21] sm:$0xff]
        %v1584 = vld [vmem:[#allocation3 + $0x29] sm:$0xff]
        %v1585 = vld [vmem:[#allocation3 + $0x31] sm:$0xff]
        %v1586 = vld [vmem:[#allocation3 + $0x39] sm:$0xff]
        %v1587 = vld [vmem:[#allocation3 + $0x41] sm:$0xff]
        %v1588 = vld [vmem:[#allocation3 + $0x49] sm:$0xff]
        %v1589 = vld [vmem:[#allocation3 + $0x51] sm:$0xff]
        %v1590 = vld [vmem:[#allocation3 + $0x59] sm:$0xff]
        %v1591 = vld [vmem:[#allocation3 + $0x61] sm:$0xff]
        %v1592 = vld [vmem:[#allocation3 + $0x69] sm:$0xff]
        %v1593 = vld [vmem:[#allocation3 + $0x71] sm:$0xff]
        %v1594 = vld [vmem:[#allocation3 + $0x79] sm:$0xff]
        %v1595 = vld [vmem:[#allocation3 + $0x81] sm:$0xff]
        %v1596 = vld [vmem:[#allocation3 + $0x89] sm:$0xff]
        %v1597 = vld [vmem:[#allocation3 + $0x91] sm:$0xff]
        %v1598 = vld [vmem:[#allocation3 + $0x99] sm:$0xff]
        %v1599 = vld [vmem:[#allocation3 + $0xa1] sm:$0xff]
        %v1600 = vld [vmem:[#allocation3 + $0xa9] sm:$0xff]
        %v1601 = vld [vmem:[#allocation3 + $0xb1] sm:$0xff]
        %v1602 = vld [vmem:[#allocation3 + $0xb9] sm:$0xff]
        %v1603 = vld [vmem:[#allocation3 + $0x2] sm:$0xff]
        %v1604 = vld [vmem:[#allocation3 + $0xa] sm:$0xff]
        %v1605 = vld [vmem:[#allocation3 + $0x12] sm:$0xff]
        %v1606 = vld [vmem:[#allocation3 + $0x1a] sm:$0xff]
        %v1607 = vld [vmem:[#allocation3 + $0x22] sm:$0xff]
        %v1608 = vld [vmem:[#allocation3 + $0x2a] sm:$0xff]
        %v1609 = vld [vmem:[#allocation3 + $0x32] sm:$0xff]
        %v1610 = vld [vmem:[#allocation3 + $0x3a] sm:$0xff]
        %v1611 = vld [vmem:[#allocation3 + $0x42] sm:$0xff]
        %v1612 = vld [vmem:[#allocation3 + $0x4a] sm:$0xff]
        %v1613 = vld [vmem:[#allocation3 + $0x52] sm:$0xff]
        %v1614 = vld [vmem:[#allocation3 + $0x5a] sm:$0xff]
        %v1615 = vld [vmem:[#allocation3 + $0x62] sm:$0xff]
        %v1616 = vld [vmem:[#allocation3 + $0x6a] sm:$0xff]
        %v1617 = vld [vmem:[#allocation3 + $0x72] sm:$0xff]
        %v1618 = vld [vmem:[#allocation3 + $0x7a] sm:$0xff]
        %v1619 = vld [vmem:[#allocation3 + $0x82] sm:$0xff]
        %v1620 = vld [vmem:[#allocation3 + $0x8a] sm:$0xff]
        %v1621 = vld [vmem:[#allocation3 + $0x92] sm:$0xff]
        %v1622 = vld [vmem:[#allocation3 + $0x9a] sm:$0xff]
        %v1623 = vld [vmem:[#allocation3 + $0xa2] sm:$0xff]
        %v1624 = vld [vmem:[#allocation3 + $0xaa] sm:$0xff]
        %v1625 = vld [vmem:[#allocation3 + $0xb2] sm:$0xff]
        %v1626 = vld [vmem:[#allocation3 + $0xba] sm:$0xff]
        %v1627 = vld [vmem:[#allocation8] sm:$0xff]
        %v1628 = vld [vmem:[#allocation8 + $0x8] sm:$0xff]
        %v1629 = vld [vmem:[#allocation8 + $0x10] sm:$0xff]
        %v1630 = vld [vmem:[#allocation8 + $0x18] sm:$0xff]
        %v1631 = vld [vmem:[#allocation8 + $0x20] sm:$0xff]
        %v1632 = vld [vmem:[#allocation8 + $0x28] sm:$0xff]
        %v1633 = vld [vmem:[#allocation8 + $0x30] sm:$0xff]
        %v1634 = vld [vmem:[#allocation8 + $0x38] sm:$0xff]
        %v1635 = vld [vmem:[#allocation8 + $0x40] sm:$0xff]
        %v1636 = vld [vmem:[#allocation8 + $0x48] sm:$0xff]
        %v1637 = vld [vmem:[#allocation8 + $0x50] sm:$0xff]
        %v1638 = vld [vmem:[#allocation8 + $0x58] sm:$0xff]
        %v1639 = vld [vmem:[#allocation8 + $0x60] sm:$0xff]
        %v1640 = vld [vmem:[#allocation8 + $0x68] sm:$0xff]
        %v1641 = vld [vmem:[#allocation8 + $0x70] sm:$0xff]
        %v1642 = vld [vmem:[#allocation8 + $0x78] sm:$0xff]
        %v1643 = vld [vmem:[#allocation8 + $0x80] sm:$0xff]
        %v1644 = vld [vmem:[#allocation8 + $0x88] sm:$0xff]
        %v1645 = vld [vmem:[#allocation8 + $0x90] sm:$0xff]
        %v1646 = vld [vmem:[#allocation8 + $0x98] sm:$0xff]
        %v1647 = vld [vmem:[#allocation8 + $0xa0] sm:$0xff]
        %v1648 = vld [vmem:[#allocation8 + $0xa8] sm:$0xff]
        %v1649 = vld [vmem:[#allocation8 + $0xb0] sm:$0xff]
        %v1650 = vld [vmem:[#allocation8 + $0xb8] sm:$0xff]
        %v1651 = vld [vmem:[#allocation8 + $0xc0] sm:$0xff]
        %v1652 = vld [vmem:[#allocation8 + $0xc8] sm:$0xff]
        %v1653 = vld [vmem:[#allocation8 + $0xd0] sm:$0xff]
        %v1654 = vld [vmem:[#allocation8 + $0xd8] sm:$0xff]
        %v1655 = vld [vmem:[#allocation8 + $0xe0] sm:$0xff]
        %v1656 = vld [vmem:[#allocation8 + $0xe8] sm:$0xff]
        %v1657 = vld [vmem:[#allocation8 + $0xf0] sm:$0xff]
        %v1658 = vld [vmem:[#allocation8 + $0xf8] sm:$0xff]
        %v1659 = vld [vmem:[#allocation8 + $0x100] sm:$0xff]
        %v1660 = vld [vmem:[#allocation8 + $0x108] sm:$0xff]
        %v1661 = vld [vmem:[#allocation8 + $0x110] sm:$0xff]
        %v1662 = vld [vmem:[#allocation8 + $0x118] sm:$0xff]
        %v1663 = vld [vmem:[#allocation8 + $0x120] sm:$0xff]
        %v1664 = vld [vmem:[#allocation8 + $0x128] sm:$0xff]
        %v1665 = vld [vmem:[#allocation8 + $0x130] sm:$0xff]
        %v1666 = vld [vmem:[#allocation8 + $0x138] sm:$0xff]
        %v1667 = vld [vmem:[#allocation8 + $0x140] sm:$0xff]
        %v1668 = vld [vmem:[#allocation8 + $0x148] sm:$0xff]
        %v1669 = vld [vmem:[#allocation8 + $0x150] sm:$0xff]
        %v1670 = vld [vmem:[#allocation8 + $0x158] sm:$0xff]
        %v1671 = vld [vmem:[#allocation8 + $0x160] sm:$0xff]
        %v1672 = vld [vmem:[#allocation8 + $0x168] sm:$0xff]
        %v1673 = vld [vmem:[#allocation8 + $0x170] sm:$0xff]
        %v1674 = vld [vmem:[#allocation8 + $0x178] sm:$0xff]
        %v1675 = vld [vmem:[#allocation3 + $0xc0] sm:$0xff]
        %v1676 = vld [vmem:[#allocation3 + $0xc8] sm:$0xff]
        %v1677 = vld [vmem:[#allocation3 + $0xc1] sm:$0xff]
        %v1678 = vld [vmem:[#allocation3 + $0xc9] sm:$0xff]
        %v1679 = vld [vmem:[#allocation3 + $0xc2] sm:$0xff]
        %v1680 = vld [vmem:[#allocation3 + $0xca] sm:$0xff]
        %s1681 = scalar_lea.vmem [#allocation8], 384
        %v1682 = vld [vmem:[%s1681] sm:$0xff]
        %v1683 = vld [vmem:[%s1681 + $0x8] sm:$0xff]
        %v1684 = vld [vmem:[%s1681 + $0x10] sm:$0xff]
        %v1685 = vld [vmem:[%s1681 + $0x18] sm:$0xff]
        %v1686 = vld [vmem:[%s1681 + $0x20] sm:$0xff]
        %v1687 = vld [vmem:[%s1681 + $0x28] sm:$0xff]
        %v1688 = vld [vmem:[%s1681 + $0x30] sm:$0xff]
        %v1689 = vld [vmem:[%s1681 + $0x38] sm:$0xff]
        %v1690 = vld [vmem:[%s1681 + $0x40] sm:$0xff]
        %v1691 = vld [vmem:[%s1681 + $0x48] sm:$0xff]
        %v1692 = vld [vmem:[%s1681 + $0x50] sm:$0xff]
        %v1693 = vld [vmem:[%s1681 + $0x58] sm:$0xff]
        %v1694 = vld [vmem:[%s1681 + $0x60] sm:$0xff]
        %v1695 = vld [vmem:[%s1681 + $0x68] sm:$0xff]
        %v1696 = vld [vmem:[%s1681 + $0x70] sm:$0xff]
        %v1697 = vld [vmem:[%s1681 + $0x78] sm:$0xff]
        %v1698 = vld [vmem:[%s1681 + $0x80] sm:$0xff]
        %v1699 = vld [vmem:[%s1681 + $0x88] sm:$0xff]
        %v1700 = vld [vmem:[%s1681 + $0x90] sm:$0xff]
        %v1701 = vld [vmem:[%s1681 + $0x98] sm:$0xff]
        %v1702 = vld [vmem:[%s1681 + $0xa0] sm:$0xff]
        %v1703 = vld [vmem:[%s1681 + $0xa8] sm:$0xff]
        %v1704 = vld [vmem:[%s1681 + $0xb0] sm:$0xff]
        %v1705 = vld [vmem:[%s1681 + $0xb8] sm:$0xff]
        %v1706 = vld [vmem:[%s1681 + $0xc0] sm:$0xff]
        %v1707 = vld [vmem:[%s1681 + $0xc8] sm:$0xff]
        %v1708 = vld [vmem:[%s1681 + $0xd0] sm:$0xff]
        %v1709 = vld [vmem:[%s1681 + $0xd8] sm:$0xff]
        %v1710 = vld [vmem:[%s1681 + $0xe0] sm:$0xff]
        %v1711 = vld [vmem:[%s1681 + $0xe8] sm:$0xff]
        %v1712 = vld [vmem:[%s1681 + $0xf0] sm:$0xff]
        %v1713 = vld [vmem:[%s1681 + $0xf8] sm:$0xff]
        %v1714 = vld [vmem:[%s1681 + $0x100] sm:$0xff]
        %v1715 = vld [vmem:[%s1681 + $0x108] sm:$0xff]
        %v1716 = vld [vmem:[%s1681 + $0x110] sm:$0xff]
        %v1717 = vld [vmem:[%s1681 + $0x118] sm:$0xff]
        %v1718 = vld [vmem:[%s1681 + $0x120] sm:$0xff]
        %v1719 = vld [vmem:[%s1681 + $0x128] sm:$0xff]
        %v1720 = vld [vmem:[%s1681 + $0x130] sm:$0xff]
        %v1721 = vld [vmem:[%s1681 + $0x138] sm:$0xff]
        %v1722 = vld [vmem:[%s1681 + $0x140] sm:$0xff]
        %v1723 = vld [vmem:[%s1681 + $0x148] sm:$0xff]
        %v1724 = vld [vmem:[%s1681 + $0x150] sm:$0xff]
        %v1725 = vld [vmem:[%s1681 + $0x158] sm:$0xff]
        %v1726 = vld [vmem:[%s1681 + $0x160] sm:$0xff]
        %v1727 = vld [vmem:[%s1681 + $0x168] sm:$0xff]
        %v1728 = vld [vmem:[%s1681 + $0x170] sm:$0xff]
        %v1729 = vld [vmem:[%s1681 + $0x178] sm:$0xff]
        %1730 = vmatpush.msra.mxu0 %v1697
        %1731 = vmatpush.msra.mxu0 %v1696
        %1732 = vmatpush.msra.mxu0 %v1695
        %1733 = vmatpush.msra.mxu0 %v1694
        %1734 = vmatpush.msra.mxu0 %v1693
        %1735 = vmatpush.msra.mxu0 %v1692
        %1736 = vmatpush.msra.mxu0 %v1691
        %1737 = vmatpush.msra.mxu0 %v1690
        %1738 = vmatpush.msra.mxu0 %v1689
        %1739 = vmatpush.msra.mxu0 %v1688
        %1740 = vmatpush.msra.mxu0 %v1687
        %1741 = vmatpush.msra.mxu0 %v1686
        %1742 = vmatpush.msra.mxu0 %v1685
        %1743 = vmatpush.msra.mxu0 %v1684
        %1744 = vmatpush.msra.mxu0 %v1683
        %1745 = vmatpush.msra.mxu0 %v1682
        %1746 = vmatmul.f32.gmra.mxu0 %v1557
        %v1747 = vpop.f32.mrf.mxu0
        %v1748 = vadd.f32 0.0, %v1747
        %1749 = vmatmul.f32.gmra.mxu0 %v1558
        %v1750 = vpop.f32.mrf.mxu0
        %v1751 = vadd.f32 0.0, %v1750
        %1752 = vmatmul.f32.gmra.mxu0 %v1559
        %v1753 = vpop.f32.mrf.mxu0
        %v1754 = vadd.f32 0.0, %v1753
        %1755 = vmatmul.f32.gmra.mxu0 %v1560
        %v1756 = vpop.f32.mrf.mxu0
        %v1757 = vadd.f32 0.0, %v1756
        %1758 = vmatmul.f32.gmra.mxu0 %v1561
        %v1759 = vpop.f32.mrf.mxu0
        %v1760 = vadd.f32 0.0, %v1759
        %1761 = vmatmul.f32.gmra.mxu0 %v1562
        %v1762 = vpop.f32.mrf.mxu0
        %v1763 = vadd.f32 0.0, %v1762
        %1764 = vmatmul.f32.gmra.mxu0 %v1563
        %v1765 = vpop.f32.mrf.mxu0
        %v1766 = vadd.f32 0.0, %v1765
        %1767 = vmatmul.f32.gmra.mxu0 %v1564
        %v1768 = vpop.f32.mrf.mxu0
        %v1769 = vadd.f32 0.0, %v1768
        %1770 = vmatmul.f32.gmra.mxu0 %v1565
        %v1771 = vpop.f32.mrf.mxu0
        %v1772 = vadd.f32 0.0, %v1771
        %1773 = vmatmul.f32.gmra.mxu0 %v1566
        %v1774 = vpop.f32.mrf.mxu0
        %v1775 = vadd.f32 0.0, %v1774
        %1776 = vmatmul.f32.gmra.mxu0 %v1567
        %v1777 = vpop.f32.mrf.mxu0
        %v1778 = vadd.f32 0.0, %v1777
        %1779 = vmatmul.f32.gmra.mxu0 %v1568
        %v1780 = vpop.f32.mrf.mxu0
        %v1781 = vadd.f32 0.0, %v1780
        %1782 = vmatmul.f32.gmra.mxu0 %v1569
        %v1783 = vpop.f32.mrf.mxu0
        %v1784 = vadd.f32 0.0, %v1783
        %1785 = vmatmul.f32.gmra.mxu0 %v1570
        %v1786 = vpop.f32.mrf.mxu0
        %v1787 = vadd.f32 0.0, %v1786
        %1788 = vmatmul.f32.gmra.mxu0 %v1571
        %v1789 = vpop.f32.mrf.mxu0
        %v1790 = vadd.f32 0.0, %v1789
        %1791 = vmatmul.f32.gmra.mxu0 %v1572
        %v1792 = vpop.f32.mrf.mxu0
        %v1793 = vadd.f32 0.0, %v1792
        %1794 = vmatmul.f32.gmra.mxu0 %v1573
        %v1795 = vpop.f32.mrf.mxu0
        %v1796 = vadd.f32 0.0, %v1795
        %1797 = vmatmul.f32.gmra.mxu0 %v1574
        %v1798 = vpop.f32.mrf.mxu0
        %v1799 = vadd.f32 0.0, %v1798
        %1800 = vmatmul.f32.gmra.mxu0 %v1575
        %v1801 = vpop.f32.mrf.mxu0
        %v1802 = vadd.f32 0.0, %v1801
        %1803 = vmatmul.f32.gmra.mxu0 %v1576
        %v1804 = vpop.f32.mrf.mxu0
        %v1805 = vadd.f32 0.0, %v1804
        %1806 = vmatmul.f32.gmra.mxu0 %v1577
        %v1807 = vpop.f32.mrf.mxu0
        %v1808 = vadd.f32 0.0, %v1807
        %1809 = vmatmul.f32.gmra.mxu0 %v1578
        %v1810 = vpop.f32.mrf.mxu0
        %v1811 = vadd.f32 0.0, %v1810
        %1812 = vmatmul.f32.gmra.mxu0 %v1675
        %v1813 = vpop.f32.mrf.mxu0
        %v1814 = vadd.f32 0.0, %v1813
        %1815 = vmatmul.f32.gmra.mxu0 %v1676
        %v1816 = vpop.f32.mrf.mxu0
        %v1817 = vadd.f32 0.0, %v1816
        %1818 = vdwg.mxu0
        %1819 = vmatpush.msra.mxu0 %v1713
        %1820 = vmatpush.msra.mxu0 %v1712
        %1821 = vmatpush.msra.mxu0 %v1711
        %1822 = vmatpush.msra.mxu0 %v1710
        %1823 = vmatpush.msra.mxu0 %v1709
        %1824 = vmatpush.msra.mxu0 %v1708
        %1825 = vmatpush.msra.mxu0 %v1707
        %1826 = vmatpush.msra.mxu0 %v1706
        %1827 = vmatpush.msra.mxu0 %v1705
        %1828 = vmatpush.msra.mxu0 %v1704
        %1829 = vmatpush.msra.mxu0 %v1703
        %1830 = vmatpush.msra.mxu0 %v1702
        %1831 = vmatpush.msra.mxu0 %v1701
        %1832 = vmatpush.msra.mxu0 %v1700
        %1833 = vmatpush.msra.mxu0 %v1699
        %1834 = vmatpush.msra.mxu0 %v1698
        %1835 = vmatmul.f32.gmra.mxu0 %v1581
        %v1836 = vpop.f32.mrf.mxu0
        %v1837 = vadd.f32 %v1748, %v1836
        %1838 = vmatmul.f32.gmra.mxu0 %v1582
        %v1839 = vpop.f32.mrf.mxu0
        %v1840 = vadd.f32 %v1751, %v1839
        %1841 = vmatmul.f32.gmra.mxu0 %v1583
        %v1842 = vpop.f32.mrf.mxu0
        %v1843 = vadd.f32 %v1754, %v1842
        %1844 = vmatmul.f32.gmra.mxu0 %v1584
        %v1845 = vpop.f32.mrf.mxu0
        %v1846 = vadd.f32 %v1757, %v1845
        %1847 = vmatmul.f32.gmra.mxu0 %v1585
        %v1848 = vpop.f32.mrf.mxu0
        %v1849 = vadd.f32 %v1760, %v1848
        %1850 = vmatmul.f32.gmra.mxu0 %v1586
        %v1851 = vpop.f32.mrf.mxu0
        %v1852 = vadd.f32 %v1763, %v1851
        %1853 = vmatmul.f32.gmra.mxu0 %v1587
        %v1854 = vpop.f32.mrf.mxu0
        %v1855 = vadd.f32 %v1766, %v1854
        %1856 = vmatmul.f32.gmra.mxu0 %v1588
        %v1857 = vpop.f32.mrf.mxu0
        %v1858 = vadd.f32 %v1769, %v1857
        %1859 = vmatmul.f32.gmra.mxu0 %v1589
        %v1860 = vpop.f32.mrf.mxu0
        %v1861 = vadd.f32 %v1772, %v1860
        %1862 = vmatmul.f32.gmra.mxu0 %v1590
        %v1863 = vpop.f32.mrf.mxu0
        %v1864 = vadd.f32 %v1775, %v1863
        %1865 = vmatmul.f32.gmra.mxu0 %v1591
        %v1866 = vpop.f32.mrf.mxu0
        %v1867 = vadd.f32 %v1778, %v1866
        %1868 = vmatmul.f32.gmra.mxu0 %v1592
        %v1869 = vpop.f32.mrf.mxu0
        %v1870 = vadd.f32 %v1781, %v1869
        %1871 = vmatmul.f32.gmra.mxu0 %v1593
        %v1872 = vpop.f32.mrf.mxu0
        %v1873 = vadd.f32 %v1784, %v1872
        %1874 = vmatmul.f32.gmra.mxu0 %v1594
        %v1875 = vpop.f32.mrf.mxu0
        %v1876 = vadd.f32 %v1787, %v1875
        %1877 = vmatmul.f32.gmra.mxu0 %v1595
        %v1878 = vpop.f32.mrf.mxu0
        %v1879 = vadd.f32 %v1790, %v1878
        %1880 = vmatmul.f32.gmra.mxu0 %v1596
        %v1881 = vpop.f32.mrf.mxu0
        %v1882 = vadd.f32 %v1793, %v1881
        %1883 = vmatmul.f32.gmra.mxu0 %v1597
        %v1884 = vpop.f32.mrf.mxu0
        %v1885 = vadd.f32 %v1796, %v1884
        %1886 = vmatmul.f32.gmra.mxu0 %v1598
        %v1887 = vpop.f32.mrf.mxu0
        %v1888 = vadd.f32 %v1799, %v1887
        %1889 = vmatmul.f32.gmra.mxu0 %v1599
        %v1890 = vpop.f32.mrf.mxu0
        %v1891 = vadd.f32 %v1802, %v1890
        %1892 = vmatmul.f32.gmra.mxu0 %v1600
        %v1893 = vpop.f32.mrf.mxu0
        %v1894 = vadd.f32 %v1805, %v1893
        %1895 = vmatmul.f32.gmra.mxu0 %v1601
        %v1896 = vpop.f32.mrf.mxu0
        %v1897 = vadd.f32 %v1808, %v1896
        %1898 = vmatmul.f32.gmra.mxu0 %v1602
        %v1899 = vpop.f32.mrf.mxu0
        %v1900 = vadd.f32 %v1811, %v1899
        %1901 = vmatmul.f32.gmra.mxu0 %v1677
        %v1902 = vpop.f32.mrf.mxu0
        %v1903 = vadd.f32 %v1814, %v1902
        %1904 = vmatmul.f32.gmra.mxu0 %v1678
        %v1905 = vpop.f32.mrf.mxu0
        %v1906 = vadd.f32 %v1817, %v1905
        %1907 = vdwg.mxu0
        %1908 = vmatpush.msra.mxu0 %v1729
        %1909 = vmatpush.msra.mxu0 %v1728
        %1910 = vmatpush.msra.mxu0 %v1727
        %1911 = vmatpush.msra.mxu0 %v1726
        %1912 = vmatpush.msra.mxu0 %v1725
        %1913 = vmatpush.msra.mxu0 %v1724
        %1914 = vmatpush.msra.mxu0 %v1723
        %1915 = vmatpush.msra.mxu0 %v1722
        %1916 = vmatpush.msra.mxu0 %v1721
        %1917 = vmatpush.msra.mxu0 %v1720
        %1918 = vmatpush.msra.mxu0 %v1719
        %1919 = vmatpush.msra.mxu0 %v1718
        %1920 = vmatpush.msra.mxu0 %v1717
        %1921 = vmatpush.msra.mxu0 %v1716
        %1922 = vmatpush.msra.mxu0 %v1715
        %1923 = vmatpush.msra.mxu0 %v1714
        %1924 = vmatmul.f32.gmra.mxu0 %v1605
        %v1925 = vpop.f32.mrf.mxu0
        %v1926 = vadd.f32 %v1837, %v1925
        %1927 = vmatmul.f32.gmra.mxu0 %v1606
        %v1928 = vpop.f32.mrf.mxu0
        %v1929 = vadd.f32 %v1840, %v1928
        %1930 = vmatmul.f32.gmra.mxu0 %v1607
        %v1931 = vpop.f32.mrf.mxu0
        %v1932 = vadd.f32 %v1843, %v1931
        %1933 = vmatmul.f32.gmra.mxu0 %v1608
        %v1934 = vpop.f32.mrf.mxu0
        %v1935 = vadd.f32 %v1846, %v1934
        %1936 = vmatmul.f32.gmra.mxu0 %v1609
        %v1937 = vpop.f32.mrf.mxu0
        %v1938 = vadd.f32 %v1849, %v1937
        %1939 = vmatmul.f32.gmra.mxu0 %v1610
        %v1940 = vpop.f32.mrf.mxu0
        %v1941 = vadd.f32 %v1852, %v1940
        %1942 = vmatmul.f32.gmra.mxu0 %v1611
        %v1943 = vpop.f32.mrf.mxu0
        %v1944 = vadd.f32 %v1855, %v1943
        %1945 = vmatmul.f32.gmra.mxu0 %v1612
        %v1946 = vpop.f32.mrf.mxu0
        %v1947 = vadd.f32 %v1858, %v1946
        %1948 = vmatmul.f32.gmra.mxu0 %v1613
        %v1949 = vpop.f32.mrf.mxu0
        %v1950 = vadd.f32 %v1861, %v1949
        %1951 = vmatmul.f32.gmra.mxu0 %v1614
        %v1952 = vpop.f32.mrf.mxu0
        %v1953 = vadd.f32 %v1864, %v1952
        %1954 = vmatmul.f32.gmra.mxu0 %v1615
        %v1955 = vpop.f32.mrf.mxu0
        %v1956 = vadd.f32 %v1867, %v1955
        %1957 = vmatmul.f32.gmra.mxu0 %v1616
        %v1958 = vpop.f32.mrf.mxu0
        %v1959 = vadd.f32 %v1870, %v1958
        %1960 = vmatmul.f32.gmra.mxu0 %v1617
        %v1961 = vpop.f32.mrf.mxu0
        %v1962 = vadd.f32 %v1873, %v1961
        %1963 = vmatmul.f32.gmra.mxu0 %v1618
        %v1964 = vpop.f32.mrf.mxu0
        %v1965 = vadd.f32 %v1876, %v1964
        %1966 = vmatmul.f32.gmra.mxu0 %v1619
        %v1967 = vpop.f32.mrf.mxu0
        %v1968 = vadd.f32 %v1879, %v1967
        %1969 = vmatmul.f32.gmra.mxu0 %v1620
        %v1970 = vpop.f32.mrf.mxu0
        %v1971 = vadd.f32 %v1882, %v1970
        %1972 = vmatmul.f32.gmra.mxu0 %v1621
        %v1973 = vpop.f32.mrf.mxu0
        %v1974 = vadd.f32 %v1885, %v1973
        %1975 = vmatmul.f32.gmra.mxu0 %v1622
        %v1976 = vpop.f32.mrf.mxu0
        %v1977 = vadd.f32 %v1888, %v1976
        %1978 = vmatmul.f32.gmra.mxu0 %v1623
        %v1979 = vpop.f32.mrf.mxu0
        %v1980 = vadd.f32 %v1891, %v1979
        %1981 = vmatmul.f32.gmra.mxu0 %v1624
        %v1982 = vpop.f32.mrf.mxu0
        %v1983 = vadd.f32 %v1894, %v1982
        %1984 = vmatmul.f32.gmra.mxu0 %v1625
        %v1985 = vpop.f32.mrf.mxu0
        %v1986 = vadd.f32 %v1897, %v1985
        %1987 = vmatmul.f32.gmra.mxu0 %v1626
        %v1988 = vpop.f32.mrf.mxu0
        %v1989 = vadd.f32 %v1900, %v1988
        %1990 = vmatmul.f32.gmra.mxu0 %v1679
        %v1991 = vpop.f32.mrf.mxu0
        %v1992 = vadd.f32 %v1903, %v1991
        %1993 = vmatmul.f32.gmra.mxu0 %v1680
        %v1994 = vpop.f32.mrf.mxu0
        %v1995 = vadd.f32 %v1906, %v1994
        %1996 = vdwg.mxu0
        %1997 = vmatpush.msra.mxu0 %v1642
        %1998 = vmatpush.msra.mxu0 %v1641
        %1999 = vmatpush.msra.mxu0 %v1640
        %2000 = vmatpush.msra.mxu0 %v1639
        %2001 = vmatpush.msra.mxu0 %v1638
        %2002 = vmatpush.msra.mxu0 %v1637
        %2003 = vmatpush.msra.mxu0 %v1636
        %2004 = vmatpush.msra.mxu0 %v1635
        %2005 = vmatpush.msra.mxu0 %v1634
        %2006 = vmatpush.msra.mxu0 %v1633
        %2007 = vmatpush.msra.mxu0 %v1632
        %2008 = vmatpush.msra.mxu0 %v1631
        %2009 = vmatpush.msra.mxu0 %v1630
        %2010 = vmatpush.msra.mxu0 %v1629
        %2011 = vmatpush.msra.mxu0 %v1628
        %2012 = vmatpush.msra.mxu0 %v1627
        %2013 = vmatmul.f32.gmra.mxu0 %v1555
        %v2014 = vpop.f32.mrf.mxu0
        %v2015 = vadd.f32 %v1926, %v2014
        %2016 = vmatmul.f32.gmra.mxu0 %v1556
        %v2017 = vpop.f32.mrf.mxu0
        %v2018 = vadd.f32 %v1929, %v2017
        %2019 = vmatmul.f32.gmra.mxu0 %v1557
        %v2020 = vpop.f32.mrf.mxu0
        %v2021 = vadd.f32 %v1932, %v2020
        %2022 = vmatmul.f32.gmra.mxu0 %v1558
        %v2023 = vpop.f32.mrf.mxu0
        %v2024 = vadd.f32 %v1935, %v2023
        %2025 = vmatmul.f32.gmra.mxu0 %v1559
        %v2026 = vpop.f32.mrf.mxu0
        %v2027 = vadd.f32 %v1938, %v2026
        %2028 = vmatmul.f32.gmra.mxu0 %v1560
        %v2029 = vpop.f32.mrf.mxu0
        %v2030 = vadd.f32 %v1941, %v2029
        %2031 = vmatmul.f32.gmra.mxu0 %v1561
        %v2032 = vpop.f32.mrf.mxu0
        %v2033 = vadd.f32 %v1944, %v2032
        %2034 = vmatmul.f32.gmra.mxu0 %v1562
        %v2035 = vpop.f32.mrf.mxu0
        %v2036 = vadd.f32 %v1947, %v2035
        %2037 = vmatmul.f32.gmra.mxu0 %v1563
        %v2038 = vpop.f32.mrf.mxu0
        %v2039 = vadd.f32 %v1950, %v2038
        %2040 = vmatmul.f32.gmra.mxu0 %v1564
        %v2041 = vpop.f32.mrf.mxu0
        %v2042 = vadd.f32 %v1953, %v2041
        %2043 = vmatmul.f32.gmra.mxu0 %v1565
        %v2044 = vpop.f32.mrf.mxu0
        %v2045 = vadd.f32 %v1956, %v2044
        %2046 = vmatmul.f32.gmra.mxu0 %v1566
        %v2047 = vpop.f32.mrf.mxu0
        %v2048 = vadd.f32 %v1959, %v2047
        %2049 = vmatmul.f32.gmra.mxu0 %v1567
        %v2050 = vpop.f32.mrf.mxu0
        %v2051 = vadd.f32 %v1962, %v2050
        %2052 = vmatmul.f32.gmra.mxu0 %v1568
        %v2053 = vpop.f32.mrf.mxu0
        %v2054 = vadd.f32 %v1965, %v2053
        %2055 = vmatmul.f32.gmra.mxu0 %v1569
        %v2056 = vpop.f32.mrf.mxu0
        %v2057 = vadd.f32 %v1968, %v2056
        %2058 = vmatmul.f32.gmra.mxu0 %v1570
        %v2059 = vpop.f32.mrf.mxu0
        %v2060 = vadd.f32 %v1971, %v2059
        %2061 = vmatmul.f32.gmra.mxu0 %v1571
        %v2062 = vpop.f32.mrf.mxu0
        %v2063 = vadd.f32 %v1974, %v2062
        %2064 = vmatmul.f32.gmra.mxu0 %v1572
        %v2065 = vpop.f32.mrf.mxu0
        %v2066 = vadd.f32 %v1977, %v2065
        %2067 = vmatmul.f32.gmra.mxu0 %v1573
        %v2068 = vpop.f32.mrf.mxu0
        %v2069 = vadd.f32 %v1980, %v2068
        %2070 = vmatmul.f32.gmra.mxu0 %v1574
        %v2071 = vpop.f32.mrf.mxu0
        %v2072 = vadd.f32 %v1983, %v2071
        %2073 = vmatmul.f32.gmra.mxu0 %v1575
        %v2074 = vpop.f32.mrf.mxu0
        %v2075 = vadd.f32 %v1986, %v2074
        %2076 = vmatmul.f32.gmra.mxu0 %v1576
        %v2077 = vpop.f32.mrf.mxu0
        %v2078 = vadd.f32 %v1989, %v2077
        %2079 = vmatmul.f32.gmra.mxu0 %v1577
        %v2080 = vpop.f32.mrf.mxu0
        %v2081 = vadd.f32 %v1992, %v2080
        %2082 = vmatmul.f32.gmra.mxu0 %v1578
        %v2083 = vpop.f32.mrf.mxu0
        %v2084 = vadd.f32 %v1995, %v2083
        %2085 = vdwg.mxu0
        %2086 = vmatpush.msra.mxu0 %v1658
        %2087 = vmatpush.msra.mxu0 %v1657
        %2088 = vmatpush.msra.mxu0 %v1656
        %2089 = vmatpush.msra.mxu0 %v1655
        %2090 = vmatpush.msra.mxu0 %v1654
        %2091 = vmatpush.msra.mxu0 %v1653
        %2092 = vmatpush.msra.mxu0 %v1652
        %2093 = vmatpush.msra.mxu0 %v1651
        %2094 = vmatpush.msra.mxu0 %v1650
        %2095 = vmatpush.msra.mxu0 %v1649
        %2096 = vmatpush.msra.mxu0 %v1648
        %2097 = vmatpush.msra.mxu0 %v1647
        %2098 = vmatpush.msra.mxu0 %v1646
        %2099 = vmatpush.msra.mxu0 %v1645
        %2100 = vmatpush.msra.mxu0 %v1644
        %2101 = vmatpush.msra.mxu0 %v1643
        %2102 = vmatmul.f32.gmra.mxu0 %v1579
        %v2103 = vpop.f32.mrf.mxu0
        %v2104 = vadd.f32 %v2015, %v2103
        %2105 = vmatmul.f32.gmra.mxu0 %v1580
        %v2106 = vpop.f32.mrf.mxu0
        %v2107 = vadd.f32 %v2018, %v2106
        %2108 = vmatmul.f32.gmra.mxu0 %v1581
        %v2109 = vpop.f32.mrf.mxu0
        %v2110 = vadd.f32 %v2021, %v2109
        %2111 = vmatmul.f32.gmra.mxu0 %v1582
        %v2112 = vpop.f32.mrf.mxu0
        %v2113 = vadd.f32 %v2024, %v2112
        %2114 = vmatmul.f32.gmra.mxu0 %v1583
        %v2115 = vpop.f32.mrf.mxu0
        %v2116 = vadd.f32 %v2027, %v2115
        %2117 = vmatmul.f32.gmra.mxu0 %v1584
        %v2118 = vpop.f32.mrf.mxu0
        %v2119 = vadd.f32 %v2030, %v2118
        %2120 = vmatmul.f32.gmra.mxu0 %v1585
        %v2121 = vpop.f32.mrf.mxu0
        %v2122 = vadd.f32 %v2033, %v2121
        %2123 = vmatmul.f32.gmra.mxu0 %v1586
        %v2124 = vpop.f32.mrf.mxu0
        %v2125 = vadd.f32 %v2036, %v2124
        %2126 = vmatmul.f32.gmra.mxu0 %v1587
        %v2127 = vpop.f32.mrf.mxu0
        %v2128 = vadd.f32 %v2039, %v2127
        %2129 = vmatmul.f32.gmra.mxu0 %v1588
        %v2130 = vpop.f32.mrf.mxu0
        %v2131 = vadd.f32 %v2042, %v2130
        %2132 = vmatmul.f32.gmra.mxu0 %v1589
        %v2133 = vpop.f32.mrf.mxu0
        %v2134 = vadd.f32 %v2045, %v2133
        %2135 = vmatmul.f32.gmra.mxu0 %v1590
        %v2136 = vpop.f32.mrf.mxu0
        %v2137 = vadd.f32 %v2048, %v2136
        %2138 = vmatmul.f32.gmra.mxu0 %v1591
        %v2139 = vpop.f32.mrf.mxu0
        %v2140 = vadd.f32 %v2051, %v2139
        %2141 = vmatmul.f32.gmra.mxu0 %v1592
        %v2142 = vpop.f32.mrf.mxu0
        %v2143 = vadd.f32 %v2054, %v2142
        %2144 = vmatmul.f32.gmra.mxu0 %v1593
        %v2145 = vpop.f32.mrf.mxu0
        %v2146 = vadd.f32 %v2057, %v2145
        %2147 = vmatmul.f32.gmra.mxu0 %v1594
        %v2148 = vpop.f32.mrf.mxu0
        %v2149 = vadd.f32 %v2060, %v2148
        %2150 = vmatmul.f32.gmra.mxu0 %v1595
        %v2151 = vpop.f32.mrf.mxu0
        %v2152 = vadd.f32 %v2063, %v2151
        %2153 = vmatmul.f32.gmra.mxu0 %v1596
        %v2154 = vpop.f32.mrf.mxu0
        %v2155 = vadd.f32 %v2066, %v2154
        %2156 = vmatmul.f32.gmra.mxu0 %v1597
        %v2157 = vpop.f32.mrf.mxu0
        %v2158 = vadd.f32 %v2069, %v2157
        %2159 = vmatmul.f32.gmra.mxu0 %v1598
        %v2160 = vpop.f32.mrf.mxu0
        %v2161 = vadd.f32 %v2072, %v2160
        %2162 = vmatmul.f32.gmra.mxu0 %v1599
        %v2163 = vpop.f32.mrf.mxu0
        %v2164 = vadd.f32 %v2075, %v2163
        %2165 = vmatmul.f32.gmra.mxu0 %v1600
        %v2166 = vpop.f32.mrf.mxu0
        %v2167 = vadd.f32 %v2078, %v2166
        %2168 = vmatmul.f32.gmra.mxu0 %v1601
        %v2169 = vpop.f32.mrf.mxu0
        %v2170 = vadd.f32 %v2081, %v2169
        %2171 = vmatmul.f32.gmra.mxu0 %v1602
        %v2172 = vpop.f32.mrf.mxu0
        %v2173 = vadd.f32 %v2084, %v2172
        %2174 = vdwg.mxu0
        %2175 = vmatpush.msra.mxu0 %v1674
        %2176 = vmatpush.msra.mxu0 %v1673
        %2177 = vmatpush.msra.mxu0 %v1672
        %2178 = vmatpush.msra.mxu0 %v1671
        %2179 = vmatpush.msra.mxu0 %v1670
        %2180 = vmatpush.msra.mxu0 %v1669
        %2181 = vmatpush.msra.mxu0 %v1668
        %2182 = vmatpush.msra.mxu0 %v1667
        %2183 = vmatpush.msra.mxu0 %v1666
        %2184 = vmatpush.msra.mxu0 %v1665
        %2185 = vmatpush.msra.mxu0 %v1664
        %2186 = vmatpush.msra.mxu0 %v1663
        %2187 = vmatpush.msra.mxu0 %v1662
        %2188 = vmatpush.msra.mxu0 %v1661
        %2189 = vmatpush.msra.mxu0 %v1660
        %2190 = vmatpush.msra.mxu0 %v1659
        %2191 = vmatmul.f32.gmra.mxu0 %v1603
        %v2192 = vpop.f32.mrf.mxu0
        %v2193 = vadd.f32 %v2104, %v2192
        %2194 = vmatmul.f32.gmra.mxu0 %v1604
        %v2195 = vpop.f32.mrf.mxu0
        %v2196 = vadd.f32 %v2107, %v2195
        %2197 = vmatmul.f32.gmra.mxu0 %v1605
        %v2198 = vpop.f32.mrf.mxu0
        %v2199 = vadd.f32 %v2110, %v2198
        %2200 = vmatmul.f32.gmra.mxu0 %v1606
        %v2201 = vpop.f32.mrf.mxu0
        %v2202 = vadd.f32 %v2113, %v2201
        %2203 = vmatmul.f32.gmra.mxu0 %v1607
        %v2204 = vpop.f32.mrf.mxu0
        %v2205 = vadd.f32 %v2116, %v2204
        %2206 = vmatmul.f32.gmra.mxu0 %v1608
        %v2207 = vpop.f32.mrf.mxu0
        %v2208 = vadd.f32 %v2119, %v2207
        %2209 = vmatmul.f32.gmra.mxu0 %v1609
        %v2210 = vpop.f32.mrf.mxu0
        %v2211 = vadd.f32 %v2122, %v2210
        %2212 = vmatmul.f32.gmra.mxu0 %v1610
        %v2213 = vpop.f32.mrf.mxu0
        %v2214 = vadd.f32 %v2125, %v2213
        %2215 = vmatmul.f32.gmra.mxu0 %v1611
        %v2216 = vpop.f32.mrf.mxu0
        %v2217 = vadd.f32 %v2128, %v2216
        %2218 = vmatmul.f32.gmra.mxu0 %v1612
        %v2219 = vpop.f32.mrf.mxu0
        %v2220 = vadd.f32 %v2131, %v2219
        %2221 = vmatmul.f32.gmra.mxu0 %v1613
        %v2222 = vpop.f32.mrf.mxu0
        %v2223 = vadd.f32 %v2134, %v2222
        %2224 = vmatmul.f32.gmra.mxu0 %v1614
        %v2225 = vpop.f32.mrf.mxu0
        %v2226 = vadd.f32 %v2137, %v2225
        %2227 = vmatmul.f32.gmra.mxu0 %v1615
        %v2228 = vpop.f32.mrf.mxu0
        %v2229 = vadd.f32 %v2140, %v2228
        %2230 = vmatmul.f32.gmra.mxu0 %v1616
        %v2231 = vpop.f32.mrf.mxu0
        %v2232 = vadd.f32 %v2143, %v2231
        %2233 = vmatmul.f32.gmra.mxu0 %v1617
        %v2234 = vpop.f32.mrf.mxu0
        %v2235 = vadd.f32 %v2146, %v2234
        %2236 = vmatmul.f32.gmra.mxu0 %v1618
        %v2237 = vpop.f32.mrf.mxu0
        %v2238 = vadd.f32 %v2149, %v2237
        %2239 = vmatmul.f32.gmra.mxu0 %v1619
        %v2240 = vpop.f32.mrf.mxu0
        %v2241 = vadd.f32 %v2152, %v2240
        %2242 = vmatmul.f32.gmra.mxu0 %v1620
        %v2243 = vpop.f32.mrf.mxu0
        %v2244 = vadd.f32 %v2155, %v2243
        %2245 = vmatmul.f32.gmra.mxu0 %v1621
        %v2246 = vpop.f32.mrf.mxu0
        %v2247 = vadd.f32 %v2158, %v2246
        %2248 = vmatmul.f32.gmra.mxu0 %v1622
        %v2249 = vpop.f32.mrf.mxu0
        %v2250 = vadd.f32 %v2161, %v2249
        %2251 = vmatmul.f32.gmra.mxu0 %v1623
        %v2252 = vpop.f32.mrf.mxu0
        %v2253 = vadd.f32 %v2164, %v2252
        %2254 = vmatmul.f32.gmra.mxu0 %v1624
        %v2255 = vpop.f32.mrf.mxu0
        %v2256 = vadd.f32 %v2167, %v2255
        %2257 = vmatmul.f32.gmra.mxu0 %v1625
        %v2258 = vpop.f32.mrf.mxu0
        %v2259 = vadd.f32 %v2170, %v2258
        %2260 = vmatmul.f32.gmra.mxu0 %v1626
        %v2261 = vpop.f32.mrf.mxu0
        %v2262 = vadd.f32 %v2173, %v2261
        %2263 = vdwg.mxu0
        %v2264 = vld [vmem:[#allocation3 + $0x20] sm:$0xff]
        %v2265 = vld [vmem:[#allocation3 + $0x28] sm:$0xff]
        %v2266 = vld [vmem:[#allocation3 + $0x30] sm:$0xff]
        %v2267 = vld [vmem:[#allocation3 + $0x38] sm:$0xff]
        %v2268 = vld [vmem:[#allocation3 + $0x40] sm:$0xff]
        %v2269 = vld [vmem:[#allocation3 + $0x48] sm:$0xff]
        %v2270 = vld [vmem:[#allocation3 + $0x50] sm:$0xff]
        %v2271 = vld [vmem:[#allocation3 + $0x58] sm:$0xff]
        %v2272 = vld [vmem:[#allocation3 + $0x60] sm:$0xff]
        %v2273 = vld [vmem:[#allocation3 + $0x68] sm:$0xff]
        %v2274 = vld [vmem:[#allocation3 + $0x70] sm:$0xff]
        %v2275 = vld [vmem:[#allocation3 + $0x78] sm:$0xff]
        %v2276 = vld [vmem:[#allocation3 + $0x80] sm:$0xff]
        %v2277 = vld [vmem:[#allocation3 + $0x88] sm:$0xff]
        %v2278 = vld [vmem:[#allocation3 + $0x90] sm:$0xff]
        %v2279 = vld [vmem:[#allocation3 + $0x98] sm:$0xff]
        %v2280 = vld [vmem:[#allocation3 + $0xa0] sm:$0xff]
        %v2281 = vld [vmem:[#allocation3 + $0xa8] sm:$0xff]
        %v2282 = vld [vmem:[#allocation3 + $0xb0] sm:$0xff]
        %v2283 = vld [vmem:[#allocation3 + $0xb8] sm:$0xff]
        %v2284 = vld [vmem:[#allocation3 + $0xc0] sm:$0xff]
        %v2285 = vld [vmem:[#allocation3 + $0xc8] sm:$0xff]
        %v2286 = vld [vmem:[#allocation3 + $0xd0] sm:$0xff]
        %v2287 = vld [vmem:[#allocation3 + $0xd8] sm:$0xff]
        %v2288 = vld [vmem:[#allocation3 + $0x21] sm:$0xff]
        %v2289 = vld [vmem:[#allocation3 + $0x29] sm:$0xff]
        %v2290 = vld [vmem:[#allocation3 + $0x31] sm:$0xff]
        %v2291 = vld [vmem:[#allocation3 + $0x39] sm:$0xff]
        %v2292 = vld [vmem:[#allocation3 + $0x41] sm:$0xff]
        %v2293 = vld [vmem:[#allocation3 + $0x49] sm:$0xff]
        %v2294 = vld [vmem:[#allocation3 + $0x51] sm:$0xff]
        %v2295 = vld [vmem:[#allocation3 + $0x59] sm:$0xff]
        %v2296 = vld [vmem:[#allocation3 + $0x61] sm:$0xff]
        %v2297 = vld [vmem:[#allocation3 + $0x69] sm:$0xff]
        %v2298 = vld [vmem:[#allocation3 + $0x71] sm:$0xff]
        %v2299 = vld [vmem:[#allocation3 + $0x79] sm:$0xff]
        %v2300 = vld [vmem:[#allocation3 + $0x81] sm:$0xff]
        %v2301 = vld [vmem:[#allocation3 + $0x89] sm:$0xff]
        %v2302 = vld [vmem:[#allocation3 + $0x91] sm:$0xff]
        %v2303 = vld [vmem:[#allocation3 + $0x99] sm:$0xff]
        %v2304 = vld [vmem:[#allocation3 + $0xa1] sm:$0xff]
        %v2305 = vld [vmem:[#allocation3 + $0xa9] sm:$0xff]
        %v2306 = vld [vmem:[#allocation3 + $0xb1] sm:$0xff]
        %v2307 = vld [vmem:[#allocation3 + $0xb9] sm:$0xff]
        %v2308 = vld [vmem:[#allocation3 + $0xc1] sm:$0xff]
        %v2309 = vld [vmem:[#allocation3 + $0xc9] sm:$0xff]
        %v2310 = vld [vmem:[#allocation3 + $0xd1] sm:$0xff]
        %v2311 = vld [vmem:[#allocation3 + $0xd9] sm:$0xff]
        %v2312 = vld [vmem:[#allocation3 + $0x22] sm:$0xff]
        %v2313 = vld [vmem:[#allocation3 + $0x2a] sm:$0xff]
        %v2314 = vld [vmem:[#allocation3 + $0x32] sm:$0xff]
        %v2315 = vld [vmem:[#allocation3 + $0x3a] sm:$0xff]
        %v2316 = vld [vmem:[#allocation3 + $0x42] sm:$0xff]
        %v2317 = vld [vmem:[#allocation3 + $0x4a] sm:$0xff]
        %v2318 = vld [vmem:[#allocation3 + $0x52] sm:$0xff]
        %v2319 = vld [vmem:[#allocation3 + $0x5a] sm:$0xff]
        %v2320 = vld [vmem:[#allocation3 + $0x62] sm:$0xff]
        %v2321 = vld [vmem:[#allocation3 + $0x6a] sm:$0xff]
        %v2322 = vld [vmem:[#allocation3 + $0x72] sm:$0xff]
        %v2323 = vld [vmem:[#allocation3 + $0x7a] sm:$0xff]
        %v2324 = vld [vmem:[#allocation3 + $0x82] sm:$0xff]
        %v2325 = vld [vmem:[#allocation3 + $0x8a] sm:$0xff]
        %v2326 = vld [vmem:[#allocation3 + $0x92] sm:$0xff]
        %v2327 = vld [vmem:[#allocation3 + $0x9a] sm:$0xff]
        %v2328 = vld [vmem:[#allocation3 + $0xa2] sm:$0xff]
        %v2329 = vld [vmem:[#allocation3 + $0xaa] sm:$0xff]
        %v2330 = vld [vmem:[#allocation3 + $0xb2] sm:$0xff]
        %v2331 = vld [vmem:[#allocation3 + $0xba] sm:$0xff]
        %v2332 = vld [vmem:[#allocation3 + $0xc2] sm:$0xff]
        %v2333 = vld [vmem:[#allocation3 + $0xca] sm:$0xff]
        %v2334 = vld [vmem:[#allocation3 + $0xd2] sm:$0xff]
        %v2335 = vld [vmem:[#allocation3 + $0xda] sm:$0xff]
        %s2336 = scalar_lea.vmem [#allocation8], 768
        %v2337 = vld [vmem:[%s2336] sm:$0xff]
        %v2338 = vld [vmem:[%s2336 + $0x8] sm:$0xff]
        %v2339 = vld [vmem:[%s2336 + $0x10] sm:$0xff]
        %v2340 = vld [vmem:[%s2336 + $0x18] sm:$0xff]
        %v2341 = vld [vmem:[%s2336 + $0x20] sm:$0xff]
        %v2342 = vld [vmem:[%s2336 + $0x28] sm:$0xff]
        %v2343 = vld [vmem:[%s2336 + $0x30] sm:$0xff]
        %v2344 = vld [vmem:[%s2336 + $0x38] sm:$0xff]
        %v2345 = vld [vmem:[%s2336 + $0x40] sm:$0xff]
        %v2346 = vld [vmem:[%s2336 + $0x48] sm:$0xff]
        %v2347 = vld [vmem:[%s2336 + $0x50] sm:$0xff]
        %v2348 = vld [vmem:[%s2336 + $0x58] sm:$0xff]
        %v2349 = vld [vmem:[%s2336 + $0x60] sm:$0xff]
        %v2350 = vld [vmem:[%s2336 + $0x68] sm:$0xff]
        %v2351 = vld [vmem:[%s2336 + $0x70] sm:$0xff]
        %v2352 = vld [vmem:[%s2336 + $0x78] sm:$0xff]
        %v2353 = vld [vmem:[%s2336 + $0x80] sm:$0xff]
        %v2354 = vld [vmem:[%s2336 + $0x88] sm:$0xff]
        %v2355 = vld [vmem:[%s2336 + $0x90] sm:$0xff]
        %v2356 = vld [vmem:[%s2336 + $0x98] sm:$0xff]
        %v2357 = vld [vmem:[%s2336 + $0xa0] sm:$0xff]
        %v2358 = vld [vmem:[%s2336 + $0xa8] sm:$0xff]
        %v2359 = vld [vmem:[%s2336 + $0xb0] sm:$0xff]
        %v2360 = vld [vmem:[%s2336 + $0xb8] sm:$0xff]
        %v2361 = vld [vmem:[%s2336 + $0xc0] sm:$0xff]
        %v2362 = vld [vmem:[%s2336 + $0xc8] sm:$0xff]
        %v2363 = vld [vmem:[%s2336 + $0xd0] sm:$0xff]
        %v2364 = vld [vmem:[%s2336 + $0xd8] sm:$0xff]
        %v2365 = vld [vmem:[%s2336 + $0xe0] sm:$0xff]
        %v2366 = vld [vmem:[%s2336 + $0xe8] sm:$0xff]
        %v2367 = vld [vmem:[%s2336 + $0xf0] sm:$0xff]
        %v2368 = vld [vmem:[%s2336 + $0xf8] sm:$0xff]
        %v2369 = vld [vmem:[%s2336 + $0x100] sm:$0xff]
        %v2370 = vld [vmem:[%s2336 + $0x108] sm:$0xff]
        %v2371 = vld [vmem:[%s2336 + $0x110] sm:$0xff]
        %v2372 = vld [vmem:[%s2336 + $0x118] sm:$0xff]
        %v2373 = vld [vmem:[%s2336 + $0x120] sm:$0xff]
        %v2374 = vld [vmem:[%s2336 + $0x128] sm:$0xff]
        %v2375 = vld [vmem:[%s2336 + $0x130] sm:$0xff]
        %v2376 = vld [vmem:[%s2336 + $0x138] sm:$0xff]
        %v2377 = vld [vmem:[%s2336 + $0x140] sm:$0xff]
        %v2378 = vld [vmem:[%s2336 + $0x148] sm:$0xff]
        %v2379 = vld [vmem:[%s2336 + $0x150] sm:$0xff]
        %v2380 = vld [vmem:[%s2336 + $0x158] sm:$0xff]
        %v2381 = vld [vmem:[%s2336 + $0x160] sm:$0xff]
        %v2382 = vld [vmem:[%s2336 + $0x168] sm:$0xff]
        %v2383 = vld [vmem:[%s2336 + $0x170] sm:$0xff]
        %v2384 = vld [vmem:[%s2336 + $0x178] sm:$0xff]
        %2385 = vmatpush.msra.mxu0 %v2352
        %2386 = vmatpush.msra.mxu0 %v2351
        %2387 = vmatpush.msra.mxu0 %v2350
        %2388 = vmatpush.msra.mxu0 %v2349
        %2389 = vmatpush.msra.mxu0 %v2348
        %2390 = vmatpush.msra.mxu0 %v2347
        %2391 = vmatpush.msra.mxu0 %v2346
        %2392 = vmatpush.msra.mxu0 %v2345
        %2393 = vmatpush.msra.mxu0 %v2344
        %2394 = vmatpush.msra.mxu0 %v2343
        %2395 = vmatpush.msra.mxu0 %v2342
        %2396 = vmatpush.msra.mxu0 %v2341
        %2397 = vmatpush.msra.mxu0 %v2340
        %2398 = vmatpush.msra.mxu0 %v2339
        %2399 = vmatpush.msra.mxu0 %v2338
        %2400 = vmatpush.msra.mxu0 %v2337
        %2401 = vmatmul.f32.gmra.mxu0 %v2264
        %v2402 = vpop.f32.mrf.mxu0
        %v2403 = vadd.f32 0.0, %v2402
        %2404 = vmatmul.f32.gmra.mxu0 %v2265
        %v2405 = vpop.f32.mrf.mxu0
        %v2406 = vadd.f32 0.0, %v2405
        %2407 = vmatmul.f32.gmra.mxu0 %v2266
        %v2408 = vpop.f32.mrf.mxu0
        %v2409 = vadd.f32 0.0, %v2408
        %2410 = vmatmul.f32.gmra.mxu0 %v2267
        %v2411 = vpop.f32.mrf.mxu0
        %v2412 = vadd.f32 0.0, %v2411
        %2413 = vmatmul.f32.gmra.mxu0 %v2268
        %v2414 = vpop.f32.mrf.mxu0
        %v2415 = vadd.f32 0.0, %v2414
        %2416 = vmatmul.f32.gmra.mxu0 %v2269
        %v2417 = vpop.f32.mrf.mxu0
        %v2418 = vadd.f32 0.0, %v2417
        %2419 = vmatmul.f32.gmra.mxu0 %v2270
        %v2420 = vpop.f32.mrf.mxu0
        %v2421 = vadd.f32 0.0, %v2420
        %2422 = vmatmul.f32.gmra.mxu0 %v2271
        %v2423 = vpop.f32.mrf.mxu0
        %v2424 = vadd.f32 0.0, %v2423
        %2425 = vmatmul.f32.gmra.mxu0 %v2272
        %v2426 = vpop.f32.mrf.mxu0
        %v2427 = vadd.f32 0.0, %v2426
        %2428 = vmatmul.f32.gmra.mxu0 %v2273
        %v2429 = vpop.f32.mrf.mxu0
        %v2430 = vadd.f32 0.0, %v2429
        %2431 = vmatmul.f32.gmra.mxu0 %v2274
        %v2432 = vpop.f32.mrf.mxu0
        %v2433 = vadd.f32 0.0, %v2432
        %2434 = vmatmul.f32.gmra.mxu0 %v2275
        %v2435 = vpop.f32.mrf.mxu0
        %v2436 = vadd.f32 0.0, %v2435
        %2437 = vmatmul.f32.gmra.mxu0 %v2276
        %v2438 = vpop.f32.mrf.mxu0
        %v2439 = vadd.f32 0.0, %v2438
        %2440 = vmatmul.f32.gmra.mxu0 %v2277
        %v2441 = vpop.f32.mrf.mxu0
        %v2442 = vadd.f32 0.0, %v2441
        %2443 = vmatmul.f32.gmra.mxu0 %v2278
        %v2444 = vpop.f32.mrf.mxu0
        %v2445 = vadd.f32 0.0, %v2444
        %2446 = vmatmul.f32.gmra.mxu0 %v2279
        %v2447 = vpop.f32.mrf.mxu0
        %v2448 = vadd.f32 0.0, %v2447
        %2449 = vmatmul.f32.gmra.mxu0 %v2280
        %v2450 = vpop.f32.mrf.mxu0
        %v2451 = vadd.f32 0.0, %v2450
        %2452 = vmatmul.f32.gmra.mxu0 %v2281
        %v2453 = vpop.f32.mrf.mxu0
        %v2454 = vadd.f32 0.0, %v2453
        %2455 = vmatmul.f32.gmra.mxu0 %v2282
        %v2456 = vpop.f32.mrf.mxu0
        %v2457 = vadd.f32 0.0, %v2456
        %2458 = vmatmul.f32.gmra.mxu0 %v2283
        %v2459 = vpop.f32.mrf.mxu0
        %v2460 = vadd.f32 0.0, %v2459
        %2461 = vmatmul.f32.gmra.mxu0 %v2284
        %v2462 = vpop.f32.mrf.mxu0
        %v2463 = vadd.f32 0.0, %v2462
        %2464 = vmatmul.f32.gmra.mxu0 %v2285
        %v2465 = vpop.f32.mrf.mxu0
        %v2466 = vadd.f32 0.0, %v2465
        %2467 = vmatmul.f32.gmra.mxu0 %v2286
        %v2468 = vpop.f32.mrf.mxu0
        %v2469 = vadd.f32 0.0, %v2468
        %2470 = vmatmul.f32.gmra.mxu0 %v2287
        %v2471 = vpop.f32.mrf.mxu0
        %v2472 = vadd.f32 0.0, %v2471
        %2473 = vdwg.mxu0
        %2474 = vmatpush.msra.mxu0 %v2368
        %2475 = vmatpush.msra.mxu0 %v2367
        %2476 = vmatpush.msra.mxu0 %v2366
        %2477 = vmatpush.msra.mxu0 %v2365
        %2478 = vmatpush.msra.mxu0 %v2364
        %2479 = vmatpush.msra.mxu0 %v2363
        %2480 = vmatpush.msra.mxu0 %v2362
        %2481 = vmatpush.msra.mxu0 %v2361
        %2482 = vmatpush.msra.mxu0 %v2360
        %2483 = vmatpush.msra.mxu0 %v2359
        %2484 = vmatpush.msra.mxu0 %v2358
        %2485 = vmatpush.msra.mxu0 %v2357
        %2486 = vmatpush.msra.mxu0 %v2356
        %2487 = vmatpush.msra.mxu0 %v2355
        %2488 = vmatpush.msra.mxu0 %v2354
        %2489 = vmatpush.msra.mxu0 %v2353
        %2490 = vmatmul.f32.gmra.mxu0 %v2288
        %v2491 = vpop.f32.mrf.mxu0
        %v2492 = vadd.f32 %v2403, %v2491
        %2493 = vmatmul.f32.gmra.mxu0 %v2289
        %v2494 = vpop.f32.mrf.mxu0
        %v2495 = vadd.f32 %v2406, %v2494
        %2496 = vmatmul.f32.gmra.mxu0 %v2290
        %v2497 = vpop.f32.mrf.mxu0
        %v2498 = vadd.f32 %v2409, %v2497
        %2499 = vmatmul.f32.gmra.mxu0 %v2291
        %v2500 = vpop.f32.mrf.mxu0
        %v2501 = vadd.f32 %v2412, %v2500
        %2502 = vmatmul.f32.gmra.mxu0 %v2292
        %v2503 = vpop.f32.mrf.mxu0
        %v2504 = vadd.f32 %v2415, %v2503
        %2505 = vmatmul.f32.gmra.mxu0 %v2293
        %v2506 = vpop.f32.mrf.mxu0
        %v2507 = vadd.f32 %v2418, %v2506
        %2508 = vmatmul.f32.gmra.mxu0 %v2294
        %v2509 = vpop.f32.mrf.mxu0
        %v2510 = vadd.f32 %v2421, %v2509
        %2511 = vmatmul.f32.gmra.mxu0 %v2295
        %v2512 = vpop.f32.mrf.mxu0
        %v2513 = vadd.f32 %v2424, %v2512
        %2514 = vmatmul.f32.gmra.mxu0 %v2296
        %v2515 = vpop.f32.mrf.mxu0
        %v2516 = vadd.f32 %v2427, %v2515
        %2517 = vmatmul.f32.gmra.mxu0 %v2297
        %v2518 = vpop.f32.mrf.mxu0
        %v2519 = vadd.f32 %v2430, %v2518
        %2520 = vmatmul.f32.gmra.mxu0 %v2298
        %v2521 = vpop.f32.mrf.mxu0
        %v2522 = vadd.f32 %v2433, %v2521
        %2523 = vmatmul.f32.gmra.mxu0 %v2299
        %v2524 = vpop.f32.mrf.mxu0
        %v2525 = vadd.f32 %v2436, %v2524
        %2526 = vmatmul.f32.gmra.mxu0 %v2300
        %v2527 = vpop.f32.mrf.mxu0
        %v2528 = vadd.f32 %v2439, %v2527
        %2529 = vmatmul.f32.gmra.mxu0 %v2301
        %v2530 = vpop.f32.mrf.mxu0
        %v2531 = vadd.f32 %v2442, %v2530
        %2532 = vmatmul.f32.gmra.mxu0 %v2302
        %v2533 = vpop.f32.mrf.mxu0
        %v2534 = vadd.f32 %v2445, %v2533
        %2535 = vmatmul.f32.gmra.mxu0 %v2303
        %v2536 = vpop.f32.mrf.mxu0
        %v2537 = vadd.f32 %v2448, %v2536
        %2538 = vmatmul.f32.gmra.mxu0 %v2304
        %v2539 = vpop.f32.mrf.mxu0
        %v2540 = vadd.f32 %v2451, %v2539
        %2541 = vmatmul.f32.gmra.mxu0 %v2305
        %v2542 = vpop.f32.mrf.mxu0
        %v2543 = vadd.f32 %v2454, %v2542
        %2544 = vmatmul.f32.gmra.mxu0 %v2306
        %v2545 = vpop.f32.mrf.mxu0
        %v2546 = vadd.f32 %v2457, %v2545
        %2547 = vmatmul.f32.gmra.mxu0 %v2307
        %v2548 = vpop.f32.mrf.mxu0
        %v2549 = vadd.f32 %v2460, %v2548
        %2550 = vmatmul.f32.gmra.mxu0 %v2308
        %v2551 = vpop.f32.mrf.mxu0
        %v2552 = vadd.f32 %v2463, %v2551
        %2553 = vmatmul.f32.gmra.mxu0 %v2309
        %v2554 = vpop.f32.mrf.mxu0
        %v2555 = vadd.f32 %v2466, %v2554
        %2556 = vmatmul.f32.gmra.mxu0 %v2310
        %v2557 = vpop.f32.mrf.mxu0
        %v2558 = vadd.f32 %v2469, %v2557
        %2559 = vmatmul.f32.gmra.mxu0 %v2311
        %v2560 = vpop.f32.mrf.mxu0
        %v2561 = vadd.f32 %v2472, %v2560
        %2562 = vdwg.mxu0
        %2563 = vmatpush.msra.mxu0 %v2384
        %2564 = vmatpush.msra.mxu0 %v2383
        %2565 = vmatpush.msra.mxu0 %v2382
        %2566 = vmatpush.msra.mxu0 %v2381
        %2567 = vmatpush.msra.mxu0 %v2380
        %2568 = vmatpush.msra.mxu0 %v2379
        %2569 = vmatpush.msra.mxu0 %v2378
        %2570 = vmatpush.msra.mxu0 %v2377
        %2571 = vmatpush.msra.mxu0 %v2376
        %2572 = vmatpush.msra.mxu0 %v2375
        %2573 = vmatpush.msra.mxu0 %v2374
        %2574 = vmatpush.msra.mxu0 %v2373
        %2575 = vmatpush.msra.mxu0 %v2372
        %2576 = vmatpush.msra.mxu0 %v2371
        %2577 = vmatpush.msra.mxu0 %v2370
        %2578 = vmatpush.msra.mxu0 %v2369
        %2579 = vmatmul.f32.gmra.mxu0 %v2312
        %v2580 = vpop.f32.mrf.mxu0
        %v2581 = vadd.f32 %v2492, %v2580
        %2582 = vmatmul.f32.gmra.mxu0 %v2313
        %v2583 = vpop.f32.mrf.mxu0
        %v2584 = vadd.f32 %v2495, %v2583
        %2585 = vmatmul.f32.gmra.mxu0 %v2314
        %v2586 = vpop.f32.mrf.mxu0
        %v2587 = vadd.f32 %v2498, %v2586
        %2588 = vmatmul.f32.gmra.mxu0 %v2315
        %v2589 = vpop.f32.mrf.mxu0
        %v2590 = vadd.f32 %v2501, %v2589
        %2591 = vmatmul.f32.gmra.mxu0 %v2316
        %v2592 = vpop.f32.mrf.mxu0
        %v2593 = vadd.f32 %v2504, %v2592
        %2594 = vmatmul.f32.gmra.mxu0 %v2317
        %v2595 = vpop.f32.mrf.mxu0
        %v2596 = vadd.f32 %v2507, %v2595
        %2597 = vmatmul.f32.gmra.mxu0 %v2318
        %v2598 = vpop.f32.mrf.mxu0
        %v2599 = vadd.f32 %v2510, %v2598
        %2600 = vmatmul.f32.gmra.mxu0 %v2319
        %v2601 = vpop.f32.mrf.mxu0
        %v2602 = vadd.f32 %v2513, %v2601
        %2603 = vmatmul.f32.gmra.mxu0 %v2320
        %v2604 = vpop.f32.mrf.mxu0
        %v2605 = vadd.f32 %v2516, %v2604
        %2606 = vmatmul.f32.gmra.mxu0 %v2321
        %v2607 = vpop.f32.mrf.mxu0
        %v2608 = vadd.f32 %v2519, %v2607
        %2609 = vmatmul.f32.gmra.mxu0 %v2322
        %v2610 = vpop.f32.mrf.mxu0
        %v2611 = vadd.f32 %v2522, %v2610
        %2612 = vmatmul.f32.gmra.mxu0 %v2323
        %v2613 = vpop.f32.mrf.mxu0
        %v2614 = vadd.f32 %v2525, %v2613
        %2615 = vmatmul.f32.gmra.mxu0 %v2324
        %v2616 = vpop.f32.mrf.mxu0
        %v2617 = vadd.f32 %v2528, %v2616
        %2618 = vmatmul.f32.gmra.mxu0 %v2325
        %v2619 = vpop.f32.mrf.mxu0
        %v2620 = vadd.f32 %v2531, %v2619
        %2621 = vmatmul.f32.gmra.mxu0 %v2326
        %v2622 = vpop.f32.mrf.mxu0
        %v2623 = vadd.f32 %v2534, %v2622
        %2624 = vmatmul.f32.gmra.mxu0 %v2327
        %v2625 = vpop.f32.mrf.mxu0
        %v2626 = vadd.f32 %v2537, %v2625
        %2627 = vmatmul.f32.gmra.mxu0 %v2328
        %v2628 = vpop.f32.mrf.mxu0
        %v2629 = vadd.f32 %v2540, %v2628
        %2630 = vmatmul.f32.gmra.mxu0 %v2329
        %v2631 = vpop.f32.mrf.mxu0
        %v2632 = vadd.f32 %v2543, %v2631
        %2633 = vmatmul.f32.gmra.mxu0 %v2330
        %v2634 = vpop.f32.mrf.mxu0
        %v2635 = vadd.f32 %v2546, %v2634
        %2636 = vmatmul.f32.gmra.mxu0 %v2331
        %v2637 = vpop.f32.mrf.mxu0
        %v2638 = vadd.f32 %v2549, %v2637
        %2639 = vmatmul.f32.gmra.mxu0 %v2332
        %v2640 = vpop.f32.mrf.mxu0
        %v2641 = vadd.f32 %v2552, %v2640
        %2642 = vmatmul.f32.gmra.mxu0 %v2333
        %v2643 = vpop.f32.mrf.mxu0
        %v2644 = vadd.f32 %v2555, %v2643
        %2645 = vmatmul.f32.gmra.mxu0 %v2334
        %v2646 = vpop.f32.mrf.mxu0
        %v2647 = vadd.f32 %v2558, %v2646
        %2648 = vmatmul.f32.gmra.mxu0 %v2335
        %v2649 = vpop.f32.mrf.mxu0
        %v2650 = vadd.f32 %v2561, %v2649
        %2651 = vdwg.mxu0
        %v2652 = vadd.f32 %v2193, %v2581
        %v2653 = vadd.f32 %v2196, %v2584
        %v2654 = vadd.f32 %v2199, %v2587
        %v2655 = vadd.f32 %v2202, %v2590
        %v2656 = vadd.f32 %v2205, %v2593
        %v2657 = vadd.f32 %v2208, %v2596
        %v2658 = vadd.f32 %v2211, %v2599
        %v2659 = vadd.f32 %v2214, %v2602
        %v2660 = vadd.f32 %v2217, %v2605
        %v2661 = vadd.f32 %v2220, %v2608
        %v2662 = vadd.f32 %v2223, %v2611
        %v2663 = vadd.f32 %v2226, %v2614
        %v2664 = vadd.f32 %v2229, %v2617
        %v2665 = vadd.f32 %v2232, %v2620
        %v2666 = vadd.f32 %v2235, %v2623
        %v2667 = vadd.f32 %v2238, %v2626
        %v2668 = vadd.f32 %v2241, %v2629
        %v2669 = vadd.f32 %v2244, %v2632
        %v2670 = vadd.f32 %v2247, %v2635
        %v2671 = vadd.f32 %v2250, %v2638
        %v2672 = vadd.f32 %v2253, %v2641
        %v2673 = vadd.f32 %v2256, %v2644
        %v2674 = vadd.f32 %v2259, %v2647
        %v2675 = vadd.f32 %v2262, %v2650
        %v2676 = vmax.f32 %v2652, 0.0
        %v2677 = vmax.f32 %v2653, 0.0
        %v2678 = vmax.f32 %v2654, 0.0
        %v2679 = vmax.f32 %v2655, 0.0
        %v2680 = vmax.f32 %v2656, 0.0
        %v2681 = vmax.f32 %v2657, 0.0
        %v2682 = vmax.f32 %v2658, 0.0
        %v2683 = vmax.f32 %v2659, 0.0
        %v2684 = vmax.f32 %v2660, 0.0
        %v2685 = vmax.f32 %v2661, 0.0
        %v2686 = vmax.f32 %v2662, 0.0
        %v2687 = vmax.f32 %v2663, 0.0
        %v2688 = vmax.f32 %v2664, 0.0
        %v2689 = vmax.f32 %v2665, 0.0
        %v2690 = vmax.f32 %v2666, 0.0
        %v2691 = vmax.f32 %v2667, 0.0
        %v2692 = vmax.f32 %v2668, 0.0
        %v2693 = vmax.f32 %v2669, 0.0
        %v2694 = vmax.f32 %v2670, 0.0
        %v2695 = vmax.f32 %v2671, 0.0
        %v2696 = vmax.f32 %v2672, 0.0
        %v2697 = vmax.f32 %v2673, 0.0
        %v2698 = vmax.f32 %v2674, 0.0
        %v2699 = vmax.f32 %v2675, 0.0
        %2700 = vst [vmem:[%s170] sm:$0xff] %v2676
        %2701 = vst [vmem:[%s170 + $0x8] sm:$0xff] %v2677
        %2702 = vst [vmem:[%s170 + $0x10] sm:$0xff] %v2678
        %2703 = vst [vmem:[%s170 + $0x18] sm:$0xff] %v2679
        %2704 = vst [vmem:[%s170 + $0x20] sm:$0xff] %v2680
        %2705 = vst [vmem:[%s170 + $0x28] sm:$0xff] %v2681
        %2706 = vst [vmem:[%s170 + $0x30] sm:$0xff] %v2682
        %2707 = vst [vmem:[%s170 + $0x38] sm:$0xff] %v2683
        %2708 = vst [vmem:[%s170 + $0x40] sm:$0xff] %v2684
        %2709 = vst [vmem:[%s170 + $0x48] sm:$0xff] %v2685
        %2710 = vst [vmem:[%s170 + $0x50] sm:$0xff] %v2686
        %2711 = vst [vmem:[%s170 + $0x58] sm:$0xff] %v2687
        %2712 = vst [vmem:[%s170 + $0x60] sm:$0xff] %v2688
        %2713 = vst [vmem:[%s170 + $0x68] sm:$0xff] %v2689
        %2714 = vst [vmem:[%s170 + $0x70] sm:$0xff] %v2690
        %2715 = vst [vmem:[%s170 + $0x78] sm:$0xff] %v2691
        %2716 = vst [vmem:[%s170 + $0x80] sm:$0xff] %v2692
        %2717 = vst [vmem:[%s170 + $0x88] sm:$0xff] %v2693
        %2718 = vst [vmem:[%s170 + $0x90] sm:$0xff] %v2694
        %2719 = vst [vmem:[%s170 + $0x98] sm:$0xff] %v2695
        %2720 = vst [vmem:[%s170 + $0xa0] sm:$0xff] %v2696
        %2721 = vst [vmem:[%s170 + $0xa8] sm:$0xff] %v2697
        %2722 = vst [vmem:[%s170 + $0xb0] sm:$0xff] %v2698
        %2723 = vst [vmem:[%s170 + $0xb8] sm:$0xff] %v2699
        %s2724 = sand.u32 %s83, 1
        %s2725 = scalar_lea.sflag [#allocation7], %s2724
        %s2726 = sand.u32 %s83, 1
        %s2727 = smul.addr %s2726, 192
        %s2728 = scalar_lea.vmem [#allocation10], %s2727
        // Predicated region
        $region53: #{tpu_custom_call.1} parent=27 // pred_check
          %p2729 = pneg %p93
        $region54: #{tpu_custom_call.1} parent=27 // pred_check_branch
          %2731 = sbr.rel (%p2729) target = $region56
        $region55: #{tpu_custom_call.1} parent=27 // pred_region
          %s2732 = smul.u32 24, %s24
          %2734 = vsyncadd %s2725, 0
          %s2735 = smul.addr %s23, 24
          %s2736 = sadd.s32 %s2732, %s2735
          %s2737 = smul.addr %s2736, 8
          %s2738 = scalar_lea.hbm %s3, %s2737
          %s2739 = sshll.u32 %s2728, 4
          %s2740 = int_to_ptr.vmem [resolvable:$true] %s2739
          %s2741 = sshll.u32 %s2738, 4
          %s2742 = int_to_ptr.hbm [resolvable:$true] %s2741
          %2747 = dma.vmem_to_hbm [thread:$0]  %s2740, 3072, %s2742, %s2725, 128, 128, 8
        $region56: #{tpu_custom_call.1} parent=27 // pred_fallthru
          _
      $region28: #{tpu_custom_call.1} parent=5 // pred_fallthru
        _
      %p2748 = scmp.le.s32.totalorder 2, %s14
      // Predicated region
      $region57: #{tpu_custom_call.1} parent=5 // pred_check
        %p2749 = pneg %p2748
      $region58: #{tpu_custom_call.1} parent=5 // pred_check_branch
        %2751 = sbr.rel (%p2749) target = $region60
      $region59: #{tpu_custom_call.1} parent=5 // pred_region
        %s2752 = ssub.s32 %s14, 2
        // Predicated region
        $region61: #{tpu_custom_call.1} parent=59 // pred_check
          %p2753 = pneg %p99
        $region62: #{tpu_custom_call.1} parent=59 // pred_check_branch
          %2755 = sbr.rel (%p2753) target = $region64
        $region63: #{tpu_custom_call.1} parent=59 // pred_region
          %s2756 = sand.u32 %s84, 1
          %s2757 = scalar_lea.sflag [#allocation7], %s2756
          %s2758 = sand.u32 %s84, 1
          %s2759 = smul.addr %s2758, 192
          %s2760 = scalar_lea.vmem [#allocation10], %s2759
          %2762 = dma.done %s2757, 3072
        $region64: #{tpu_custom_call.1} parent=59 // pred_fallthru
          _
      $region60: #{tpu_custom_call.1} parent=5 // pred_fallthru
        _
    $region6: #{tpu_custom_call.1} parent=1 // loop_footer
      %s18 = sadd.s32 1, %s14
    $region7: #{tpu_custom_call.1} parent=1 // loop_footer_branch
      %13 = sbr.rel target = $region3
    $region8: #{tpu_custom_call.1} parent=1 // loop_exit
      _
    %2763 = vsyncpa [#allocation6], 1
    %s2764 = scalar_lea.sflag [#allocation6], 1
    %2765 = vsyncpa %s2764, 1
    %2766 = vsyncpa [#allocation9], 1
    %2767 = vsyncpa [#allocation7], 1
    %s2768 = scalar_lea.sflag [#allocation7], 1
    %2769 = vsyncpa %s2768, 1
  %2770 = vsyncmov [#allocation4]
  %s2771 = vpop.sfrf %2770
  %p2772 = scmp.eq.s32.totalorder %s2771, 0
  %p2773 = pneg %p2772
  %2775 = shalt.err (%p2773)
  %s2776 = scalar_lea.sflag [#allocation4], 1
  %2777 = vsyncmov %s2776
  %s2778 = vpop.sfrf %2777
  %p2779 = scmp.eq.s32.totalorder %s2778, 0
  %p2780 = pneg %p2779
  %2782 = shalt.err (%p2780)

</llo_original>
